<compile_context>
chip_gen: v7x
topology: tpu7x:2x2x1
jax: 0.10.0
libtpu: 0.0.40
codegen_flags: <defaults>
</compile_context>

<pallas_src>
import functools

import jax
import jax.numpy as jnp
from jax.experimental import pallas as pl
from jax.experimental.pallas import tpu as pltpu

# ---------------- configuration ----------------------------------------------
INPUT_SIZE = 16                       # L (Conv1d sequence length)
CONFIG = dict(
    feature_extraction_depth=3,
    groups=4,                         # feature_extraction_out_channels
    activ_function="relu",
    classification_depth=2,
    dropout=0.1,
)
NORM = False
NUM_CLASS = 10                        # unused by forward (output is always 2)
BATCH = 8

L = INPUT_SIZE
C = INPUT_SIZE * CONFIG["groups"]     # conv channels = 64
D = INPUT_SIZE * C                    # flattened feature size = 1024
GSZ = C // CONFIG["groups"]           # channels per group = 16


def _activ(name):
    if name == "relu":
        return lambda x: jnp.maximum(x, 0.0)
    if name == "sigmoid":
        return jax.nn.sigmoid
    if name == "tanh":
        return jnp.tanh
    raise ValueError(f"Invalid choose_activ({name})")


def _pack_factor():
    """Lane-packing factor for feature columns: 2 on v5e (128-wide MXU), else 4."""
    try:
        kind = jax.devices()[0].device_kind.lower()
    except Exception:
        kind = ""
    p = 2 if "v5" in kind else 4
    while p > 1 and L % p:
        p //= 2
    return max(p, 1)


def _vmem_spec():
    return pl.BlockSpec(memory_space=pltpu.MemorySpace.VMEM)


# ---------------- fused Pallas kernel -----------------------------------------
def fused_kernel(x_ref, w0_ref, b0_ref, wbd_ref, bbd_ref, w1_hbm,
                 b1_ref, w2_ref, b2_ref,
                 logits_ref, prob_ref,
                 w1_vmem, w1_sem,
                 *, n_grouped, n_chunks, pc, act):
    # Single DMA for the dominant HBM->VMEM transfer (bf16 hidden weight,
    # ~2 MiB) issued immediately so it overlaps the features compute below;
    # exactly one wait, right before the classifier accumulation loop.
    w1_copy = pltpu.make_async_copy(w1_hbm, w1_vmem, w1_sem)
    w1_copy.start()

    # ---- conv0 (1->C, k=1) + channel broadcast, all L positions at once -----
    # Column j = q*PC + p*C + c  <->  (channel c, position l = q*pack + p);
    # w0sel is a pack-time selection weight so no in-kernel relayout is needed.
    x = x_ref[...].astype(jnp.bfloat16)                          # (B, L)
    h0 = act(jnp.dot(x, w0_ref[...], preferred_element_type=jnp.float32)
             + b0_ref[...])                                      # (B, D) f32

    # ---- grouped 1x1 convs, per packed-position chunk (bf16 in / f32 acc) ---
    feats = []
    for q in range(n_chunks):
        h = h0[:, q * pc:(q + 1) * pc].astype(jnp.bfloat16)      # (B, PC)
        for i in range(n_grouped):
            h = act(jnp.dot(h, wbd_ref[i], preferred_element_type=jnp.float32)
                    + bbd_ref[i]).astype(jnp.bfloat16)
        feats.append(h)

    # ---- classifier hidden layer: flatten ordering is baked into w1p rows ---
    w1_copy.wait()                                               # whole slab resident
    z = b1_ref[...]                                              # (1, D), broadcasts
    for q in range(n_chunks):
        z = z + jnp.dot(feats[q], w1_vmem[q],
                        preferred_element_type=jnp.float32)
    # Dropout(p) is identity at inference time.

    logits = jnp.dot(z, w2_ref[...], preferred_element_type=jnp.float32) + b2_ref[...]
    logits_ref[...] = logits
    prob_ref[...] = jax.nn.sigmoid(logits)


# ---------------- wrapper ------------------------------------------------------
def gcood_forward(x, kp, pack):
    """x: (B, 1, L) float32 in PyTorch NCL layout. Returns (logits, probab)."""
    B, _, L_ = x.shape
    assert L_ == L and L_ % pack == 0, "sequence length must be a multiple of pack"
    assert CONFIG["classification_depth"] == 2, "fused kernel wires one hidden layer"
    act = _activ(CONFIG["activ_function"])
    n_grouped = CONFIG["feature_extraction_depth"] - 1
    Q = L_ // pack
    PC = pack * C

    x2 = x[:, 0, :]        # (B, L): the only wrapper-side op (512 B at B=8)

    fused = pl.pallas_call(
        functools.partial(fused_kernel, n_grouped=n_grouped, n_chunks=Q,
                          pc=PC, act=act),
        out_shape=(jax.ShapeDtypeStruct((B, 2), jnp.float32),
                   jax.ShapeDtypeStruct((B, 2), jnp.float32)),
        in_specs=[
            _vmem_spec(),                           # x2
            _vmem_spec(),                           # w0sel (conv0 as selection matmul)
            _vmem_spec(),                           # b0t
            _vmem_spec(),                           # wbd (block-diag grouped convs, bf16)
            _vmem_spec(),                           # bbd
            pl.BlockSpec(memory_space=pl.ANY),      # w1p stays in HBM, DMA'd manually
            _vmem_spec(),                           # b1
            _vmem_spec(),                           # w2T
            _vmem_spec(),                           # b2
        ],
        out_specs=(_vmem_spec(), _vmem_spec()),
        scratch_shapes=[
            pltpu.VMEM((Q, PC, D), jnp.bfloat16),   # prefetched hidden weight (~2 MiB)
            pltpu.SemaphoreType.DMA,                # single DMA completion semaphore
        ],
    )
    logits, prob = fused(x2, kp["w0sel"], kp["b0t"], kp["wbd"], kp["bbd"],
                         kp["w1p"], kp["b1"], kp["w2T"], kp["b2"])
    return logits, prob


# ---------------- parameter init (deterministic, PyTorch shapes) ---------------
def init_params(key):
    ks = jax.random.split(key, 8)
    n_grouped = CONFIG["feature_extraction_depth"] - 1
    n_hidden = CONFIG["classification_depth"] - 1
    return dict(
        conv0_w=jax.random.normal(ks[0], (C, 1, 1), jnp.float32) * 0.3,
        conv0_b=jax.random.normal(ks[1], (C,), jnp.float32) * 0.1,
        convg_w=jax.random.normal(ks[2], (n_grouped, C, GSZ, 1), jnp.float32)
                * (1.0 / jnp.sqrt(GSZ)),
        convg_b=jax.random.normal(ks[3], (n_grouped, C), jnp.float32) * 0.1,
        lin_h_w=jax.random.normal(ks[4], (n_hidden, D, D), jnp.float32)
                * (1.0 / jnp.sqrt(D)),
        lin_h_b=jax.random.normal(ks[5], (n_hidden, D), jnp.float32) * 0.02,
        lin_o_w=jax.random.normal(ks[6], (2, D), jnp.float32) * (1.0 / jnp.sqrt(D)),
        lin_o_b=jax.random.normal(ks[7], (2,), jnp.float32) * 0.02,
    )


def pack_kernel_params(p, pack):
    """Repack PyTorch-shaped params into lane-packed, right-multiply kernel form."""
    Q = L // pack
    PC = pack * C

    # conv0 + channel broadcast as one (L, D) selection matmul:
    #   w0sel[l, l*C + c] = conv0_w[c]; zero elsewhere.  b0t[l*C + c] = conv0_b[c].
    w0 = p["conv0_w"][:, 0, 0]                                   # (C,)
    w0sel = (jnp.eye(L, dtype=jnp.float32)[:, :, None] * w0[None, None, :]
             ).reshape(L, D).astype(jnp.bfloat16)
    b0t = jnp.tile(p["conv0_b"], L).reshape(1, D)

    # grouped 1x1 convs: block-diagonal over groups, replicated over pack
    # positions; stored bf16 (halves this weight's HBM DMA, bf16-native MXU).
    n_grouped = p["convg_w"].shape[0]
    wbd_c = jnp.zeros((n_grouped, C, C), jnp.float32)
    for i in range(n_grouped):
        for g in range(CONFIG["groups"]):
            blk = p["convg_w"][i, g * GSZ:(g + 1) * GSZ, :, 0]   # (out, in)
            wbd_c = wbd_c.at[i, g * GSZ:(g + 1) * GSZ, g * GSZ:(g + 1) * GSZ].set(blk.T)
    wbd = jnp.zeros((n_grouped, PC, PC), jnp.float32)
    for pp in range(pack):
        wbd = wbd.at[:, pp * C:(pp + 1) * C, pp * C:(pp + 1) * C].set(wbd_c)
    wbd = wbd.astype(jnp.bfloat16)
    bbd = jnp.tile(p["convg_b"], (1, pack)).reshape(n_grouped, 1, PC)

    # Hidden Linear weight with the nn.Flatten() ordering folded into a row
    # permutation:  w1p[q, p*C + c, d] = W[d, c*L + q*pack + p].  Stored bf16 to
    # halve the dominant HBM->VMEM DMA; accumulation stays f32.
    # TODO(synk): int8 (v5e/v6e) / fp8 (v7x) per-column-scaled quantization.
    W = p["lin_h_w"][0]                                          # (D, D)
    w1p = (W.reshape(D, C, Q, pack)
             .transpose(2, 3, 1, 0)
             .reshape(Q, PC, D)
             .astype(jnp.bfloat16))
    b1 = p["lin_h_b"][0].reshape(1, D)

    w2T = p["lin_o_w"].T                                         # (D, 2)
    b2 = p["lin_o_b"].reshape(1, 2)
    return dict(w0sel=w0sel, b0t=b0t, wbd=wbd, bbd=bbd, w1p=w1p, b1=b1,
                w2T=w2T, b2=b2)


# ---------------- pure-JAX reference (mirrors PyTorch exactly) -----------------
def ref_forward(x, p):
    act = _activ(CONFIG["activ_function"])
    B, _, _ = x.shape
    h = act(p["conv0_w"][None, :, 0, 0, None] * x + p["conv0_b"][None, :, None])
    for i in range(CONFIG["feature_extraction_depth"] - 1):
        outs = []
        for g in range(CONFIG["groups"]):
            hg = h[:, g * GSZ:(g + 1) * GSZ, :]
            wg = p["convg_w"][i, g * GSZ:(g + 1) * GSZ, :, 0]
            outs.append(jnp.einsum("oi,bil->bol", wg, hg))
        h = act(jnp.concatenate(outs, axis=1) + p["convg_b"][i][None, :, None])
    flat = h.reshape(B, C * L)
    z = flat
    for i in range(CONFIG["classification_depth"] - 1):
        z = z @ p["lin_h_w"][i].T + p["lin_h_b"][i]
    logits = z @ p["lin_o_w"].T + p["lin_o_b"]
    return logits, jax.nn.sigmoid(logits)


# ---------------- main ----------------------------------------------------------
if __name__ == "__main__":
    key = jax.random.PRNGKey(0)
    pk, xk = jax.random.split(key)
    params = init_params(pk)
    pack = _pack_factor()
    kparams = pack_kernel_params(params, pack)

    x = jax.random.normal(xk, (BATCH, 1, INPUT_SIZE), jnp.float32)

    logits, prob = jax.jit(lambda xx: gcood_forward(xx, kparams, pack))(x)
    jax.block_until_ready((logits, prob))

    ref_logits, ref_prob = ref_forward(x, params)
    assert logits.shape == (BATCH, 2) and prob.shape == (BATCH, 2)
    # Tolerance reflects bf16 weights AND bf16 activations through the grouped
    # convs and the K=1024 hidden contraction (DMA-halving optimizations);
    # expected logit error is a few 1e-3 on logits of O(0.2) magnitude.
    assert jnp.allclose(logits, ref_logits, atol=2e-2, rtol=2e-2), "logits mismatch"
    assert jnp.allclose(prob, ref_prob, atol=1e-2, rtol=2e-2), "probab mismatch"
    print("KERNEL_OK")
</pallas_src>

<mosaic_0001>
module attributes {stable_mosaic.version = 11 : i64} {
  func.func @fused_kernel(%arg0: memref<8x16xf32, #tpu.memory_space<vmem>>, %arg1: memref<16x1024xbf16, #tpu.memory_space<vmem>>, %arg2: memref<1x1024xf32, #tpu.memory_space<vmem>>, %arg3: memref<2x256x256xbf16, #tpu.memory_space<vmem>>, %arg4: memref<2x1x256xf32, #tpu.memory_space<vmem>>, %arg5: memref<4x256x1024xbf16, #tpu.memory_space<any>>, %arg6: memref<1x1024xf32, #tpu.memory_space<vmem>>, %arg7: memref<1024x2xf32, #tpu.memory_space<vmem>>, %arg8: memref<1x2xf32, #tpu.memory_space<vmem>>, %arg9: memref<8x2xf32, #tpu.memory_space<vmem>>, %arg10: memref<8x2xf32, #tpu.memory_space<vmem>>, %arg11: memref<4x256x1024xbf16, #tpu.memory_space<vmem>>, %arg12: memref<!tpu.dma_semaphore, #tpu.memory_space<semaphore_mem>>) attributes {dimension_semantics = [], scalar_prefetch = 0 : i64, scratch_operands = 2 : i64, tpu.core_type = #tpu.core_type<tc>} {
    tpu.enqueue_dma source(%arg5 : memref<4x256x1024xbf16, #tpu.memory_space<any>>) target(%arg11 : memref<4x256x1024xbf16, #tpu.memory_space<vmem>>) target_semaphore(%arg12 : memref<!tpu.dma_semaphore, #tpu.memory_space<semaphore_mem>>)
    %c0 = arith.constant 0 : index
    %c0_0 = arith.constant 0 : index
    %0 = vector.load %arg0[%c0, %c0_0] : memref<8x16xf32, #tpu.memory_space<vmem>>, vector<8x16xf32>
    %1 = arith.truncf %0 : vector<8x16xf32> to vector<8x16xbf16>
    %c0_1 = arith.constant 0 : index
    %c0_2 = arith.constant 0 : index
    %2 = vector.load %arg1[%c0_1, %c0_2] : memref<16x1024xbf16, #tpu.memory_space<vmem>>, vector<16x1024xbf16>
    %cst = arith.constant dense<0.000000e+00> : vector<8x1024xf32>
    %3 = tpu.matmul %1, %2, %cst {dimension_numbers = #tpu.dot_dimension_numbers<[1], [0], [0], [1], [0, 0, 1, 1], [], []>} : vector<8x16xbf16>, vector<16x1024xbf16>, vector<8x1024xf32> -> vector<8x1024xf32>
    %c0_3 = arith.constant 0 : index
    %c0_4 = arith.constant 0 : index
    %4 = vector.load %arg2[%c0_3, %c0_4] : memref<1x1024xf32, #tpu.memory_space<vmem>>, vector<1x1024xf32>
    %5 = vector.broadcast %4 : vector<1x1024xf32> to vector<8x1024xf32>
    %6 = arith.addf %3, %5 : vector<8x1024xf32>
    %cst_5 = arith.constant 0.000000e+00 : f32
    %7 = vector.broadcast %cst_5 : f32 to vector<8x1024xf32>
    %8 = arith.maximumf %6, %7 : vector<8x1024xf32>
    %9 = vector.extract_strided_slice %8 {offsets = [0, 0], sizes = [8, 256], strides = [1, 1]} : vector<8x1024xf32> to vector<8x256xf32>
    %10 = arith.truncf %9 : vector<8x256xf32> to vector<8x256xbf16>
    %c0_6 = arith.constant 0 : index
    %c0_7 = arith.constant 0 : index
    %c0_8 = arith.constant 0 : index
    %11 = vector.load %arg3[%c0_6, %c0_7, %c0_8] : memref<2x256x256xbf16, #tpu.memory_space<vmem>>, vector<1x256x256xbf16>
    %12 = vector.shape_cast %11 : vector<1x256x256xbf16> to vector<256x256xbf16>
    %cst_9 = arith.constant dense<0.000000e+00> : vector<8x256xf32>
    %13 = tpu.matmul %10, %12, %cst_9 {dimension_numbers = #tpu.dot_dimension_numbers<[1], [0], [0], [1], [0, 0, 1, 1], [], []>} : vector<8x256xbf16>, vector<256x256xbf16>, vector<8x256xf32> -> vector<8x256xf32>
    %c0_10 = arith.constant 0 : index
    %c0_11 = arith.constant 0 : index
    %c0_12 = arith.constant 0 : index
    %14 = vector.load %arg4[%c0_10, %c0_11, %c0_12] : memref<2x1x256xf32, #tpu.memory_space<vmem>>, vector<1x1x256xf32>
    %15 = vector.shape_cast %14 : vector<1x1x256xf32> to vector<1x256xf32>
    %16 = vector.broadcast %15 : vector<1x256xf32> to vector<8x256xf32>
    %17 = arith.addf %13, %16 : vector<8x256xf32>
    %cst_13 = arith.constant 0.000000e+00 : f32
    %18 = vector.broadcast %cst_13 : f32 to vector<8x256xf32>
    %19 = arith.maximumf %17, %18 : vector<8x256xf32>
    %20 = arith.truncf %19 : vector<8x256xf32> to vector<8x256xbf16>
    %c1 = arith.constant 1 : index
    %c0_14 = arith.constant 0 : index
    %c0_15 = arith.constant 0 : index
    %21 = vector.load %arg3[%c1, %c0_14, %c0_15] : memref<2x256x256xbf16, #tpu.memory_space<vmem>>, vector<1x256x256xbf16>
    %22 = vector.shape_cast %21 : vector<1x256x256xbf16> to vector<256x256xbf16>
    %cst_16 = arith.constant dense<0.000000e+00> : vector<8x256xf32>
    %23 = tpu.matmul %20, %22, %cst_16 {dimension_numbers = #tpu.dot_dimension_numbers<[1], [0], [0], [1], [0, 0, 1, 1], [], []>} : vector<8x256xbf16>, vector<256x256xbf16>, vector<8x256xf32> -> vector<8x256xf32>
    %c1_17 = arith.constant 1 : index
    %c0_18 = arith.constant 0 : index
    %c0_19 = arith.constant 0 : index
    %24 = vector.load %arg4[%c1_17, %c0_18, %c0_19] : memref<2x1x256xf32, #tpu.memory_space<vmem>>, vector<1x1x256xf32>
    %25 = vector.shape_cast %24 : vector<1x1x256xf32> to vector<1x256xf32>
    %26 = vector.broadcast %25 : vector<1x256xf32> to vector<8x256xf32>
    %27 = arith.addf %23, %26 : vector<8x256xf32>
    %cst_20 = arith.constant 0.000000e+00 : f32
    %28 = vector.broadcast %cst_20 : f32 to vector<8x256xf32>
    %29 = arith.maximumf %27, %28 : vector<8x256xf32>
    %30 = arith.truncf %29 : vector<8x256xf32> to vector<8x256xbf16>
    %31 = vector.extract_strided_slice %8 {offsets = [0, 256], sizes = [8, 256], strides = [1, 1]} : vector<8x1024xf32> to vector<8x256xf32>
    %32 = arith.truncf %31 : vector<8x256xf32> to vector<8x256xbf16>
    %c0_21 = arith.constant 0 : index
    %c0_22 = arith.constant 0 : index
    %c0_23 = arith.constant 0 : index
    %33 = vector.load %arg3[%c0_21, %c0_22, %c0_23] : memref<2x256x256xbf16, #tpu.memory_space<vmem>>, vector<1x256x256xbf16>
    %34 = vector.shape_cast %33 : vector<1x256x256xbf16> to vector<256x256xbf16>
    %cst_24 = arith.constant dense<0.000000e+00> : vector<8x256xf32>
    %35 = tpu.matmul %32, %34, %cst_24 {dimension_numbers = #tpu.dot_dimension_numbers<[1], [0], [0], [1], [0, 0, 1, 1], [], []>} : vector<8x256xbf16>, vector<256x256xbf16>, vector<8x256xf32> -> vector<8x256xf32>
    %c0_25 = arith.constant 0 : index
    %c0_26 = arith.constant 0 : index
    %c0_27 = arith.constant 0 : index
    %36 = vector.load %arg4[%c0_25, %c0_26, %c0_27] : memref<2x1x256xf32, #tpu.memory_space<vmem>>, vector<1x1x256xf32>
    %37 = vector.shape_cast %36 : vector<1x1x256xf32> to vector<1x256xf32>
    %38 = vector.broadcast %37 : vector<1x256xf32> to vector<8x256xf32>
    %39 = arith.addf %35, %38 : vector<8x256xf32>
    %cst_28 = arith.constant 0.000000e+00 : f32
    %40 = vector.broadcast %cst_28 : f32 to vector<8x256xf32>
    %41 = arith.maximumf %39, %40 : vector<8x256xf32>
    %42 = arith.truncf %41 : vector<8x256xf32> to vector<8x256xbf16>
    %c1_29 = arith.constant 1 : index
    %c0_30 = arith.constant 0 : index
    %c0_31 = arith.constant 0 : index
    %43 = vector.load %arg3[%c1_29, %c0_30, %c0_31] : memref<2x256x256xbf16, #tpu.memory_space<vmem>>, vector<1x256x256xbf16>
    %44 = vector.shape_cast %43 : vector<1x256x256xbf16> to vector<256x256xbf16>
    %cst_32 = arith.constant dense<0.000000e+00> : vector<8x256xf32>
    %45 = tpu.matmul %42, %44, %cst_32 {dimension_numbers = #tpu.dot_dimension_numbers<[1], [0], [0], [1], [0, 0, 1, 1], [], []>} : vector<8x256xbf16>, vector<256x256xbf16>, vector<8x256xf32> -> vector<8x256xf32>
    %c1_33 = arith.constant 1 : index
    %c0_34 = arith.constant 0 : index
    %c0_35 = arith.constant 0 : index
    %46 = vector.load %arg4[%c1_33, %c0_34, %c0_35] : memref<2x1x256xf32, #tpu.memory_space<vmem>>, vector<1x1x256xf32>
    %47 = vector.shape_cast %46 : vector<1x1x256xf32> to vector<1x256xf32>
    %48 = vector.broadcast %47 : vector<1x256xf32> to vector<8x256xf32>
    %49 = arith.addf %45, %48 : vector<8x256xf32>
    %cst_36 = arith.constant 0.000000e+00 : f32
    %50 = vector.broadcast %cst_36 : f32 to vector<8x256xf32>
    %51 = arith.maximumf %49, %50 : vector<8x256xf32>
    %52 = arith.truncf %51 : vector<8x256xf32> to vector<8x256xbf16>
    %53 = vector.extract_strided_slice %8 {offsets = [0, 512], sizes = [8, 256], strides = [1, 1]} : vector<8x1024xf32> to vector<8x256xf32>
    %54 = arith.truncf %53 : vector<8x256xf32> to vector<8x256xbf16>
    %c0_37 = arith.constant 0 : index
    %c0_38 = arith.constant 0 : index
    %c0_39 = arith.constant 0 : index
    %55 = vector.load %arg3[%c0_37, %c0_38, %c0_39] : memref<2x256x256xbf16, #tpu.memory_space<vmem>>, vector<1x256x256xbf16>
    %56 = vector.shape_cast %55 : vector<1x256x256xbf16> to vector<256x256xbf16>
    %cst_40 = arith.constant dense<0.000000e+00> : vector<8x256xf32>
    %57 = tpu.matmul %54, %56, %cst_40 {dimension_numbers = #tpu.dot_dimension_numbers<[1], [0], [0], [1], [0, 0, 1, 1], [], []>} : vector<8x256xbf16>, vector<256x256xbf16>, vector<8x256xf32> -> vector<8x256xf32>
    %c0_41 = arith.constant 0 : index
    %c0_42 = arith.constant 0 : index
    %c0_43 = arith.constant 0 : index
    %58 = vector.load %arg4[%c0_41, %c0_42, %c0_43] : memref<2x1x256xf32, #tpu.memory_space<vmem>>, vector<1x1x256xf32>
    %59 = vector.shape_cast %58 : vector<1x1x256xf32> to vector<1x256xf32>
    %60 = vector.broadcast %59 : vector<1x256xf32> to vector<8x256xf32>
    %61 = arith.addf %57, %60 : vector<8x256xf32>
    %cst_44 = arith.constant 0.000000e+00 : f32
    %62 = vector.broadcast %cst_44 : f32 to vector<8x256xf32>
    %63 = arith.maximumf %61, %62 : vector<8x256xf32>
    %64 = arith.truncf %63 : vector<8x256xf32> to vector<8x256xbf16>
    %c1_45 = arith.constant 1 : index
    %c0_46 = arith.constant 0 : index
    %c0_47 = arith.constant 0 : index
    %65 = vector.load %arg3[%c1_45, %c0_46, %c0_47] : memref<2x256x256xbf16, #tpu.memory_space<vmem>>, vector<1x256x256xbf16>
    %66 = vector.shape_cast %65 : vector<1x256x256xbf16> to vector<256x256xbf16>
    %cst_48 = arith.constant dense<0.000000e+00> : vector<8x256xf32>
    %67 = tpu.matmul %64, %66, %cst_48 {dimension_numbers = #tpu.dot_dimension_numbers<[1], [0], [0], [1], [0, 0, 1, 1], [], []>} : vector<8x256xbf16>, vector<256x256xbf16>, vector<8x256xf32> -> vector<8x256xf32>
    %c1_49 = arith.constant 1 : index
    %c0_50 = arith.constant 0 : index
    %c0_51 = arith.constant 0 : index
    %68 = vector.load %arg4[%c1_49, %c0_50, %c0_51] : memref<2x1x256xf32, #tpu.memory_space<vmem>>, vector<1x1x256xf32>
    %69 = vector.shape_cast %68 : vector<1x1x256xf32> to vector<1x256xf32>
    %70 = vector.broadcast %69 : vector<1x256xf32> to vector<8x256xf32>
    %71 = arith.addf %67, %70 : vector<8x256xf32>
    %cst_52 = arith.constant 0.000000e+00 : f32
    %72 = vector.broadcast %cst_52 : f32 to vector<8x256xf32>
    %73 = arith.maximumf %71, %72 : vector<8x256xf32>
    %74 = arith.truncf %73 : vector<8x256xf32> to vector<8x256xbf16>
    %75 = vector.extract_strided_slice %8 {offsets = [0, 768], sizes = [8, 256], strides = [1, 1]} : vector<8x1024xf32> to vector<8x256xf32>
    %76 = arith.truncf %75 : vector<8x256xf32> to vector<8x256xbf16>
    %c0_53 = arith.constant 0 : index
    %c0_54 = arith.constant 0 : index
    %c0_55 = arith.constant 0 : index
    %77 = vector.load %arg3[%c0_53, %c0_54, %c0_55] : memref<2x256x256xbf16, #tpu.memory_space<vmem>>, vector<1x256x256xbf16>
    %78 = vector.shape_cast %77 : vector<1x256x256xbf16> to vector<256x256xbf16>
    %cst_56 = arith.constant dense<0.000000e+00> : vector<8x256xf32>
    %79 = tpu.matmul %76, %78, %cst_56 {dimension_numbers = #tpu.dot_dimension_numbers<[1], [0], [0], [1], [0, 0, 1, 1], [], []>} : vector<8x256xbf16>, vector<256x256xbf16>, vector<8x256xf32> -> vector<8x256xf32>
    %c0_57 = arith.constant 0 : index
    %c0_58 = arith.constant 0 : index
    %c0_59 = arith.constant 0 : index
    %80 = vector.load %arg4[%c0_57, %c0_58, %c0_59] : memref<2x1x256xf32, #tpu.memory_space<vmem>>, vector<1x1x256xf32>
    %81 = vector.shape_cast %80 : vector<1x1x256xf32> to vector<1x256xf32>
    %82 = vector.broadcast %81 : vector<1x256xf32> to vector<8x256xf32>
    %83 = arith.addf %79, %82 : vector<8x256xf32>
    %cst_60 = arith.constant 0.000000e+00 : f32
    %84 = vector.broadcast %cst_60 : f32 to vector<8x256xf32>
    %85 = arith.maximumf %83, %84 : vector<8x256xf32>
    %86 = arith.truncf %85 : vector<8x256xf32> to vector<8x256xbf16>
    %c1_61 = arith.constant 1 : index
    %c0_62 = arith.constant 0 : index
    %c0_63 = arith.constant 0 : index
    %87 = vector.load %arg3[%c1_61, %c0_62, %c0_63] : memref<2x256x256xbf16, #tpu.memory_space<vmem>>, vector<1x256x256xbf16>
    %88 = vector.shape_cast %87 : vector<1x256x256xbf16> to vector<256x256xbf16>
    %cst_64 = arith.constant dense<0.000000e+00> : vector<8x256xf32>
    %89 = tpu.matmul %86, %88, %cst_64 {dimension_numbers = #tpu.dot_dimension_numbers<[1], [0], [0], [1], [0, 0, 1, 1], [], []>} : vector<8x256xbf16>, vector<256x256xbf16>, vector<8x256xf32> -> vector<8x256xf32>
    %c1_65 = arith.constant 1 : index
    %c0_66 = arith.constant 0 : index
    %c0_67 = arith.constant 0 : index
    %90 = vector.load %arg4[%c1_65, %c0_66, %c0_67] : memref<2x1x256xf32, #tpu.memory_space<vmem>>, vector<1x1x256xf32>
    %91 = vector.shape_cast %90 : vector<1x1x256xf32> to vector<1x256xf32>
    %92 = vector.broadcast %91 : vector<1x256xf32> to vector<8x256xf32>
    %93 = arith.addf %89, %92 : vector<8x256xf32>
    %cst_68 = arith.constant 0.000000e+00 : f32
    %94 = vector.broadcast %cst_68 : f32 to vector<8x256xf32>
    %95 = arith.maximumf %93, %94 : vector<8x256xf32>
    %96 = arith.truncf %95 : vector<8x256xf32> to vector<8x256xbf16>
    tpu.wait_dma2 semaphore(%arg12 : memref<!tpu.dma_semaphore, #tpu.memory_space<semaphore_mem>>) src(%arg5 : memref<4x256x1024xbf16, #tpu.memory_space<any>>) dst(%arg11 : memref<4x256x1024xbf16, #tpu.memory_space<vmem>>)
    %c0_69 = arith.constant 0 : index
    %c0_70 = arith.constant 0 : index
    %97 = vector.load %arg6[%c0_69, %c0_70] : memref<1x1024xf32, #tpu.memory_space<vmem>>, vector<1x1024xf32>
    %c0_71 = arith.constant 0 : index
    %c0_72 = arith.constant 0 : index
    %c0_73 = arith.constant 0 : index
    %98 = vector.load %arg11[%c0_71, %c0_72, %c0_73] : memref<4x256x1024xbf16, #tpu.memory_space<vmem>>, vector<1x256x1024xbf16>
    %99 = vector.shape_cast %98 : vector<1x256x1024xbf16> to vector<256x1024xbf16>
    %cst_74 = arith.constant dense<0.000000e+00> : vector<8x1024xf32>
    %100 = tpu.matmul %30, %99, %cst_74 {dimension_numbers = #tpu.dot_dimension_numbers<[1], [0], [0], [1], [0, 0, 1, 1], [], []>} : vector<8x256xbf16>, vector<256x1024xbf16>, vector<8x1024xf32> -> vector<8x1024xf32>
    %101 = vector.broadcast %97 : vector<1x1024xf32> to vector<8x1024xf32>
    %102 = arith.addf %101, %100 : vector<8x1024xf32>
    %c1_75 = arith.constant 1 : index
    %c0_76 = arith.constant 0 : index
    %c0_77 = arith.constant 0 : index
    %103 = vector.load %arg11[%c1_75, %c0_76, %c0_77] : memref<4x256x1024xbf16, #tpu.memory_space<vmem>>, vector<1x256x1024xbf16>
    %104 = vector.shape_cast %103 : vector<1x256x1024xbf16> to vector<256x1024xbf16>
    %cst_78 = arith.constant dense<0.000000e+00> : vector<8x1024xf32>
    %105 = tpu.matmul %52, %104, %cst_78 {dimension_numbers = #tpu.dot_dimension_numbers<[1], [0], [0], [1], [0, 0, 1, 1], [], []>} : vector<8x256xbf16>, vector<256x1024xbf16>, vector<8x1024xf32> -> vector<8x1024xf32>
    %106 = arith.addf %102, %105 : vector<8x1024xf32>
    %c2 = arith.constant 2 : index
    %c0_79 = arith.constant 0 : index
    %c0_80 = arith.constant 0 : index
    %107 = vector.load %arg11[%c2, %c0_79, %c0_80] : memref<4x256x1024xbf16, #tpu.memory_space<vmem>>, vector<1x256x1024xbf16>
    %108 = vector.shape_cast %107 : vector<1x256x1024xbf16> to vector<256x1024xbf16>
    %cst_81 = arith.constant dense<0.000000e+00> : vector<8x1024xf32>
    %109 = tpu.matmul %74, %108, %cst_81 {dimension_numbers = #tpu.dot_dimension_numbers<[1], [0], [0], [1], [0, 0, 1, 1], [], []>} : vector<8x256xbf16>, vector<256x1024xbf16>, vector<8x1024xf32> -> vector<8x1024xf32>
    %110 = arith.addf %106, %109 : vector<8x1024xf32>
    %c3 = arith.constant 3 : index
    %c0_82 = arith.constant 0 : index
    %c0_83 = arith.constant 0 : index
    %111 = vector.load %arg11[%c3, %c0_82, %c0_83] : memref<4x256x1024xbf16, #tpu.memory_space<vmem>>, vector<1x256x1024xbf16>
    %112 = vector.shape_cast %111 : vector<1x256x1024xbf16> to vector<256x1024xbf16>
    %cst_84 = arith.constant dense<0.000000e+00> : vector<8x1024xf32>
    %113 = tpu.matmul %96, %112, %cst_84 {dimension_numbers = #tpu.dot_dimension_numbers<[1], [0], [0], [1], [0, 0, 1, 1], [], []>} : vector<8x256xbf16>, vector<256x1024xbf16>, vector<8x1024xf32> -> vector<8x1024xf32>
    %114 = arith.addf %110, %113 : vector<8x1024xf32>
    %c0_85 = arith.constant 0 : index
    %c0_86 = arith.constant 0 : index
    %115 = vector.load %arg7[%c0_85, %c0_86] : memref<1024x2xf32, #tpu.memory_space<vmem>>, vector<1024x2xf32>
    %cst_87 = arith.constant dense<0.000000e+00> : vector<8x2xf32>
    %116 = tpu.matmul %114, %115, %cst_87 {dimension_numbers = #tpu.dot_dimension_numbers<[1], [0], [0], [1], [0, 0, 1, 1], [], []>} : vector<8x1024xf32>, vector<1024x2xf32>, vector<8x2xf32> -> vector<8x2xf32>
    %c0_88 = arith.constant 0 : index
    %c0_89 = arith.constant 0 : index
    %117 = vector.load %arg8[%c0_88, %c0_89] : memref<1x2xf32, #tpu.memory_space<vmem>>, vector<1x2xf32>
    %118 = vector.broadcast %117 : vector<1x2xf32> to vector<8x2xf32>
    %119 = arith.addf %116, %118 : vector<8x2xf32>
    %c0_90 = arith.constant 0 : index
    %c0_91 = arith.constant 0 : index
    %120 = vector.load %arg9[%c0_90, %c0_91] : memref<8x2xf32, #tpu.memory_space<vmem>>, vector<8x2xf32>
    tpu.vector_store %arg9[%c0_90, %c0_91], %119 {strides = array<i32>} : memref<8x2xf32, #tpu.memory_space<vmem>>, vector<8x2xf32>,
    %121 = arith.negf %119 : vector<8x2xf32>
    %122 = math.exp %121 : vector<8x2xf32>
    %cst_92 = arith.constant 1.000000e+00 : f32
    %123 = vector.broadcast %cst_92 : f32 to vector<8x2xf32>
    %124 = arith.addf %123, %122 : vector<8x2xf32>
    %125 = arith.divf %123, %124 : vector<8x2xf32>
    %c0_93 = arith.constant 0 : index
    %c0_94 = arith.constant 0 : index
    %126 = vector.load %arg10[%c0_93, %c0_94] : memref<8x2xf32, #tpu.memory_space<vmem>>, vector<8x2xf32>
    tpu.vector_store %arg10[%c0_93, %c0_94], %125 {strides = array<i32>} : memref<8x2xf32, #tpu.memory_space<vmem>>, vector<8x2xf32>,
    return
  }
}

</mosaic_0001>

<llo_original>
// kernel: _lambda_.1
$region0: #{_lambda_.1}
  #allocation0 [shape = 'u32[]', space=smem, size = 0x4, offset = 0x4, fixed_abs, tag = 'smem constant byte address 0x4 - core index']
  #allocation1 [shape = 'u32[144,128]{1,0:T(1,128)}', space=vmem, size = 0x12000, scoped, tag = 'internal scratch']
  #allocation2 [shape = 'bf16[4,256,1024]{2,1,0:T(16,128)(2,1)}', space=vmem, size = 0x200000, scoped, tag = 'scratch operand']
  #allocation3 [shape = 's32[1]{0}', space=sflag, size = 0x4, scoped, tag = 'scratch operand']
  #allocation4 [shape = 's32[]', space=sflag, size = 0x4, offset = 0, fixed_abs, tag = 'sflag constant byte address 0x0 - dummy sync flag']
  %s0 = inlined_call_operand.vmem [shape: f32[8,16], index: 0, kind: input, shape index: {}]
  %s1 = inlined_call_operand.vmem [shape: bf16[16,1024], index: 1, kind: input, shape index: {}]
  %s2 = inlined_call_operand.vmem [shape: f32[1,1024], index: 2, kind: input, shape index: {}]
  %s3 = inlined_call_operand.vmem [shape: bf16[2,256,256], index: 3, kind: input, shape index: {}]
  %s4 = inlined_call_operand.vmem [shape: f32[2,1,256], index: 4, kind: input, shape index: {}]
  %s5 = inlined_call_operand.vmem [shape: bf16[4,256,1024], index: 5, kind: input, shape index: {}]
  %s6 = inlined_call_operand.vmem [shape: f32[1,1024], index: 6, kind: input, shape index: {}]
  %s7 = inlined_call_operand.vmem [shape: f32[1024,2], index: 7, kind: input, shape index: {}]
  %s8 = inlined_call_operand.vmem [shape: f32[1,2], index: 8, kind: input, shape index: {}]
  %s9 = inlined_call_operand.vmem [shape: f32[8,2], index: 9, kind: output, shape index: {0}]
  %s10 = inlined_call_operand.vmem [shape: f32[8,2], index: 10, kind: output, shape index: {1}]
  %11 = xla_tuple %s9, %s10
  %s12 = sld [smem:[#allocation0]]
  $region98: #{_lambda_.1} parent=0
    _
  %s14 = ssub.s32 1, %s12
  %s15 = scalar_select 0, %s14, %s12
  // Predicated region
  $region2: #{_lambda_.1} parent=0 // pred_check
    _
  $region3: #{_lambda_.1} parent=0 // pred_check_branch
    %17 = sbr.rel (0) target = $region5
  $region4: #{_lambda_.1} parent=0 // pred_region
    _
  $region5: #{_lambda_.1} parent=0 // pred_fallthru
    _
  // Predicated region
  $region6: #{_lambda_.1} parent=0 // pred_check
    _
  $region7: #{_lambda_.1} parent=0 // pred_check_branch
    %19 = sbr.rel (0) target = $region9
  $region8: #{_lambda_.1} parent=0 // pred_region
    _
  $region9: #{_lambda_.1} parent=0 // pred_fallthru
    _
  // Predicated region
  $region10: #{_lambda_.1} parent=0 // pred_check
    _
  $region11: #{_lambda_.1} parent=0 // pred_check_branch
    %21 = sbr.rel (0) target = $region13
  $region12: #{_lambda_.1} parent=0 // pred_region
    _
  $region13: #{_lambda_.1} parent=0 // pred_fallthru
    _
  // Predicated region
  $region14: #{_lambda_.1} parent=0 // pred_check
    _
  $region15: #{_lambda_.1} parent=0 // pred_check_branch
    %23 = sbr.rel (0) target = $region17
  $region16: #{_lambda_.1} parent=0 // pred_region
    _
  $region17: #{_lambda_.1} parent=0 // pred_fallthru
    _
  // Predicated region
  $region18: #{_lambda_.1} parent=0 // pred_check
    _
  $region19: #{_lambda_.1} parent=0 // pred_check_branch
    %25 = sbr.rel (0) target = $region21
  $region20: #{_lambda_.1} parent=0 // pred_region
    _
  $region21: #{_lambda_.1} parent=0 // pred_fallthru
    _
  // Predicated region
  $region22: #{_lambda_.1} parent=0 // pred_check
    _
  $region23: #{_lambda_.1} parent=0 // pred_check_branch
    %27 = sbr.rel (0) target = $region25
  $region24: #{_lambda_.1} parent=0 // pred_region
    _
  $region25: #{_lambda_.1} parent=0 // pred_fallthru
    _
  // Predicated region
  $region26: #{_lambda_.1} parent=0 // pred_check
    _
  $region27: #{_lambda_.1} parent=0 // pred_check_branch
    %29 = sbr.rel (0) target = $region29
  $region28: #{_lambda_.1} parent=0 // pred_region
    _
  $region29: #{_lambda_.1} parent=0 // pred_fallthru
    _
  // Predicated region
  $region30: #{_lambda_.1} parent=0 // pred_check
    _
  $region31: #{_lambda_.1} parent=0 // pred_check_branch
    %31 = sbr.rel (0) target = $region33
  $region32: #{_lambda_.1} parent=0 // pred_region
    _
  $region33: #{_lambda_.1} parent=0 // pred_fallthru
    _
  %p34 = scmp.lt.u32.totalorder 4, 8
  %p35 = pneg %p34
  // Predicated region
  $region34: #{_lambda_.1} parent=0 // pred_check
    _
  $region35: #{_lambda_.1} parent=0 // pred_check_branch
    %37 = sbr.rel (%p34) target = $region37
  $region36: #{_lambda_.1} parent=0 // pred_region
    %s1084 = sand.u32 4, 7
    %p1085 = scmp.eq.s32.totalorder %s1084, 0
    // Predicated region
    $region49: #{_lambda_.1} parent=36 // pred_check
      %p1086 = pneg %p1085
    $region50: #{_lambda_.1} parent=36 // pred_check_branch
      %1088 = sbr.rel (%p1086) target = $region52
    $region51: #{_lambda_.1} parent=36 // pred_region
      %s1089 = sshrl.u32 4, 3
      %s1090 = smul.u32 2, %s1089
      // While loop
      $region53: #{_lambda_.1} parent=51 // loop_pre_header
        _
      $region54: #{_lambda_.1} parent=51 // loop_header
        %s1096 = sphi 0, %s1098
        %p1097 = scmp.ge.s32.totalorder %s1096, %s1090
        %s1101 = sphi 0, %s2135
        %s1102 = sphi 0, %s2131
        %s1103 = sphi %s5, %s2142
        %s1104 = sphi [#allocation2], %s2143
      $region55: #{_lambda_.1} parent=51 // loop_header_branch
        %1100 = sbr.rel (%p1097) target = $region59
      $region56: #{_lambda_.1} parent=51 // loop_body
        %v1105 = vld [vmem:[%s1103] sm:$0xff]
        %1106 = vst [vmem:[%s1104] sm:$0xff] %v1105
        %v1107 = vld [vmem:[%s1103 + $0x4] sm:$0xff]
        %1108 = vst [vmem:[%s1104 + $0x8] sm:$0xff] %v1107
        %v1109 = vld [vmem:[%s1103 + $0x8] sm:$0xff]
        %1110 = vst [vmem:[%s1104 + $0x10] sm:$0xff] %v1109
        %v1111 = vld [vmem:[%s1103 + $0xc] sm:$0xff]
        %1112 = vst [vmem:[%s1104 + $0x18] sm:$0xff] %v1111
        %v1113 = vld [vmem:[%s1103 + $0x10] sm:$0xff]
        %1114 = vst [vmem:[%s1104 + $0x20] sm:$0xff] %v1113
        %v1115 = vld [vmem:[%s1103 + $0x14] sm:$0xff]
        %1116 = vst [vmem:[%s1104 + $0x28] sm:$0xff] %v1115
        %v1117 = vld [vmem:[%s1103 + $0x18] sm:$0xff]
        %1118 = vst [vmem:[%s1104 + $0x30] sm:$0xff] %v1117
        %v1119 = vld [vmem:[%s1103 + $0x1c] sm:$0xff]
        %1120 = vst [vmem:[%s1104 + $0x38] sm:$0xff] %v1119
        %v1121 = vld [vmem:[%s1103 + $0x40] sm:$0xff]
        %1122 = vst [vmem:[%s1104 + $0x40] sm:$0xff] %v1121
        %v1123 = vld [vmem:[%s1103 + $0x44] sm:$0xff]
        %1124 = vst [vmem:[%s1104 + $0x48] sm:$0xff] %v1123
        %v1125 = vld [vmem:[%s1103 + $0x48] sm:$0xff]
        %1126 = vst [vmem:[%s1104 + $0x50] sm:$0xff] %v1125
        %v1127 = vld [vmem:[%s1103 + $0x4c] sm:$0xff]
        %1128 = vst [vmem:[%s1104 + $0x58] sm:$0xff] %v1127
        %v1129 = vld [vmem:[%s1103 + $0x50] sm:$0xff]
        %1130 = vst [vmem:[%s1104 + $0x60] sm:$0xff] %v1129
        %v1131 = vld [vmem:[%s1103 + $0x54] sm:$0xff]
        %1132 = vst [vmem:[%s1104 + $0x68] sm:$0xff] %v1131
        %v1133 = vld [vmem:[%s1103 + $0x58] sm:$0xff]
        %1134 = vst [vmem:[%s1104 + $0x70] sm:$0xff] %v1133
        %v1135 = vld [vmem:[%s1103 + $0x5c] sm:$0xff]
        %1136 = vst [vmem:[%s1104 + $0x78] sm:$0xff] %v1135
        %v1137 = vld [vmem:[%s1103 + $0x80] sm:$0xff]
        %1138 = vst [vmem:[%s1104 + $0x80] sm:$0xff] %v1137
        %v1139 = vld [vmem:[%s1103 + $0x84] sm:$0xff]
        %1140 = vst [vmem:[%s1104 + $0x88] sm:$0xff] %v1139
        %v1141 = vld [vmem:[%s1103 + $0x88] sm:$0xff]
        %1142 = vst [vmem:[%s1104 + $0x90] sm:$0xff] %v1141
        %v1143 = vld [vmem:[%s1103 + $0x8c] sm:$0xff]
        %1144 = vst [vmem:[%s1104 + $0x98] sm:$0xff] %v1143
        %v1145 = vld [vmem:[%s1103 + $0x90] sm:$0xff]
        %1146 = vst [vmem:[%s1104 + $0xa0] sm:$0xff] %v1145
        %v1147 = vld [vmem:[%s1103 + $0x94] sm:$0xff]
        %1148 = vst [vmem:[%s1104 + $0xa8] sm:$0xff] %v1147
        %v1149 = vld [vmem:[%s1103 + $0x98] sm:$0xff]
        %1150 = vst [vmem:[%s1104 + $0xb0] sm:$0xff] %v1149
        %v1151 = vld [vmem:[%s1103 + $0x9c] sm:$0xff]
        %1152 = vst [vmem:[%s1104 + $0xb8] sm:$0xff] %v1151
        %v1153 = vld [vmem:[%s1103 + $0xc0] sm:$0xff]
        %1154 = vst [vmem:[%s1104 + $0xc0] sm:$0xff] %v1153
        %v1155 = vld [vmem:[%s1103 + $0xc4] sm:$0xff]
        %1156 = vst [vmem:[%s1104 + $0xc8] sm:$0xff] %v1155
        %v1157 = vld [vmem:[%s1103 + $0xc8] sm:$0xff]
        %1158 = vst [vmem:[%s1104 + $0xd0] sm:$0xff] %v1157
        %v1159 = vld [vmem:[%s1103 + $0xcc] sm:$0xff]
        %1160 = vst [vmem:[%s1104 + $0xd8] sm:$0xff] %v1159
        %v1161 = vld [vmem:[%s1103 + $0xd0] sm:$0xff]
        %1162 = vst [vmem:[%s1104 + $0xe0] sm:$0xff] %v1161
        %v1163 = vld [vmem:[%s1103 + $0xd4] sm:$0xff]
        %1164 = vst [vmem:[%s1104 + $0xe8] sm:$0xff] %v1163
        %v1165 = vld [vmem:[%s1103 + $0xd8] sm:$0xff]
        %1166 = vst [vmem:[%s1104 + $0xf0] sm:$0xff] %v1165
        %v1167 = vld [vmem:[%s1103 + $0xdc] sm:$0xff]
        %1168 = vst [vmem:[%s1104 + $0xf8] sm:$0xff] %v1167
        %v1169 = vld [vmem:[%s1103 + $0x100] sm:$0xff]
        %1170 = vst [vmem:[%s1104 + $0x100] sm:$0xff] %v1169
        %v1171 = vld [vmem:[%s1103 + $0x104] sm:$0xff]
        %1172 = vst [vmem:[%s1104 + $0x108] sm:$0xff] %v1171
        %v1173 = vld [vmem:[%s1103 + $0x108] sm:$0xff]
        %1174 = vst [vmem:[%s1104 + $0x110] sm:$0xff] %v1173
        %v1175 = vld [vmem:[%s1103 + $0x10c] sm:$0xff]
        %1176 = vst [vmem:[%s1104 + $0x118] sm:$0xff] %v1175
        %v1177 = vld [vmem:[%s1103 + $0x110] sm:$0xff]
        %1178 = vst [vmem:[%s1104 + $0x120] sm:$0xff] %v1177
        %v1179 = vld [vmem:[%s1103 + $0x114] sm:$0xff]
        %1180 = vst [vmem:[%s1104 + $0x128] sm:$0xff] %v1179
        %v1181 = vld [vmem:[%s1103 + $0x118] sm:$0xff]
        %1182 = vst [vmem:[%s1104 + $0x130] sm:$0xff] %v1181
        %v1183 = vld [vmem:[%s1103 + $0x11c] sm:$0xff]
        %1184 = vst [vmem:[%s1104 + $0x138] sm:$0xff] %v1183
        %v1185 = vld [vmem:[%s1103 + $0x140] sm:$0xff]
        %1186 = vst [vmem:[%s1104 + $0x140] sm:$0xff] %v1185
        %v1187 = vld [vmem:[%s1103 + $0x144] sm:$0xff]
        %1188 = vst [vmem:[%s1104 + $0x148] sm:$0xff] %v1187
        %v1189 = vld [vmem:[%s1103 + $0x148] sm:$0xff]
        %1190 = vst [vmem:[%s1104 + $0x150] sm:$0xff] %v1189
        %v1191 = vld [vmem:[%s1103 + $0x14c] sm:$0xff]
        %1192 = vst [vmem:[%s1104 + $0x158] sm:$0xff] %v1191
        %v1193 = vld [vmem:[%s1103 + $0x150] sm:$0xff]
        %1194 = vst [vmem:[%s1104 + $0x160] sm:$0xff] %v1193
        %v1195 = vld [vmem:[%s1103 + $0x154] sm:$0xff]
        %1196 = vst [vmem:[%s1104 + $0x168] sm:$0xff] %v1195
        %v1197 = vld [vmem:[%s1103 + $0x158] sm:$0xff]
        %1198 = vst [vmem:[%s1104 + $0x170] sm:$0xff] %v1197
        %v1199 = vld [vmem:[%s1103 + $0x15c] sm:$0xff]
        %1200 = vst [vmem:[%s1104 + $0x178] sm:$0xff] %v1199
        %v1201 = vld [vmem:[%s1103 + $0x180] sm:$0xff]
        %1202 = vst [vmem:[%s1104 + $0x180] sm:$0xff] %v1201
        %v1203 = vld [vmem:[%s1103 + $0x184] sm:$0xff]
        %1204 = vst [vmem:[%s1104 + $0x188] sm:$0xff] %v1203
        %v1205 = vld [vmem:[%s1103 + $0x188] sm:$0xff]
        %1206 = vst [vmem:[%s1104 + $0x190] sm:$0xff] %v1205
        %v1207 = vld [vmem:[%s1103 + $0x18c] sm:$0xff]
        %1208 = vst [vmem:[%s1104 + $0x198] sm:$0xff] %v1207
        %v1209 = vld [vmem:[%s1103 + $0x190] sm:$0xff]
        %1210 = vst [vmem:[%s1104 + $0x1a0] sm:$0xff] %v1209
        %v1211 = vld [vmem:[%s1103 + $0x194] sm:$0xff]
        %1212 = vst [vmem:[%s1104 + $0x1a8] sm:$0xff] %v1211
        %v1213 = vld [vmem:[%s1103 + $0x198] sm:$0xff]
        %1214 = vst [vmem:[%s1104 + $0x1b0] sm:$0xff] %v1213
        %v1215 = vld [vmem:[%s1103 + $0x19c] sm:$0xff]
        %1216 = vst [vmem:[%s1104 + $0x1b8] sm:$0xff] %v1215
        %v1217 = vld [vmem:[%s1103 + $0x1c0] sm:$0xff]
        %1218 = vst [vmem:[%s1104 + $0x1c0] sm:$0xff] %v1217
        %v1219 = vld [vmem:[%s1103 + $0x1c4] sm:$0xff]
        %1220 = vst [vmem:[%s1104 + $0x1c8] sm:$0xff] %v1219
        %v1221 = vld [vmem:[%s1103 + $0x1c8] sm:$0xff]
        %1222 = vst [vmem:[%s1104 + $0x1d0] sm:$0xff] %v1221
        %v1223 = vld [vmem:[%s1103 + $0x1cc] sm:$0xff]
        %1224 = vst [vmem:[%s1104 + $0x1d8] sm:$0xff] %v1223
        %v1225 = vld [vmem:[%s1103 + $0x1d0] sm:$0xff]
        %1226 = vst [vmem:[%s1104 + $0x1e0] sm:$0xff] %v1225
        %v1227 = vld [vmem:[%s1103 + $0x1d4] sm:$0xff]
        %1228 = vst [vmem:[%s1104 + $0x1e8] sm:$0xff] %v1227
        %v1229 = vld [vmem:[%s1103 + $0x1d8] sm:$0xff]
        %1230 = vst [vmem:[%s1104 + $0x1f0] sm:$0xff] %v1229
        %v1231 = vld [vmem:[%s1103 + $0x1dc] sm:$0xff]
        %1232 = vst [vmem:[%s1104 + $0x1f8] sm:$0xff] %v1231
        %v1233 = vld [vmem:[%s1103 + $0x200] sm:$0xff]
        %1234 = vst [vmem:[%s1104 + $0x200] sm:$0xff] %v1233
        %v1235 = vld [vmem:[%s1103 + $0x204] sm:$0xff]
        %1236 = vst [vmem:[%s1104 + $0x208] sm:$0xff] %v1235
        %v1237 = vld [vmem:[%s1103 + $0x208] sm:$0xff]
        %1238 = vst [vmem:[%s1104 + $0x210] sm:$0xff] %v1237
        %v1239 = vld [vmem:[%s1103 + $0x20c] sm:$0xff]
        %1240 = vst [vmem:[%s1104 + $0x218] sm:$0xff] %v1239
        %v1241 = vld [vmem:[%s1103 + $0x210] sm:$0xff]
        %1242 = vst [vmem:[%s1104 + $0x220] sm:$0xff] %v1241
        %v1243 = vld [vmem:[%s1103 + $0x214] sm:$0xff]
        %1244 = vst [vmem:[%s1104 + $0x228] sm:$0xff] %v1243
        %v1245 = vld [vmem:[%s1103 + $0x218] sm:$0xff]
        %1246 = vst [vmem:[%s1104 + $0x230] sm:$0xff] %v1245
        %v1247 = vld [vmem:[%s1103 + $0x21c] sm:$0xff]
        %1248 = vst [vmem:[%s1104 + $0x238] sm:$0xff] %v1247
        %v1249 = vld [vmem:[%s1103 + $0x240] sm:$0xff]
        %1250 = vst [vmem:[%s1104 + $0x240] sm:$0xff] %v1249
        %v1251 = vld [vmem:[%s1103 + $0x244] sm:$0xff]
        %1252 = vst [vmem:[%s1104 + $0x248] sm:$0xff] %v1251
        %v1253 = vld [vmem:[%s1103 + $0x248] sm:$0xff]
        %1254 = vst [vmem:[%s1104 + $0x250] sm:$0xff] %v1253
        %v1255 = vld [vmem:[%s1103 + $0x24c] sm:$0xff]
        %1256 = vst [vmem:[%s1104 + $0x258] sm:$0xff] %v1255
        %v1257 = vld [vmem:[%s1103 + $0x250] sm:$0xff]
        %1258 = vst [vmem:[%s1104 + $0x260] sm:$0xff] %v1257
        %v1259 = vld [vmem:[%s1103 + $0x254] sm:$0xff]
        %1260 = vst [vmem:[%s1104 + $0x268] sm:$0xff] %v1259
        %v1261 = vld [vmem:[%s1103 + $0x258] sm:$0xff]
        %1262 = vst [vmem:[%s1104 + $0x270] sm:$0xff] %v1261
        %v1263 = vld [vmem:[%s1103 + $0x25c] sm:$0xff]
        %1264 = vst [vmem:[%s1104 + $0x278] sm:$0xff] %v1263
        %v1265 = vld [vmem:[%s1103 + $0x280] sm:$0xff]
        %1266 = vst [vmem:[%s1104 + $0x280] sm:$0xff] %v1265
        %v1267 = vld [vmem:[%s1103 + $0x284] sm:$0xff]
        %1268 = vst [vmem:[%s1104 + $0x288] sm:$0xff] %v1267
        %v1269 = vld [vmem:[%s1103 + $0x288] sm:$0xff]
        %1270 = vst [vmem:[%s1104 + $0x290] sm:$0xff] %v1269
        %v1271 = vld [vmem:[%s1103 + $0x28c] sm:$0xff]
        %1272 = vst [vmem:[%s1104 + $0x298] sm:$0xff] %v1271
        %v1273 = vld [vmem:[%s1103 + $0x290] sm:$0xff]
        %1274 = vst [vmem:[%s1104 + $0x2a0] sm:$0xff] %v1273
        %v1275 = vld [vmem:[%s1103 + $0x294] sm:$0xff]
        %1276 = vst [vmem:[%s1104 + $0x2a8] sm:$0xff] %v1275
        %v1277 = vld [vmem:[%s1103 + $0x298] sm:$0xff]
        %1278 = vst [vmem:[%s1104 + $0x2b0] sm:$0xff] %v1277
        %v1279 = vld [vmem:[%s1103 + $0x29c] sm:$0xff]
        %1280 = vst [vmem:[%s1104 + $0x2b8] sm:$0xff] %v1279
        %v1281 = vld [vmem:[%s1103 + $0x2c0] sm:$0xff]
        %1282 = vst [vmem:[%s1104 + $0x2c0] sm:$0xff] %v1281
        %v1283 = vld [vmem:[%s1103 + $0x2c4] sm:$0xff]
        %1284 = vst [vmem:[%s1104 + $0x2c8] sm:$0xff] %v1283
        %v1285 = vld [vmem:[%s1103 + $0x2c8] sm:$0xff]
        %1286 = vst [vmem:[%s1104 + $0x2d0] sm:$0xff] %v1285
        %v1287 = vld [vmem:[%s1103 + $0x2cc] sm:$0xff]
        %1288 = vst [vmem:[%s1104 + $0x2d8] sm:$0xff] %v1287
        %v1289 = vld [vmem:[%s1103 + $0x2d0] sm:$0xff]
        %1290 = vst [vmem:[%s1104 + $0x2e0] sm:$0xff] %v1289
        %v1291 = vld [vmem:[%s1103 + $0x2d4] sm:$0xff]
        %1292 = vst [vmem:[%s1104 + $0x2e8] sm:$0xff] %v1291
        %v1293 = vld [vmem:[%s1103 + $0x2d8] sm:$0xff]
        %1294 = vst [vmem:[%s1104 + $0x2f0] sm:$0xff] %v1293
        %v1295 = vld [vmem:[%s1103 + $0x2dc] sm:$0xff]
        %1296 = vst [vmem:[%s1104 + $0x2f8] sm:$0xff] %v1295
        %v1297 = vld [vmem:[%s1103 + $0x300] sm:$0xff]
        %1298 = vst [vmem:[%s1104 + $0x300] sm:$0xff] %v1297
        %v1299 = vld [vmem:[%s1103 + $0x304] sm:$0xff]
        %1300 = vst [vmem:[%s1104 + $0x308] sm:$0xff] %v1299
        %v1301 = vld [vmem:[%s1103 + $0x308] sm:$0xff]
        %1302 = vst [vmem:[%s1104 + $0x310] sm:$0xff] %v1301
        %v1303 = vld [vmem:[%s1103 + $0x30c] sm:$0xff]
        %1304 = vst [vmem:[%s1104 + $0x318] sm:$0xff] %v1303
        %v1305 = vld [vmem:[%s1103 + $0x310] sm:$0xff]
        %1306 = vst [vmem:[%s1104 + $0x320] sm:$0xff] %v1305
        %v1307 = vld [vmem:[%s1103 + $0x314] sm:$0xff]
        %1308 = vst [vmem:[%s1104 + $0x328] sm:$0xff] %v1307
        %v1309 = vld [vmem:[%s1103 + $0x318] sm:$0xff]
        %1310 = vst [vmem:[%s1104 + $0x330] sm:$0xff] %v1309
        %v1311 = vld [vmem:[%s1103 + $0x31c] sm:$0xff]
        %1312 = vst [vmem:[%s1104 + $0x338] sm:$0xff] %v1311
        %v1313 = vld [vmem:[%s1103 + $0x340] sm:$0xff]
        %1314 = vst [vmem:[%s1104 + $0x340] sm:$0xff] %v1313
        %v1315 = vld [vmem:[%s1103 + $0x344] sm:$0xff]
        %1316 = vst [vmem:[%s1104 + $0x348] sm:$0xff] %v1315
        %v1317 = vld [vmem:[%s1103 + $0x348] sm:$0xff]
        %1318 = vst [vmem:[%s1104 + $0x350] sm:$0xff] %v1317
        %v1319 = vld [vmem:[%s1103 + $0x34c] sm:$0xff]
        %1320 = vst [vmem:[%s1104 + $0x358] sm:$0xff] %v1319
        %v1321 = vld [vmem:[%s1103 + $0x350] sm:$0xff]
        %1322 = vst [vmem:[%s1104 + $0x360] sm:$0xff] %v1321
        %v1323 = vld [vmem:[%s1103 + $0x354] sm:$0xff]
        %1324 = vst [vmem:[%s1104 + $0x368] sm:$0xff] %v1323
        %v1325 = vld [vmem:[%s1103 + $0x358] sm:$0xff]
        %1326 = vst [vmem:[%s1104 + $0x370] sm:$0xff] %v1325
        %v1327 = vld [vmem:[%s1103 + $0x35c] sm:$0xff]
        %1328 = vst [vmem:[%s1104 + $0x378] sm:$0xff] %v1327
        %v1329 = vld [vmem:[%s1103 + $0x380] sm:$0xff]
        %1330 = vst [vmem:[%s1104 + $0x380] sm:$0xff] %v1329
        %v1331 = vld [vmem:[%s1103 + $0x384] sm:$0xff]
        %1332 = vst [vmem:[%s1104 + $0x388] sm:$0xff] %v1331
        %v1333 = vld [vmem:[%s1103 + $0x388] sm:$0xff]
        %1334 = vst [vmem:[%s1104 + $0x390] sm:$0xff] %v1333
        %v1335 = vld [vmem:[%s1103 + $0x38c] sm:$0xff]
        %1336 = vst [vmem:[%s1104 + $0x398] sm:$0xff] %v1335
        %v1337 = vld [vmem:[%s1103 + $0x390] sm:$0xff]
        %1338 = vst [vmem:[%s1104 + $0x3a0] sm:$0xff] %v1337
        %v1339 = vld [vmem:[%s1103 + $0x394] sm:$0xff]
        %1340 = vst [vmem:[%s1104 + $0x3a8] sm:$0xff] %v1339
        %v1341 = vld [vmem:[%s1103 + $0x398] sm:$0xff]
        %1342 = vst [vmem:[%s1104 + $0x3b0] sm:$0xff] %v1341
        %v1343 = vld [vmem:[%s1103 + $0x39c] sm:$0xff]
        %1344 = vst [vmem:[%s1104 + $0x3b8] sm:$0xff] %v1343
        %v1345 = vld [vmem:[%s1103 + $0x3c0] sm:$0xff]
        %1346 = vst [vmem:[%s1104 + $0x3c0] sm:$0xff] %v1345
        %v1347 = vld [vmem:[%s1103 + $0x3c4] sm:$0xff]
        %1348 = vst [vmem:[%s1104 + $0x3c8] sm:$0xff] %v1347
        %v1349 = vld [vmem:[%s1103 + $0x3c8] sm:$0xff]
        %1350 = vst [vmem:[%s1104 + $0x3d0] sm:$0xff] %v1349
        %v1351 = vld [vmem:[%s1103 + $0x3cc] sm:$0xff]
        %1352 = vst [vmem:[%s1104 + $0x3d8] sm:$0xff] %v1351
        %v1353 = vld [vmem:[%s1103 + $0x3d0] sm:$0xff]
        %1354 = vst [vmem:[%s1104 + $0x3e0] sm:$0xff] %v1353
        %v1355 = vld [vmem:[%s1103 + $0x3d4] sm:$0xff]
        %1356 = vst [vmem:[%s1104 + $0x3e8] sm:$0xff] %v1355
        %v1357 = vld [vmem:[%s1103 + $0x3d8] sm:$0xff]
        %1358 = vst [vmem:[%s1104 + $0x3f0] sm:$0xff] %v1357
        %v1359 = vld [vmem:[%s1103 + $0x3dc] sm:$0xff]
        %1360 = vst [vmem:[%s1104 + $0x3f8] sm:$0xff] %v1359
        %v1361 = vld [vmem:[%s1103 + $0x400] sm:$0xff]
        %1362 = vst [vmem:[%s1104 + $0x400] sm:$0xff] %v1361
        %v1363 = vld [vmem:[%s1103 + $0x404] sm:$0xff]
        %1364 = vst [vmem:[%s1104 + $0x408] sm:$0xff] %v1363
        %v1365 = vld [vmem:[%s1103 + $0x408] sm:$0xff]
        %1366 = vst [vmem:[%s1104 + $0x410] sm:$0xff] %v1365
        %v1367 = vld [vmem:[%s1103 + $0x40c] sm:$0xff]
        %1368 = vst [vmem:[%s1104 + $0x418] sm:$0xff] %v1367
        %v1369 = vld [vmem:[%s1103 + $0x410] sm:$0xff]
        %1370 = vst [vmem:[%s1104 + $0x420] sm:$0xff] %v1369
        %v1371 = vld [vmem:[%s1103 + $0x414] sm:$0xff]
        %1372 = vst [vmem:[%s1104 + $0x428] sm:$0xff] %v1371
        %v1373 = vld [vmem:[%s1103 + $0x418] sm:$0xff]
        %1374 = vst [vmem:[%s1104 + $0x430] sm:$0xff] %v1373
        %v1375 = vld [vmem:[%s1103 + $0x41c] sm:$0xff]
        %1376 = vst [vmem:[%s1104 + $0x438] sm:$0xff] %v1375
        %v1377 = vld [vmem:[%s1103 + $0x440] sm:$0xff]
        %1378 = vst [vmem:[%s1104 + $0x440] sm:$0xff] %v1377
        %v1379 = vld [vmem:[%s1103 + $0x444] sm:$0xff]
        %1380 = vst [vmem:[%s1104 + $0x448] sm:$0xff] %v1379
        %v1381 = vld [vmem:[%s1103 + $0x448] sm:$0xff]
        %1382 = vst [vmem:[%s1104 + $0x450] sm:$0xff] %v1381
        %v1383 = vld [vmem:[%s1103 + $0x44c] sm:$0xff]
        %1384 = vst [vmem:[%s1104 + $0x458] sm:$0xff] %v1383
        %v1385 = vld [vmem:[%s1103 + $0x450] sm:$0xff]
        %1386 = vst [vmem:[%s1104 + $0x460] sm:$0xff] %v1385
        %v1387 = vld [vmem:[%s1103 + $0x454] sm:$0xff]
        %1388 = vst [vmem:[%s1104 + $0x468] sm:$0xff] %v1387
        %v1389 = vld [vmem:[%s1103 + $0x458] sm:$0xff]
        %1390 = vst [vmem:[%s1104 + $0x470] sm:$0xff] %v1389
        %v1391 = vld [vmem:[%s1103 + $0x45c] sm:$0xff]
        %1392 = vst [vmem:[%s1104 + $0x478] sm:$0xff] %v1391
        %v1393 = vld [vmem:[%s1103 + $0x480] sm:$0xff]
        %1394 = vst [vmem:[%s1104 + $0x480] sm:$0xff] %v1393
        %v1395 = vld [vmem:[%s1103 + $0x484] sm:$0xff]
        %1396 = vst [vmem:[%s1104 + $0x488] sm:$0xff] %v1395
        %v1397 = vld [vmem:[%s1103 + $0x488] sm:$0xff]
        %1398 = vst [vmem:[%s1104 + $0x490] sm:$0xff] %v1397
        %v1399 = vld [vmem:[%s1103 + $0x48c] sm:$0xff]
        %1400 = vst [vmem:[%s1104 + $0x498] sm:$0xff] %v1399
        %v1401 = vld [vmem:[%s1103 + $0x490] sm:$0xff]
        %1402 = vst [vmem:[%s1104 + $0x4a0] sm:$0xff] %v1401
        %v1403 = vld [vmem:[%s1103 + $0x494] sm:$0xff]
        %1404 = vst [vmem:[%s1104 + $0x4a8] sm:$0xff] %v1403
        %v1405 = vld [vmem:[%s1103 + $0x498] sm:$0xff]
        %1406 = vst [vmem:[%s1104 + $0x4b0] sm:$0xff] %v1405
        %v1407 = vld [vmem:[%s1103 + $0x49c] sm:$0xff]
        %1408 = vst [vmem:[%s1104 + $0x4b8] sm:$0xff] %v1407
        %v1409 = vld [vmem:[%s1103 + $0x4c0] sm:$0xff]
        %1410 = vst [vmem:[%s1104 + $0x4c0] sm:$0xff] %v1409
        %v1411 = vld [vmem:[%s1103 + $0x4c4] sm:$0xff]
        %1412 = vst [vmem:[%s1104 + $0x4c8] sm:$0xff] %v1411
        %v1413 = vld [vmem:[%s1103 + $0x4c8] sm:$0xff]
        %1414 = vst [vmem:[%s1104 + $0x4d0] sm:$0xff] %v1413
        %v1415 = vld [vmem:[%s1103 + $0x4cc] sm:$0xff]
        %1416 = vst [vmem:[%s1104 + $0x4d8] sm:$0xff] %v1415
        %v1417 = vld [vmem:[%s1103 + $0x4d0] sm:$0xff]
        %1418 = vst [vmem:[%s1104 + $0x4e0] sm:$0xff] %v1417
        %v1419 = vld [vmem:[%s1103 + $0x4d4] sm:$0xff]
        %1420 = vst [vmem:[%s1104 + $0x4e8] sm:$0xff] %v1419
        %v1421 = vld [vmem:[%s1103 + $0x4d8] sm:$0xff]
        %1422 = vst [vmem:[%s1104 + $0x4f0] sm:$0xff] %v1421
        %v1423 = vld [vmem:[%s1103 + $0x4dc] sm:$0xff]
        %1424 = vst [vmem:[%s1104 + $0x4f8] sm:$0xff] %v1423
        %v1425 = vld [vmem:[%s1103 + $0x500] sm:$0xff]
        %1426 = vst [vmem:[%s1104 + $0x500] sm:$0xff] %v1425
        %v1427 = vld [vmem:[%s1103 + $0x504] sm:$0xff]
        %1428 = vst [vmem:[%s1104 + $0x508] sm:$0xff] %v1427
        %v1429 = vld [vmem:[%s1103 + $0x508] sm:$0xff]
        %1430 = vst [vmem:[%s1104 + $0x510] sm:$0xff] %v1429
        %v1431 = vld [vmem:[%s1103 + $0x50c] sm:$0xff]
        %1432 = vst [vmem:[%s1104 + $0x518] sm:$0xff] %v1431
        %v1433 = vld [vmem:[%s1103 + $0x510] sm:$0xff]
        %1434 = vst [vmem:[%s1104 + $0x520] sm:$0xff] %v1433
        %v1435 = vld [vmem:[%s1103 + $0x514] sm:$0xff]
        %1436 = vst [vmem:[%s1104 + $0x528] sm:$0xff] %v1435
        %v1437 = vld [vmem:[%s1103 + $0x518] sm:$0xff]
        %1438 = vst [vmem:[%s1104 + $0x530] sm:$0xff] %v1437
        %v1439 = vld [vmem:[%s1103 + $0x51c] sm:$0xff]
        %1440 = vst [vmem:[%s1104 + $0x538] sm:$0xff] %v1439
        %v1441 = vld [vmem:[%s1103 + $0x540] sm:$0xff]
        %1442 = vst [vmem:[%s1104 + $0x540] sm:$0xff] %v1441
        %v1443 = vld [vmem:[%s1103 + $0x544] sm:$0xff]
        %1444 = vst [vmem:[%s1104 + $0x548] sm:$0xff] %v1443
        %v1445 = vld [vmem:[%s1103 + $0x548] sm:$0xff]
        %1446 = vst [vmem:[%s1104 + $0x550] sm:$0xff] %v1445
        %v1447 = vld [vmem:[%s1103 + $0x54c] sm:$0xff]
        %1448 = vst [vmem:[%s1104 + $0x558] sm:$0xff] %v1447
        %v1449 = vld [vmem:[%s1103 + $0x550] sm:$0xff]
        %1450 = vst [vmem:[%s1104 + $0x560] sm:$0xff] %v1449
        %v1451 = vld [vmem:[%s1103 + $0x554] sm:$0xff]
        %1452 = vst [vmem:[%s1104 + $0x568] sm:$0xff] %v1451
        %v1453 = vld [vmem:[%s1103 + $0x558] sm:$0xff]
        %1454 = vst [vmem:[%s1104 + $0x570] sm:$0xff] %v1453
        %v1455 = vld [vmem:[%s1103 + $0x55c] sm:$0xff]
        %1456 = vst [vmem:[%s1104 + $0x578] sm:$0xff] %v1455
        %v1457 = vld [vmem:[%s1103 + $0x580] sm:$0xff]
        %1458 = vst [vmem:[%s1104 + $0x580] sm:$0xff] %v1457
        %v1459 = vld [vmem:[%s1103 + $0x584] sm:$0xff]
        %1460 = vst [vmem:[%s1104 + $0x588] sm:$0xff] %v1459
        %v1461 = vld [vmem:[%s1103 + $0x588] sm:$0xff]
        %1462 = vst [vmem:[%s1104 + $0x590] sm:$0xff] %v1461
        %v1463 = vld [vmem:[%s1103 + $0x58c] sm:$0xff]
        %1464 = vst [vmem:[%s1104 + $0x598] sm:$0xff] %v1463
        %v1465 = vld [vmem:[%s1103 + $0x590] sm:$0xff]
        %1466 = vst [vmem:[%s1104 + $0x5a0] sm:$0xff] %v1465
        %v1467 = vld [vmem:[%s1103 + $0x594] sm:$0xff]
        %1468 = vst [vmem:[%s1104 + $0x5a8] sm:$0xff] %v1467
        %v1469 = vld [vmem:[%s1103 + $0x598] sm:$0xff]
        %1470 = vst [vmem:[%s1104 + $0x5b0] sm:$0xff] %v1469
        %v1471 = vld [vmem:[%s1103 + $0x59c] sm:$0xff]
        %1472 = vst [vmem:[%s1104 + $0x5b8] sm:$0xff] %v1471
        %v1473 = vld [vmem:[%s1103 + $0x5c0] sm:$0xff]
        %1474 = vst [vmem:[%s1104 + $0x5c0] sm:$0xff] %v1473
        %v1475 = vld [vmem:[%s1103 + $0x5c4] sm:$0xff]
        %1476 = vst [vmem:[%s1104 + $0x5c8] sm:$0xff] %v1475
        %v1477 = vld [vmem:[%s1103 + $0x5c8] sm:$0xff]
        %1478 = vst [vmem:[%s1104 + $0x5d0] sm:$0xff] %v1477
        %v1479 = vld [vmem:[%s1103 + $0x5cc] sm:$0xff]
        %1480 = vst [vmem:[%s1104 + $0x5d8] sm:$0xff] %v1479
        %v1481 = vld [vmem:[%s1103 + $0x5d0] sm:$0xff]
        %1482 = vst [vmem:[%s1104 + $0x5e0] sm:$0xff] %v1481
        %v1483 = vld [vmem:[%s1103 + $0x5d4] sm:$0xff]
        %1484 = vst [vmem:[%s1104 + $0x5e8] sm:$0xff] %v1483
        %v1485 = vld [vmem:[%s1103 + $0x5d8] sm:$0xff]
        %1486 = vst [vmem:[%s1104 + $0x5f0] sm:$0xff] %v1485
        %v1487 = vld [vmem:[%s1103 + $0x5dc] sm:$0xff]
        %1488 = vst [vmem:[%s1104 + $0x5f8] sm:$0xff] %v1487
        %v1489 = vld [vmem:[%s1103 + $0x600] sm:$0xff]
        %1490 = vst [vmem:[%s1104 + $0x600] sm:$0xff] %v1489
        %v1491 = vld [vmem:[%s1103 + $0x604] sm:$0xff]
        %1492 = vst [vmem:[%s1104 + $0x608] sm:$0xff] %v1491
        %v1493 = vld [vmem:[%s1103 + $0x608] sm:$0xff]
        %1494 = vst [vmem:[%s1104 + $0x610] sm:$0xff] %v1493
        %v1495 = vld [vmem:[%s1103 + $0x60c] sm:$0xff]
        %1496 = vst [vmem:[%s1104 + $0x618] sm:$0xff] %v1495
        %v1497 = vld [vmem:[%s1103 + $0x610] sm:$0xff]
        %1498 = vst [vmem:[%s1104 + $0x620] sm:$0xff] %v1497
        %v1499 = vld [vmem:[%s1103 + $0x614] sm:$0xff]
        %1500 = vst [vmem:[%s1104 + $0x628] sm:$0xff] %v1499
        %v1501 = vld [vmem:[%s1103 + $0x618] sm:$0xff]
        %1502 = vst [vmem:[%s1104 + $0x630] sm:$0xff] %v1501
        %v1503 = vld [vmem:[%s1103 + $0x61c] sm:$0xff]
        %1504 = vst [vmem:[%s1104 + $0x638] sm:$0xff] %v1503
        %v1505 = vld [vmem:[%s1103 + $0x640] sm:$0xff]
        %1506 = vst [vmem:[%s1104 + $0x640] sm:$0xff] %v1505
        %v1507 = vld [vmem:[%s1103 + $0x644] sm:$0xff]
        %1508 = vst [vmem:[%s1104 + $0x648] sm:$0xff] %v1507
        %v1509 = vld [vmem:[%s1103 + $0x648] sm:$0xff]
        %1510 = vst [vmem:[%s1104 + $0x650] sm:$0xff] %v1509
        %v1511 = vld [vmem:[%s1103 + $0x64c] sm:$0xff]
        %1512 = vst [vmem:[%s1104 + $0x658] sm:$0xff] %v1511
        %v1513 = vld [vmem:[%s1103 + $0x650] sm:$0xff]
        %1514 = vst [vmem:[%s1104 + $0x660] sm:$0xff] %v1513
        %v1515 = vld [vmem:[%s1103 + $0x654] sm:$0xff]
        %1516 = vst [vmem:[%s1104 + $0x668] sm:$0xff] %v1515
        %v1517 = vld [vmem:[%s1103 + $0x658] sm:$0xff]
        %1518 = vst [vmem:[%s1104 + $0x670] sm:$0xff] %v1517
        %v1519 = vld [vmem:[%s1103 + $0x65c] sm:$0xff]
        %1520 = vst [vmem:[%s1104 + $0x678] sm:$0xff] %v1519
        %v1521 = vld [vmem:[%s1103 + $0x680] sm:$0xff]
        %1522 = vst [vmem:[%s1104 + $0x680] sm:$0xff] %v1521
        %v1523 = vld [vmem:[%s1103 + $0x684] sm:$0xff]
        %1524 = vst [vmem:[%s1104 + $0x688] sm:$0xff] %v1523
        %v1525 = vld [vmem:[%s1103 + $0x688] sm:$0xff]
        %1526 = vst [vmem:[%s1104 + $0x690] sm:$0xff] %v1525
        %v1527 = vld [vmem:[%s1103 + $0x68c] sm:$0xff]
        %1528 = vst [vmem:[%s1104 + $0x698] sm:$0xff] %v1527
        %v1529 = vld [vmem:[%s1103 + $0x690] sm:$0xff]
        %1530 = vst [vmem:[%s1104 + $0x6a0] sm:$0xff] %v1529
        %v1531 = vld [vmem:[%s1103 + $0x694] sm:$0xff]
        %1532 = vst [vmem:[%s1104 + $0x6a8] sm:$0xff] %v1531
        %v1533 = vld [vmem:[%s1103 + $0x698] sm:$0xff]
        %1534 = vst [vmem:[%s1104 + $0x6b0] sm:$0xff] %v1533
        %v1535 = vld [vmem:[%s1103 + $0x69c] sm:$0xff]
        %1536 = vst [vmem:[%s1104 + $0x6b8] sm:$0xff] %v1535
        %v1537 = vld [vmem:[%s1103 + $0x6c0] sm:$0xff]
        %1538 = vst [vmem:[%s1104 + $0x6c0] sm:$0xff] %v1537
        %v1539 = vld [vmem:[%s1103 + $0x6c4] sm:$0xff]
        %1540 = vst [vmem:[%s1104 + $0x6c8] sm:$0xff] %v1539
        %v1541 = vld [vmem:[%s1103 + $0x6c8] sm:$0xff]
        %1542 = vst [vmem:[%s1104 + $0x6d0] sm:$0xff] %v1541
        %v1543 = vld [vmem:[%s1103 + $0x6cc] sm:$0xff]
        %1544 = vst [vmem:[%s1104 + $0x6d8] sm:$0xff] %v1543
        %v1545 = vld [vmem:[%s1103 + $0x6d0] sm:$0xff]
        %1546 = vst [vmem:[%s1104 + $0x6e0] sm:$0xff] %v1545
        %v1547 = vld [vmem:[%s1103 + $0x6d4] sm:$0xff]
        %1548 = vst [vmem:[%s1104 + $0x6e8] sm:$0xff] %v1547
        %v1549 = vld [vmem:[%s1103 + $0x6d8] sm:$0xff]
        %1550 = vst [vmem:[%s1104 + $0x6f0] sm:$0xff] %v1549
        %v1551 = vld [vmem:[%s1103 + $0x6dc] sm:$0xff]
        %1552 = vst [vmem:[%s1104 + $0x6f8] sm:$0xff] %v1551
        %v1553 = vld [vmem:[%s1103 + $0x700] sm:$0xff]
        %1554 = vst [vmem:[%s1104 + $0x700] sm:$0xff] %v1553
        %v1555 = vld [vmem:[%s1103 + $0x704] sm:$0xff]
        %1556 = vst [vmem:[%s1104 + $0x708] sm:$0xff] %v1555
        %v1557 = vld [vmem:[%s1103 + $0x708] sm:$0xff]
        %1558 = vst [vmem:[%s1104 + $0x710] sm:$0xff] %v1557
        %v1559 = vld [vmem:[%s1103 + $0x70c] sm:$0xff]
        %1560 = vst [vmem:[%s1104 + $0x718] sm:$0xff] %v1559
        %v1561 = vld [vmem:[%s1103 + $0x710] sm:$0xff]
        %1562 = vst [vmem:[%s1104 + $0x720] sm:$0xff] %v1561
        %v1563 = vld [vmem:[%s1103 + $0x714] sm:$0xff]
        %1564 = vst [vmem:[%s1104 + $0x728] sm:$0xff] %v1563
        %v1565 = vld [vmem:[%s1103 + $0x718] sm:$0xff]
        %1566 = vst [vmem:[%s1104 + $0x730] sm:$0xff] %v1565
        %v1567 = vld [vmem:[%s1103 + $0x71c] sm:$0xff]
        %1568 = vst [vmem:[%s1104 + $0x738] sm:$0xff] %v1567
        %v1569 = vld [vmem:[%s1103 + $0x740] sm:$0xff]
        %1570 = vst [vmem:[%s1104 + $0x740] sm:$0xff] %v1569
        %v1571 = vld [vmem:[%s1103 + $0x744] sm:$0xff]
        %1572 = vst [vmem:[%s1104 + $0x748] sm:$0xff] %v1571
        %v1573 = vld [vmem:[%s1103 + $0x748] sm:$0xff]
        %1574 = vst [vmem:[%s1104 + $0x750] sm:$0xff] %v1573
        %v1575 = vld [vmem:[%s1103 + $0x74c] sm:$0xff]
        %1576 = vst [vmem:[%s1104 + $0x758] sm:$0xff] %v1575
        %v1577 = vld [vmem:[%s1103 + $0x750] sm:$0xff]
        %1578 = vst [vmem:[%s1104 + $0x760] sm:$0xff] %v1577
        %v1579 = vld [vmem:[%s1103 + $0x754] sm:$0xff]
        %1580 = vst [vmem:[%s1104 + $0x768] sm:$0xff] %v1579
        %v1581 = vld [vmem:[%s1103 + $0x758] sm:$0xff]
        %1582 = vst [vmem:[%s1104 + $0x770] sm:$0xff] %v1581
        %v1583 = vld [vmem:[%s1103 + $0x75c] sm:$0xff]
        %1584 = vst [vmem:[%s1104 + $0x778] sm:$0xff] %v1583
        %v1585 = vld [vmem:[%s1103 + $0x780] sm:$0xff]
        %1586 = vst [vmem:[%s1104 + $0x780] sm:$0xff] %v1585
        %v1587 = vld [vmem:[%s1103 + $0x784] sm:$0xff]
        %1588 = vst [vmem:[%s1104 + $0x788] sm:$0xff] %v1587
        %v1589 = vld [vmem:[%s1103 + $0x788] sm:$0xff]
        %1590 = vst [vmem:[%s1104 + $0x790] sm:$0xff] %v1589
        %v1591 = vld [vmem:[%s1103 + $0x78c] sm:$0xff]
        %1592 = vst [vmem:[%s1104 + $0x798] sm:$0xff] %v1591
        %v1593 = vld [vmem:[%s1103 + $0x790] sm:$0xff]
        %1594 = vst [vmem:[%s1104 + $0x7a0] sm:$0xff] %v1593
        %v1595 = vld [vmem:[%s1103 + $0x794] sm:$0xff]
        %1596 = vst [vmem:[%s1104 + $0x7a8] sm:$0xff] %v1595
        %v1597 = vld [vmem:[%s1103 + $0x798] sm:$0xff]
        %1598 = vst [vmem:[%s1104 + $0x7b0] sm:$0xff] %v1597
        %v1599 = vld [vmem:[%s1103 + $0x79c] sm:$0xff]
        %1600 = vst [vmem:[%s1104 + $0x7b8] sm:$0xff] %v1599
        %v1601 = vld [vmem:[%s1103 + $0x7c0] sm:$0xff]
        %1602 = vst [vmem:[%s1104 + $0x7c0] sm:$0xff] %v1601
        %v1603 = vld [vmem:[%s1103 + $0x7c4] sm:$0xff]
        %1604 = vst [vmem:[%s1104 + $0x7c8] sm:$0xff] %v1603
        %v1605 = vld [vmem:[%s1103 + $0x7c8] sm:$0xff]
        %1606 = vst [vmem:[%s1104 + $0x7d0] sm:$0xff] %v1605
        %v1607 = vld [vmem:[%s1103 + $0x7cc] sm:$0xff]
        %1608 = vst [vmem:[%s1104 + $0x7d8] sm:$0xff] %v1607
        %v1609 = vld [vmem:[%s1103 + $0x7d0] sm:$0xff]
        %1610 = vst [vmem:[%s1104 + $0x7e0] sm:$0xff] %v1609
        %v1611 = vld [vmem:[%s1103 + $0x7d4] sm:$0xff]
        %1612 = vst [vmem:[%s1104 + $0x7e8] sm:$0xff] %v1611
        %v1613 = vld [vmem:[%s1103 + $0x7d8] sm:$0xff]
        %1614 = vst [vmem:[%s1104 + $0x7f0] sm:$0xff] %v1613
        %v1615 = vld [vmem:[%s1103 + $0x7dc] sm:$0xff]
        %1616 = vst [vmem:[%s1104 + $0x7f8] sm:$0xff] %v1615
        %v1617 = vld [vmem:[%s1103 + $0x800] sm:$0xff]
        %1618 = vst [vmem:[%s1104 + $0x800] sm:$0xff] %v1617
        %v1619 = vld [vmem:[%s1103 + $0x804] sm:$0xff]
        %1620 = vst [vmem:[%s1104 + $0x808] sm:$0xff] %v1619
        %v1621 = vld [vmem:[%s1103 + $0x808] sm:$0xff]
        %1622 = vst [vmem:[%s1104 + $0x810] sm:$0xff] %v1621
        %v1623 = vld [vmem:[%s1103 + $0x80c] sm:$0xff]
        %1624 = vst [vmem:[%s1104 + $0x818] sm:$0xff] %v1623
        %v1625 = vld [vmem:[%s1103 + $0x810] sm:$0xff]
        %1626 = vst [vmem:[%s1104 + $0x820] sm:$0xff] %v1625
        %v1627 = vld [vmem:[%s1103 + $0x814] sm:$0xff]
        %1628 = vst [vmem:[%s1104 + $0x828] sm:$0xff] %v1627
        %v1629 = vld [vmem:[%s1103 + $0x818] sm:$0xff]
        %1630 = vst [vmem:[%s1104 + $0x830] sm:$0xff] %v1629
        %v1631 = vld [vmem:[%s1103 + $0x81c] sm:$0xff]
        %1632 = vst [vmem:[%s1104 + $0x838] sm:$0xff] %v1631
        %v1633 = vld [vmem:[%s1103 + $0x840] sm:$0xff]
        %1634 = vst [vmem:[%s1104 + $0x840] sm:$0xff] %v1633
        %v1635 = vld [vmem:[%s1103 + $0x844] sm:$0xff]
        %1636 = vst [vmem:[%s1104 + $0x848] sm:$0xff] %v1635
        %v1637 = vld [vmem:[%s1103 + $0x848] sm:$0xff]
        %1638 = vst [vmem:[%s1104 + $0x850] sm:$0xff] %v1637
        %v1639 = vld [vmem:[%s1103 + $0x84c] sm:$0xff]
        %1640 = vst [vmem:[%s1104 + $0x858] sm:$0xff] %v1639
        %v1641 = vld [vmem:[%s1103 + $0x850] sm:$0xff]
        %1642 = vst [vmem:[%s1104 + $0x860] sm:$0xff] %v1641
        %v1643 = vld [vmem:[%s1103 + $0x854] sm:$0xff]
        %1644 = vst [vmem:[%s1104 + $0x868] sm:$0xff] %v1643
        %v1645 = vld [vmem:[%s1103 + $0x858] sm:$0xff]
        %1646 = vst [vmem:[%s1104 + $0x870] sm:$0xff] %v1645
        %v1647 = vld [vmem:[%s1103 + $0x85c] sm:$0xff]
        %1648 = vst [vmem:[%s1104 + $0x878] sm:$0xff] %v1647
        %v1649 = vld [vmem:[%s1103 + $0x880] sm:$0xff]
        %1650 = vst [vmem:[%s1104 + $0x880] sm:$0xff] %v1649
        %v1651 = vld [vmem:[%s1103 + $0x884] sm:$0xff]
        %1652 = vst [vmem:[%s1104 + $0x888] sm:$0xff] %v1651
        %v1653 = vld [vmem:[%s1103 + $0x888] sm:$0xff]
        %1654 = vst [vmem:[%s1104 + $0x890] sm:$0xff] %v1653
        %v1655 = vld [vmem:[%s1103 + $0x88c] sm:$0xff]
        %1656 = vst [vmem:[%s1104 + $0x898] sm:$0xff] %v1655
        %v1657 = vld [vmem:[%s1103 + $0x890] sm:$0xff]
        %1658 = vst [vmem:[%s1104 + $0x8a0] sm:$0xff] %v1657
        %v1659 = vld [vmem:[%s1103 + $0x894] sm:$0xff]
        %1660 = vst [vmem:[%s1104 + $0x8a8] sm:$0xff] %v1659
        %v1661 = vld [vmem:[%s1103 + $0x898] sm:$0xff]
        %1662 = vst [vmem:[%s1104 + $0x8b0] sm:$0xff] %v1661
        %v1663 = vld [vmem:[%s1103 + $0x89c] sm:$0xff]
        %1664 = vst [vmem:[%s1104 + $0x8b8] sm:$0xff] %v1663
        %v1665 = vld [vmem:[%s1103 + $0x8c0] sm:$0xff]
        %1666 = vst [vmem:[%s1104 + $0x8c0] sm:$0xff] %v1665
        %v1667 = vld [vmem:[%s1103 + $0x8c4] sm:$0xff]
        %1668 = vst [vmem:[%s1104 + $0x8c8] sm:$0xff] %v1667
        %v1669 = vld [vmem:[%s1103 + $0x8c8] sm:$0xff]
        %1670 = vst [vmem:[%s1104 + $0x8d0] sm:$0xff] %v1669
        %v1671 = vld [vmem:[%s1103 + $0x8cc] sm:$0xff]
        %1672 = vst [vmem:[%s1104 + $0x8d8] sm:$0xff] %v1671
        %v1673 = vld [vmem:[%s1103 + $0x8d0] sm:$0xff]
        %1674 = vst [vmem:[%s1104 + $0x8e0] sm:$0xff] %v1673
        %v1675 = vld [vmem:[%s1103 + $0x8d4] sm:$0xff]
        %1676 = vst [vmem:[%s1104 + $0x8e8] sm:$0xff] %v1675
        %v1677 = vld [vmem:[%s1103 + $0x8d8] sm:$0xff]
        %1678 = vst [vmem:[%s1104 + $0x8f0] sm:$0xff] %v1677
        %v1679 = vld [vmem:[%s1103 + $0x8dc] sm:$0xff]
        %1680 = vst [vmem:[%s1104 + $0x8f8] sm:$0xff] %v1679
        %v1681 = vld [vmem:[%s1103 + $0x900] sm:$0xff]
        %1682 = vst [vmem:[%s1104 + $0x900] sm:$0xff] %v1681
        %v1683 = vld [vmem:[%s1103 + $0x904] sm:$0xff]
        %1684 = vst [vmem:[%s1104 + $0x908] sm:$0xff] %v1683
        %v1685 = vld [vmem:[%s1103 + $0x908] sm:$0xff]
        %1686 = vst [vmem:[%s1104 + $0x910] sm:$0xff] %v1685
        %v1687 = vld [vmem:[%s1103 + $0x90c] sm:$0xff]
        %1688 = vst [vmem:[%s1104 + $0x918] sm:$0xff] %v1687
        %v1689 = vld [vmem:[%s1103 + $0x910] sm:$0xff]
        %1690 = vst [vmem:[%s1104 + $0x920] sm:$0xff] %v1689
        %v1691 = vld [vmem:[%s1103 + $0x914] sm:$0xff]
        %1692 = vst [vmem:[%s1104 + $0x928] sm:$0xff] %v1691
        %v1693 = vld [vmem:[%s1103 + $0x918] sm:$0xff]
        %1694 = vst [vmem:[%s1104 + $0x930] sm:$0xff] %v1693
        %v1695 = vld [vmem:[%s1103 + $0x91c] sm:$0xff]
        %1696 = vst [vmem:[%s1104 + $0x938] sm:$0xff] %v1695
        %v1697 = vld [vmem:[%s1103 + $0x940] sm:$0xff]
        %1698 = vst [vmem:[%s1104 + $0x940] sm:$0xff] %v1697
        %v1699 = vld [vmem:[%s1103 + $0x944] sm:$0xff]
        %1700 = vst [vmem:[%s1104 + $0x948] sm:$0xff] %v1699
        %v1701 = vld [vmem:[%s1103 + $0x948] sm:$0xff]
        %1702 = vst [vmem:[%s1104 + $0x950] sm:$0xff] %v1701
        %v1703 = vld [vmem:[%s1103 + $0x94c] sm:$0xff]
        %1704 = vst [vmem:[%s1104 + $0x958] sm:$0xff] %v1703
        %v1705 = vld [vmem:[%s1103 + $0x950] sm:$0xff]
        %1706 = vst [vmem:[%s1104 + $0x960] sm:$0xff] %v1705
        %v1707 = vld [vmem:[%s1103 + $0x954] sm:$0xff]
        %1708 = vst [vmem:[%s1104 + $0x968] sm:$0xff] %v1707
        %v1709 = vld [vmem:[%s1103 + $0x958] sm:$0xff]
        %1710 = vst [vmem:[%s1104 + $0x970] sm:$0xff] %v1709
        %v1711 = vld [vmem:[%s1103 + $0x95c] sm:$0xff]
        %1712 = vst [vmem:[%s1104 + $0x978] sm:$0xff] %v1711
        %v1713 = vld [vmem:[%s1103 + $0x980] sm:$0xff]
        %1714 = vst [vmem:[%s1104 + $0x980] sm:$0xff] %v1713
        %v1715 = vld [vmem:[%s1103 + $0x984] sm:$0xff]
        %1716 = vst [vmem:[%s1104 + $0x988] sm:$0xff] %v1715
        %v1717 = vld [vmem:[%s1103 + $0x988] sm:$0xff]
        %1718 = vst [vmem:[%s1104 + $0x990] sm:$0xff] %v1717
        %v1719 = vld [vmem:[%s1103 + $0x98c] sm:$0xff]
        %1720 = vst [vmem:[%s1104 + $0x998] sm:$0xff] %v1719
        %v1721 = vld [vmem:[%s1103 + $0x990] sm:$0xff]
        %1722 = vst [vmem:[%s1104 + $0x9a0] sm:$0xff] %v1721
        %v1723 = vld [vmem:[%s1103 + $0x994] sm:$0xff]
        %1724 = vst [vmem:[%s1104 + $0x9a8] sm:$0xff] %v1723
        %v1725 = vld [vmem:[%s1103 + $0x998] sm:$0xff]
        %1726 = vst [vmem:[%s1104 + $0x9b0] sm:$0xff] %v1725
        %v1727 = vld [vmem:[%s1103 + $0x99c] sm:$0xff]
        %1728 = vst [vmem:[%s1104 + $0x9b8] sm:$0xff] %v1727
        %v1729 = vld [vmem:[%s1103 + $0x9c0] sm:$0xff]
        %1730 = vst [vmem:[%s1104 + $0x9c0] sm:$0xff] %v1729
        %v1731 = vld [vmem:[%s1103 + $0x9c4] sm:$0xff]
        %1732 = vst [vmem:[%s1104 + $0x9c8] sm:$0xff] %v1731
        %v1733 = vld [vmem:[%s1103 + $0x9c8] sm:$0xff]
        %1734 = vst [vmem:[%s1104 + $0x9d0] sm:$0xff] %v1733
        %v1735 = vld [vmem:[%s1103 + $0x9cc] sm:$0xff]
        %1736 = vst [vmem:[%s1104 + $0x9d8] sm:$0xff] %v1735
        %v1737 = vld [vmem:[%s1103 + $0x9d0] sm:$0xff]
        %1738 = vst [vmem:[%s1104 + $0x9e0] sm:$0xff] %v1737
        %v1739 = vld [vmem:[%s1103 + $0x9d4] sm:$0xff]
        %1740 = vst [vmem:[%s1104 + $0x9e8] sm:$0xff] %v1739
        %v1741 = vld [vmem:[%s1103 + $0x9d8] sm:$0xff]
        %1742 = vst [vmem:[%s1104 + $0x9f0] sm:$0xff] %v1741
        %v1743 = vld [vmem:[%s1103 + $0x9dc] sm:$0xff]
        %1744 = vst [vmem:[%s1104 + $0x9f8] sm:$0xff] %v1743
        %v1745 = vld [vmem:[%s1103 + $0xa00] sm:$0xff]
        %1746 = vst [vmem:[%s1104 + $0xa00] sm:$0xff] %v1745
        %v1747 = vld [vmem:[%s1103 + $0xa04] sm:$0xff]
        %1748 = vst [vmem:[%s1104 + $0xa08] sm:$0xff] %v1747
        %v1749 = vld [vmem:[%s1103 + $0xa08] sm:$0xff]
        %1750 = vst [vmem:[%s1104 + $0xa10] sm:$0xff] %v1749
        %v1751 = vld [vmem:[%s1103 + $0xa0c] sm:$0xff]
        %1752 = vst [vmem:[%s1104 + $0xa18] sm:$0xff] %v1751
        %v1753 = vld [vmem:[%s1103 + $0xa10] sm:$0xff]
        %1754 = vst [vmem:[%s1104 + $0xa20] sm:$0xff] %v1753
        %v1755 = vld [vmem:[%s1103 + $0xa14] sm:$0xff]
        %1756 = vst [vmem:[%s1104 + $0xa28] sm:$0xff] %v1755
        %v1757 = vld [vmem:[%s1103 + $0xa18] sm:$0xff]
        %1758 = vst [vmem:[%s1104 + $0xa30] sm:$0xff] %v1757
        %v1759 = vld [vmem:[%s1103 + $0xa1c] sm:$0xff]
        %1760 = vst [vmem:[%s1104 + $0xa38] sm:$0xff] %v1759
        %v1761 = vld [vmem:[%s1103 + $0xa40] sm:$0xff]
        %1762 = vst [vmem:[%s1104 + $0xa40] sm:$0xff] %v1761
        %v1763 = vld [vmem:[%s1103 + $0xa44] sm:$0xff]
        %1764 = vst [vmem:[%s1104 + $0xa48] sm:$0xff] %v1763
        %v1765 = vld [vmem:[%s1103 + $0xa48] sm:$0xff]
        %1766 = vst [vmem:[%s1104 + $0xa50] sm:$0xff] %v1765
        %v1767 = vld [vmem:[%s1103 + $0xa4c] sm:$0xff]
        %1768 = vst [vmem:[%s1104 + $0xa58] sm:$0xff] %v1767
        %v1769 = vld [vmem:[%s1103 + $0xa50] sm:$0xff]
        %1770 = vst [vmem:[%s1104 + $0xa60] sm:$0xff] %v1769
        %v1771 = vld [vmem:[%s1103 + $0xa54] sm:$0xff]
        %1772 = vst [vmem:[%s1104 + $0xa68] sm:$0xff] %v1771
        %v1773 = vld [vmem:[%s1103 + $0xa58] sm:$0xff]
        %1774 = vst [vmem:[%s1104 + $0xa70] sm:$0xff] %v1773
        %v1775 = vld [vmem:[%s1103 + $0xa5c] sm:$0xff]
        %1776 = vst [vmem:[%s1104 + $0xa78] sm:$0xff] %v1775
        %v1777 = vld [vmem:[%s1103 + $0xa80] sm:$0xff]
        %1778 = vst [vmem:[%s1104 + $0xa80] sm:$0xff] %v1777
        %v1779 = vld [vmem:[%s1103 + $0xa84] sm:$0xff]
        %1780 = vst [vmem:[%s1104 + $0xa88] sm:$0xff] %v1779
        %v1781 = vld [vmem:[%s1103 + $0xa88] sm:$0xff]
        %1782 = vst [vmem:[%s1104 + $0xa90] sm:$0xff] %v1781
        %v1783 = vld [vmem:[%s1103 + $0xa8c] sm:$0xff]
        %1784 = vst [vmem:[%s1104 + $0xa98] sm:$0xff] %v1783
        %v1785 = vld [vmem:[%s1103 + $0xa90] sm:$0xff]
        %1786 = vst [vmem:[%s1104 + $0xaa0] sm:$0xff] %v1785
        %v1787 = vld [vmem:[%s1103 + $0xa94] sm:$0xff]
        %1788 = vst [vmem:[%s1104 + $0xaa8] sm:$0xff] %v1787
        %v1789 = vld [vmem:[%s1103 + $0xa98] sm:$0xff]
        %1790 = vst [vmem:[%s1104 + $0xab0] sm:$0xff] %v1789
        %v1791 = vld [vmem:[%s1103 + $0xa9c] sm:$0xff]
        %1792 = vst [vmem:[%s1104 + $0xab8] sm:$0xff] %v1791
        %v1793 = vld [vmem:[%s1103 + $0xac0] sm:$0xff]
        %1794 = vst [vmem:[%s1104 + $0xac0] sm:$0xff] %v1793
        %v1795 = vld [vmem:[%s1103 + $0xac4] sm:$0xff]
        %1796 = vst [vmem:[%s1104 + $0xac8] sm:$0xff] %v1795
        %v1797 = vld [vmem:[%s1103 + $0xac8] sm:$0xff]
        %1798 = vst [vmem:[%s1104 + $0xad0] sm:$0xff] %v1797
        %v1799 = vld [vmem:[%s1103 + $0xacc] sm:$0xff]
        %1800 = vst [vmem:[%s1104 + $0xad8] sm:$0xff] %v1799
        %v1801 = vld [vmem:[%s1103 + $0xad0] sm:$0xff]
        %1802 = vst [vmem:[%s1104 + $0xae0] sm:$0xff] %v1801
        %v1803 = vld [vmem:[%s1103 + $0xad4] sm:$0xff]
        %1804 = vst [vmem:[%s1104 + $0xae8] sm:$0xff] %v1803
        %v1805 = vld [vmem:[%s1103 + $0xad8] sm:$0xff]
        %1806 = vst [vmem:[%s1104 + $0xaf0] sm:$0xff] %v1805
        %v1807 = vld [vmem:[%s1103 + $0xadc] sm:$0xff]
        %1808 = vst [vmem:[%s1104 + $0xaf8] sm:$0xff] %v1807
        %v1809 = vld [vmem:[%s1103 + $0xb00] sm:$0xff]
        %1810 = vst [vmem:[%s1104 + $0xb00] sm:$0xff] %v1809
        %v1811 = vld [vmem:[%s1103 + $0xb04] sm:$0xff]
        %1812 = vst [vmem:[%s1104 + $0xb08] sm:$0xff] %v1811
        %v1813 = vld [vmem:[%s1103 + $0xb08] sm:$0xff]
        %1814 = vst [vmem:[%s1104 + $0xb10] sm:$0xff] %v1813
        %v1815 = vld [vmem:[%s1103 + $0xb0c] sm:$0xff]
        %1816 = vst [vmem:[%s1104 + $0xb18] sm:$0xff] %v1815
        %v1817 = vld [vmem:[%s1103 + $0xb10] sm:$0xff]
        %1818 = vst [vmem:[%s1104 + $0xb20] sm:$0xff] %v1817
        %v1819 = vld [vmem:[%s1103 + $0xb14] sm:$0xff]
        %1820 = vst [vmem:[%s1104 + $0xb28] sm:$0xff] %v1819
        %v1821 = vld [vmem:[%s1103 + $0xb18] sm:$0xff]
        %1822 = vst [vmem:[%s1104 + $0xb30] sm:$0xff] %v1821
        %v1823 = vld [vmem:[%s1103 + $0xb1c] sm:$0xff]
        %1824 = vst [vmem:[%s1104 + $0xb38] sm:$0xff] %v1823
        %v1825 = vld [vmem:[%s1103 + $0xb40] sm:$0xff]
        %1826 = vst [vmem:[%s1104 + $0xb40] sm:$0xff] %v1825
        %v1827 = vld [vmem:[%s1103 + $0xb44] sm:$0xff]
        %1828 = vst [vmem:[%s1104 + $0xb48] sm:$0xff] %v1827
        %v1829 = vld [vmem:[%s1103 + $0xb48] sm:$0xff]
        %1830 = vst [vmem:[%s1104 + $0xb50] sm:$0xff] %v1829
        %v1831 = vld [vmem:[%s1103 + $0xb4c] sm:$0xff]
        %1832 = vst [vmem:[%s1104 + $0xb58] sm:$0xff] %v1831
        %v1833 = vld [vmem:[%s1103 + $0xb50] sm:$0xff]
        %1834 = vst [vmem:[%s1104 + $0xb60] sm:$0xff] %v1833
        %v1835 = vld [vmem:[%s1103 + $0xb54] sm:$0xff]
        %1836 = vst [vmem:[%s1104 + $0xb68] sm:$0xff] %v1835
        %v1837 = vld [vmem:[%s1103 + $0xb58] sm:$0xff]
        %1838 = vst [vmem:[%s1104 + $0xb70] sm:$0xff] %v1837
        %v1839 = vld [vmem:[%s1103 + $0xb5c] sm:$0xff]
        %1840 = vst [vmem:[%s1104 + $0xb78] sm:$0xff] %v1839
        %v1841 = vld [vmem:[%s1103 + $0xb80] sm:$0xff]
        %1842 = vst [vmem:[%s1104 + $0xb80] sm:$0xff] %v1841
        %v1843 = vld [vmem:[%s1103 + $0xb84] sm:$0xff]
        %1844 = vst [vmem:[%s1104 + $0xb88] sm:$0xff] %v1843
        %v1845 = vld [vmem:[%s1103 + $0xb88] sm:$0xff]
        %1846 = vst [vmem:[%s1104 + $0xb90] sm:$0xff] %v1845
        %v1847 = vld [vmem:[%s1103 + $0xb8c] sm:$0xff]
        %1848 = vst [vmem:[%s1104 + $0xb98] sm:$0xff] %v1847
        %v1849 = vld [vmem:[%s1103 + $0xb90] sm:$0xff]
        %1850 = vst [vmem:[%s1104 + $0xba0] sm:$0xff] %v1849
        %v1851 = vld [vmem:[%s1103 + $0xb94] sm:$0xff]
        %1852 = vst [vmem:[%s1104 + $0xba8] sm:$0xff] %v1851
        %v1853 = vld [vmem:[%s1103 + $0xb98] sm:$0xff]
        %1854 = vst [vmem:[%s1104 + $0xbb0] sm:$0xff] %v1853
        %v1855 = vld [vmem:[%s1103 + $0xb9c] sm:$0xff]
        %1856 = vst [vmem:[%s1104 + $0xbb8] sm:$0xff] %v1855
        %v1857 = vld [vmem:[%s1103 + $0xbc0] sm:$0xff]
        %1858 = vst [vmem:[%s1104 + $0xbc0] sm:$0xff] %v1857
        %v1859 = vld [vmem:[%s1103 + $0xbc4] sm:$0xff]
        %1860 = vst [vmem:[%s1104 + $0xbc8] sm:$0xff] %v1859
        %v1861 = vld [vmem:[%s1103 + $0xbc8] sm:$0xff]
        %1862 = vst [vmem:[%s1104 + $0xbd0] sm:$0xff] %v1861
        %v1863 = vld [vmem:[%s1103 + $0xbcc] sm:$0xff]
        %1864 = vst [vmem:[%s1104 + $0xbd8] sm:$0xff] %v1863
        %v1865 = vld [vmem:[%s1103 + $0xbd0] sm:$0xff]
        %1866 = vst [vmem:[%s1104 + $0xbe0] sm:$0xff] %v1865
        %v1867 = vld [vmem:[%s1103 + $0xbd4] sm:$0xff]
        %1868 = vst [vmem:[%s1104 + $0xbe8] sm:$0xff] %v1867
        %v1869 = vld [vmem:[%s1103 + $0xbd8] sm:$0xff]
        %1870 = vst [vmem:[%s1104 + $0xbf0] sm:$0xff] %v1869
        %v1871 = vld [vmem:[%s1103 + $0xbdc] sm:$0xff]
        %1872 = vst [vmem:[%s1104 + $0xbf8] sm:$0xff] %v1871
        %v1873 = vld [vmem:[%s1103 + $0xc00] sm:$0xff]
        %1874 = vst [vmem:[%s1104 + $0xc00] sm:$0xff] %v1873
        %v1875 = vld [vmem:[%s1103 + $0xc04] sm:$0xff]
        %1876 = vst [vmem:[%s1104 + $0xc08] sm:$0xff] %v1875
        %v1877 = vld [vmem:[%s1103 + $0xc08] sm:$0xff]
        %1878 = vst [vmem:[%s1104 + $0xc10] sm:$0xff] %v1877
        %v1879 = vld [vmem:[%s1103 + $0xc0c] sm:$0xff]
        %1880 = vst [vmem:[%s1104 + $0xc18] sm:$0xff] %v1879
        %v1881 = vld [vmem:[%s1103 + $0xc10] sm:$0xff]
        %1882 = vst [vmem:[%s1104 + $0xc20] sm:$0xff] %v1881
        %v1883 = vld [vmem:[%s1103 + $0xc14] sm:$0xff]
        %1884 = vst [vmem:[%s1104 + $0xc28] sm:$0xff] %v1883
        %v1885 = vld [vmem:[%s1103 + $0xc18] sm:$0xff]
        %1886 = vst [vmem:[%s1104 + $0xc30] sm:$0xff] %v1885
        %v1887 = vld [vmem:[%s1103 + $0xc1c] sm:$0xff]
        %1888 = vst [vmem:[%s1104 + $0xc38] sm:$0xff] %v1887
        %v1889 = vld [vmem:[%s1103 + $0xc40] sm:$0xff]
        %1890 = vst [vmem:[%s1104 + $0xc40] sm:$0xff] %v1889
        %v1891 = vld [vmem:[%s1103 + $0xc44] sm:$0xff]
        %1892 = vst [vmem:[%s1104 + $0xc48] sm:$0xff] %v1891
        %v1893 = vld [vmem:[%s1103 + $0xc48] sm:$0xff]
        %1894 = vst [vmem:[%s1104 + $0xc50] sm:$0xff] %v1893
        %v1895 = vld [vmem:[%s1103 + $0xc4c] sm:$0xff]
        %1896 = vst [vmem:[%s1104 + $0xc58] sm:$0xff] %v1895
        %v1897 = vld [vmem:[%s1103 + $0xc50] sm:$0xff]
        %1898 = vst [vmem:[%s1104 + $0xc60] sm:$0xff] %v1897
        %v1899 = vld [vmem:[%s1103 + $0xc54] sm:$0xff]
        %1900 = vst [vmem:[%s1104 + $0xc68] sm:$0xff] %v1899
        %v1901 = vld [vmem:[%s1103 + $0xc58] sm:$0xff]
        %1902 = vst [vmem:[%s1104 + $0xc70] sm:$0xff] %v1901
        %v1903 = vld [vmem:[%s1103 + $0xc5c] sm:$0xff]
        %1904 = vst [vmem:[%s1104 + $0xc78] sm:$0xff] %v1903
        %v1905 = vld [vmem:[%s1103 + $0xc80] sm:$0xff]
        %1906 = vst [vmem:[%s1104 + $0xc80] sm:$0xff] %v1905
        %v1907 = vld [vmem:[%s1103 + $0xc84] sm:$0xff]
        %1908 = vst [vmem:[%s1104 + $0xc88] sm:$0xff] %v1907
        %v1909 = vld [vmem:[%s1103 + $0xc88] sm:$0xff]
        %1910 = vst [vmem:[%s1104 + $0xc90] sm:$0xff] %v1909
        %v1911 = vld [vmem:[%s1103 + $0xc8c] sm:$0xff]
        %1912 = vst [vmem:[%s1104 + $0xc98] sm:$0xff] %v1911
        %v1913 = vld [vmem:[%s1103 + $0xc90] sm:$0xff]
        %1914 = vst [vmem:[%s1104 + $0xca0] sm:$0xff] %v1913
        %v1915 = vld [vmem:[%s1103 + $0xc94] sm:$0xff]
        %1916 = vst [vmem:[%s1104 + $0xca8] sm:$0xff] %v1915
        %v1917 = vld [vmem:[%s1103 + $0xc98] sm:$0xff]
        %1918 = vst [vmem:[%s1104 + $0xcb0] sm:$0xff] %v1917
        %v1919 = vld [vmem:[%s1103 + $0xc9c] sm:$0xff]
        %1920 = vst [vmem:[%s1104 + $0xcb8] sm:$0xff] %v1919
        %v1921 = vld [vmem:[%s1103 + $0xcc0] sm:$0xff]
        %1922 = vst [vmem:[%s1104 + $0xcc0] sm:$0xff] %v1921
        %v1923 = vld [vmem:[%s1103 + $0xcc4] sm:$0xff]
        %1924 = vst [vmem:[%s1104 + $0xcc8] sm:$0xff] %v1923
        %v1925 = vld [vmem:[%s1103 + $0xcc8] sm:$0xff]
        %1926 = vst [vmem:[%s1104 + $0xcd0] sm:$0xff] %v1925
        %v1927 = vld [vmem:[%s1103 + $0xccc] sm:$0xff]
        %1928 = vst [vmem:[%s1104 + $0xcd8] sm:$0xff] %v1927
        %v1929 = vld [vmem:[%s1103 + $0xcd0] sm:$0xff]
        %1930 = vst [vmem:[%s1104 + $0xce0] sm:$0xff] %v1929
        %v1931 = vld [vmem:[%s1103 + $0xcd4] sm:$0xff]
        %1932 = vst [vmem:[%s1104 + $0xce8] sm:$0xff] %v1931
        %v1933 = vld [vmem:[%s1103 + $0xcd8] sm:$0xff]
        %1934 = vst [vmem:[%s1104 + $0xcf0] sm:$0xff] %v1933
        %v1935 = vld [vmem:[%s1103 + $0xcdc] sm:$0xff]
        %1936 = vst [vmem:[%s1104 + $0xcf8] sm:$0xff] %v1935
        %v1937 = vld [vmem:[%s1103 + $0xd00] sm:$0xff]
        %1938 = vst [vmem:[%s1104 + $0xd00] sm:$0xff] %v1937
        %v1939 = vld [vmem:[%s1103 + $0xd04] sm:$0xff]
        %1940 = vst [vmem:[%s1104 + $0xd08] sm:$0xff] %v1939
        %v1941 = vld [vmem:[%s1103 + $0xd08] sm:$0xff]
        %1942 = vst [vmem:[%s1104 + $0xd10] sm:$0xff] %v1941
        %v1943 = vld [vmem:[%s1103 + $0xd0c] sm:$0xff]
        %1944 = vst [vmem:[%s1104 + $0xd18] sm:$0xff] %v1943
        %v1945 = vld [vmem:[%s1103 + $0xd10] sm:$0xff]
        %1946 = vst [vmem:[%s1104 + $0xd20] sm:$0xff] %v1945
        %v1947 = vld [vmem:[%s1103 + $0xd14] sm:$0xff]
        %1948 = vst [vmem:[%s1104 + $0xd28] sm:$0xff] %v1947
        %v1949 = vld [vmem:[%s1103 + $0xd18] sm:$0xff]
        %1950 = vst [vmem:[%s1104 + $0xd30] sm:$0xff] %v1949
        %v1951 = vld [vmem:[%s1103 + $0xd1c] sm:$0xff]
        %1952 = vst [vmem:[%s1104 + $0xd38] sm:$0xff] %v1951
        %v1953 = vld [vmem:[%s1103 + $0xd40] sm:$0xff]
        %1954 = vst [vmem:[%s1104 + $0xd40] sm:$0xff] %v1953
        %v1955 = vld [vmem:[%s1103 + $0xd44] sm:$0xff]
        %1956 = vst [vmem:[%s1104 + $0xd48] sm:$0xff] %v1955
        %v1957 = vld [vmem:[%s1103 + $0xd48] sm:$0xff]
        %1958 = vst [vmem:[%s1104 + $0xd50] sm:$0xff] %v1957
        %v1959 = vld [vmem:[%s1103 + $0xd4c] sm:$0xff]
        %1960 = vst [vmem:[%s1104 + $0xd58] sm:$0xff] %v1959
        %v1961 = vld [vmem:[%s1103 + $0xd50] sm:$0xff]
        %1962 = vst [vmem:[%s1104 + $0xd60] sm:$0xff] %v1961
        %v1963 = vld [vmem:[%s1103 + $0xd54] sm:$0xff]
        %1964 = vst [vmem:[%s1104 + $0xd68] sm:$0xff] %v1963
        %v1965 = vld [vmem:[%s1103 + $0xd58] sm:$0xff]
        %1966 = vst [vmem:[%s1104 + $0xd70] sm:$0xff] %v1965
        %v1967 = vld [vmem:[%s1103 + $0xd5c] sm:$0xff]
        %1968 = vst [vmem:[%s1104 + $0xd78] sm:$0xff] %v1967
        %v1969 = vld [vmem:[%s1103 + $0xd80] sm:$0xff]
        %1970 = vst [vmem:[%s1104 + $0xd80] sm:$0xff] %v1969
        %v1971 = vld [vmem:[%s1103 + $0xd84] sm:$0xff]
        %1972 = vst [vmem:[%s1104 + $0xd88] sm:$0xff] %v1971
        %v1973 = vld [vmem:[%s1103 + $0xd88] sm:$0xff]
        %1974 = vst [vmem:[%s1104 + $0xd90] sm:$0xff] %v1973
        %v1975 = vld [vmem:[%s1103 + $0xd8c] sm:$0xff]
        %1976 = vst [vmem:[%s1104 + $0xd98] sm:$0xff] %v1975
        %v1977 = vld [vmem:[%s1103 + $0xd90] sm:$0xff]
        %1978 = vst [vmem:[%s1104 + $0xda0] sm:$0xff] %v1977
        %v1979 = vld [vmem:[%s1103 + $0xd94] sm:$0xff]
        %1980 = vst [vmem:[%s1104 + $0xda8] sm:$0xff] %v1979
        %v1981 = vld [vmem:[%s1103 + $0xd98] sm:$0xff]
        %1982 = vst [vmem:[%s1104 + $0xdb0] sm:$0xff] %v1981
        %v1983 = vld [vmem:[%s1103 + $0xd9c] sm:$0xff]
        %1984 = vst [vmem:[%s1104 + $0xdb8] sm:$0xff] %v1983
        %v1985 = vld [vmem:[%s1103 + $0xdc0] sm:$0xff]
        %1986 = vst [vmem:[%s1104 + $0xdc0] sm:$0xff] %v1985
        %v1987 = vld [vmem:[%s1103 + $0xdc4] sm:$0xff]
        %1988 = vst [vmem:[%s1104 + $0xdc8] sm:$0xff] %v1987
        %v1989 = vld [vmem:[%s1103 + $0xdc8] sm:$0xff]
        %1990 = vst [vmem:[%s1104 + $0xdd0] sm:$0xff] %v1989
        %v1991 = vld [vmem:[%s1103 + $0xdcc] sm:$0xff]
        %1992 = vst [vmem:[%s1104 + $0xdd8] sm:$0xff] %v1991
        %v1993 = vld [vmem:[%s1103 + $0xdd0] sm:$0xff]
        %1994 = vst [vmem:[%s1104 + $0xde0] sm:$0xff] %v1993
        %v1995 = vld [vmem:[%s1103 + $0xdd4] sm:$0xff]
        %1996 = vst [vmem:[%s1104 + $0xde8] sm:$0xff] %v1995
        %v1997 = vld [vmem:[%s1103 + $0xdd8] sm:$0xff]
        %1998 = vst [vmem:[%s1104 + $0xdf0] sm:$0xff] %v1997
        %v1999 = vld [vmem:[%s1103 + $0xddc] sm:$0xff]
        %2000 = vst [vmem:[%s1104 + $0xdf8] sm:$0xff] %v1999
        %v2001 = vld [vmem:[%s1103 + $0xe00] sm:$0xff]
        %2002 = vst [vmem:[%s1104 + $0xe00] sm:$0xff] %v2001
        %v2003 = vld [vmem:[%s1103 + $0xe04] sm:$0xff]
        %2004 = vst [vmem:[%s1104 + $0xe08] sm:$0xff] %v2003
        %v2005 = vld [vmem:[%s1103 + $0xe08] sm:$0xff]
        %2006 = vst [vmem:[%s1104 + $0xe10] sm:$0xff] %v2005
        %v2007 = vld [vmem:[%s1103 + $0xe0c] sm:$0xff]
        %2008 = vst [vmem:[%s1104 + $0xe18] sm:$0xff] %v2007
        %v2009 = vld [vmem:[%s1103 + $0xe10] sm:$0xff]
        %2010 = vst [vmem:[%s1104 + $0xe20] sm:$0xff] %v2009
        %v2011 = vld [vmem:[%s1103 + $0xe14] sm:$0xff]
        %2012 = vst [vmem:[%s1104 + $0xe28] sm:$0xff] %v2011
        %v2013 = vld [vmem:[%s1103 + $0xe18] sm:$0xff]
        %2014 = vst [vmem:[%s1104 + $0xe30] sm:$0xff] %v2013
        %v2015 = vld [vmem:[%s1103 + $0xe1c] sm:$0xff]
        %2016 = vst [vmem:[%s1104 + $0xe38] sm:$0xff] %v2015
        %v2017 = vld [vmem:[%s1103 + $0xe40] sm:$0xff]
        %2018 = vst [vmem:[%s1104 + $0xe40] sm:$0xff] %v2017
        %v2019 = vld [vmem:[%s1103 + $0xe44] sm:$0xff]
        %2020 = vst [vmem:[%s1104 + $0xe48] sm:$0xff] %v2019
        %v2021 = vld [vmem:[%s1103 + $0xe48] sm:$0xff]
        %2022 = vst [vmem:[%s1104 + $0xe50] sm:$0xff] %v2021
        %v2023 = vld [vmem:[%s1103 + $0xe4c] sm:$0xff]
        %2024 = vst [vmem:[%s1104 + $0xe58] sm:$0xff] %v2023
        %v2025 = vld [vmem:[%s1103 + $0xe50] sm:$0xff]
        %2026 = vst [vmem:[%s1104 + $0xe60] sm:$0xff] %v2025
        %v2027 = vld [vmem:[%s1103 + $0xe54] sm:$0xff]
        %2028 = vst [vmem:[%s1104 + $0xe68] sm:$0xff] %v2027
        %v2029 = vld [vmem:[%s1103 + $0xe58] sm:$0xff]
        %2030 = vst [vmem:[%s1104 + $0xe70] sm:$0xff] %v2029
        %v2031 = vld [vmem:[%s1103 + $0xe5c] sm:$0xff]
        %2032 = vst [vmem:[%s1104 + $0xe78] sm:$0xff] %v2031
        %v2033 = vld [vmem:[%s1103 + $0xe80] sm:$0xff]
        %2034 = vst [vmem:[%s1104 + $0xe80] sm:$0xff] %v2033
        %v2035 = vld [vmem:[%s1103 + $0xe84] sm:$0xff]
        %2036 = vst [vmem:[%s1104 + $0xe88] sm:$0xff] %v2035
        %v2037 = vld [vmem:[%s1103 + $0xe88] sm:$0xff]
        %2038 = vst [vmem:[%s1104 + $0xe90] sm:$0xff] %v2037
        %v2039 = vld [vmem:[%s1103 + $0xe8c] sm:$0xff]
        %2040 = vst [vmem:[%s1104 + $0xe98] sm:$0xff] %v2039
        %v2041 = vld [vmem:[%s1103 + $0xe90] sm:$0xff]
        %2042 = vst [vmem:[%s1104 + $0xea0] sm:$0xff] %v2041
        %v2043 = vld [vmem:[%s1103 + $0xe94] sm:$0xff]
        %2044 = vst [vmem:[%s1104 + $0xea8] sm:$0xff] %v2043
        %v2045 = vld [vmem:[%s1103 + $0xe98] sm:$0xff]
        %2046 = vst [vmem:[%s1104 + $0xeb0] sm:$0xff] %v2045
        %v2047 = vld [vmem:[%s1103 + $0xe9c] sm:$0xff]
        %2048 = vst [vmem:[%s1104 + $0xeb8] sm:$0xff] %v2047
        %v2049 = vld [vmem:[%s1103 + $0xec0] sm:$0xff]
        %2050 = vst [vmem:[%s1104 + $0xec0] sm:$0xff] %v2049
        %v2051 = vld [vmem:[%s1103 + $0xec4] sm:$0xff]
        %2052 = vst [vmem:[%s1104 + $0xec8] sm:$0xff] %v2051
        %v2053 = vld [vmem:[%s1103 + $0xec8] sm:$0xff]
        %2054 = vst [vmem:[%s1104 + $0xed0] sm:$0xff] %v2053
        %v2055 = vld [vmem:[%s1103 + $0xecc] sm:$0xff]
        %2056 = vst [vmem:[%s1104 + $0xed8] sm:$0xff] %v2055
        %v2057 = vld [vmem:[%s1103 + $0xed0] sm:$0xff]
        %2058 = vst [vmem:[%s1104 + $0xee0] sm:$0xff] %v2057
        %v2059 = vld [vmem:[%s1103 + $0xed4] sm:$0xff]
        %2060 = vst [vmem:[%s1104 + $0xee8] sm:$0xff] %v2059
        %v2061 = vld [vmem:[%s1103 + $0xed8] sm:$0xff]
        %2062 = vst [vmem:[%s1104 + $0xef0] sm:$0xff] %v2061
        %v2063 = vld [vmem:[%s1103 + $0xedc] sm:$0xff]
        %2064 = vst [vmem:[%s1104 + $0xef8] sm:$0xff] %v2063
        %v2065 = vld [vmem:[%s1103 + $0xf00] sm:$0xff]
        %2066 = vst [vmem:[%s1104 + $0xf00] sm:$0xff] %v2065
        %v2067 = vld [vmem:[%s1103 + $0xf04] sm:$0xff]
        %2068 = vst [vmem:[%s1104 + $0xf08] sm:$0xff] %v2067
        %v2069 = vld [vmem:[%s1103 + $0xf08] sm:$0xff]
        %2070 = vst [vmem:[%s1104 + $0xf10] sm:$0xff] %v2069
        %v2071 = vld [vmem:[%s1103 + $0xf0c] sm:$0xff]
        %2072 = vst [vmem:[%s1104 + $0xf18] sm:$0xff] %v2071
        %v2073 = vld [vmem:[%s1103 + $0xf10] sm:$0xff]
        %2074 = vst [vmem:[%s1104 + $0xf20] sm:$0xff] %v2073
        %v2075 = vld [vmem:[%s1103 + $0xf14] sm:$0xff]
        %2076 = vst [vmem:[%s1104 + $0xf28] sm:$0xff] %v2075
        %v2077 = vld [vmem:[%s1103 + $0xf18] sm:$0xff]
        %2078 = vst [vmem:[%s1104 + $0xf30] sm:$0xff] %v2077
        %v2079 = vld [vmem:[%s1103 + $0xf1c] sm:$0xff]
        %2080 = vst [vmem:[%s1104 + $0xf38] sm:$0xff] %v2079
        %v2081 = vld [vmem:[%s1103 + $0xf40] sm:$0xff]
        %2082 = vst [vmem:[%s1104 + $0xf40] sm:$0xff] %v2081
        %v2083 = vld [vmem:[%s1103 + $0xf44] sm:$0xff]
        %2084 = vst [vmem:[%s1104 + $0xf48] sm:$0xff] %v2083
        %v2085 = vld [vmem:[%s1103 + $0xf48] sm:$0xff]
        %2086 = vst [vmem:[%s1104 + $0xf50] sm:$0xff] %v2085
        %v2087 = vld [vmem:[%s1103 + $0xf4c] sm:$0xff]
        %2088 = vst [vmem:[%s1104 + $0xf58] sm:$0xff] %v2087
        %v2089 = vld [vmem:[%s1103 + $0xf50] sm:$0xff]
        %2090 = vst [vmem:[%s1104 + $0xf60] sm:$0xff] %v2089
        %v2091 = vld [vmem:[%s1103 + $0xf54] sm:$0xff]
        %2092 = vst [vmem:[%s1104 + $0xf68] sm:$0xff] %v2091
        %v2093 = vld [vmem:[%s1103 + $0xf58] sm:$0xff]
        %2094 = vst [vmem:[%s1104 + $0xf70] sm:$0xff] %v2093
        %v2095 = vld [vmem:[%s1103 + $0xf5c] sm:$0xff]
        %2096 = vst [vmem:[%s1104 + $0xf78] sm:$0xff] %v2095
        %v2097 = vld [vmem:[%s1103 + $0xf80] sm:$0xff]
        %2098 = vst [vmem:[%s1104 + $0xf80] sm:$0xff] %v2097
        %v2099 = vld [vmem:[%s1103 + $0xf84] sm:$0xff]
        %2100 = vst [vmem:[%s1104 + $0xf88] sm:$0xff] %v2099
        %v2101 = vld [vmem:[%s1103 + $0xf88] sm:$0xff]
        %2102 = vst [vmem:[%s1104 + $0xf90] sm:$0xff] %v2101
        %v2103 = vld [vmem:[%s1103 + $0xf8c] sm:$0xff]
        %2104 = vst [vmem:[%s1104 + $0xf98] sm:$0xff] %v2103
        %v2105 = vld [vmem:[%s1103 + $0xf90] sm:$0xff]
        %2106 = vst [vmem:[%s1104 + $0xfa0] sm:$0xff] %v2105
        %v2107 = vld [vmem:[%s1103 + $0xf94] sm:$0xff]
        %2108 = vst [vmem:[%s1104 + $0xfa8] sm:$0xff] %v2107
        %v2109 = vld [vmem:[%s1103 + $0xf98] sm:$0xff]
        %2110 = vst [vmem:[%s1104 + $0xfb0] sm:$0xff] %v2109
        %v2111 = vld [vmem:[%s1103 + $0xf9c] sm:$0xff]
        %2112 = vst [vmem:[%s1104 + $0xfb8] sm:$0xff] %v2111
        %v2113 = vld [vmem:[%s1103 + $0xfc0] sm:$0xff]
        %2114 = vst [vmem:[%s1104 + $0xfc0] sm:$0xff] %v2113
        %v2115 = vld [vmem:[%s1103 + $0xfc4] sm:$0xff]
        %2116 = vst [vmem:[%s1104 + $0xfc8] sm:$0xff] %v2115
        %v2117 = vld [vmem:[%s1103 + $0xfc8] sm:$0xff]
        %2118 = vst [vmem:[%s1104 + $0xfd0] sm:$0xff] %v2117
        %v2119 = vld [vmem:[%s1103 + $0xfcc] sm:$0xff]
        %2120 = vst [vmem:[%s1104 + $0xfd8] sm:$0xff] %v2119
        %v2121 = vld [vmem:[%s1103 + $0xfd0] sm:$0xff]
        %2122 = vst [vmem:[%s1104 + $0xfe0] sm:$0xff] %v2121
        %v2123 = vld [vmem:[%s1103 + $0xfd4] sm:$0xff]
        %2124 = vst [vmem:[%s1104 + $0xfe8] sm:$0xff] %v2123
        %v2125 = vld [vmem:[%s1103 + $0xfd8] sm:$0xff]
        %2126 = vst [vmem:[%s1104 + $0xff0] sm:$0xff] %v2125
        %v2127 = vld [vmem:[%s1103 + $0xfdc] sm:$0xff]
        %2128 = vst [vmem:[%s1104 + $0xff8] sm:$0xff] %v2127
        %s2129 = sadd.s32 1, %s1102
        %p2130 = scmp.ge.s32.totalorder %s2129, %s1089
        %s2131 = scalar_select %p2130, 0, %s2129
        %s2132 = sadd.s32 1, %s1101
        %s2133 = scalar_select %p2130, %s2132, %s1101
        %p2134 = scmp.ge.s32.totalorder %s2133, 2
        %s2135 = scalar_select %p2134, 0, %s2133
        %s2136 = smul.u32 %s2135, 32
        %s2137 = smul.u32 %s2131, 8
        %s2138 = sadd.s32 %s2136, %s2137
        %s2139 = smul.u32 %s2135, 4
        %s2140 = smul.u32 %s2131, 8
        %s2141 = sadd.s32 %s2139, %s2140
        %s2142 = scalar_lea.vmem %s5, %s2138
        %s2143 = scalar_lea.vmem [#allocation2], %s2141
      $region57: #{_lambda_.1} parent=51 // loop_footer
        %s1098 = sadd.s32 %s1096, 1
      $region58: #{_lambda_.1} parent=51 // loop_footer_branch
        %1095 = sbr.rel target = $region54
      $region59: #{_lambda_.1} parent=51 // loop_exit
        _
    $region52: #{_lambda_.1} parent=36 // pred_fallthru
      _
    %p2144 = pneg %p1085
    // Predicated region
    $region60: #{_lambda_.1} parent=36 // pred_check
      _
    $region61: #{_lambda_.1} parent=36 // pred_check_branch
      %2146 = sbr.rel (%p1085) target = $region63
    $region62: #{_lambda_.1} parent=36 // pred_region
      %s2147 = sand.u32 4, 7
      %s2148 = ssub.s32 4, %s2147
      %s2149 = scalar_lea.vmem %s5, %s2148
      %s2150 = ssub.s32 4, %s2147
      %s2151 = scalar_lea.vmem [#allocation2], %s2150
      %s2152 = sshrl.u32 4, 3
      %s2153 = smul.u32 2, %s2152
      // While loop
      $region64: #{_lambda_.1} parent=62 // loop_pre_header
        _
      $region65: #{_lambda_.1} parent=62 // loop_header
        %s2159 = sphi 0, %s2161
        %p2160 = scmp.ge.s32.totalorder %s2159, %s2153
        %s2164 = sphi 0, %s3198
        %s2165 = sphi 0, %s3194
        %s2166 = sphi %s5, %s3205
        %s2167 = sphi [#allocation2], %s3206
      $region66: #{_lambda_.1} parent=62 // loop_header_branch
        %2163 = sbr.rel (%p2160) target = $region70
      $region67: #{_lambda_.1} parent=62 // loop_body
        %v2168 = vld [vmem:[%s2166] sm:$0xff]
        %2169 = vst [vmem:[%s2167] sm:$0xff] %v2168
        %v2170 = vld [vmem:[%s2166 + $0x4] sm:$0xff]
        %2171 = vst [vmem:[%s2167 + $0x8] sm:$0xff] %v2170
        %v2172 = vld [vmem:[%s2166 + $0x8] sm:$0xff]
        %2173 = vst [vmem:[%s2167 + $0x10] sm:$0xff] %v2172
        %v2174 = vld [vmem:[%s2166 + $0xc] sm:$0xff]
        %2175 = vst [vmem:[%s2167 + $0x18] sm:$0xff] %v2174
        %v2176 = vld [vmem:[%s2166 + $0x10] sm:$0xff]
        %2177 = vst [vmem:[%s2167 + $0x20] sm:$0xff] %v2176
        %v2178 = vld [vmem:[%s2166 + $0x14] sm:$0xff]
        %2179 = vst [vmem:[%s2167 + $0x28] sm:$0xff] %v2178
        %v2180 = vld [vmem:[%s2166 + $0x18] sm:$0xff]
        %2181 = vst [vmem:[%s2167 + $0x30] sm:$0xff] %v2180
        %v2182 = vld [vmem:[%s2166 + $0x1c] sm:$0xff]
        %2183 = vst [vmem:[%s2167 + $0x38] sm:$0xff] %v2182
        %v2184 = vld [vmem:[%s2166 + $0x40] sm:$0xff]
        %2185 = vst [vmem:[%s2167 + $0x40] sm:$0xff] %v2184
        %v2186 = vld [vmem:[%s2166 + $0x44] sm:$0xff]
        %2187 = vst [vmem:[%s2167 + $0x48] sm:$0xff] %v2186
        %v2188 = vld [vmem:[%s2166 + $0x48] sm:$0xff]
        %2189 = vst [vmem:[%s2167 + $0x50] sm:$0xff] %v2188
        %v2190 = vld [vmem:[%s2166 + $0x4c] sm:$0xff]
        %2191 = vst [vmem:[%s2167 + $0x58] sm:$0xff] %v2190
        %v2192 = vld [vmem:[%s2166 + $0x50] sm:$0xff]
        %2193 = vst [vmem:[%s2167 + $0x60] sm:$0xff] %v2192
        %v2194 = vld [vmem:[%s2166 + $0x54] sm:$0xff]
        %2195 = vst [vmem:[%s2167 + $0x68] sm:$0xff] %v2194
        %v2196 = vld [vmem:[%s2166 + $0x58] sm:$0xff]
        %2197 = vst [vmem:[%s2167 + $0x70] sm:$0xff] %v2196
        %v2198 = vld [vmem:[%s2166 + $0x5c] sm:$0xff]
        %2199 = vst [vmem:[%s2167 + $0x78] sm:$0xff] %v2198
        %v2200 = vld [vmem:[%s2166 + $0x80] sm:$0xff]
        %2201 = vst [vmem:[%s2167 + $0x80] sm:$0xff] %v2200
        %v2202 = vld [vmem:[%s2166 + $0x84] sm:$0xff]
        %2203 = vst [vmem:[%s2167 + $0x88] sm:$0xff] %v2202
        %v2204 = vld [vmem:[%s2166 + $0x88] sm:$0xff]
        %2205 = vst [vmem:[%s2167 + $0x90] sm:$0xff] %v2204
        %v2206 = vld [vmem:[%s2166 + $0x8c] sm:$0xff]
        %2207 = vst [vmem:[%s2167 + $0x98] sm:$0xff] %v2206
        %v2208 = vld [vmem:[%s2166 + $0x90] sm:$0xff]
        %2209 = vst [vmem:[%s2167 + $0xa0] sm:$0xff] %v2208
        %v2210 = vld [vmem:[%s2166 + $0x94] sm:$0xff]
        %2211 = vst [vmem:[%s2167 + $0xa8] sm:$0xff] %v2210
        %v2212 = vld [vmem:[%s2166 + $0x98] sm:$0xff]
        %2213 = vst [vmem:[%s2167 + $0xb0] sm:$0xff] %v2212
        %v2214 = vld [vmem:[%s2166 + $0x9c] sm:$0xff]
        %2215 = vst [vmem:[%s2167 + $0xb8] sm:$0xff] %v2214
        %v2216 = vld [vmem:[%s2166 + $0xc0] sm:$0xff]
        %2217 = vst [vmem:[%s2167 + $0xc0] sm:$0xff] %v2216
        %v2218 = vld [vmem:[%s2166 + $0xc4] sm:$0xff]
        %2219 = vst [vmem:[%s2167 + $0xc8] sm:$0xff] %v2218
        %v2220 = vld [vmem:[%s2166 + $0xc8] sm:$0xff]
        %2221 = vst [vmem:[%s2167 + $0xd0] sm:$0xff] %v2220
        %v2222 = vld [vmem:[%s2166 + $0xcc] sm:$0xff]
        %2223 = vst [vmem:[%s2167 + $0xd8] sm:$0xff] %v2222
        %v2224 = vld [vmem:[%s2166 + $0xd0] sm:$0xff]
        %2225 = vst [vmem:[%s2167 + $0xe0] sm:$0xff] %v2224
        %v2226 = vld [vmem:[%s2166 + $0xd4] sm:$0xff]
        %2227 = vst [vmem:[%s2167 + $0xe8] sm:$0xff] %v2226
        %v2228 = vld [vmem:[%s2166 + $0xd8] sm:$0xff]
        %2229 = vst [vmem:[%s2167 + $0xf0] sm:$0xff] %v2228
        %v2230 = vld [vmem:[%s2166 + $0xdc] sm:$0xff]
        %2231 = vst [vmem:[%s2167 + $0xf8] sm:$0xff] %v2230
        %v2232 = vld [vmem:[%s2166 + $0x100] sm:$0xff]
        %2233 = vst [vmem:[%s2167 + $0x100] sm:$0xff] %v2232
        %v2234 = vld [vmem:[%s2166 + $0x104] sm:$0xff]
        %2235 = vst [vmem:[%s2167 + $0x108] sm:$0xff] %v2234
        %v2236 = vld [vmem:[%s2166 + $0x108] sm:$0xff]
        %2237 = vst [vmem:[%s2167 + $0x110] sm:$0xff] %v2236
        %v2238 = vld [vmem:[%s2166 + $0x10c] sm:$0xff]
        %2239 = vst [vmem:[%s2167 + $0x118] sm:$0xff] %v2238
        %v2240 = vld [vmem:[%s2166 + $0x110] sm:$0xff]
        %2241 = vst [vmem:[%s2167 + $0x120] sm:$0xff] %v2240
        %v2242 = vld [vmem:[%s2166 + $0x114] sm:$0xff]
        %2243 = vst [vmem:[%s2167 + $0x128] sm:$0xff] %v2242
        %v2244 = vld [vmem:[%s2166 + $0x118] sm:$0xff]
        %2245 = vst [vmem:[%s2167 + $0x130] sm:$0xff] %v2244
        %v2246 = vld [vmem:[%s2166 + $0x11c] sm:$0xff]
        %2247 = vst [vmem:[%s2167 + $0x138] sm:$0xff] %v2246
        %v2248 = vld [vmem:[%s2166 + $0x140] sm:$0xff]
        %2249 = vst [vmem:[%s2167 + $0x140] sm:$0xff] %v2248
        %v2250 = vld [vmem:[%s2166 + $0x144] sm:$0xff]
        %2251 = vst [vmem:[%s2167 + $0x148] sm:$0xff] %v2250
        %v2252 = vld [vmem:[%s2166 + $0x148] sm:$0xff]
        %2253 = vst [vmem:[%s2167 + $0x150] sm:$0xff] %v2252
        %v2254 = vld [vmem:[%s2166 + $0x14c] sm:$0xff]
        %2255 = vst [vmem:[%s2167 + $0x158] sm:$0xff] %v2254
        %v2256 = vld [vmem:[%s2166 + $0x150] sm:$0xff]
        %2257 = vst [vmem:[%s2167 + $0x160] sm:$0xff] %v2256
        %v2258 = vld [vmem:[%s2166 + $0x154] sm:$0xff]
        %2259 = vst [vmem:[%s2167 + $0x168] sm:$0xff] %v2258
        %v2260 = vld [vmem:[%s2166 + $0x158] sm:$0xff]
        %2261 = vst [vmem:[%s2167 + $0x170] sm:$0xff] %v2260
        %v2262 = vld [vmem:[%s2166 + $0x15c] sm:$0xff]
        %2263 = vst [vmem:[%s2167 + $0x178] sm:$0xff] %v2262
        %v2264 = vld [vmem:[%s2166 + $0x180] sm:$0xff]
        %2265 = vst [vmem:[%s2167 + $0x180] sm:$0xff] %v2264
        %v2266 = vld [vmem:[%s2166 + $0x184] sm:$0xff]
        %2267 = vst [vmem:[%s2167 + $0x188] sm:$0xff] %v2266
        %v2268 = vld [vmem:[%s2166 + $0x188] sm:$0xff]
        %2269 = vst [vmem:[%s2167 + $0x190] sm:$0xff] %v2268
        %v2270 = vld [vmem:[%s2166 + $0x18c] sm:$0xff]
        %2271 = vst [vmem:[%s2167 + $0x198] sm:$0xff] %v2270
        %v2272 = vld [vmem:[%s2166 + $0x190] sm:$0xff]
        %2273 = vst [vmem:[%s2167 + $0x1a0] sm:$0xff] %v2272
        %v2274 = vld [vmem:[%s2166 + $0x194] sm:$0xff]
        %2275 = vst [vmem:[%s2167 + $0x1a8] sm:$0xff] %v2274
        %v2276 = vld [vmem:[%s2166 + $0x198] sm:$0xff]
        %2277 = vst [vmem:[%s2167 + $0x1b0] sm:$0xff] %v2276
        %v2278 = vld [vmem:[%s2166 + $0x19c] sm:$0xff]
        %2279 = vst [vmem:[%s2167 + $0x1b8] sm:$0xff] %v2278
        %v2280 = vld [vmem:[%s2166 + $0x1c0] sm:$0xff]
        %2281 = vst [vmem:[%s2167 + $0x1c0] sm:$0xff] %v2280
        %v2282 = vld [vmem:[%s2166 + $0x1c4] sm:$0xff]
        %2283 = vst [vmem:[%s2167 + $0x1c8] sm:$0xff] %v2282
        %v2284 = vld [vmem:[%s2166 + $0x1c8] sm:$0xff]
        %2285 = vst [vmem:[%s2167 + $0x1d0] sm:$0xff] %v2284
        %v2286 = vld [vmem:[%s2166 + $0x1cc] sm:$0xff]
        %2287 = vst [vmem:[%s2167 + $0x1d8] sm:$0xff] %v2286
        %v2288 = vld [vmem:[%s2166 + $0x1d0] sm:$0xff]
        %2289 = vst [vmem:[%s2167 + $0x1e0] sm:$0xff] %v2288
        %v2290 = vld [vmem:[%s2166 + $0x1d4] sm:$0xff]
        %2291 = vst [vmem:[%s2167 + $0x1e8] sm:$0xff] %v2290
        %v2292 = vld [vmem:[%s2166 + $0x1d8] sm:$0xff]
        %2293 = vst [vmem:[%s2167 + $0x1f0] sm:$0xff] %v2292
        %v2294 = vld [vmem:[%s2166 + $0x1dc] sm:$0xff]
        %2295 = vst [vmem:[%s2167 + $0x1f8] sm:$0xff] %v2294
        %v2296 = vld [vmem:[%s2166 + $0x200] sm:$0xff]
        %2297 = vst [vmem:[%s2167 + $0x200] sm:$0xff] %v2296
        %v2298 = vld [vmem:[%s2166 + $0x204] sm:$0xff]
        %2299 = vst [vmem:[%s2167 + $0x208] sm:$0xff] %v2298
        %v2300 = vld [vmem:[%s2166 + $0x208] sm:$0xff]
        %2301 = vst [vmem:[%s2167 + $0x210] sm:$0xff] %v2300
        %v2302 = vld [vmem:[%s2166 + $0x20c] sm:$0xff]
        %2303 = vst [vmem:[%s2167 + $0x218] sm:$0xff] %v2302
        %v2304 = vld [vmem:[%s2166 + $0x210] sm:$0xff]
        %2305 = vst [vmem:[%s2167 + $0x220] sm:$0xff] %v2304
        %v2306 = vld [vmem:[%s2166 + $0x214] sm:$0xff]
        %2307 = vst [vmem:[%s2167 + $0x228] sm:$0xff] %v2306
        %v2308 = vld [vmem:[%s2166 + $0x218] sm:$0xff]
        %2309 = vst [vmem:[%s2167 + $0x230] sm:$0xff] %v2308
        %v2310 = vld [vmem:[%s2166 + $0x21c] sm:$0xff]
        %2311 = vst [vmem:[%s2167 + $0x238] sm:$0xff] %v2310
        %v2312 = vld [vmem:[%s2166 + $0x240] sm:$0xff]
        %2313 = vst [vmem:[%s2167 + $0x240] sm:$0xff] %v2312
        %v2314 = vld [vmem:[%s2166 + $0x244] sm:$0xff]
        %2315 = vst [vmem:[%s2167 + $0x248] sm:$0xff] %v2314
        %v2316 = vld [vmem:[%s2166 + $0x248] sm:$0xff]
        %2317 = vst [vmem:[%s2167 + $0x250] sm:$0xff] %v2316
        %v2318 = vld [vmem:[%s2166 + $0x24c] sm:$0xff]
        %2319 = vst [vmem:[%s2167 + $0x258] sm:$0xff] %v2318
        %v2320 = vld [vmem:[%s2166 + $0x250] sm:$0xff]
        %2321 = vst [vmem:[%s2167 + $0x260] sm:$0xff] %v2320
        %v2322 = vld [vmem:[%s2166 + $0x254] sm:$0xff]
        %2323 = vst [vmem:[%s2167 + $0x268] sm:$0xff] %v2322
        %v2324 = vld [vmem:[%s2166 + $0x258] sm:$0xff]
        %2325 = vst [vmem:[%s2167 + $0x270] sm:$0xff] %v2324
        %v2326 = vld [vmem:[%s2166 + $0x25c] sm:$0xff]
        %2327 = vst [vmem:[%s2167 + $0x278] sm:$0xff] %v2326
        %v2328 = vld [vmem:[%s2166 + $0x280] sm:$0xff]
        %2329 = vst [vmem:[%s2167 + $0x280] sm:$0xff] %v2328
        %v2330 = vld [vmem:[%s2166 + $0x284] sm:$0xff]
        %2331 = vst [vmem:[%s2167 + $0x288] sm:$0xff] %v2330
        %v2332 = vld [vmem:[%s2166 + $0x288] sm:$0xff]
        %2333 = vst [vmem:[%s2167 + $0x290] sm:$0xff] %v2332
        %v2334 = vld [vmem:[%s2166 + $0x28c] sm:$0xff]
        %2335 = vst [vmem:[%s2167 + $0x298] sm:$0xff] %v2334
        %v2336 = vld [vmem:[%s2166 + $0x290] sm:$0xff]
        %2337 = vst [vmem:[%s2167 + $0x2a0] sm:$0xff] %v2336
        %v2338 = vld [vmem:[%s2166 + $0x294] sm:$0xff]
        %2339 = vst [vmem:[%s2167 + $0x2a8] sm:$0xff] %v2338
        %v2340 = vld [vmem:[%s2166 + $0x298] sm:$0xff]
        %2341 = vst [vmem:[%s2167 + $0x2b0] sm:$0xff] %v2340
        %v2342 = vld [vmem:[%s2166 + $0x29c] sm:$0xff]
        %2343 = vst [vmem:[%s2167 + $0x2b8] sm:$0xff] %v2342
        %v2344 = vld [vmem:[%s2166 + $0x2c0] sm:$0xff]
        %2345 = vst [vmem:[%s2167 + $0x2c0] sm:$0xff] %v2344
        %v2346 = vld [vmem:[%s2166 + $0x2c4] sm:$0xff]
        %2347 = vst [vmem:[%s2167 + $0x2c8] sm:$0xff] %v2346
        %v2348 = vld [vmem:[%s2166 + $0x2c8] sm:$0xff]
        %2349 = vst [vmem:[%s2167 + $0x2d0] sm:$0xff] %v2348
        %v2350 = vld [vmem:[%s2166 + $0x2cc] sm:$0xff]
        %2351 = vst [vmem:[%s2167 + $0x2d8] sm:$0xff] %v2350
        %v2352 = vld [vmem:[%s2166 + $0x2d0] sm:$0xff]
        %2353 = vst [vmem:[%s2167 + $0x2e0] sm:$0xff] %v2352
        %v2354 = vld [vmem:[%s2166 + $0x2d4] sm:$0xff]
        %2355 = vst [vmem:[%s2167 + $0x2e8] sm:$0xff] %v2354
        %v2356 = vld [vmem:[%s2166 + $0x2d8] sm:$0xff]
        %2357 = vst [vmem:[%s2167 + $0x2f0] sm:$0xff] %v2356
        %v2358 = vld [vmem:[%s2166 + $0x2dc] sm:$0xff]
        %2359 = vst [vmem:[%s2167 + $0x2f8] sm:$0xff] %v2358
        %v2360 = vld [vmem:[%s2166 + $0x300] sm:$0xff]
        %2361 = vst [vmem:[%s2167 + $0x300] sm:$0xff] %v2360
        %v2362 = vld [vmem:[%s2166 + $0x304] sm:$0xff]
        %2363 = vst [vmem:[%s2167 + $0x308] sm:$0xff] %v2362
        %v2364 = vld [vmem:[%s2166 + $0x308] sm:$0xff]
        %2365 = vst [vmem:[%s2167 + $0x310] sm:$0xff] %v2364
        %v2366 = vld [vmem:[%s2166 + $0x30c] sm:$0xff]
        %2367 = vst [vmem:[%s2167 + $0x318] sm:$0xff] %v2366
        %v2368 = vld [vmem:[%s2166 + $0x310] sm:$0xff]
        %2369 = vst [vmem:[%s2167 + $0x320] sm:$0xff] %v2368
        %v2370 = vld [vmem:[%s2166 + $0x314] sm:$0xff]
        %2371 = vst [vmem:[%s2167 + $0x328] sm:$0xff] %v2370
        %v2372 = vld [vmem:[%s2166 + $0x318] sm:$0xff]
        %2373 = vst [vmem:[%s2167 + $0x330] sm:$0xff] %v2372
        %v2374 = vld [vmem:[%s2166 + $0x31c] sm:$0xff]
        %2375 = vst [vmem:[%s2167 + $0x338] sm:$0xff] %v2374
        %v2376 = vld [vmem:[%s2166 + $0x340] sm:$0xff]
        %2377 = vst [vmem:[%s2167 + $0x340] sm:$0xff] %v2376
        %v2378 = vld [vmem:[%s2166 + $0x344] sm:$0xff]
        %2379 = vst [vmem:[%s2167 + $0x348] sm:$0xff] %v2378
        %v2380 = vld [vmem:[%s2166 + $0x348] sm:$0xff]
        %2381 = vst [vmem:[%s2167 + $0x350] sm:$0xff] %v2380
        %v2382 = vld [vmem:[%s2166 + $0x34c] sm:$0xff]
        %2383 = vst [vmem:[%s2167 + $0x358] sm:$0xff] %v2382
        %v2384 = vld [vmem:[%s2166 + $0x350] sm:$0xff]
        %2385 = vst [vmem:[%s2167 + $0x360] sm:$0xff] %v2384
        %v2386 = vld [vmem:[%s2166 + $0x354] sm:$0xff]
        %2387 = vst [vmem:[%s2167 + $0x368] sm:$0xff] %v2386
        %v2388 = vld [vmem:[%s2166 + $0x358] sm:$0xff]
        %2389 = vst [vmem:[%s2167 + $0x370] sm:$0xff] %v2388
        %v2390 = vld [vmem:[%s2166 + $0x35c] sm:$0xff]
        %2391 = vst [vmem:[%s2167 + $0x378] sm:$0xff] %v2390
        %v2392 = vld [vmem:[%s2166 + $0x380] sm:$0xff]
        %2393 = vst [vmem:[%s2167 + $0x380] sm:$0xff] %v2392
        %v2394 = vld [vmem:[%s2166 + $0x384] sm:$0xff]
        %2395 = vst [vmem:[%s2167 + $0x388] sm:$0xff] %v2394
        %v2396 = vld [vmem:[%s2166 + $0x388] sm:$0xff]
        %2397 = vst [vmem:[%s2167 + $0x390] sm:$0xff] %v2396
        %v2398 = vld [vmem:[%s2166 + $0x38c] sm:$0xff]
        %2399 = vst [vmem:[%s2167 + $0x398] sm:$0xff] %v2398
        %v2400 = vld [vmem:[%s2166 + $0x390] sm:$0xff]
        %2401 = vst [vmem:[%s2167 + $0x3a0] sm:$0xff] %v2400
        %v2402 = vld [vmem:[%s2166 + $0x394] sm:$0xff]
        %2403 = vst [vmem:[%s2167 + $0x3a8] sm:$0xff] %v2402
        %v2404 = vld [vmem:[%s2166 + $0x398] sm:$0xff]
        %2405 = vst [vmem:[%s2167 + $0x3b0] sm:$0xff] %v2404
        %v2406 = vld [vmem:[%s2166 + $0x39c] sm:$0xff]
        %2407 = vst [vmem:[%s2167 + $0x3b8] sm:$0xff] %v2406
        %v2408 = vld [vmem:[%s2166 + $0x3c0] sm:$0xff]
        %2409 = vst [vmem:[%s2167 + $0x3c0] sm:$0xff] %v2408
        %v2410 = vld [vmem:[%s2166 + $0x3c4] sm:$0xff]
        %2411 = vst [vmem:[%s2167 + $0x3c8] sm:$0xff] %v2410
        %v2412 = vld [vmem:[%s2166 + $0x3c8] sm:$0xff]
        %2413 = vst [vmem:[%s2167 + $0x3d0] sm:$0xff] %v2412
        %v2414 = vld [vmem:[%s2166 + $0x3cc] sm:$0xff]
        %2415 = vst [vmem:[%s2167 + $0x3d8] sm:$0xff] %v2414
        %v2416 = vld [vmem:[%s2166 + $0x3d0] sm:$0xff]
        %2417 = vst [vmem:[%s2167 + $0x3e0] sm:$0xff] %v2416
        %v2418 = vld [vmem:[%s2166 + $0x3d4] sm:$0xff]
        %2419 = vst [vmem:[%s2167 + $0x3e8] sm:$0xff] %v2418
        %v2420 = vld [vmem:[%s2166 + $0x3d8] sm:$0xff]
        %2421 = vst [vmem:[%s2167 + $0x3f0] sm:$0xff] %v2420
        %v2422 = vld [vmem:[%s2166 + $0x3dc] sm:$0xff]
        %2423 = vst [vmem:[%s2167 + $0x3f8] sm:$0xff] %v2422
        %v2424 = vld [vmem:[%s2166 + $0x400] sm:$0xff]
        %2425 = vst [vmem:[%s2167 + $0x400] sm:$0xff] %v2424
        %v2426 = vld [vmem:[%s2166 + $0x404] sm:$0xff]
        %2427 = vst [vmem:[%s2167 + $0x408] sm:$0xff] %v2426
        %v2428 = vld [vmem:[%s2166 + $0x408] sm:$0xff]
        %2429 = vst [vmem:[%s2167 + $0x410] sm:$0xff] %v2428
        %v2430 = vld [vmem:[%s2166 + $0x40c] sm:$0xff]
        %2431 = vst [vmem:[%s2167 + $0x418] sm:$0xff] %v2430
        %v2432 = vld [vmem:[%s2166 + $0x410] sm:$0xff]
        %2433 = vst [vmem:[%s2167 + $0x420] sm:$0xff] %v2432
        %v2434 = vld [vmem:[%s2166 + $0x414] sm:$0xff]
        %2435 = vst [vmem:[%s2167 + $0x428] sm:$0xff] %v2434
        %v2436 = vld [vmem:[%s2166 + $0x418] sm:$0xff]
        %2437 = vst [vmem:[%s2167 + $0x430] sm:$0xff] %v2436
        %v2438 = vld [vmem:[%s2166 + $0x41c] sm:$0xff]
        %2439 = vst [vmem:[%s2167 + $0x438] sm:$0xff] %v2438
        %v2440 = vld [vmem:[%s2166 + $0x440] sm:$0xff]
        %2441 = vst [vmem:[%s2167 + $0x440] sm:$0xff] %v2440
        %v2442 = vld [vmem:[%s2166 + $0x444] sm:$0xff]
        %2443 = vst [vmem:[%s2167 + $0x448] sm:$0xff] %v2442
        %v2444 = vld [vmem:[%s2166 + $0x448] sm:$0xff]
        %2445 = vst [vmem:[%s2167 + $0x450] sm:$0xff] %v2444
        %v2446 = vld [vmem:[%s2166 + $0x44c] sm:$0xff]
        %2447 = vst [vmem:[%s2167 + $0x458] sm:$0xff] %v2446
        %v2448 = vld [vmem:[%s2166 + $0x450] sm:$0xff]
        %2449 = vst [vmem:[%s2167 + $0x460] sm:$0xff] %v2448
        %v2450 = vld [vmem:[%s2166 + $0x454] sm:$0xff]
        %2451 = vst [vmem:[%s2167 + $0x468] sm:$0xff] %v2450
        %v2452 = vld [vmem:[%s2166 + $0x458] sm:$0xff]
        %2453 = vst [vmem:[%s2167 + $0x470] sm:$0xff] %v2452
        %v2454 = vld [vmem:[%s2166 + $0x45c] sm:$0xff]
        %2455 = vst [vmem:[%s2167 + $0x478] sm:$0xff] %v2454
        %v2456 = vld [vmem:[%s2166 + $0x480] sm:$0xff]
        %2457 = vst [vmem:[%s2167 + $0x480] sm:$0xff] %v2456
        %v2458 = vld [vmem:[%s2166 + $0x484] sm:$0xff]
        %2459 = vst [vmem:[%s2167 + $0x488] sm:$0xff] %v2458
        %v2460 = vld [vmem:[%s2166 + $0x488] sm:$0xff]
        %2461 = vst [vmem:[%s2167 + $0x490] sm:$0xff] %v2460
        %v2462 = vld [vmem:[%s2166 + $0x48c] sm:$0xff]
        %2463 = vst [vmem:[%s2167 + $0x498] sm:$0xff] %v2462
        %v2464 = vld [vmem:[%s2166 + $0x490] sm:$0xff]
        %2465 = vst [vmem:[%s2167 + $0x4a0] sm:$0xff] %v2464
        %v2466 = vld [vmem:[%s2166 + $0x494] sm:$0xff]
        %2467 = vst [vmem:[%s2167 + $0x4a8] sm:$0xff] %v2466
        %v2468 = vld [vmem:[%s2166 + $0x498] sm:$0xff]
        %2469 = vst [vmem:[%s2167 + $0x4b0] sm:$0xff] %v2468
        %v2470 = vld [vmem:[%s2166 + $0x49c] sm:$0xff]
        %2471 = vst [vmem:[%s2167 + $0x4b8] sm:$0xff] %v2470
        %v2472 = vld [vmem:[%s2166 + $0x4c0] sm:$0xff]
        %2473 = vst [vmem:[%s2167 + $0x4c0] sm:$0xff] %v2472
        %v2474 = vld [vmem:[%s2166 + $0x4c4] sm:$0xff]
        %2475 = vst [vmem:[%s2167 + $0x4c8] sm:$0xff] %v2474
        %v2476 = vld [vmem:[%s2166 + $0x4c8] sm:$0xff]
        %2477 = vst [vmem:[%s2167 + $0x4d0] sm:$0xff] %v2476
        %v2478 = vld [vmem:[%s2166 + $0x4cc] sm:$0xff]
        %2479 = vst [vmem:[%s2167 + $0x4d8] sm:$0xff] %v2478
        %v2480 = vld [vmem:[%s2166 + $0x4d0] sm:$0xff]
        %2481 = vst [vmem:[%s2167 + $0x4e0] sm:$0xff] %v2480
        %v2482 = vld [vmem:[%s2166 + $0x4d4] sm:$0xff]
        %2483 = vst [vmem:[%s2167 + $0x4e8] sm:$0xff] %v2482
        %v2484 = vld [vmem:[%s2166 + $0x4d8] sm:$0xff]
        %2485 = vst [vmem:[%s2167 + $0x4f0] sm:$0xff] %v2484
        %v2486 = vld [vmem:[%s2166 + $0x4dc] sm:$0xff]
        %2487 = vst [vmem:[%s2167 + $0x4f8] sm:$0xff] %v2486
        %v2488 = vld [vmem:[%s2166 + $0x500] sm:$0xff]
        %2489 = vst [vmem:[%s2167 + $0x500] sm:$0xff] %v2488
        %v2490 = vld [vmem:[%s2166 + $0x504] sm:$0xff]
        %2491 = vst [vmem:[%s2167 + $0x508] sm:$0xff] %v2490
        %v2492 = vld [vmem:[%s2166 + $0x508] sm:$0xff]
        %2493 = vst [vmem:[%s2167 + $0x510] sm:$0xff] %v2492
        %v2494 = vld [vmem:[%s2166 + $0x50c] sm:$0xff]
        %2495 = vst [vmem:[%s2167 + $0x518] sm:$0xff] %v2494
        %v2496 = vld [vmem:[%s2166 + $0x510] sm:$0xff]
        %2497 = vst [vmem:[%s2167 + $0x520] sm:$0xff] %v2496
        %v2498 = vld [vmem:[%s2166 + $0x514] sm:$0xff]
        %2499 = vst [vmem:[%s2167 + $0x528] sm:$0xff] %v2498
        %v2500 = vld [vmem:[%s2166 + $0x518] sm:$0xff]
        %2501 = vst [vmem:[%s2167 + $0x530] sm:$0xff] %v2500
        %v2502 = vld [vmem:[%s2166 + $0x51c] sm:$0xff]
        %2503 = vst [vmem:[%s2167 + $0x538] sm:$0xff] %v2502
        %v2504 = vld [vmem:[%s2166 + $0x540] sm:$0xff]
        %2505 = vst [vmem:[%s2167 + $0x540] sm:$0xff] %v2504
        %v2506 = vld [vmem:[%s2166 + $0x544] sm:$0xff]
        %2507 = vst [vmem:[%s2167 + $0x548] sm:$0xff] %v2506
        %v2508 = vld [vmem:[%s2166 + $0x548] sm:$0xff]
        %2509 = vst [vmem:[%s2167 + $0x550] sm:$0xff] %v2508
        %v2510 = vld [vmem:[%s2166 + $0x54c] sm:$0xff]
        %2511 = vst [vmem:[%s2167 + $0x558] sm:$0xff] %v2510
        %v2512 = vld [vmem:[%s2166 + $0x550] sm:$0xff]
        %2513 = vst [vmem:[%s2167 + $0x560] sm:$0xff] %v2512
        %v2514 = vld [vmem:[%s2166 + $0x554] sm:$0xff]
        %2515 = vst [vmem:[%s2167 + $0x568] sm:$0xff] %v2514
        %v2516 = vld [vmem:[%s2166 + $0x558] sm:$0xff]
        %2517 = vst [vmem:[%s2167 + $0x570] sm:$0xff] %v2516
        %v2518 = vld [vmem:[%s2166 + $0x55c] sm:$0xff]
        %2519 = vst [vmem:[%s2167 + $0x578] sm:$0xff] %v2518
        %v2520 = vld [vmem:[%s2166 + $0x580] sm:$0xff]
        %2521 = vst [vmem:[%s2167 + $0x580] sm:$0xff] %v2520
        %v2522 = vld [vmem:[%s2166 + $0x584] sm:$0xff]
        %2523 = vst [vmem:[%s2167 + $0x588] sm:$0xff] %v2522
        %v2524 = vld [vmem:[%s2166 + $0x588] sm:$0xff]
        %2525 = vst [vmem:[%s2167 + $0x590] sm:$0xff] %v2524
        %v2526 = vld [vmem:[%s2166 + $0x58c] sm:$0xff]
        %2527 = vst [vmem:[%s2167 + $0x598] sm:$0xff] %v2526
        %v2528 = vld [vmem:[%s2166 + $0x590] sm:$0xff]
        %2529 = vst [vmem:[%s2167 + $0x5a0] sm:$0xff] %v2528
        %v2530 = vld [vmem:[%s2166 + $0x594] sm:$0xff]
        %2531 = vst [vmem:[%s2167 + $0x5a8] sm:$0xff] %v2530
        %v2532 = vld [vmem:[%s2166 + $0x598] sm:$0xff]
        %2533 = vst [vmem:[%s2167 + $0x5b0] sm:$0xff] %v2532
        %v2534 = vld [vmem:[%s2166 + $0x59c] sm:$0xff]
        %2535 = vst [vmem:[%s2167 + $0x5b8] sm:$0xff] %v2534
        %v2536 = vld [vmem:[%s2166 + $0x5c0] sm:$0xff]
        %2537 = vst [vmem:[%s2167 + $0x5c0] sm:$0xff] %v2536
        %v2538 = vld [vmem:[%s2166 + $0x5c4] sm:$0xff]
        %2539 = vst [vmem:[%s2167 + $0x5c8] sm:$0xff] %v2538
        %v2540 = vld [vmem:[%s2166 + $0x5c8] sm:$0xff]
        %2541 = vst [vmem:[%s2167 + $0x5d0] sm:$0xff] %v2540
        %v2542 = vld [vmem:[%s2166 + $0x5cc] sm:$0xff]
        %2543 = vst [vmem:[%s2167 + $0x5d8] sm:$0xff] %v2542
        %v2544 = vld [vmem:[%s2166 + $0x5d0] sm:$0xff]
        %2545 = vst [vmem:[%s2167 + $0x5e0] sm:$0xff] %v2544
        %v2546 = vld [vmem:[%s2166 + $0x5d4] sm:$0xff]
        %2547 = vst [vmem:[%s2167 + $0x5e8] sm:$0xff] %v2546
        %v2548 = vld [vmem:[%s2166 + $0x5d8] sm:$0xff]
        %2549 = vst [vmem:[%s2167 + $0x5f0] sm:$0xff] %v2548
        %v2550 = vld [vmem:[%s2166 + $0x5dc] sm:$0xff]
        %2551 = vst [vmem:[%s2167 + $0x5f8] sm:$0xff] %v2550
        %v2552 = vld [vmem:[%s2166 + $0x600] sm:$0xff]
        %2553 = vst [vmem:[%s2167 + $0x600] sm:$0xff] %v2552
        %v2554 = vld [vmem:[%s2166 + $0x604] sm:$0xff]
        %2555 = vst [vmem:[%s2167 + $0x608] sm:$0xff] %v2554
        %v2556 = vld [vmem:[%s2166 + $0x608] sm:$0xff]
        %2557 = vst [vmem:[%s2167 + $0x610] sm:$0xff] %v2556
        %v2558 = vld [vmem:[%s2166 + $0x60c] sm:$0xff]
        %2559 = vst [vmem:[%s2167 + $0x618] sm:$0xff] %v2558
        %v2560 = vld [vmem:[%s2166 + $0x610] sm:$0xff]
        %2561 = vst [vmem:[%s2167 + $0x620] sm:$0xff] %v2560
        %v2562 = vld [vmem:[%s2166 + $0x614] sm:$0xff]
        %2563 = vst [vmem:[%s2167 + $0x628] sm:$0xff] %v2562
        %v2564 = vld [vmem:[%s2166 + $0x618] sm:$0xff]
        %2565 = vst [vmem:[%s2167 + $0x630] sm:$0xff] %v2564
        %v2566 = vld [vmem:[%s2166 + $0x61c] sm:$0xff]
        %2567 = vst [vmem:[%s2167 + $0x638] sm:$0xff] %v2566
        %v2568 = vld [vmem:[%s2166 + $0x640] sm:$0xff]
        %2569 = vst [vmem:[%s2167 + $0x640] sm:$0xff] %v2568
        %v2570 = vld [vmem:[%s2166 + $0x644] sm:$0xff]
        %2571 = vst [vmem:[%s2167 + $0x648] sm:$0xff] %v2570
        %v2572 = vld [vmem:[%s2166 + $0x648] sm:$0xff]
        %2573 = vst [vmem:[%s2167 + $0x650] sm:$0xff] %v2572
        %v2574 = vld [vmem:[%s2166 + $0x64c] sm:$0xff]
        %2575 = vst [vmem:[%s2167 + $0x658] sm:$0xff] %v2574
        %v2576 = vld [vmem:[%s2166 + $0x650] sm:$0xff]
        %2577 = vst [vmem:[%s2167 + $0x660] sm:$0xff] %v2576
        %v2578 = vld [vmem:[%s2166 + $0x654] sm:$0xff]
        %2579 = vst [vmem:[%s2167 + $0x668] sm:$0xff] %v2578
        %v2580 = vld [vmem:[%s2166 + $0x658] sm:$0xff]
        %2581 = vst [vmem:[%s2167 + $0x670] sm:$0xff] %v2580
        %v2582 = vld [vmem:[%s2166 + $0x65c] sm:$0xff]
        %2583 = vst [vmem:[%s2167 + $0x678] sm:$0xff] %v2582
        %v2584 = vld [vmem:[%s2166 + $0x680] sm:$0xff]
        %2585 = vst [vmem:[%s2167 + $0x680] sm:$0xff] %v2584
        %v2586 = vld [vmem:[%s2166 + $0x684] sm:$0xff]
        %2587 = vst [vmem:[%s2167 + $0x688] sm:$0xff] %v2586
        %v2588 = vld [vmem:[%s2166 + $0x688] sm:$0xff]
        %2589 = vst [vmem:[%s2167 + $0x690] sm:$0xff] %v2588
        %v2590 = vld [vmem:[%s2166 + $0x68c] sm:$0xff]
        %2591 = vst [vmem:[%s2167 + $0x698] sm:$0xff] %v2590
        %v2592 = vld [vmem:[%s2166 + $0x690] sm:$0xff]
        %2593 = vst [vmem:[%s2167 + $0x6a0] sm:$0xff] %v2592
        %v2594 = vld [vmem:[%s2166 + $0x694] sm:$0xff]
        %2595 = vst [vmem:[%s2167 + $0x6a8] sm:$0xff] %v2594
        %v2596 = vld [vmem:[%s2166 + $0x698] sm:$0xff]
        %2597 = vst [vmem:[%s2167 + $0x6b0] sm:$0xff] %v2596
        %v2598 = vld [vmem:[%s2166 + $0x69c] sm:$0xff]
        %2599 = vst [vmem:[%s2167 + $0x6b8] sm:$0xff] %v2598
        %v2600 = vld [vmem:[%s2166 + $0x6c0] sm:$0xff]
        %2601 = vst [vmem:[%s2167 + $0x6c0] sm:$0xff] %v2600
        %v2602 = vld [vmem:[%s2166 + $0x6c4] sm:$0xff]
        %2603 = vst [vmem:[%s2167 + $0x6c8] sm:$0xff] %v2602
        %v2604 = vld [vmem:[%s2166 + $0x6c8] sm:$0xff]
        %2605 = vst [vmem:[%s2167 + $0x6d0] sm:$0xff] %v2604
        %v2606 = vld [vmem:[%s2166 + $0x6cc] sm:$0xff]
        %2607 = vst [vmem:[%s2167 + $0x6d8] sm:$0xff] %v2606
        %v2608 = vld [vmem:[%s2166 + $0x6d0] sm:$0xff]
        %2609 = vst [vmem:[%s2167 + $0x6e0] sm:$0xff] %v2608
        %v2610 = vld [vmem:[%s2166 + $0x6d4] sm:$0xff]
        %2611 = vst [vmem:[%s2167 + $0x6e8] sm:$0xff] %v2610
        %v2612 = vld [vmem:[%s2166 + $0x6d8] sm:$0xff]
        %2613 = vst [vmem:[%s2167 + $0x6f0] sm:$0xff] %v2612
        %v2614 = vld [vmem:[%s2166 + $0x6dc] sm:$0xff]
        %2615 = vst [vmem:[%s2167 + $0x6f8] sm:$0xff] %v2614
        %v2616 = vld [vmem:[%s2166 + $0x700] sm:$0xff]
        %2617 = vst [vmem:[%s2167 + $0x700] sm:$0xff] %v2616
        %v2618 = vld [vmem:[%s2166 + $0x704] sm:$0xff]
        %2619 = vst [vmem:[%s2167 + $0x708] sm:$0xff] %v2618
        %v2620 = vld [vmem:[%s2166 + $0x708] sm:$0xff]
        %2621 = vst [vmem:[%s2167 + $0x710] sm:$0xff] %v2620
        %v2622 = vld [vmem:[%s2166 + $0x70c] sm:$0xff]
        %2623 = vst [vmem:[%s2167 + $0x718] sm:$0xff] %v2622
        %v2624 = vld [vmem:[%s2166 + $0x710] sm:$0xff]
        %2625 = vst [vmem:[%s2167 + $0x720] sm:$0xff] %v2624
        %v2626 = vld [vmem:[%s2166 + $0x714] sm:$0xff]
        %2627 = vst [vmem:[%s2167 + $0x728] sm:$0xff] %v2626
        %v2628 = vld [vmem:[%s2166 + $0x718] sm:$0xff]
        %2629 = vst [vmem:[%s2167 + $0x730] sm:$0xff] %v2628
        %v2630 = vld [vmem:[%s2166 + $0x71c] sm:$0xff]
        %2631 = vst [vmem:[%s2167 + $0x738] sm:$0xff] %v2630
        %v2632 = vld [vmem:[%s2166 + $0x740] sm:$0xff]
        %2633 = vst [vmem:[%s2167 + $0x740] sm:$0xff] %v2632
        %v2634 = vld [vmem:[%s2166 + $0x744] sm:$0xff]
        %2635 = vst [vmem:[%s2167 + $0x748] sm:$0xff] %v2634
        %v2636 = vld [vmem:[%s2166 + $0x748] sm:$0xff]
        %2637 = vst [vmem:[%s2167 + $0x750] sm:$0xff] %v2636
        %v2638 = vld [vmem:[%s2166 + $0x74c] sm:$0xff]
        %2639 = vst [vmem:[%s2167 + $0x758] sm:$0xff] %v2638
        %v2640 = vld [vmem:[%s2166 + $0x750] sm:$0xff]
        %2641 = vst [vmem:[%s2167 + $0x760] sm:$0xff] %v2640
        %v2642 = vld [vmem:[%s2166 + $0x754] sm:$0xff]
        %2643 = vst [vmem:[%s2167 + $0x768] sm:$0xff] %v2642
        %v2644 = vld [vmem:[%s2166 + $0x758] sm:$0xff]
        %2645 = vst [vmem:[%s2167 + $0x770] sm:$0xff] %v2644
        %v2646 = vld [vmem:[%s2166 + $0x75c] sm:$0xff]
        %2647 = vst [vmem:[%s2167 + $0x778] sm:$0xff] %v2646
        %v2648 = vld [vmem:[%s2166 + $0x780] sm:$0xff]
        %2649 = vst [vmem:[%s2167 + $0x780] sm:$0xff] %v2648
        %v2650 = vld [vmem:[%s2166 + $0x784] sm:$0xff]
        %2651 = vst [vmem:[%s2167 + $0x788] sm:$0xff] %v2650
        %v2652 = vld [vmem:[%s2166 + $0x788] sm:$0xff]
        %2653 = vst [vmem:[%s2167 + $0x790] sm:$0xff] %v2652
        %v2654 = vld [vmem:[%s2166 + $0x78c] sm:$0xff]
        %2655 = vst [vmem:[%s2167 + $0x798] sm:$0xff] %v2654
        %v2656 = vld [vmem:[%s2166 + $0x790] sm:$0xff]
        %2657 = vst [vmem:[%s2167 + $0x7a0] sm:$0xff] %v2656
        %v2658 = vld [vmem:[%s2166 + $0x794] sm:$0xff]
        %2659 = vst [vmem:[%s2167 + $0x7a8] sm:$0xff] %v2658
        %v2660 = vld [vmem:[%s2166 + $0x798] sm:$0xff]
        %2661 = vst [vmem:[%s2167 + $0x7b0] sm:$0xff] %v2660
        %v2662 = vld [vmem:[%s2166 + $0x79c] sm:$0xff]
        %2663 = vst [vmem:[%s2167 + $0x7b8] sm:$0xff] %v2662
        %v2664 = vld [vmem:[%s2166 + $0x7c0] sm:$0xff]
        %2665 = vst [vmem:[%s2167 + $0x7c0] sm:$0xff] %v2664
        %v2666 = vld [vmem:[%s2166 + $0x7c4] sm:$0xff]
        %2667 = vst [vmem:[%s2167 + $0x7c8] sm:$0xff] %v2666
        %v2668 = vld [vmem:[%s2166 + $0x7c8] sm:$0xff]
        %2669 = vst [vmem:[%s2167 + $0x7d0] sm:$0xff] %v2668
        %v2670 = vld [vmem:[%s2166 + $0x7cc] sm:$0xff]
        %2671 = vst [vmem:[%s2167 + $0x7d8] sm:$0xff] %v2670
        %v2672 = vld [vmem:[%s2166 + $0x7d0] sm:$0xff]
        %2673 = vst [vmem:[%s2167 + $0x7e0] sm:$0xff] %v2672
        %v2674 = vld [vmem:[%s2166 + $0x7d4] sm:$0xff]
        %2675 = vst [vmem:[%s2167 + $0x7e8] sm:$0xff] %v2674
        %v2676 = vld [vmem:[%s2166 + $0x7d8] sm:$0xff]
        %2677 = vst [vmem:[%s2167 + $0x7f0] sm:$0xff] %v2676
        %v2678 = vld [vmem:[%s2166 + $0x7dc] sm:$0xff]
        %2679 = vst [vmem:[%s2167 + $0x7f8] sm:$0xff] %v2678
        %v2680 = vld [vmem:[%s2166 + $0x800] sm:$0xff]
        %2681 = vst [vmem:[%s2167 + $0x800] sm:$0xff] %v2680
        %v2682 = vld [vmem:[%s2166 + $0x804] sm:$0xff]
        %2683 = vst [vmem:[%s2167 + $0x808] sm:$0xff] %v2682
        %v2684 = vld [vmem:[%s2166 + $0x808] sm:$0xff]
        %2685 = vst [vmem:[%s2167 + $0x810] sm:$0xff] %v2684
        %v2686 = vld [vmem:[%s2166 + $0x80c] sm:$0xff]
        %2687 = vst [vmem:[%s2167 + $0x818] sm:$0xff] %v2686
        %v2688 = vld [vmem:[%s2166 + $0x810] sm:$0xff]
        %2689 = vst [vmem:[%s2167 + $0x820] sm:$0xff] %v2688
        %v2690 = vld [vmem:[%s2166 + $0x814] sm:$0xff]
        %2691 = vst [vmem:[%s2167 + $0x828] sm:$0xff] %v2690
        %v2692 = vld [vmem:[%s2166 + $0x818] sm:$0xff]
        %2693 = vst [vmem:[%s2167 + $0x830] sm:$0xff] %v2692
        %v2694 = vld [vmem:[%s2166 + $0x81c] sm:$0xff]
        %2695 = vst [vmem:[%s2167 + $0x838] sm:$0xff] %v2694
        %v2696 = vld [vmem:[%s2166 + $0x840] sm:$0xff]
        %2697 = vst [vmem:[%s2167 + $0x840] sm:$0xff] %v2696
        %v2698 = vld [vmem:[%s2166 + $0x844] sm:$0xff]
        %2699 = vst [vmem:[%s2167 + $0x848] sm:$0xff] %v2698
        %v2700 = vld [vmem:[%s2166 + $0x848] sm:$0xff]
        %2701 = vst [vmem:[%s2167 + $0x850] sm:$0xff] %v2700
        %v2702 = vld [vmem:[%s2166 + $0x84c] sm:$0xff]
        %2703 = vst [vmem:[%s2167 + $0x858] sm:$0xff] %v2702
        %v2704 = vld [vmem:[%s2166 + $0x850] sm:$0xff]
        %2705 = vst [vmem:[%s2167 + $0x860] sm:$0xff] %v2704
        %v2706 = vld [vmem:[%s2166 + $0x854] sm:$0xff]
        %2707 = vst [vmem:[%s2167 + $0x868] sm:$0xff] %v2706
        %v2708 = vld [vmem:[%s2166 + $0x858] sm:$0xff]
        %2709 = vst [vmem:[%s2167 + $0x870] sm:$0xff] %v2708
        %v2710 = vld [vmem:[%s2166 + $0x85c] sm:$0xff]
        %2711 = vst [vmem:[%s2167 + $0x878] sm:$0xff] %v2710
        %v2712 = vld [vmem:[%s2166 + $0x880] sm:$0xff]
        %2713 = vst [vmem:[%s2167 + $0x880] sm:$0xff] %v2712
        %v2714 = vld [vmem:[%s2166 + $0x884] sm:$0xff]
        %2715 = vst [vmem:[%s2167 + $0x888] sm:$0xff] %v2714
        %v2716 = vld [vmem:[%s2166 + $0x888] sm:$0xff]
        %2717 = vst [vmem:[%s2167 + $0x890] sm:$0xff] %v2716
        %v2718 = vld [vmem:[%s2166 + $0x88c] sm:$0xff]
        %2719 = vst [vmem:[%s2167 + $0x898] sm:$0xff] %v2718
        %v2720 = vld [vmem:[%s2166 + $0x890] sm:$0xff]
        %2721 = vst [vmem:[%s2167 + $0x8a0] sm:$0xff] %v2720
        %v2722 = vld [vmem:[%s2166 + $0x894] sm:$0xff]
        %2723 = vst [vmem:[%s2167 + $0x8a8] sm:$0xff] %v2722
        %v2724 = vld [vmem:[%s2166 + $0x898] sm:$0xff]
        %2725 = vst [vmem:[%s2167 + $0x8b0] sm:$0xff] %v2724
        %v2726 = vld [vmem:[%s2166 + $0x89c] sm:$0xff]
        %2727 = vst [vmem:[%s2167 + $0x8b8] sm:$0xff] %v2726
        %v2728 = vld [vmem:[%s2166 + $0x8c0] sm:$0xff]
        %2729 = vst [vmem:[%s2167 + $0x8c0] sm:$0xff] %v2728
        %v2730 = vld [vmem:[%s2166 + $0x8c4] sm:$0xff]
        %2731 = vst [vmem:[%s2167 + $0x8c8] sm:$0xff] %v2730
        %v2732 = vld [vmem:[%s2166 + $0x8c8] sm:$0xff]
        %2733 = vst [vmem:[%s2167 + $0x8d0] sm:$0xff] %v2732
        %v2734 = vld [vmem:[%s2166 + $0x8cc] sm:$0xff]
        %2735 = vst [vmem:[%s2167 + $0x8d8] sm:$0xff] %v2734
        %v2736 = vld [vmem:[%s2166 + $0x8d0] sm:$0xff]
        %2737 = vst [vmem:[%s2167 + $0x8e0] sm:$0xff] %v2736
        %v2738 = vld [vmem:[%s2166 + $0x8d4] sm:$0xff]
        %2739 = vst [vmem:[%s2167 + $0x8e8] sm:$0xff] %v2738
        %v2740 = vld [vmem:[%s2166 + $0x8d8] sm:$0xff]
        %2741 = vst [vmem:[%s2167 + $0x8f0] sm:$0xff] %v2740
        %v2742 = vld [vmem:[%s2166 + $0x8dc] sm:$0xff]
        %2743 = vst [vmem:[%s2167 + $0x8f8] sm:$0xff] %v2742
        %v2744 = vld [vmem:[%s2166 + $0x900] sm:$0xff]
        %2745 = vst [vmem:[%s2167 + $0x900] sm:$0xff] %v2744
        %v2746 = vld [vmem:[%s2166 + $0x904] sm:$0xff]
        %2747 = vst [vmem:[%s2167 + $0x908] sm:$0xff] %v2746
        %v2748 = vld [vmem:[%s2166 + $0x908] sm:$0xff]
        %2749 = vst [vmem:[%s2167 + $0x910] sm:$0xff] %v2748
        %v2750 = vld [vmem:[%s2166 + $0x90c] sm:$0xff]
        %2751 = vst [vmem:[%s2167 + $0x918] sm:$0xff] %v2750
        %v2752 = vld [vmem:[%s2166 + $0x910] sm:$0xff]
        %2753 = vst [vmem:[%s2167 + $0x920] sm:$0xff] %v2752
        %v2754 = vld [vmem:[%s2166 + $0x914] sm:$0xff]
        %2755 = vst [vmem:[%s2167 + $0x928] sm:$0xff] %v2754
        %v2756 = vld [vmem:[%s2166 + $0x918] sm:$0xff]
        %2757 = vst [vmem:[%s2167 + $0x930] sm:$0xff] %v2756
        %v2758 = vld [vmem:[%s2166 + $0x91c] sm:$0xff]
        %2759 = vst [vmem:[%s2167 + $0x938] sm:$0xff] %v2758
        %v2760 = vld [vmem:[%s2166 + $0x940] sm:$0xff]
        %2761 = vst [vmem:[%s2167 + $0x940] sm:$0xff] %v2760
        %v2762 = vld [vmem:[%s2166 + $0x944] sm:$0xff]
        %2763 = vst [vmem:[%s2167 + $0x948] sm:$0xff] %v2762
        %v2764 = vld [vmem:[%s2166 + $0x948] sm:$0xff]
        %2765 = vst [vmem:[%s2167 + $0x950] sm:$0xff] %v2764
        %v2766 = vld [vmem:[%s2166 + $0x94c] sm:$0xff]
        %2767 = vst [vmem:[%s2167 + $0x958] sm:$0xff] %v2766
        %v2768 = vld [vmem:[%s2166 + $0x950] sm:$0xff]
        %2769 = vst [vmem:[%s2167 + $0x960] sm:$0xff] %v2768
        %v2770 = vld [vmem:[%s2166 + $0x954] sm:$0xff]
        %2771 = vst [vmem:[%s2167 + $0x968] sm:$0xff] %v2770
        %v2772 = vld [vmem:[%s2166 + $0x958] sm:$0xff]
        %2773 = vst [vmem:[%s2167 + $0x970] sm:$0xff] %v2772
        %v2774 = vld [vmem:[%s2166 + $0x95c] sm:$0xff]
        %2775 = vst [vmem:[%s2167 + $0x978] sm:$0xff] %v2774
        %v2776 = vld [vmem:[%s2166 + $0x980] sm:$0xff]
        %2777 = vst [vmem:[%s2167 + $0x980] sm:$0xff] %v2776
        %v2778 = vld [vmem:[%s2166 + $0x984] sm:$0xff]
        %2779 = vst [vmem:[%s2167 + $0x988] sm:$0xff] %v2778
        %v2780 = vld [vmem:[%s2166 + $0x988] sm:$0xff]
        %2781 = vst [vmem:[%s2167 + $0x990] sm:$0xff] %v2780
        %v2782 = vld [vmem:[%s2166 + $0x98c] sm:$0xff]
        %2783 = vst [vmem:[%s2167 + $0x998] sm:$0xff] %v2782
        %v2784 = vld [vmem:[%s2166 + $0x990] sm:$0xff]
        %2785 = vst [vmem:[%s2167 + $0x9a0] sm:$0xff] %v2784
        %v2786 = vld [vmem:[%s2166 + $0x994] sm:$0xff]
        %2787 = vst [vmem:[%s2167 + $0x9a8] sm:$0xff] %v2786
        %v2788 = vld [vmem:[%s2166 + $0x998] sm:$0xff]
        %2789 = vst [vmem:[%s2167 + $0x9b0] sm:$0xff] %v2788
        %v2790 = vld [vmem:[%s2166 + $0x99c] sm:$0xff]
        %2791 = vst [vmem:[%s2167 + $0x9b8] sm:$0xff] %v2790
        %v2792 = vld [vmem:[%s2166 + $0x9c0] sm:$0xff]
        %2793 = vst [vmem:[%s2167 + $0x9c0] sm:$0xff] %v2792
        %v2794 = vld [vmem:[%s2166 + $0x9c4] sm:$0xff]
        %2795 = vst [vmem:[%s2167 + $0x9c8] sm:$0xff] %v2794
        %v2796 = vld [vmem:[%s2166 + $0x9c8] sm:$0xff]
        %2797 = vst [vmem:[%s2167 + $0x9d0] sm:$0xff] %v2796
        %v2798 = vld [vmem:[%s2166 + $0x9cc] sm:$0xff]
        %2799 = vst [vmem:[%s2167 + $0x9d8] sm:$0xff] %v2798
        %v2800 = vld [vmem:[%s2166 + $0x9d0] sm:$0xff]
        %2801 = vst [vmem:[%s2167 + $0x9e0] sm:$0xff] %v2800
        %v2802 = vld [vmem:[%s2166 + $0x9d4] sm:$0xff]
        %2803 = vst [vmem:[%s2167 + $0x9e8] sm:$0xff] %v2802
        %v2804 = vld [vmem:[%s2166 + $0x9d8] sm:$0xff]
        %2805 = vst [vmem:[%s2167 + $0x9f0] sm:$0xff] %v2804
        %v2806 = vld [vmem:[%s2166 + $0x9dc] sm:$0xff]
        %2807 = vst [vmem:[%s2167 + $0x9f8] sm:$0xff] %v2806
        %v2808 = vld [vmem:[%s2166 + $0xa00] sm:$0xff]
        %2809 = vst [vmem:[%s2167 + $0xa00] sm:$0xff] %v2808
        %v2810 = vld [vmem:[%s2166 + $0xa04] sm:$0xff]
        %2811 = vst [vmem:[%s2167 + $0xa08] sm:$0xff] %v2810
        %v2812 = vld [vmem:[%s2166 + $0xa08] sm:$0xff]
        %2813 = vst [vmem:[%s2167 + $0xa10] sm:$0xff] %v2812
        %v2814 = vld [vmem:[%s2166 + $0xa0c] sm:$0xff]
        %2815 = vst [vmem:[%s2167 + $0xa18] sm:$0xff] %v2814
        %v2816 = vld [vmem:[%s2166 + $0xa10] sm:$0xff]
        %2817 = vst [vmem:[%s2167 + $0xa20] sm:$0xff] %v2816
        %v2818 = vld [vmem:[%s2166 + $0xa14] sm:$0xff]
        %2819 = vst [vmem:[%s2167 + $0xa28] sm:$0xff] %v2818
        %v2820 = vld [vmem:[%s2166 + $0xa18] sm:$0xff]
        %2821 = vst [vmem:[%s2167 + $0xa30] sm:$0xff] %v2820
        %v2822 = vld [vmem:[%s2166 + $0xa1c] sm:$0xff]
        %2823 = vst [vmem:[%s2167 + $0xa38] sm:$0xff] %v2822
        %v2824 = vld [vmem:[%s2166 + $0xa40] sm:$0xff]
        %2825 = vst [vmem:[%s2167 + $0xa40] sm:$0xff] %v2824
        %v2826 = vld [vmem:[%s2166 + $0xa44] sm:$0xff]
        %2827 = vst [vmem:[%s2167 + $0xa48] sm:$0xff] %v2826
        %v2828 = vld [vmem:[%s2166 + $0xa48] sm:$0xff]
        %2829 = vst [vmem:[%s2167 + $0xa50] sm:$0xff] %v2828
        %v2830 = vld [vmem:[%s2166 + $0xa4c] sm:$0xff]
        %2831 = vst [vmem:[%s2167 + $0xa58] sm:$0xff] %v2830
        %v2832 = vld [vmem:[%s2166 + $0xa50] sm:$0xff]
        %2833 = vst [vmem:[%s2167 + $0xa60] sm:$0xff] %v2832
        %v2834 = vld [vmem:[%s2166 + $0xa54] sm:$0xff]
        %2835 = vst [vmem:[%s2167 + $0xa68] sm:$0xff] %v2834
        %v2836 = vld [vmem:[%s2166 + $0xa58] sm:$0xff]
        %2837 = vst [vmem:[%s2167 + $0xa70] sm:$0xff] %v2836
        %v2838 = vld [vmem:[%s2166 + $0xa5c] sm:$0xff]
        %2839 = vst [vmem:[%s2167 + $0xa78] sm:$0xff] %v2838
        %v2840 = vld [vmem:[%s2166 + $0xa80] sm:$0xff]
        %2841 = vst [vmem:[%s2167 + $0xa80] sm:$0xff] %v2840
        %v2842 = vld [vmem:[%s2166 + $0xa84] sm:$0xff]
        %2843 = vst [vmem:[%s2167 + $0xa88] sm:$0xff] %v2842
        %v2844 = vld [vmem:[%s2166 + $0xa88] sm:$0xff]
        %2845 = vst [vmem:[%s2167 + $0xa90] sm:$0xff] %v2844
        %v2846 = vld [vmem:[%s2166 + $0xa8c] sm:$0xff]
        %2847 = vst [vmem:[%s2167 + $0xa98] sm:$0xff] %v2846
        %v2848 = vld [vmem:[%s2166 + $0xa90] sm:$0xff]
        %2849 = vst [vmem:[%s2167 + $0xaa0] sm:$0xff] %v2848
        %v2850 = vld [vmem:[%s2166 + $0xa94] sm:$0xff]
        %2851 = vst [vmem:[%s2167 + $0xaa8] sm:$0xff] %v2850
        %v2852 = vld [vmem:[%s2166 + $0xa98] sm:$0xff]
        %2853 = vst [vmem:[%s2167 + $0xab0] sm:$0xff] %v2852
        %v2854 = vld [vmem:[%s2166 + $0xa9c] sm:$0xff]
        %2855 = vst [vmem:[%s2167 + $0xab8] sm:$0xff] %v2854
        %v2856 = vld [vmem:[%s2166 + $0xac0] sm:$0xff]
        %2857 = vst [vmem:[%s2167 + $0xac0] sm:$0xff] %v2856
        %v2858 = vld [vmem:[%s2166 + $0xac4] sm:$0xff]
        %2859 = vst [vmem:[%s2167 + $0xac8] sm:$0xff] %v2858
        %v2860 = vld [vmem:[%s2166 + $0xac8] sm:$0xff]
        %2861 = vst [vmem:[%s2167 + $0xad0] sm:$0xff] %v2860
        %v2862 = vld [vmem:[%s2166 + $0xacc] sm:$0xff]
        %2863 = vst [vmem:[%s2167 + $0xad8] sm:$0xff] %v2862
        %v2864 = vld [vmem:[%s2166 + $0xad0] sm:$0xff]
        %2865 = vst [vmem:[%s2167 + $0xae0] sm:$0xff] %v2864
        %v2866 = vld [vmem:[%s2166 + $0xad4] sm:$0xff]
        %2867 = vst [vmem:[%s2167 + $0xae8] sm:$0xff] %v2866
        %v2868 = vld [vmem:[%s2166 + $0xad8] sm:$0xff]
        %2869 = vst [vmem:[%s2167 + $0xaf0] sm:$0xff] %v2868
        %v2870 = vld [vmem:[%s2166 + $0xadc] sm:$0xff]
        %2871 = vst [vmem:[%s2167 + $0xaf8] sm:$0xff] %v2870
        %v2872 = vld [vmem:[%s2166 + $0xb00] sm:$0xff]
        %2873 = vst [vmem:[%s2167 + $0xb00] sm:$0xff] %v2872
        %v2874 = vld [vmem:[%s2166 + $0xb04] sm:$0xff]
        %2875 = vst [vmem:[%s2167 + $0xb08] sm:$0xff] %v2874
        %v2876 = vld [vmem:[%s2166 + $0xb08] sm:$0xff]
        %2877 = vst [vmem:[%s2167 + $0xb10] sm:$0xff] %v2876
        %v2878 = vld [vmem:[%s2166 + $0xb0c] sm:$0xff]
        %2879 = vst [vmem:[%s2167 + $0xb18] sm:$0xff] %v2878
        %v2880 = vld [vmem:[%s2166 + $0xb10] sm:$0xff]
        %2881 = vst [vmem:[%s2167 + $0xb20] sm:$0xff] %v2880
        %v2882 = vld [vmem:[%s2166 + $0xb14] sm:$0xff]
        %2883 = vst [vmem:[%s2167 + $0xb28] sm:$0xff] %v2882
        %v2884 = vld [vmem:[%s2166 + $0xb18] sm:$0xff]
        %2885 = vst [vmem:[%s2167 + $0xb30] sm:$0xff] %v2884
        %v2886 = vld [vmem:[%s2166 + $0xb1c] sm:$0xff]
        %2887 = vst [vmem:[%s2167 + $0xb38] sm:$0xff] %v2886
        %v2888 = vld [vmem:[%s2166 + $0xb40] sm:$0xff]
        %2889 = vst [vmem:[%s2167 + $0xb40] sm:$0xff] %v2888
        %v2890 = vld [vmem:[%s2166 + $0xb44] sm:$0xff]
        %2891 = vst [vmem:[%s2167 + $0xb48] sm:$0xff] %v2890
        %v2892 = vld [vmem:[%s2166 + $0xb48] sm:$0xff]
        %2893 = vst [vmem:[%s2167 + $0xb50] sm:$0xff] %v2892
        %v2894 = vld [vmem:[%s2166 + $0xb4c] sm:$0xff]
        %2895 = vst [vmem:[%s2167 + $0xb58] sm:$0xff] %v2894
        %v2896 = vld [vmem:[%s2166 + $0xb50] sm:$0xff]
        %2897 = vst [vmem:[%s2167 + $0xb60] sm:$0xff] %v2896
        %v2898 = vld [vmem:[%s2166 + $0xb54] sm:$0xff]
        %2899 = vst [vmem:[%s2167 + $0xb68] sm:$0xff] %v2898
        %v2900 = vld [vmem:[%s2166 + $0xb58] sm:$0xff]
        %2901 = vst [vmem:[%s2167 + $0xb70] sm:$0xff] %v2900
        %v2902 = vld [vmem:[%s2166 + $0xb5c] sm:$0xff]
        %2903 = vst [vmem:[%s2167 + $0xb78] sm:$0xff] %v2902
        %v2904 = vld [vmem:[%s2166 + $0xb80] sm:$0xff]
        %2905 = vst [vmem:[%s2167 + $0xb80] sm:$0xff] %v2904
        %v2906 = vld [vmem:[%s2166 + $0xb84] sm:$0xff]
        %2907 = vst [vmem:[%s2167 + $0xb88] sm:$0xff] %v2906
        %v2908 = vld [vmem:[%s2166 + $0xb88] sm:$0xff]
        %2909 = vst [vmem:[%s2167 + $0xb90] sm:$0xff] %v2908
        %v2910 = vld [vmem:[%s2166 + $0xb8c] sm:$0xff]
        %2911 = vst [vmem:[%s2167 + $0xb98] sm:$0xff] %v2910
        %v2912 = vld [vmem:[%s2166 + $0xb90] sm:$0xff]
        %2913 = vst [vmem:[%s2167 + $0xba0] sm:$0xff] %v2912
        %v2914 = vld [vmem:[%s2166 + $0xb94] sm:$0xff]
        %2915 = vst [vmem:[%s2167 + $0xba8] sm:$0xff] %v2914
        %v2916 = vld [vmem:[%s2166 + $0xb98] sm:$0xff]
        %2917 = vst [vmem:[%s2167 + $0xbb0] sm:$0xff] %v2916
        %v2918 = vld [vmem:[%s2166 + $0xb9c] sm:$0xff]
        %2919 = vst [vmem:[%s2167 + $0xbb8] sm:$0xff] %v2918
        %v2920 = vld [vmem:[%s2166 + $0xbc0] sm:$0xff]
        %2921 = vst [vmem:[%s2167 + $0xbc0] sm:$0xff] %v2920
        %v2922 = vld [vmem:[%s2166 + $0xbc4] sm:$0xff]
        %2923 = vst [vmem:[%s2167 + $0xbc8] sm:$0xff] %v2922
        %v2924 = vld [vmem:[%s2166 + $0xbc8] sm:$0xff]
        %2925 = vst [vmem:[%s2167 + $0xbd0] sm:$0xff] %v2924
        %v2926 = vld [vmem:[%s2166 + $0xbcc] sm:$0xff]
        %2927 = vst [vmem:[%s2167 + $0xbd8] sm:$0xff] %v2926
        %v2928 = vld [vmem:[%s2166 + $0xbd0] sm:$0xff]
        %2929 = vst [vmem:[%s2167 + $0xbe0] sm:$0xff] %v2928
        %v2930 = vld [vmem:[%s2166 + $0xbd4] sm:$0xff]
        %2931 = vst [vmem:[%s2167 + $0xbe8] sm:$0xff] %v2930
        %v2932 = vld [vmem:[%s2166 + $0xbd8] sm:$0xff]
        %2933 = vst [vmem:[%s2167 + $0xbf0] sm:$0xff] %v2932
        %v2934 = vld [vmem:[%s2166 + $0xbdc] sm:$0xff]
        %2935 = vst [vmem:[%s2167 + $0xbf8] sm:$0xff] %v2934
        %v2936 = vld [vmem:[%s2166 + $0xc00] sm:$0xff]
        %2937 = vst [vmem:[%s2167 + $0xc00] sm:$0xff] %v2936
        %v2938 = vld [vmem:[%s2166 + $0xc04] sm:$0xff]
        %2939 = vst [vmem:[%s2167 + $0xc08] sm:$0xff] %v2938
        %v2940 = vld [vmem:[%s2166 + $0xc08] sm:$0xff]
        %2941 = vst [vmem:[%s2167 + $0xc10] sm:$0xff] %v2940
        %v2942 = vld [vmem:[%s2166 + $0xc0c] sm:$0xff]
        %2943 = vst [vmem:[%s2167 + $0xc18] sm:$0xff] %v2942
        %v2944 = vld [vmem:[%s2166 + $0xc10] sm:$0xff]
        %2945 = vst [vmem:[%s2167 + $0xc20] sm:$0xff] %v2944
        %v2946 = vld [vmem:[%s2166 + $0xc14] sm:$0xff]
        %2947 = vst [vmem:[%s2167 + $0xc28] sm:$0xff] %v2946
        %v2948 = vld [vmem:[%s2166 + $0xc18] sm:$0xff]
        %2949 = vst [vmem:[%s2167 + $0xc30] sm:$0xff] %v2948
        %v2950 = vld [vmem:[%s2166 + $0xc1c] sm:$0xff]
        %2951 = vst [vmem:[%s2167 + $0xc38] sm:$0xff] %v2950
        %v2952 = vld [vmem:[%s2166 + $0xc40] sm:$0xff]
        %2953 = vst [vmem:[%s2167 + $0xc40] sm:$0xff] %v2952
        %v2954 = vld [vmem:[%s2166 + $0xc44] sm:$0xff]
        %2955 = vst [vmem:[%s2167 + $0xc48] sm:$0xff] %v2954
        %v2956 = vld [vmem:[%s2166 + $0xc48] sm:$0xff]
        %2957 = vst [vmem:[%s2167 + $0xc50] sm:$0xff] %v2956
        %v2958 = vld [vmem:[%s2166 + $0xc4c] sm:$0xff]
        %2959 = vst [vmem:[%s2167 + $0xc58] sm:$0xff] %v2958
        %v2960 = vld [vmem:[%s2166 + $0xc50] sm:$0xff]
        %2961 = vst [vmem:[%s2167 + $0xc60] sm:$0xff] %v2960
        %v2962 = vld [vmem:[%s2166 + $0xc54] sm:$0xff]
        %2963 = vst [vmem:[%s2167 + $0xc68] sm:$0xff] %v2962
        %v2964 = vld [vmem:[%s2166 + $0xc58] sm:$0xff]
        %2965 = vst [vmem:[%s2167 + $0xc70] sm:$0xff] %v2964
        %v2966 = vld [vmem:[%s2166 + $0xc5c] sm:$0xff]
        %2967 = vst [vmem:[%s2167 + $0xc78] sm:$0xff] %v2966
        %v2968 = vld [vmem:[%s2166 + $0xc80] sm:$0xff]
        %2969 = vst [vmem:[%s2167 + $0xc80] sm:$0xff] %v2968
        %v2970 = vld [vmem:[%s2166 + $0xc84] sm:$0xff]
        %2971 = vst [vmem:[%s2167 + $0xc88] sm:$0xff] %v2970
        %v2972 = vld [vmem:[%s2166 + $0xc88] sm:$0xff]
        %2973 = vst [vmem:[%s2167 + $0xc90] sm:$0xff] %v2972
        %v2974 = vld [vmem:[%s2166 + $0xc8c] sm:$0xff]
        %2975 = vst [vmem:[%s2167 + $0xc98] sm:$0xff] %v2974
        %v2976 = vld [vmem:[%s2166 + $0xc90] sm:$0xff]
        %2977 = vst [vmem:[%s2167 + $0xca0] sm:$0xff] %v2976
        %v2978 = vld [vmem:[%s2166 + $0xc94] sm:$0xff]
        %2979 = vst [vmem:[%s2167 + $0xca8] sm:$0xff] %v2978
        %v2980 = vld [vmem:[%s2166 + $0xc98] sm:$0xff]
        %2981 = vst [vmem:[%s2167 + $0xcb0] sm:$0xff] %v2980
        %v2982 = vld [vmem:[%s2166 + $0xc9c] sm:$0xff]
        %2983 = vst [vmem:[%s2167 + $0xcb8] sm:$0xff] %v2982
        %v2984 = vld [vmem:[%s2166 + $0xcc0] sm:$0xff]
        %2985 = vst [vmem:[%s2167 + $0xcc0] sm:$0xff] %v2984
        %v2986 = vld [vmem:[%s2166 + $0xcc4] sm:$0xff]
        %2987 = vst [vmem:[%s2167 + $0xcc8] sm:$0xff] %v2986
        %v2988 = vld [vmem:[%s2166 + $0xcc8] sm:$0xff]
        %2989 = vst [vmem:[%s2167 + $0xcd0] sm:$0xff] %v2988
        %v2990 = vld [vmem:[%s2166 + $0xccc] sm:$0xff]
        %2991 = vst [vmem:[%s2167 + $0xcd8] sm:$0xff] %v2990
        %v2992 = vld [vmem:[%s2166 + $0xcd0] sm:$0xff]
        %2993 = vst [vmem:[%s2167 + $0xce0] sm:$0xff] %v2992
        %v2994 = vld [vmem:[%s2166 + $0xcd4] sm:$0xff]
        %2995 = vst [vmem:[%s2167 + $0xce8] sm:$0xff] %v2994
        %v2996 = vld [vmem:[%s2166 + $0xcd8] sm:$0xff]
        %2997 = vst [vmem:[%s2167 + $0xcf0] sm:$0xff] %v2996
        %v2998 = vld [vmem:[%s2166 + $0xcdc] sm:$0xff]
        %2999 = vst [vmem:[%s2167 + $0xcf8] sm:$0xff] %v2998
        %v3000 = vld [vmem:[%s2166 + $0xd00] sm:$0xff]
        %3001 = vst [vmem:[%s2167 + $0xd00] sm:$0xff] %v3000
        %v3002 = vld [vmem:[%s2166 + $0xd04] sm:$0xff]
        %3003 = vst [vmem:[%s2167 + $0xd08] sm:$0xff] %v3002
        %v3004 = vld [vmem:[%s2166 + $0xd08] sm:$0xff]
        %3005 = vst [vmem:[%s2167 + $0xd10] sm:$0xff] %v3004
        %v3006 = vld [vmem:[%s2166 + $0xd0c] sm:$0xff]
        %3007 = vst [vmem:[%s2167 + $0xd18] sm:$0xff] %v3006
        %v3008 = vld [vmem:[%s2166 + $0xd10] sm:$0xff]
        %3009 = vst [vmem:[%s2167 + $0xd20] sm:$0xff] %v3008
        %v3010 = vld [vmem:[%s2166 + $0xd14] sm:$0xff]
        %3011 = vst [vmem:[%s2167 + $0xd28] sm:$0xff] %v3010
        %v3012 = vld [vmem:[%s2166 + $0xd18] sm:$0xff]
        %3013 = vst [vmem:[%s2167 + $0xd30] sm:$0xff] %v3012
        %v3014 = vld [vmem:[%s2166 + $0xd1c] sm:$0xff]
        %3015 = vst [vmem:[%s2167 + $0xd38] sm:$0xff] %v3014
        %v3016 = vld [vmem:[%s2166 + $0xd40] sm:$0xff]
        %3017 = vst [vmem:[%s2167 + $0xd40] sm:$0xff] %v3016
        %v3018 = vld [vmem:[%s2166 + $0xd44] sm:$0xff]
        %3019 = vst [vmem:[%s2167 + $0xd48] sm:$0xff] %v3018
        %v3020 = vld [vmem:[%s2166 + $0xd48] sm:$0xff]
        %3021 = vst [vmem:[%s2167 + $0xd50] sm:$0xff] %v3020
        %v3022 = vld [vmem:[%s2166 + $0xd4c] sm:$0xff]
        %3023 = vst [vmem:[%s2167 + $0xd58] sm:$0xff] %v3022
        %v3024 = vld [vmem:[%s2166 + $0xd50] sm:$0xff]
        %3025 = vst [vmem:[%s2167 + $0xd60] sm:$0xff] %v3024
        %v3026 = vld [vmem:[%s2166 + $0xd54] sm:$0xff]
        %3027 = vst [vmem:[%s2167 + $0xd68] sm:$0xff] %v3026
        %v3028 = vld [vmem:[%s2166 + $0xd58] sm:$0xff]
        %3029 = vst [vmem:[%s2167 + $0xd70] sm:$0xff] %v3028
        %v3030 = vld [vmem:[%s2166 + $0xd5c] sm:$0xff]
        %3031 = vst [vmem:[%s2167 + $0xd78] sm:$0xff] %v3030
        %v3032 = vld [vmem:[%s2166 + $0xd80] sm:$0xff]
        %3033 = vst [vmem:[%s2167 + $0xd80] sm:$0xff] %v3032
        %v3034 = vld [vmem:[%s2166 + $0xd84] sm:$0xff]
        %3035 = vst [vmem:[%s2167 + $0xd88] sm:$0xff] %v3034
        %v3036 = vld [vmem:[%s2166 + $0xd88] sm:$0xff]
        %3037 = vst [vmem:[%s2167 + $0xd90] sm:$0xff] %v3036
        %v3038 = vld [vmem:[%s2166 + $0xd8c] sm:$0xff]
        %3039 = vst [vmem:[%s2167 + $0xd98] sm:$0xff] %v3038
        %v3040 = vld [vmem:[%s2166 + $0xd90] sm:$0xff]
        %3041 = vst [vmem:[%s2167 + $0xda0] sm:$0xff] %v3040
        %v3042 = vld [vmem:[%s2166 + $0xd94] sm:$0xff]
        %3043 = vst [vmem:[%s2167 + $0xda8] sm:$0xff] %v3042
        %v3044 = vld [vmem:[%s2166 + $0xd98] sm:$0xff]
        %3045 = vst [vmem:[%s2167 + $0xdb0] sm:$0xff] %v3044
        %v3046 = vld [vmem:[%s2166 + $0xd9c] sm:$0xff]
        %3047 = vst [vmem:[%s2167 + $0xdb8] sm:$0xff] %v3046
        %v3048 = vld [vmem:[%s2166 + $0xdc0] sm:$0xff]
        %3049 = vst [vmem:[%s2167 + $0xdc0] sm:$0xff] %v3048
        %v3050 = vld [vmem:[%s2166 + $0xdc4] sm:$0xff]
        %3051 = vst [vmem:[%s2167 + $0xdc8] sm:$0xff] %v3050
        %v3052 = vld [vmem:[%s2166 + $0xdc8] sm:$0xff]
        %3053 = vst [vmem:[%s2167 + $0xdd0] sm:$0xff] %v3052
        %v3054 = vld [vmem:[%s2166 + $0xdcc] sm:$0xff]
        %3055 = vst [vmem:[%s2167 + $0xdd8] sm:$0xff] %v3054
        %v3056 = vld [vmem:[%s2166 + $0xdd0] sm:$0xff]
        %3057 = vst [vmem:[%s2167 + $0xde0] sm:$0xff] %v3056
        %v3058 = vld [vmem:[%s2166 + $0xdd4] sm:$0xff]
        %3059 = vst [vmem:[%s2167 + $0xde8] sm:$0xff] %v3058
        %v3060 = vld [vmem:[%s2166 + $0xdd8] sm:$0xff]
        %3061 = vst [vmem:[%s2167 + $0xdf0] sm:$0xff] %v3060
        %v3062 = vld [vmem:[%s2166 + $0xddc] sm:$0xff]
        %3063 = vst [vmem:[%s2167 + $0xdf8] sm:$0xff] %v3062
        %v3064 = vld [vmem:[%s2166 + $0xe00] sm:$0xff]
        %3065 = vst [vmem:[%s2167 + $0xe00] sm:$0xff] %v3064
        %v3066 = vld [vmem:[%s2166 + $0xe04] sm:$0xff]
        %3067 = vst [vmem:[%s2167 + $0xe08] sm:$0xff] %v3066
        %v3068 = vld [vmem:[%s2166 + $0xe08] sm:$0xff]
        %3069 = vst [vmem:[%s2167 + $0xe10] sm:$0xff] %v3068
        %v3070 = vld [vmem:[%s2166 + $0xe0c] sm:$0xff]
        %3071 = vst [vmem:[%s2167 + $0xe18] sm:$0xff] %v3070
        %v3072 = vld [vmem:[%s2166 + $0xe10] sm:$0xff]
        %3073 = vst [vmem:[%s2167 + $0xe20] sm:$0xff] %v3072
        %v3074 = vld [vmem:[%s2166 + $0xe14] sm:$0xff]
        %3075 = vst [vmem:[%s2167 + $0xe28] sm:$0xff] %v3074
        %v3076 = vld [vmem:[%s2166 + $0xe18] sm:$0xff]
        %3077 = vst [vmem:[%s2167 + $0xe30] sm:$0xff] %v3076
        %v3078 = vld [vmem:[%s2166 + $0xe1c] sm:$0xff]
        %3079 = vst [vmem:[%s2167 + $0xe38] sm:$0xff] %v3078
        %v3080 = vld [vmem:[%s2166 + $0xe40] sm:$0xff]
        %3081 = vst [vmem:[%s2167 + $0xe40] sm:$0xff] %v3080
        %v3082 = vld [vmem:[%s2166 + $0xe44] sm:$0xff]
        %3083 = vst [vmem:[%s2167 + $0xe48] sm:$0xff] %v3082
        %v3084 = vld [vmem:[%s2166 + $0xe48] sm:$0xff]
        %3085 = vst [vmem:[%s2167 + $0xe50] sm:$0xff] %v3084
        %v3086 = vld [vmem:[%s2166 + $0xe4c] sm:$0xff]
        %3087 = vst [vmem:[%s2167 + $0xe58] sm:$0xff] %v3086
        %v3088 = vld [vmem:[%s2166 + $0xe50] sm:$0xff]
        %3089 = vst [vmem:[%s2167 + $0xe60] sm:$0xff] %v3088
        %v3090 = vld [vmem:[%s2166 + $0xe54] sm:$0xff]
        %3091 = vst [vmem:[%s2167 + $0xe68] sm:$0xff] %v3090
        %v3092 = vld [vmem:[%s2166 + $0xe58] sm:$0xff]
        %3093 = vst [vmem:[%s2167 + $0xe70] sm:$0xff] %v3092
        %v3094 = vld [vmem:[%s2166 + $0xe5c] sm:$0xff]
        %3095 = vst [vmem:[%s2167 + $0xe78] sm:$0xff] %v3094
        %v3096 = vld [vmem:[%s2166 + $0xe80] sm:$0xff]
        %3097 = vst [vmem:[%s2167 + $0xe80] sm:$0xff] %v3096
        %v3098 = vld [vmem:[%s2166 + $0xe84] sm:$0xff]
        %3099 = vst [vmem:[%s2167 + $0xe88] sm:$0xff] %v3098
        %v3100 = vld [vmem:[%s2166 + $0xe88] sm:$0xff]
        %3101 = vst [vmem:[%s2167 + $0xe90] sm:$0xff] %v3100
        %v3102 = vld [vmem:[%s2166 + $0xe8c] sm:$0xff]
        %3103 = vst [vmem:[%s2167 + $0xe98] sm:$0xff] %v3102
        %v3104 = vld [vmem:[%s2166 + $0xe90] sm:$0xff]
        %3105 = vst [vmem:[%s2167 + $0xea0] sm:$0xff] %v3104
        %v3106 = vld [vmem:[%s2166 + $0xe94] sm:$0xff]
        %3107 = vst [vmem:[%s2167 + $0xea8] sm:$0xff] %v3106
        %v3108 = vld [vmem:[%s2166 + $0xe98] sm:$0xff]
        %3109 = vst [vmem:[%s2167 + $0xeb0] sm:$0xff] %v3108
        %v3110 = vld [vmem:[%s2166 + $0xe9c] sm:$0xff]
        %3111 = vst [vmem:[%s2167 + $0xeb8] sm:$0xff] %v3110
        %v3112 = vld [vmem:[%s2166 + $0xec0] sm:$0xff]
        %3113 = vst [vmem:[%s2167 + $0xec0] sm:$0xff] %v3112
        %v3114 = vld [vmem:[%s2166 + $0xec4] sm:$0xff]
        %3115 = vst [vmem:[%s2167 + $0xec8] sm:$0xff] %v3114
        %v3116 = vld [vmem:[%s2166 + $0xec8] sm:$0xff]
        %3117 = vst [vmem:[%s2167 + $0xed0] sm:$0xff] %v3116
        %v3118 = vld [vmem:[%s2166 + $0xecc] sm:$0xff]
        %3119 = vst [vmem:[%s2167 + $0xed8] sm:$0xff] %v3118
        %v3120 = vld [vmem:[%s2166 + $0xed0] sm:$0xff]
        %3121 = vst [vmem:[%s2167 + $0xee0] sm:$0xff] %v3120
        %v3122 = vld [vmem:[%s2166 + $0xed4] sm:$0xff]
        %3123 = vst [vmem:[%s2167 + $0xee8] sm:$0xff] %v3122
        %v3124 = vld [vmem:[%s2166 + $0xed8] sm:$0xff]
        %3125 = vst [vmem:[%s2167 + $0xef0] sm:$0xff] %v3124
        %v3126 = vld [vmem:[%s2166 + $0xedc] sm:$0xff]
        %3127 = vst [vmem:[%s2167 + $0xef8] sm:$0xff] %v3126
        %v3128 = vld [vmem:[%s2166 + $0xf00] sm:$0xff]
        %3129 = vst [vmem:[%s2167 + $0xf00] sm:$0xff] %v3128
        %v3130 = vld [vmem:[%s2166 + $0xf04] sm:$0xff]
        %3131 = vst [vmem:[%s2167 + $0xf08] sm:$0xff] %v3130
        %v3132 = vld [vmem:[%s2166 + $0xf08] sm:$0xff]
        %3133 = vst [vmem:[%s2167 + $0xf10] sm:$0xff] %v3132
        %v3134 = vld [vmem:[%s2166 + $0xf0c] sm:$0xff]
        %3135 = vst [vmem:[%s2167 + $0xf18] sm:$0xff] %v3134
        %v3136 = vld [vmem:[%s2166 + $0xf10] sm:$0xff]
        %3137 = vst [vmem:[%s2167 + $0xf20] sm:$0xff] %v3136
        %v3138 = vld [vmem:[%s2166 + $0xf14] sm:$0xff]
        %3139 = vst [vmem:[%s2167 + $0xf28] sm:$0xff] %v3138
        %v3140 = vld [vmem:[%s2166 + $0xf18] sm:$0xff]
        %3141 = vst [vmem:[%s2167 + $0xf30] sm:$0xff] %v3140
        %v3142 = vld [vmem:[%s2166 + $0xf1c] sm:$0xff]
        %3143 = vst [vmem:[%s2167 + $0xf38] sm:$0xff] %v3142
        %v3144 = vld [vmem:[%s2166 + $0xf40] sm:$0xff]
        %3145 = vst [vmem:[%s2167 + $0xf40] sm:$0xff] %v3144
        %v3146 = vld [vmem:[%s2166 + $0xf44] sm:$0xff]
        %3147 = vst [vmem:[%s2167 + $0xf48] sm:$0xff] %v3146
        %v3148 = vld [vmem:[%s2166 + $0xf48] sm:$0xff]
        %3149 = vst [vmem:[%s2167 + $0xf50] sm:$0xff] %v3148
        %v3150 = vld [vmem:[%s2166 + $0xf4c] sm:$0xff]
        %3151 = vst [vmem:[%s2167 + $0xf58] sm:$0xff] %v3150
        %v3152 = vld [vmem:[%s2166 + $0xf50] sm:$0xff]
        %3153 = vst [vmem:[%s2167 + $0xf60] sm:$0xff] %v3152
        %v3154 = vld [vmem:[%s2166 + $0xf54] sm:$0xff]
        %3155 = vst [vmem:[%s2167 + $0xf68] sm:$0xff] %v3154
        %v3156 = vld [vmem:[%s2166 + $0xf58] sm:$0xff]
        %3157 = vst [vmem:[%s2167 + $0xf70] sm:$0xff] %v3156
        %v3158 = vld [vmem:[%s2166 + $0xf5c] sm:$0xff]
        %3159 = vst [vmem:[%s2167 + $0xf78] sm:$0xff] %v3158
        %v3160 = vld [vmem:[%s2166 + $0xf80] sm:$0xff]
        %3161 = vst [vmem:[%s2167 + $0xf80] sm:$0xff] %v3160
        %v3162 = vld [vmem:[%s2166 + $0xf84] sm:$0xff]
        %3163 = vst [vmem:[%s2167 + $0xf88] sm:$0xff] %v3162
        %v3164 = vld [vmem:[%s2166 + $0xf88] sm:$0xff]
        %3165 = vst [vmem:[%s2167 + $0xf90] sm:$0xff] %v3164
        %v3166 = vld [vmem:[%s2166 + $0xf8c] sm:$0xff]
        %3167 = vst [vmem:[%s2167 + $0xf98] sm:$0xff] %v3166
        %v3168 = vld [vmem:[%s2166 + $0xf90] sm:$0xff]
        %3169 = vst [vmem:[%s2167 + $0xfa0] sm:$0xff] %v3168
        %v3170 = vld [vmem:[%s2166 + $0xf94] sm:$0xff]
        %3171 = vst [vmem:[%s2167 + $0xfa8] sm:$0xff] %v3170
        %v3172 = vld [vmem:[%s2166 + $0xf98] sm:$0xff]
        %3173 = vst [vmem:[%s2167 + $0xfb0] sm:$0xff] %v3172
        %v3174 = vld [vmem:[%s2166 + $0xf9c] sm:$0xff]
        %3175 = vst [vmem:[%s2167 + $0xfb8] sm:$0xff] %v3174
        %v3176 = vld [vmem:[%s2166 + $0xfc0] sm:$0xff]
        %3177 = vst [vmem:[%s2167 + $0xfc0] sm:$0xff] %v3176
        %v3178 = vld [vmem:[%s2166 + $0xfc4] sm:$0xff]
        %3179 = vst [vmem:[%s2167 + $0xfc8] sm:$0xff] %v3178
        %v3180 = vld [vmem:[%s2166 + $0xfc8] sm:$0xff]
        %3181 = vst [vmem:[%s2167 + $0xfd0] sm:$0xff] %v3180
        %v3182 = vld [vmem:[%s2166 + $0xfcc] sm:$0xff]
        %3183 = vst [vmem:[%s2167 + $0xfd8] sm:$0xff] %v3182
        %v3184 = vld [vmem:[%s2166 + $0xfd0] sm:$0xff]
        %3185 = vst [vmem:[%s2167 + $0xfe0] sm:$0xff] %v3184
        %v3186 = vld [vmem:[%s2166 + $0xfd4] sm:$0xff]
        %3187 = vst [vmem:[%s2167 + $0xfe8] sm:$0xff] %v3186
        %v3188 = vld [vmem:[%s2166 + $0xfd8] sm:$0xff]
        %3189 = vst [vmem:[%s2167 + $0xff0] sm:$0xff] %v3188
        %v3190 = vld [vmem:[%s2166 + $0xfdc] sm:$0xff]
        %3191 = vst [vmem:[%s2167 + $0xff8] sm:$0xff] %v3190
        %s3192 = sadd.s32 1, %s2165
        %p3193 = scmp.ge.s32.totalorder %s3192, %s2152
        %s3194 = scalar_select %p3193, 0, %s3192
        %s3195 = sadd.s32 1, %s2164
        %s3196 = scalar_select %p3193, %s3195, %s2164
        %p3197 = scmp.ge.s32.totalorder %s3196, 2
        %s3198 = scalar_select %p3197, 0, %s3196
        %s3199 = smul.u32 %s3198, 32
        %s3200 = smul.u32 %s3194, 8
        %s3201 = sadd.s32 %s3199, %s3200
        %s3202 = smul.u32 %s3198, 4
        %s3203 = smul.u32 %s3194, 8
        %s3204 = sadd.s32 %s3202, %s3203
        %s3205 = scalar_lea.vmem %s5, %s3201
        %s3206 = scalar_lea.vmem [#allocation2], %s3204
      $region68: #{_lambda_.1} parent=62 // loop_footer
        %s2161 = sadd.s32 %s2159, 1
      $region69: #{_lambda_.1} parent=62 // loop_footer_branch
        %2158 = sbr.rel target = $region65
      $region70: #{_lambda_.1} parent=62 // loop_exit
        _
      %s3207 = sshllo.u32 0, %s2147
      loop: start=0, step=1, limit=2
      $region71: #{_lambda_.1} parent=62 // loop_pre_header
        _
      $region72: #{_lambda_.1} parent=62 // loop_header
        %s3211 = sphi 0, %s3215
        %p3212 = scmp.ge.s32.totalorder %s3211, 2
        %s3216 = sphi 0, %s4245
        %s3217 = sphi %s2149, %s4248
        %s3218 = sphi %s2151, %s4249
      $region73: #{_lambda_.1} parent=62 // loop_header_branch
        %3214 = sbr.rel (%p3212) target = $region77
      $region74: #{_lambda_.1} parent=62 // loop_body
        %v3219 = vld [vmem:[%s3217] sm:%s3207]
        %3220 = vst [vmem:[%s3218] sm:%s3207] %v3219
        %v3221 = vld [vmem:[%s3217 + $0x4] sm:%s3207]
        %3222 = vst [vmem:[%s3218 + $0x8] sm:%s3207] %v3221
        %v3223 = vld [vmem:[%s3217 + $0x8] sm:%s3207]
        %3224 = vst [vmem:[%s3218 + $0x10] sm:%s3207] %v3223
        %v3225 = vld [vmem:[%s3217 + $0xc] sm:%s3207]
        %3226 = vst [vmem:[%s3218 + $0x18] sm:%s3207] %v3225
        %v3227 = vld [vmem:[%s3217 + $0x10] sm:%s3207]
        %3228 = vst [vmem:[%s3218 + $0x20] sm:%s3207] %v3227
        %v3229 = vld [vmem:[%s3217 + $0x14] sm:%s3207]
        %3230 = vst [vmem:[%s3218 + $0x28] sm:%s3207] %v3229
        %v3231 = vld [vmem:[%s3217 + $0x18] sm:%s3207]
        %3232 = vst [vmem:[%s3218 + $0x30] sm:%s3207] %v3231
        %v3233 = vld [vmem:[%s3217 + $0x1c] sm:%s3207]
        %3234 = vst [vmem:[%s3218 + $0x38] sm:%s3207] %v3233
        %v3235 = vld [vmem:[%s3217 + $0x40] sm:%s3207]
        %3236 = vst [vmem:[%s3218 + $0x40] sm:%s3207] %v3235
        %v3237 = vld [vmem:[%s3217 + $0x44] sm:%s3207]
        %3238 = vst [vmem:[%s3218 + $0x48] sm:%s3207] %v3237
        %v3239 = vld [vmem:[%s3217 + $0x48] sm:%s3207]
        %3240 = vst [vmem:[%s3218 + $0x50] sm:%s3207] %v3239
        %v3241 = vld [vmem:[%s3217 + $0x4c] sm:%s3207]
        %3242 = vst [vmem:[%s3218 + $0x58] sm:%s3207] %v3241
        %v3243 = vld [vmem:[%s3217 + $0x50] sm:%s3207]
        %3244 = vst [vmem:[%s3218 + $0x60] sm:%s3207] %v3243
        %v3245 = vld [vmem:[%s3217 + $0x54] sm:%s3207]
        %3246 = vst [vmem:[%s3218 + $0x68] sm:%s3207] %v3245
        %v3247 = vld [vmem:[%s3217 + $0x58] sm:%s3207]
        %3248 = vst [vmem:[%s3218 + $0x70] sm:%s3207] %v3247
        %v3249 = vld [vmem:[%s3217 + $0x5c] sm:%s3207]
        %3250 = vst [vmem:[%s3218 + $0x78] sm:%s3207] %v3249
        %v3251 = vld [vmem:[%s3217 + $0x80] sm:%s3207]
        %3252 = vst [vmem:[%s3218 + $0x80] sm:%s3207] %v3251
        %v3253 = vld [vmem:[%s3217 + $0x84] sm:%s3207]
        %3254 = vst [vmem:[%s3218 + $0x88] sm:%s3207] %v3253
        %v3255 = vld [vmem:[%s3217 + $0x88] sm:%s3207]
        %3256 = vst [vmem:[%s3218 + $0x90] sm:%s3207] %v3255
        %v3257 = vld [vmem:[%s3217 + $0x8c] sm:%s3207]
        %3258 = vst [vmem:[%s3218 + $0x98] sm:%s3207] %v3257
        %v3259 = vld [vmem:[%s3217 + $0x90] sm:%s3207]
        %3260 = vst [vmem:[%s3218 + $0xa0] sm:%s3207] %v3259
        %v3261 = vld [vmem:[%s3217 + $0x94] sm:%s3207]
        %3262 = vst [vmem:[%s3218 + $0xa8] sm:%s3207] %v3261
        %v3263 = vld [vmem:[%s3217 + $0x98] sm:%s3207]
        %3264 = vst [vmem:[%s3218 + $0xb0] sm:%s3207] %v3263
        %v3265 = vld [vmem:[%s3217 + $0x9c] sm:%s3207]
        %3266 = vst [vmem:[%s3218 + $0xb8] sm:%s3207] %v3265
        %v3267 = vld [vmem:[%s3217 + $0xc0] sm:%s3207]
        %3268 = vst [vmem:[%s3218 + $0xc0] sm:%s3207] %v3267
        %v3269 = vld [vmem:[%s3217 + $0xc4] sm:%s3207]
        %3270 = vst [vmem:[%s3218 + $0xc8] sm:%s3207] %v3269
        %v3271 = vld [vmem:[%s3217 + $0xc8] sm:%s3207]
        %3272 = vst [vmem:[%s3218 + $0xd0] sm:%s3207] %v3271
        %v3273 = vld [vmem:[%s3217 + $0xcc] sm:%s3207]
        %3274 = vst [vmem:[%s3218 + $0xd8] sm:%s3207] %v3273
        %v3275 = vld [vmem:[%s3217 + $0xd0] sm:%s3207]
        %3276 = vst [vmem:[%s3218 + $0xe0] sm:%s3207] %v3275
        %v3277 = vld [vmem:[%s3217 + $0xd4] sm:%s3207]
        %3278 = vst [vmem:[%s3218 + $0xe8] sm:%s3207] %v3277
        %v3279 = vld [vmem:[%s3217 + $0xd8] sm:%s3207]
        %3280 = vst [vmem:[%s3218 + $0xf0] sm:%s3207] %v3279
        %v3281 = vld [vmem:[%s3217 + $0xdc] sm:%s3207]
        %3282 = vst [vmem:[%s3218 + $0xf8] sm:%s3207] %v3281
        %v3283 = vld [vmem:[%s3217 + $0x100] sm:%s3207]
        %3284 = vst [vmem:[%s3218 + $0x100] sm:%s3207] %v3283
        %v3285 = vld [vmem:[%s3217 + $0x104] sm:%s3207]
        %3286 = vst [vmem:[%s3218 + $0x108] sm:%s3207] %v3285
        %v3287 = vld [vmem:[%s3217 + $0x108] sm:%s3207]
        %3288 = vst [vmem:[%s3218 + $0x110] sm:%s3207] %v3287
        %v3289 = vld [vmem:[%s3217 + $0x10c] sm:%s3207]
        %3290 = vst [vmem:[%s3218 + $0x118] sm:%s3207] %v3289
        %v3291 = vld [vmem:[%s3217 + $0x110] sm:%s3207]
        %3292 = vst [vmem:[%s3218 + $0x120] sm:%s3207] %v3291
        %v3293 = vld [vmem:[%s3217 + $0x114] sm:%s3207]
        %3294 = vst [vmem:[%s3218 + $0x128] sm:%s3207] %v3293
        %v3295 = vld [vmem:[%s3217 + $0x118] sm:%s3207]
        %3296 = vst [vmem:[%s3218 + $0x130] sm:%s3207] %v3295
        %v3297 = vld [vmem:[%s3217 + $0x11c] sm:%s3207]
        %3298 = vst [vmem:[%s3218 + $0x138] sm:%s3207] %v3297
        %v3299 = vld [vmem:[%s3217 + $0x140] sm:%s3207]
        %3300 = vst [vmem:[%s3218 + $0x140] sm:%s3207] %v3299
        %v3301 = vld [vmem:[%s3217 + $0x144] sm:%s3207]
        %3302 = vst [vmem:[%s3218 + $0x148] sm:%s3207] %v3301
        %v3303 = vld [vmem:[%s3217 + $0x148] sm:%s3207]
        %3304 = vst [vmem:[%s3218 + $0x150] sm:%s3207] %v3303
        %v3305 = vld [vmem:[%s3217 + $0x14c] sm:%s3207]
        %3306 = vst [vmem:[%s3218 + $0x158] sm:%s3207] %v3305
        %v3307 = vld [vmem:[%s3217 + $0x150] sm:%s3207]
        %3308 = vst [vmem:[%s3218 + $0x160] sm:%s3207] %v3307
        %v3309 = vld [vmem:[%s3217 + $0x154] sm:%s3207]
        %3310 = vst [vmem:[%s3218 + $0x168] sm:%s3207] %v3309
        %v3311 = vld [vmem:[%s3217 + $0x158] sm:%s3207]
        %3312 = vst [vmem:[%s3218 + $0x170] sm:%s3207] %v3311
        %v3313 = vld [vmem:[%s3217 + $0x15c] sm:%s3207]
        %3314 = vst [vmem:[%s3218 + $0x178] sm:%s3207] %v3313
        %v3315 = vld [vmem:[%s3217 + $0x180] sm:%s3207]
        %3316 = vst [vmem:[%s3218 + $0x180] sm:%s3207] %v3315
        %v3317 = vld [vmem:[%s3217 + $0x184] sm:%s3207]
        %3318 = vst [vmem:[%s3218 + $0x188] sm:%s3207] %v3317
        %v3319 = vld [vmem:[%s3217 + $0x188] sm:%s3207]
        %3320 = vst [vmem:[%s3218 + $0x190] sm:%s3207] %v3319
        %v3321 = vld [vmem:[%s3217 + $0x18c] sm:%s3207]
        %3322 = vst [vmem:[%s3218 + $0x198] sm:%s3207] %v3321
        %v3323 = vld [vmem:[%s3217 + $0x190] sm:%s3207]
        %3324 = vst [vmem:[%s3218 + $0x1a0] sm:%s3207] %v3323
        %v3325 = vld [vmem:[%s3217 + $0x194] sm:%s3207]
        %3326 = vst [vmem:[%s3218 + $0x1a8] sm:%s3207] %v3325
        %v3327 = vld [vmem:[%s3217 + $0x198] sm:%s3207]
        %3328 = vst [vmem:[%s3218 + $0x1b0] sm:%s3207] %v3327
        %v3329 = vld [vmem:[%s3217 + $0x19c] sm:%s3207]
        %3330 = vst [vmem:[%s3218 + $0x1b8] sm:%s3207] %v3329
        %v3331 = vld [vmem:[%s3217 + $0x1c0] sm:%s3207]
        %3332 = vst [vmem:[%s3218 + $0x1c0] sm:%s3207] %v3331
        %v3333 = vld [vmem:[%s3217 + $0x1c4] sm:%s3207]
        %3334 = vst [vmem:[%s3218 + $0x1c8] sm:%s3207] %v3333
        %v3335 = vld [vmem:[%s3217 + $0x1c8] sm:%s3207]
        %3336 = vst [vmem:[%s3218 + $0x1d0] sm:%s3207] %v3335
        %v3337 = vld [vmem:[%s3217 + $0x1cc] sm:%s3207]
        %3338 = vst [vmem:[%s3218 + $0x1d8] sm:%s3207] %v3337
        %v3339 = vld [vmem:[%s3217 + $0x1d0] sm:%s3207]
        %3340 = vst [vmem:[%s3218 + $0x1e0] sm:%s3207] %v3339
        %v3341 = vld [vmem:[%s3217 + $0x1d4] sm:%s3207]
        %3342 = vst [vmem:[%s3218 + $0x1e8] sm:%s3207] %v3341
        %v3343 = vld [vmem:[%s3217 + $0x1d8] sm:%s3207]
        %3344 = vst [vmem:[%s3218 + $0x1f0] sm:%s3207] %v3343
        %v3345 = vld [vmem:[%s3217 + $0x1dc] sm:%s3207]
        %3346 = vst [vmem:[%s3218 + $0x1f8] sm:%s3207] %v3345
        %v3347 = vld [vmem:[%s3217 + $0x200] sm:%s3207]
        %3348 = vst [vmem:[%s3218 + $0x200] sm:%s3207] %v3347
        %v3349 = vld [vmem:[%s3217 + $0x204] sm:%s3207]
        %3350 = vst [vmem:[%s3218 + $0x208] sm:%s3207] %v3349
        %v3351 = vld [vmem:[%s3217 + $0x208] sm:%s3207]
        %3352 = vst [vmem:[%s3218 + $0x210] sm:%s3207] %v3351
        %v3353 = vld [vmem:[%s3217 + $0x20c] sm:%s3207]
        %3354 = vst [vmem:[%s3218 + $0x218] sm:%s3207] %v3353
        %v3355 = vld [vmem:[%s3217 + $0x210] sm:%s3207]
        %3356 = vst [vmem:[%s3218 + $0x220] sm:%s3207] %v3355
        %v3357 = vld [vmem:[%s3217 + $0x214] sm:%s3207]
        %3358 = vst [vmem:[%s3218 + $0x228] sm:%s3207] %v3357
        %v3359 = vld [vmem:[%s3217 + $0x218] sm:%s3207]
        %3360 = vst [vmem:[%s3218 + $0x230] sm:%s3207] %v3359
        %v3361 = vld [vmem:[%s3217 + $0x21c] sm:%s3207]
        %3362 = vst [vmem:[%s3218 + $0x238] sm:%s3207] %v3361
        %v3363 = vld [vmem:[%s3217 + $0x240] sm:%s3207]
        %3364 = vst [vmem:[%s3218 + $0x240] sm:%s3207] %v3363
        %v3365 = vld [vmem:[%s3217 + $0x244] sm:%s3207]
        %3366 = vst [vmem:[%s3218 + $0x248] sm:%s3207] %v3365
        %v3367 = vld [vmem:[%s3217 + $0x248] sm:%s3207]
        %3368 = vst [vmem:[%s3218 + $0x250] sm:%s3207] %v3367
        %v3369 = vld [vmem:[%s3217 + $0x24c] sm:%s3207]
        %3370 = vst [vmem:[%s3218 + $0x258] sm:%s3207] %v3369
        %v3371 = vld [vmem:[%s3217 + $0x250] sm:%s3207]
        %3372 = vst [vmem:[%s3218 + $0x260] sm:%s3207] %v3371
        %v3373 = vld [vmem:[%s3217 + $0x254] sm:%s3207]
        %3374 = vst [vmem:[%s3218 + $0x268] sm:%s3207] %v3373
        %v3375 = vld [vmem:[%s3217 + $0x258] sm:%s3207]
        %3376 = vst [vmem:[%s3218 + $0x270] sm:%s3207] %v3375
        %v3377 = vld [vmem:[%s3217 + $0x25c] sm:%s3207]
        %3378 = vst [vmem:[%s3218 + $0x278] sm:%s3207] %v3377
        %v3379 = vld [vmem:[%s3217 + $0x280] sm:%s3207]
        %3380 = vst [vmem:[%s3218 + $0x280] sm:%s3207] %v3379
        %v3381 = vld [vmem:[%s3217 + $0x284] sm:%s3207]
        %3382 = vst [vmem:[%s3218 + $0x288] sm:%s3207] %v3381
        %v3383 = vld [vmem:[%s3217 + $0x288] sm:%s3207]
        %3384 = vst [vmem:[%s3218 + $0x290] sm:%s3207] %v3383
        %v3385 = vld [vmem:[%s3217 + $0x28c] sm:%s3207]
        %3386 = vst [vmem:[%s3218 + $0x298] sm:%s3207] %v3385
        %v3387 = vld [vmem:[%s3217 + $0x290] sm:%s3207]
        %3388 = vst [vmem:[%s3218 + $0x2a0] sm:%s3207] %v3387
        %v3389 = vld [vmem:[%s3217 + $0x294] sm:%s3207]
        %3390 = vst [vmem:[%s3218 + $0x2a8] sm:%s3207] %v3389
        %v3391 = vld [vmem:[%s3217 + $0x298] sm:%s3207]
        %3392 = vst [vmem:[%s3218 + $0x2b0] sm:%s3207] %v3391
        %v3393 = vld [vmem:[%s3217 + $0x29c] sm:%s3207]
        %3394 = vst [vmem:[%s3218 + $0x2b8] sm:%s3207] %v3393
        %v3395 = vld [vmem:[%s3217 + $0x2c0] sm:%s3207]
        %3396 = vst [vmem:[%s3218 + $0x2c0] sm:%s3207] %v3395
        %v3397 = vld [vmem:[%s3217 + $0x2c4] sm:%s3207]
        %3398 = vst [vmem:[%s3218 + $0x2c8] sm:%s3207] %v3397
        %v3399 = vld [vmem:[%s3217 + $0x2c8] sm:%s3207]
        %3400 = vst [vmem:[%s3218 + $0x2d0] sm:%s3207] %v3399
        %v3401 = vld [vmem:[%s3217 + $0x2cc] sm:%s3207]
        %3402 = vst [vmem:[%s3218 + $0x2d8] sm:%s3207] %v3401
        %v3403 = vld [vmem:[%s3217 + $0x2d0] sm:%s3207]
        %3404 = vst [vmem:[%s3218 + $0x2e0] sm:%s3207] %v3403
        %v3405 = vld [vmem:[%s3217 + $0x2d4] sm:%s3207]
        %3406 = vst [vmem:[%s3218 + $0x2e8] sm:%s3207] %v3405
        %v3407 = vld [vmem:[%s3217 + $0x2d8] sm:%s3207]
        %3408 = vst [vmem:[%s3218 + $0x2f0] sm:%s3207] %v3407
        %v3409 = vld [vmem:[%s3217 + $0x2dc] sm:%s3207]
        %3410 = vst [vmem:[%s3218 + $0x2f8] sm:%s3207] %v3409
        %v3411 = vld [vmem:[%s3217 + $0x300] sm:%s3207]
        %3412 = vst [vmem:[%s3218 + $0x300] sm:%s3207] %v3411
        %v3413 = vld [vmem:[%s3217 + $0x304] sm:%s3207]
        %3414 = vst [vmem:[%s3218 + $0x308] sm:%s3207] %v3413
        %v3415 = vld [vmem:[%s3217 + $0x308] sm:%s3207]
        %3416 = vst [vmem:[%s3218 + $0x310] sm:%s3207] %v3415
        %v3417 = vld [vmem:[%s3217 + $0x30c] sm:%s3207]
        %3418 = vst [vmem:[%s3218 + $0x318] sm:%s3207] %v3417
        %v3419 = vld [vmem:[%s3217 + $0x310] sm:%s3207]
        %3420 = vst [vmem:[%s3218 + $0x320] sm:%s3207] %v3419
        %v3421 = vld [vmem:[%s3217 + $0x314] sm:%s3207]
        %3422 = vst [vmem:[%s3218 + $0x328] sm:%s3207] %v3421
        %v3423 = vld [vmem:[%s3217 + $0x318] sm:%s3207]
        %3424 = vst [vmem:[%s3218 + $0x330] sm:%s3207] %v3423
        %v3425 = vld [vmem:[%s3217 + $0x31c] sm:%s3207]
        %3426 = vst [vmem:[%s3218 + $0x338] sm:%s3207] %v3425
        %v3427 = vld [vmem:[%s3217 + $0x340] sm:%s3207]
        %3428 = vst [vmem:[%s3218 + $0x340] sm:%s3207] %v3427
        %v3429 = vld [vmem:[%s3217 + $0x344] sm:%s3207]
        %3430 = vst [vmem:[%s3218 + $0x348] sm:%s3207] %v3429
        %v3431 = vld [vmem:[%s3217 + $0x348] sm:%s3207]
        %3432 = vst [vmem:[%s3218 + $0x350] sm:%s3207] %v3431
        %v3433 = vld [vmem:[%s3217 + $0x34c] sm:%s3207]
        %3434 = vst [vmem:[%s3218 + $0x358] sm:%s3207] %v3433
        %v3435 = vld [vmem:[%s3217 + $0x350] sm:%s3207]
        %3436 = vst [vmem:[%s3218 + $0x360] sm:%s3207] %v3435
        %v3437 = vld [vmem:[%s3217 + $0x354] sm:%s3207]
        %3438 = vst [vmem:[%s3218 + $0x368] sm:%s3207] %v3437
        %v3439 = vld [vmem:[%s3217 + $0x358] sm:%s3207]
        %3440 = vst [vmem:[%s3218 + $0x370] sm:%s3207] %v3439
        %v3441 = vld [vmem:[%s3217 + $0x35c] sm:%s3207]
        %3442 = vst [vmem:[%s3218 + $0x378] sm:%s3207] %v3441
        %v3443 = vld [vmem:[%s3217 + $0x380] sm:%s3207]
        %3444 = vst [vmem:[%s3218 + $0x380] sm:%s3207] %v3443
        %v3445 = vld [vmem:[%s3217 + $0x384] sm:%s3207]
        %3446 = vst [vmem:[%s3218 + $0x388] sm:%s3207] %v3445
        %v3447 = vld [vmem:[%s3217 + $0x388] sm:%s3207]
        %3448 = vst [vmem:[%s3218 + $0x390] sm:%s3207] %v3447
        %v3449 = vld [vmem:[%s3217 + $0x38c] sm:%s3207]
        %3450 = vst [vmem:[%s3218 + $0x398] sm:%s3207] %v3449
        %v3451 = vld [vmem:[%s3217 + $0x390] sm:%s3207]
        %3452 = vst [vmem:[%s3218 + $0x3a0] sm:%s3207] %v3451
        %v3453 = vld [vmem:[%s3217 + $0x394] sm:%s3207]
        %3454 = vst [vmem:[%s3218 + $0x3a8] sm:%s3207] %v3453
        %v3455 = vld [vmem:[%s3217 + $0x398] sm:%s3207]
        %3456 = vst [vmem:[%s3218 + $0x3b0] sm:%s3207] %v3455
        %v3457 = vld [vmem:[%s3217 + $0x39c] sm:%s3207]
        %3458 = vst [vmem:[%s3218 + $0x3b8] sm:%s3207] %v3457
        %v3459 = vld [vmem:[%s3217 + $0x3c0] sm:%s3207]
        %3460 = vst [vmem:[%s3218 + $0x3c0] sm:%s3207] %v3459
        %v3461 = vld [vmem:[%s3217 + $0x3c4] sm:%s3207]
        %3462 = vst [vmem:[%s3218 + $0x3c8] sm:%s3207] %v3461
        %v3463 = vld [vmem:[%s3217 + $0x3c8] sm:%s3207]
        %3464 = vst [vmem:[%s3218 + $0x3d0] sm:%s3207] %v3463
        %v3465 = vld [vmem:[%s3217 + $0x3cc] sm:%s3207]
        %3466 = vst [vmem:[%s3218 + $0x3d8] sm:%s3207] %v3465
        %v3467 = vld [vmem:[%s3217 + $0x3d0] sm:%s3207]
        %3468 = vst [vmem:[%s3218 + $0x3e0] sm:%s3207] %v3467
        %v3469 = vld [vmem:[%s3217 + $0x3d4] sm:%s3207]
        %3470 = vst [vmem:[%s3218 + $0x3e8] sm:%s3207] %v3469
        %v3471 = vld [vmem:[%s3217 + $0x3d8] sm:%s3207]
        %3472 = vst [vmem:[%s3218 + $0x3f0] sm:%s3207] %v3471
        %v3473 = vld [vmem:[%s3217 + $0x3dc] sm:%s3207]
        %3474 = vst [vmem:[%s3218 + $0x3f8] sm:%s3207] %v3473
        %v3475 = vld [vmem:[%s3217 + $0x400] sm:%s3207]
        %3476 = vst [vmem:[%s3218 + $0x400] sm:%s3207] %v3475
        %v3477 = vld [vmem:[%s3217 + $0x404] sm:%s3207]
        %3478 = vst [vmem:[%s3218 + $0x408] sm:%s3207] %v3477
        %v3479 = vld [vmem:[%s3217 + $0x408] sm:%s3207]
        %3480 = vst [vmem:[%s3218 + $0x410] sm:%s3207] %v3479
        %v3481 = vld [vmem:[%s3217 + $0x40c] sm:%s3207]
        %3482 = vst [vmem:[%s3218 + $0x418] sm:%s3207] %v3481
        %v3483 = vld [vmem:[%s3217 + $0x410] sm:%s3207]
        %3484 = vst [vmem:[%s3218 + $0x420] sm:%s3207] %v3483
        %v3485 = vld [vmem:[%s3217 + $0x414] sm:%s3207]
        %3486 = vst [vmem:[%s3218 + $0x428] sm:%s3207] %v3485
        %v3487 = vld [vmem:[%s3217 + $0x418] sm:%s3207]
        %3488 = vst [vmem:[%s3218 + $0x430] sm:%s3207] %v3487
        %v3489 = vld [vmem:[%s3217 + $0x41c] sm:%s3207]
        %3490 = vst [vmem:[%s3218 + $0x438] sm:%s3207] %v3489
        %v3491 = vld [vmem:[%s3217 + $0x440] sm:%s3207]
        %3492 = vst [vmem:[%s3218 + $0x440] sm:%s3207] %v3491
        %v3493 = vld [vmem:[%s3217 + $0x444] sm:%s3207]
        %3494 = vst [vmem:[%s3218 + $0x448] sm:%s3207] %v3493
        %v3495 = vld [vmem:[%s3217 + $0x448] sm:%s3207]
        %3496 = vst [vmem:[%s3218 + $0x450] sm:%s3207] %v3495
        %v3497 = vld [vmem:[%s3217 + $0x44c] sm:%s3207]
        %3498 = vst [vmem:[%s3218 + $0x458] sm:%s3207] %v3497
        %v3499 = vld [vmem:[%s3217 + $0x450] sm:%s3207]
        %3500 = vst [vmem:[%s3218 + $0x460] sm:%s3207] %v3499
        %v3501 = vld [vmem:[%s3217 + $0x454] sm:%s3207]
        %3502 = vst [vmem:[%s3218 + $0x468] sm:%s3207] %v3501
        %v3503 = vld [vmem:[%s3217 + $0x458] sm:%s3207]
        %3504 = vst [vmem:[%s3218 + $0x470] sm:%s3207] %v3503
        %v3505 = vld [vmem:[%s3217 + $0x45c] sm:%s3207]
        %3506 = vst [vmem:[%s3218 + $0x478] sm:%s3207] %v3505
        %v3507 = vld [vmem:[%s3217 + $0x480] sm:%s3207]
        %3508 = vst [vmem:[%s3218 + $0x480] sm:%s3207] %v3507
        %v3509 = vld [vmem:[%s3217 + $0x484] sm:%s3207]
        %3510 = vst [vmem:[%s3218 + $0x488] sm:%s3207] %v3509
        %v3511 = vld [vmem:[%s3217 + $0x488] sm:%s3207]
        %3512 = vst [vmem:[%s3218 + $0x490] sm:%s3207] %v3511
        %v3513 = vld [vmem:[%s3217 + $0x48c] sm:%s3207]
        %3514 = vst [vmem:[%s3218 + $0x498] sm:%s3207] %v3513
        %v3515 = vld [vmem:[%s3217 + $0x490] sm:%s3207]
        %3516 = vst [vmem:[%s3218 + $0x4a0] sm:%s3207] %v3515
        %v3517 = vld [vmem:[%s3217 + $0x494] sm:%s3207]
        %3518 = vst [vmem:[%s3218 + $0x4a8] sm:%s3207] %v3517
        %v3519 = vld [vmem:[%s3217 + $0x498] sm:%s3207]
        %3520 = vst [vmem:[%s3218 + $0x4b0] sm:%s3207] %v3519
        %v3521 = vld [vmem:[%s3217 + $0x49c] sm:%s3207]
        %3522 = vst [vmem:[%s3218 + $0x4b8] sm:%s3207] %v3521
        %v3523 = vld [vmem:[%s3217 + $0x4c0] sm:%s3207]
        %3524 = vst [vmem:[%s3218 + $0x4c0] sm:%s3207] %v3523
        %v3525 = vld [vmem:[%s3217 + $0x4c4] sm:%s3207]
        %3526 = vst [vmem:[%s3218 + $0x4c8] sm:%s3207] %v3525
        %v3527 = vld [vmem:[%s3217 + $0x4c8] sm:%s3207]
        %3528 = vst [vmem:[%s3218 + $0x4d0] sm:%s3207] %v3527
        %v3529 = vld [vmem:[%s3217 + $0x4cc] sm:%s3207]
        %3530 = vst [vmem:[%s3218 + $0x4d8] sm:%s3207] %v3529
        %v3531 = vld [vmem:[%s3217 + $0x4d0] sm:%s3207]
        %3532 = vst [vmem:[%s3218 + $0x4e0] sm:%s3207] %v3531
        %v3533 = vld [vmem:[%s3217 + $0x4d4] sm:%s3207]
        %3534 = vst [vmem:[%s3218 + $0x4e8] sm:%s3207] %v3533
        %v3535 = vld [vmem:[%s3217 + $0x4d8] sm:%s3207]
        %3536 = vst [vmem:[%s3218 + $0x4f0] sm:%s3207] %v3535
        %v3537 = vld [vmem:[%s3217 + $0x4dc] sm:%s3207]
        %3538 = vst [vmem:[%s3218 + $0x4f8] sm:%s3207] %v3537
        %v3539 = vld [vmem:[%s3217 + $0x500] sm:%s3207]
        %3540 = vst [vmem:[%s3218 + $0x500] sm:%s3207] %v3539
        %v3541 = vld [vmem:[%s3217 + $0x504] sm:%s3207]
        %3542 = vst [vmem:[%s3218 + $0x508] sm:%s3207] %v3541
        %v3543 = vld [vmem:[%s3217 + $0x508] sm:%s3207]
        %3544 = vst [vmem:[%s3218 + $0x510] sm:%s3207] %v3543
        %v3545 = vld [vmem:[%s3217 + $0x50c] sm:%s3207]
        %3546 = vst [vmem:[%s3218 + $0x518] sm:%s3207] %v3545
        %v3547 = vld [vmem:[%s3217 + $0x510] sm:%s3207]
        %3548 = vst [vmem:[%s3218 + $0x520] sm:%s3207] %v3547
        %v3549 = vld [vmem:[%s3217 + $0x514] sm:%s3207]
        %3550 = vst [vmem:[%s3218 + $0x528] sm:%s3207] %v3549
        %v3551 = vld [vmem:[%s3217 + $0x518] sm:%s3207]
        %3552 = vst [vmem:[%s3218 + $0x530] sm:%s3207] %v3551
        %v3553 = vld [vmem:[%s3217 + $0x51c] sm:%s3207]
        %3554 = vst [vmem:[%s3218 + $0x538] sm:%s3207] %v3553
        %v3555 = vld [vmem:[%s3217 + $0x540] sm:%s3207]
        %3556 = vst [vmem:[%s3218 + $0x540] sm:%s3207] %v3555
        %v3557 = vld [vmem:[%s3217 + $0x544] sm:%s3207]
        %3558 = vst [vmem:[%s3218 + $0x548] sm:%s3207] %v3557
        %v3559 = vld [vmem:[%s3217 + $0x548] sm:%s3207]
        %3560 = vst [vmem:[%s3218 + $0x550] sm:%s3207] %v3559
        %v3561 = vld [vmem:[%s3217 + $0x54c] sm:%s3207]
        %3562 = vst [vmem:[%s3218 + $0x558] sm:%s3207] %v3561
        %v3563 = vld [vmem:[%s3217 + $0x550] sm:%s3207]
        %3564 = vst [vmem:[%s3218 + $0x560] sm:%s3207] %v3563
        %v3565 = vld [vmem:[%s3217 + $0x554] sm:%s3207]
        %3566 = vst [vmem:[%s3218 + $0x568] sm:%s3207] %v3565
        %v3567 = vld [vmem:[%s3217 + $0x558] sm:%s3207]
        %3568 = vst [vmem:[%s3218 + $0x570] sm:%s3207] %v3567
        %v3569 = vld [vmem:[%s3217 + $0x55c] sm:%s3207]
        %3570 = vst [vmem:[%s3218 + $0x578] sm:%s3207] %v3569
        %v3571 = vld [vmem:[%s3217 + $0x580] sm:%s3207]
        %3572 = vst [vmem:[%s3218 + $0x580] sm:%s3207] %v3571
        %v3573 = vld [vmem:[%s3217 + $0x584] sm:%s3207]
        %3574 = vst [vmem:[%s3218 + $0x588] sm:%s3207] %v3573
        %v3575 = vld [vmem:[%s3217 + $0x588] sm:%s3207]
        %3576 = vst [vmem:[%s3218 + $0x590] sm:%s3207] %v3575
        %v3577 = vld [vmem:[%s3217 + $0x58c] sm:%s3207]
        %3578 = vst [vmem:[%s3218 + $0x598] sm:%s3207] %v3577
        %v3579 = vld [vmem:[%s3217 + $0x590] sm:%s3207]
        %3580 = vst [vmem:[%s3218 + $0x5a0] sm:%s3207] %v3579
        %v3581 = vld [vmem:[%s3217 + $0x594] sm:%s3207]
        %3582 = vst [vmem:[%s3218 + $0x5a8] sm:%s3207] %v3581
        %v3583 = vld [vmem:[%s3217 + $0x598] sm:%s3207]
        %3584 = vst [vmem:[%s3218 + $0x5b0] sm:%s3207] %v3583
        %v3585 = vld [vmem:[%s3217 + $0x59c] sm:%s3207]
        %3586 = vst [vmem:[%s3218 + $0x5b8] sm:%s3207] %v3585
        %v3587 = vld [vmem:[%s3217 + $0x5c0] sm:%s3207]
        %3588 = vst [vmem:[%s3218 + $0x5c0] sm:%s3207] %v3587
        %v3589 = vld [vmem:[%s3217 + $0x5c4] sm:%s3207]
        %3590 = vst [vmem:[%s3218 + $0x5c8] sm:%s3207] %v3589
        %v3591 = vld [vmem:[%s3217 + $0x5c8] sm:%s3207]
        %3592 = vst [vmem:[%s3218 + $0x5d0] sm:%s3207] %v3591
        %v3593 = vld [vmem:[%s3217 + $0x5cc] sm:%s3207]
        %3594 = vst [vmem:[%s3218 + $0x5d8] sm:%s3207] %v3593
        %v3595 = vld [vmem:[%s3217 + $0x5d0] sm:%s3207]
        %3596 = vst [vmem:[%s3218 + $0x5e0] sm:%s3207] %v3595
        %v3597 = vld [vmem:[%s3217 + $0x5d4] sm:%s3207]
        %3598 = vst [vmem:[%s3218 + $0x5e8] sm:%s3207] %v3597
        %v3599 = vld [vmem:[%s3217 + $0x5d8] sm:%s3207]
        %3600 = vst [vmem:[%s3218 + $0x5f0] sm:%s3207] %v3599
        %v3601 = vld [vmem:[%s3217 + $0x5dc] sm:%s3207]
        %3602 = vst [vmem:[%s3218 + $0x5f8] sm:%s3207] %v3601
        %v3603 = vld [vmem:[%s3217 + $0x600] sm:%s3207]
        %3604 = vst [vmem:[%s3218 + $0x600] sm:%s3207] %v3603
        %v3605 = vld [vmem:[%s3217 + $0x604] sm:%s3207]
        %3606 = vst [vmem:[%s3218 + $0x608] sm:%s3207] %v3605
        %v3607 = vld [vmem:[%s3217 + $0x608] sm:%s3207]
        %3608 = vst [vmem:[%s3218 + $0x610] sm:%s3207] %v3607
        %v3609 = vld [vmem:[%s3217 + $0x60c] sm:%s3207]
        %3610 = vst [vmem:[%s3218 + $0x618] sm:%s3207] %v3609
        %v3611 = vld [vmem:[%s3217 + $0x610] sm:%s3207]
        %3612 = vst [vmem:[%s3218 + $0x620] sm:%s3207] %v3611
        %v3613 = vld [vmem:[%s3217 + $0x614] sm:%s3207]
        %3614 = vst [vmem:[%s3218 + $0x628] sm:%s3207] %v3613
        %v3615 = vld [vmem:[%s3217 + $0x618] sm:%s3207]
        %3616 = vst [vmem:[%s3218 + $0x630] sm:%s3207] %v3615
        %v3617 = vld [vmem:[%s3217 + $0x61c] sm:%s3207]
        %3618 = vst [vmem:[%s3218 + $0x638] sm:%s3207] %v3617
        %v3619 = vld [vmem:[%s3217 + $0x640] sm:%s3207]
        %3620 = vst [vmem:[%s3218 + $0x640] sm:%s3207] %v3619
        %v3621 = vld [vmem:[%s3217 + $0x644] sm:%s3207]
        %3622 = vst [vmem:[%s3218 + $0x648] sm:%s3207] %v3621
        %v3623 = vld [vmem:[%s3217 + $0x648] sm:%s3207]
        %3624 = vst [vmem:[%s3218 + $0x650] sm:%s3207] %v3623
        %v3625 = vld [vmem:[%s3217 + $0x64c] sm:%s3207]
        %3626 = vst [vmem:[%s3218 + $0x658] sm:%s3207] %v3625
        %v3627 = vld [vmem:[%s3217 + $0x650] sm:%s3207]
        %3628 = vst [vmem:[%s3218 + $0x660] sm:%s3207] %v3627
        %v3629 = vld [vmem:[%s3217 + $0x654] sm:%s3207]
        %3630 = vst [vmem:[%s3218 + $0x668] sm:%s3207] %v3629
        %v3631 = vld [vmem:[%s3217 + $0x658] sm:%s3207]
        %3632 = vst [vmem:[%s3218 + $0x670] sm:%s3207] %v3631
        %v3633 = vld [vmem:[%s3217 + $0x65c] sm:%s3207]
        %3634 = vst [vmem:[%s3218 + $0x678] sm:%s3207] %v3633
        %v3635 = vld [vmem:[%s3217 + $0x680] sm:%s3207]
        %3636 = vst [vmem:[%s3218 + $0x680] sm:%s3207] %v3635
        %v3637 = vld [vmem:[%s3217 + $0x684] sm:%s3207]
        %3638 = vst [vmem:[%s3218 + $0x688] sm:%s3207] %v3637
        %v3639 = vld [vmem:[%s3217 + $0x688] sm:%s3207]
        %3640 = vst [vmem:[%s3218 + $0x690] sm:%s3207] %v3639
        %v3641 = vld [vmem:[%s3217 + $0x68c] sm:%s3207]
        %3642 = vst [vmem:[%s3218 + $0x698] sm:%s3207] %v3641
        %v3643 = vld [vmem:[%s3217 + $0x690] sm:%s3207]
        %3644 = vst [vmem:[%s3218 + $0x6a0] sm:%s3207] %v3643
        %v3645 = vld [vmem:[%s3217 + $0x694] sm:%s3207]
        %3646 = vst [vmem:[%s3218 + $0x6a8] sm:%s3207] %v3645
        %v3647 = vld [vmem:[%s3217 + $0x698] sm:%s3207]
        %3648 = vst [vmem:[%s3218 + $0x6b0] sm:%s3207] %v3647
        %v3649 = vld [vmem:[%s3217 + $0x69c] sm:%s3207]
        %3650 = vst [vmem:[%s3218 + $0x6b8] sm:%s3207] %v3649
        %v3651 = vld [vmem:[%s3217 + $0x6c0] sm:%s3207]
        %3652 = vst [vmem:[%s3218 + $0x6c0] sm:%s3207] %v3651
        %v3653 = vld [vmem:[%s3217 + $0x6c4] sm:%s3207]
        %3654 = vst [vmem:[%s3218 + $0x6c8] sm:%s3207] %v3653
        %v3655 = vld [vmem:[%s3217 + $0x6c8] sm:%s3207]
        %3656 = vst [vmem:[%s3218 + $0x6d0] sm:%s3207] %v3655
        %v3657 = vld [vmem:[%s3217 + $0x6cc] sm:%s3207]
        %3658 = vst [vmem:[%s3218 + $0x6d8] sm:%s3207] %v3657
        %v3659 = vld [vmem:[%s3217 + $0x6d0] sm:%s3207]
        %3660 = vst [vmem:[%s3218 + $0x6e0] sm:%s3207] %v3659
        %v3661 = vld [vmem:[%s3217 + $0x6d4] sm:%s3207]
        %3662 = vst [vmem:[%s3218 + $0x6e8] sm:%s3207] %v3661
        %v3663 = vld [vmem:[%s3217 + $0x6d8] sm:%s3207]
        %3664 = vst [vmem:[%s3218 + $0x6f0] sm:%s3207] %v3663
        %v3665 = vld [vmem:[%s3217 + $0x6dc] sm:%s3207]
        %3666 = vst [vmem:[%s3218 + $0x6f8] sm:%s3207] %v3665
        %v3667 = vld [vmem:[%s3217 + $0x700] sm:%s3207]
        %3668 = vst [vmem:[%s3218 + $0x700] sm:%s3207] %v3667
        %v3669 = vld [vmem:[%s3217 + $0x704] sm:%s3207]
        %3670 = vst [vmem:[%s3218 + $0x708] sm:%s3207] %v3669
        %v3671 = vld [vmem:[%s3217 + $0x708] sm:%s3207]
        %3672 = vst [vmem:[%s3218 + $0x710] sm:%s3207] %v3671
        %v3673 = vld [vmem:[%s3217 + $0x70c] sm:%s3207]
        %3674 = vst [vmem:[%s3218 + $0x718] sm:%s3207] %v3673
        %v3675 = vld [vmem:[%s3217 + $0x710] sm:%s3207]
        %3676 = vst [vmem:[%s3218 + $0x720] sm:%s3207] %v3675
        %v3677 = vld [vmem:[%s3217 + $0x714] sm:%s3207]
        %3678 = vst [vmem:[%s3218 + $0x728] sm:%s3207] %v3677
        %v3679 = vld [vmem:[%s3217 + $0x718] sm:%s3207]
        %3680 = vst [vmem:[%s3218 + $0x730] sm:%s3207] %v3679
        %v3681 = vld [vmem:[%s3217 + $0x71c] sm:%s3207]
        %3682 = vst [vmem:[%s3218 + $0x738] sm:%s3207] %v3681
        %v3683 = vld [vmem:[%s3217 + $0x740] sm:%s3207]
        %3684 = vst [vmem:[%s3218 + $0x740] sm:%s3207] %v3683
        %v3685 = vld [vmem:[%s3217 + $0x744] sm:%s3207]
        %3686 = vst [vmem:[%s3218 + $0x748] sm:%s3207] %v3685
        %v3687 = vld [vmem:[%s3217 + $0x748] sm:%s3207]
        %3688 = vst [vmem:[%s3218 + $0x750] sm:%s3207] %v3687
        %v3689 = vld [vmem:[%s3217 + $0x74c] sm:%s3207]
        %3690 = vst [vmem:[%s3218 + $0x758] sm:%s3207] %v3689
        %v3691 = vld [vmem:[%s3217 + $0x750] sm:%s3207]
        %3692 = vst [vmem:[%s3218 + $0x760] sm:%s3207] %v3691
        %v3693 = vld [vmem:[%s3217 + $0x754] sm:%s3207]
        %3694 = vst [vmem:[%s3218 + $0x768] sm:%s3207] %v3693
        %v3695 = vld [vmem:[%s3217 + $0x758] sm:%s3207]
        %3696 = vst [vmem:[%s3218 + $0x770] sm:%s3207] %v3695
        %v3697 = vld [vmem:[%s3217 + $0x75c] sm:%s3207]
        %3698 = vst [vmem:[%s3218 + $0x778] sm:%s3207] %v3697
        %v3699 = vld [vmem:[%s3217 + $0x780] sm:%s3207]
        %3700 = vst [vmem:[%s3218 + $0x780] sm:%s3207] %v3699
        %v3701 = vld [vmem:[%s3217 + $0x784] sm:%s3207]
        %3702 = vst [vmem:[%s3218 + $0x788] sm:%s3207] %v3701
        %v3703 = vld [vmem:[%s3217 + $0x788] sm:%s3207]
        %3704 = vst [vmem:[%s3218 + $0x790] sm:%s3207] %v3703
        %v3705 = vld [vmem:[%s3217 + $0x78c] sm:%s3207]
        %3706 = vst [vmem:[%s3218 + $0x798] sm:%s3207] %v3705
        %v3707 = vld [vmem:[%s3217 + $0x790] sm:%s3207]
        %3708 = vst [vmem:[%s3218 + $0x7a0] sm:%s3207] %v3707
        %v3709 = vld [vmem:[%s3217 + $0x794] sm:%s3207]
        %3710 = vst [vmem:[%s3218 + $0x7a8] sm:%s3207] %v3709
        %v3711 = vld [vmem:[%s3217 + $0x798] sm:%s3207]
        %3712 = vst [vmem:[%s3218 + $0x7b0] sm:%s3207] %v3711
        %v3713 = vld [vmem:[%s3217 + $0x79c] sm:%s3207]
        %3714 = vst [vmem:[%s3218 + $0x7b8] sm:%s3207] %v3713
        %v3715 = vld [vmem:[%s3217 + $0x7c0] sm:%s3207]
        %3716 = vst [vmem:[%s3218 + $0x7c0] sm:%s3207] %v3715
        %v3717 = vld [vmem:[%s3217 + $0x7c4] sm:%s3207]
        %3718 = vst [vmem:[%s3218 + $0x7c8] sm:%s3207] %v3717
        %v3719 = vld [vmem:[%s3217 + $0x7c8] sm:%s3207]
        %3720 = vst [vmem:[%s3218 + $0x7d0] sm:%s3207] %v3719
        %v3721 = vld [vmem:[%s3217 + $0x7cc] sm:%s3207]
        %3722 = vst [vmem:[%s3218 + $0x7d8] sm:%s3207] %v3721
        %v3723 = vld [vmem:[%s3217 + $0x7d0] sm:%s3207]
        %3724 = vst [vmem:[%s3218 + $0x7e0] sm:%s3207] %v3723
        %v3725 = vld [vmem:[%s3217 + $0x7d4] sm:%s3207]
        %3726 = vst [vmem:[%s3218 + $0x7e8] sm:%s3207] %v3725
        %v3727 = vld [vmem:[%s3217 + $0x7d8] sm:%s3207]
        %3728 = vst [vmem:[%s3218 + $0x7f0] sm:%s3207] %v3727
        %v3729 = vld [vmem:[%s3217 + $0x7dc] sm:%s3207]
        %3730 = vst [vmem:[%s3218 + $0x7f8] sm:%s3207] %v3729
        %v3731 = vld [vmem:[%s3217 + $0x800] sm:%s3207]
        %3732 = vst [vmem:[%s3218 + $0x800] sm:%s3207] %v3731
        %v3733 = vld [vmem:[%s3217 + $0x804] sm:%s3207]
        %3734 = vst [vmem:[%s3218 + $0x808] sm:%s3207] %v3733
        %v3735 = vld [vmem:[%s3217 + $0x808] sm:%s3207]
        %3736 = vst [vmem:[%s3218 + $0x810] sm:%s3207] %v3735
        %v3737 = vld [vmem:[%s3217 + $0x80c] sm:%s3207]
        %3738 = vst [vmem:[%s3218 + $0x818] sm:%s3207] %v3737
        %v3739 = vld [vmem:[%s3217 + $0x810] sm:%s3207]
        %3740 = vst [vmem:[%s3218 + $0x820] sm:%s3207] %v3739
        %v3741 = vld [vmem:[%s3217 + $0x814] sm:%s3207]
        %3742 = vst [vmem:[%s3218 + $0x828] sm:%s3207] %v3741
        %v3743 = vld [vmem:[%s3217 + $0x818] sm:%s3207]
        %3744 = vst [vmem:[%s3218 + $0x830] sm:%s3207] %v3743
        %v3745 = vld [vmem:[%s3217 + $0x81c] sm:%s3207]
        %3746 = vst [vmem:[%s3218 + $0x838] sm:%s3207] %v3745
        %v3747 = vld [vmem:[%s3217 + $0x840] sm:%s3207]
        %3748 = vst [vmem:[%s3218 + $0x840] sm:%s3207] %v3747
        %v3749 = vld [vmem:[%s3217 + $0x844] sm:%s3207]
        %3750 = vst [vmem:[%s3218 + $0x848] sm:%s3207] %v3749
        %v3751 = vld [vmem:[%s3217 + $0x848] sm:%s3207]
        %3752 = vst [vmem:[%s3218 + $0x850] sm:%s3207] %v3751
        %v3753 = vld [vmem:[%s3217 + $0x84c] sm:%s3207]
        %3754 = vst [vmem:[%s3218 + $0x858] sm:%s3207] %v3753
        %v3755 = vld [vmem:[%s3217 + $0x850] sm:%s3207]
        %3756 = vst [vmem:[%s3218 + $0x860] sm:%s3207] %v3755
        %v3757 = vld [vmem:[%s3217 + $0x854] sm:%s3207]
        %3758 = vst [vmem:[%s3218 + $0x868] sm:%s3207] %v3757
        %v3759 = vld [vmem:[%s3217 + $0x858] sm:%s3207]
        %3760 = vst [vmem:[%s3218 + $0x870] sm:%s3207] %v3759
        %v3761 = vld [vmem:[%s3217 + $0x85c] sm:%s3207]
        %3762 = vst [vmem:[%s3218 + $0x878] sm:%s3207] %v3761
        %v3763 = vld [vmem:[%s3217 + $0x880] sm:%s3207]
        %3764 = vst [vmem:[%s3218 + $0x880] sm:%s3207] %v3763
        %v3765 = vld [vmem:[%s3217 + $0x884] sm:%s3207]
        %3766 = vst [vmem:[%s3218 + $0x888] sm:%s3207] %v3765
        %v3767 = vld [vmem:[%s3217 + $0x888] sm:%s3207]
        %3768 = vst [vmem:[%s3218 + $0x890] sm:%s3207] %v3767
        %v3769 = vld [vmem:[%s3217 + $0x88c] sm:%s3207]
        %3770 = vst [vmem:[%s3218 + $0x898] sm:%s3207] %v3769
        %v3771 = vld [vmem:[%s3217 + $0x890] sm:%s3207]
        %3772 = vst [vmem:[%s3218 + $0x8a0] sm:%s3207] %v3771
        %v3773 = vld [vmem:[%s3217 + $0x894] sm:%s3207]
        %3774 = vst [vmem:[%s3218 + $0x8a8] sm:%s3207] %v3773
        %v3775 = vld [vmem:[%s3217 + $0x898] sm:%s3207]
        %3776 = vst [vmem:[%s3218 + $0x8b0] sm:%s3207] %v3775
        %v3777 = vld [vmem:[%s3217 + $0x89c] sm:%s3207]
        %3778 = vst [vmem:[%s3218 + $0x8b8] sm:%s3207] %v3777
        %v3779 = vld [vmem:[%s3217 + $0x8c0] sm:%s3207]
        %3780 = vst [vmem:[%s3218 + $0x8c0] sm:%s3207] %v3779
        %v3781 = vld [vmem:[%s3217 + $0x8c4] sm:%s3207]
        %3782 = vst [vmem:[%s3218 + $0x8c8] sm:%s3207] %v3781
        %v3783 = vld [vmem:[%s3217 + $0x8c8] sm:%s3207]
        %3784 = vst [vmem:[%s3218 + $0x8d0] sm:%s3207] %v3783
        %v3785 = vld [vmem:[%s3217 + $0x8cc] sm:%s3207]
        %3786 = vst [vmem:[%s3218 + $0x8d8] sm:%s3207] %v3785
        %v3787 = vld [vmem:[%s3217 + $0x8d0] sm:%s3207]
        %3788 = vst [vmem:[%s3218 + $0x8e0] sm:%s3207] %v3787
        %v3789 = vld [vmem:[%s3217 + $0x8d4] sm:%s3207]
        %3790 = vst [vmem:[%s3218 + $0x8e8] sm:%s3207] %v3789
        %v3791 = vld [vmem:[%s3217 + $0x8d8] sm:%s3207]
        %3792 = vst [vmem:[%s3218 + $0x8f0] sm:%s3207] %v3791
        %v3793 = vld [vmem:[%s3217 + $0x8dc] sm:%s3207]
        %3794 = vst [vmem:[%s3218 + $0x8f8] sm:%s3207] %v3793
        %v3795 = vld [vmem:[%s3217 + $0x900] sm:%s3207]
        %3796 = vst [vmem:[%s3218 + $0x900] sm:%s3207] %v3795
        %v3797 = vld [vmem:[%s3217 + $0x904] sm:%s3207]
        %3798 = vst [vmem:[%s3218 + $0x908] sm:%s3207] %v3797
        %v3799 = vld [vmem:[%s3217 + $0x908] sm:%s3207]
        %3800 = vst [vmem:[%s3218 + $0x910] sm:%s3207] %v3799
        %v3801 = vld [vmem:[%s3217 + $0x90c] sm:%s3207]
        %3802 = vst [vmem:[%s3218 + $0x918] sm:%s3207] %v3801
        %v3803 = vld [vmem:[%s3217 + $0x910] sm:%s3207]
        %3804 = vst [vmem:[%s3218 + $0x920] sm:%s3207] %v3803
        %v3805 = vld [vmem:[%s3217 + $0x914] sm:%s3207]
        %3806 = vst [vmem:[%s3218 + $0x928] sm:%s3207] %v3805
        %v3807 = vld [vmem:[%s3217 + $0x918] sm:%s3207]
        %3808 = vst [vmem:[%s3218 + $0x930] sm:%s3207] %v3807
        %v3809 = vld [vmem:[%s3217 + $0x91c] sm:%s3207]
        %3810 = vst [vmem:[%s3218 + $0x938] sm:%s3207] %v3809
        %v3811 = vld [vmem:[%s3217 + $0x940] sm:%s3207]
        %3812 = vst [vmem:[%s3218 + $0x940] sm:%s3207] %v3811
        %v3813 = vld [vmem:[%s3217 + $0x944] sm:%s3207]
        %3814 = vst [vmem:[%s3218 + $0x948] sm:%s3207] %v3813
        %v3815 = vld [vmem:[%s3217 + $0x948] sm:%s3207]
        %3816 = vst [vmem:[%s3218 + $0x950] sm:%s3207] %v3815
        %v3817 = vld [vmem:[%s3217 + $0x94c] sm:%s3207]
        %3818 = vst [vmem:[%s3218 + $0x958] sm:%s3207] %v3817
        %v3819 = vld [vmem:[%s3217 + $0x950] sm:%s3207]
        %3820 = vst [vmem:[%s3218 + $0x960] sm:%s3207] %v3819
        %v3821 = vld [vmem:[%s3217 + $0x954] sm:%s3207]
        %3822 = vst [vmem:[%s3218 + $0x968] sm:%s3207] %v3821
        %v3823 = vld [vmem:[%s3217 + $0x958] sm:%s3207]
        %3824 = vst [vmem:[%s3218 + $0x970] sm:%s3207] %v3823
        %v3825 = vld [vmem:[%s3217 + $0x95c] sm:%s3207]
        %3826 = vst [vmem:[%s3218 + $0x978] sm:%s3207] %v3825
        %v3827 = vld [vmem:[%s3217 + $0x980] sm:%s3207]
        %3828 = vst [vmem:[%s3218 + $0x980] sm:%s3207] %v3827
        %v3829 = vld [vmem:[%s3217 + $0x984] sm:%s3207]
        %3830 = vst [vmem:[%s3218 + $0x988] sm:%s3207] %v3829
        %v3831 = vld [vmem:[%s3217 + $0x988] sm:%s3207]
        %3832 = vst [vmem:[%s3218 + $0x990] sm:%s3207] %v3831
        %v3833 = vld [vmem:[%s3217 + $0x98c] sm:%s3207]
        %3834 = vst [vmem:[%s3218 + $0x998] sm:%s3207] %v3833
        %v3835 = vld [vmem:[%s3217 + $0x990] sm:%s3207]
        %3836 = vst [vmem:[%s3218 + $0x9a0] sm:%s3207] %v3835
        %v3837 = vld [vmem:[%s3217 + $0x994] sm:%s3207]
        %3838 = vst [vmem:[%s3218 + $0x9a8] sm:%s3207] %v3837
        %v3839 = vld [vmem:[%s3217 + $0x998] sm:%s3207]
        %3840 = vst [vmem:[%s3218 + $0x9b0] sm:%s3207] %v3839
        %v3841 = vld [vmem:[%s3217 + $0x99c] sm:%s3207]
        %3842 = vst [vmem:[%s3218 + $0x9b8] sm:%s3207] %v3841
        %v3843 = vld [vmem:[%s3217 + $0x9c0] sm:%s3207]
        %3844 = vst [vmem:[%s3218 + $0x9c0] sm:%s3207] %v3843
        %v3845 = vld [vmem:[%s3217 + $0x9c4] sm:%s3207]
        %3846 = vst [vmem:[%s3218 + $0x9c8] sm:%s3207] %v3845
        %v3847 = vld [vmem:[%s3217 + $0x9c8] sm:%s3207]
        %3848 = vst [vmem:[%s3218 + $0x9d0] sm:%s3207] %v3847
        %v3849 = vld [vmem:[%s3217 + $0x9cc] sm:%s3207]
        %3850 = vst [vmem:[%s3218 + $0x9d8] sm:%s3207] %v3849
        %v3851 = vld [vmem:[%s3217 + $0x9d0] sm:%s3207]
        %3852 = vst [vmem:[%s3218 + $0x9e0] sm:%s3207] %v3851
        %v3853 = vld [vmem:[%s3217 + $0x9d4] sm:%s3207]
        %3854 = vst [vmem:[%s3218 + $0x9e8] sm:%s3207] %v3853
        %v3855 = vld [vmem:[%s3217 + $0x9d8] sm:%s3207]
        %3856 = vst [vmem:[%s3218 + $0x9f0] sm:%s3207] %v3855
        %v3857 = vld [vmem:[%s3217 + $0x9dc] sm:%s3207]
        %3858 = vst [vmem:[%s3218 + $0x9f8] sm:%s3207] %v3857
        %v3859 = vld [vmem:[%s3217 + $0xa00] sm:%s3207]
        %3860 = vst [vmem:[%s3218 + $0xa00] sm:%s3207] %v3859
        %v3861 = vld [vmem:[%s3217 + $0xa04] sm:%s3207]
        %3862 = vst [vmem:[%s3218 + $0xa08] sm:%s3207] %v3861
        %v3863 = vld [vmem:[%s3217 + $0xa08] sm:%s3207]
        %3864 = vst [vmem:[%s3218 + $0xa10] sm:%s3207] %v3863
        %v3865 = vld [vmem:[%s3217 + $0xa0c] sm:%s3207]
        %3866 = vst [vmem:[%s3218 + $0xa18] sm:%s3207] %v3865
        %v3867 = vld [vmem:[%s3217 + $0xa10] sm:%s3207]
        %3868 = vst [vmem:[%s3218 + $0xa20] sm:%s3207] %v3867
        %v3869 = vld [vmem:[%s3217 + $0xa14] sm:%s3207]
        %3870 = vst [vmem:[%s3218 + $0xa28] sm:%s3207] %v3869
        %v3871 = vld [vmem:[%s3217 + $0xa18] sm:%s3207]
        %3872 = vst [vmem:[%s3218 + $0xa30] sm:%s3207] %v3871
        %v3873 = vld [vmem:[%s3217 + $0xa1c] sm:%s3207]
        %3874 = vst [vmem:[%s3218 + $0xa38] sm:%s3207] %v3873
        %v3875 = vld [vmem:[%s3217 + $0xa40] sm:%s3207]
        %3876 = vst [vmem:[%s3218 + $0xa40] sm:%s3207] %v3875
        %v3877 = vld [vmem:[%s3217 + $0xa44] sm:%s3207]
        %3878 = vst [vmem:[%s3218 + $0xa48] sm:%s3207] %v3877
        %v3879 = vld [vmem:[%s3217 + $0xa48] sm:%s3207]
        %3880 = vst [vmem:[%s3218 + $0xa50] sm:%s3207] %v3879
        %v3881 = vld [vmem:[%s3217 + $0xa4c] sm:%s3207]
        %3882 = vst [vmem:[%s3218 + $0xa58] sm:%s3207] %v3881
        %v3883 = vld [vmem:[%s3217 + $0xa50] sm:%s3207]
        %3884 = vst [vmem:[%s3218 + $0xa60] sm:%s3207] %v3883
        %v3885 = vld [vmem:[%s3217 + $0xa54] sm:%s3207]
        %3886 = vst [vmem:[%s3218 + $0xa68] sm:%s3207] %v3885
        %v3887 = vld [vmem:[%s3217 + $0xa58] sm:%s3207]
        %3888 = vst [vmem:[%s3218 + $0xa70] sm:%s3207] %v3887
        %v3889 = vld [vmem:[%s3217 + $0xa5c] sm:%s3207]
        %3890 = vst [vmem:[%s3218 + $0xa78] sm:%s3207] %v3889
        %v3891 = vld [vmem:[%s3217 + $0xa80] sm:%s3207]
        %3892 = vst [vmem:[%s3218 + $0xa80] sm:%s3207] %v3891
        %v3893 = vld [vmem:[%s3217 + $0xa84] sm:%s3207]
        %3894 = vst [vmem:[%s3218 + $0xa88] sm:%s3207] %v3893
        %v3895 = vld [vmem:[%s3217 + $0xa88] sm:%s3207]
        %3896 = vst [vmem:[%s3218 + $0xa90] sm:%s3207] %v3895
        %v3897 = vld [vmem:[%s3217 + $0xa8c] sm:%s3207]
        %3898 = vst [vmem:[%s3218 + $0xa98] sm:%s3207] %v3897
        %v3899 = vld [vmem:[%s3217 + $0xa90] sm:%s3207]
        %3900 = vst [vmem:[%s3218 + $0xaa0] sm:%s3207] %v3899
        %v3901 = vld [vmem:[%s3217 + $0xa94] sm:%s3207]
        %3902 = vst [vmem:[%s3218 + $0xaa8] sm:%s3207] %v3901
        %v3903 = vld [vmem:[%s3217 + $0xa98] sm:%s3207]
        %3904 = vst [vmem:[%s3218 + $0xab0] sm:%s3207] %v3903
        %v3905 = vld [vmem:[%s3217 + $0xa9c] sm:%s3207]
        %3906 = vst [vmem:[%s3218 + $0xab8] sm:%s3207] %v3905
        %v3907 = vld [vmem:[%s3217 + $0xac0] sm:%s3207]
        %3908 = vst [vmem:[%s3218 + $0xac0] sm:%s3207] %v3907
        %v3909 = vld [vmem:[%s3217 + $0xac4] sm:%s3207]
        %3910 = vst [vmem:[%s3218 + $0xac8] sm:%s3207] %v3909
        %v3911 = vld [vmem:[%s3217 + $0xac8] sm:%s3207]
        %3912 = vst [vmem:[%s3218 + $0xad0] sm:%s3207] %v3911
        %v3913 = vld [vmem:[%s3217 + $0xacc] sm:%s3207]
        %3914 = vst [vmem:[%s3218 + $0xad8] sm:%s3207] %v3913
        %v3915 = vld [vmem:[%s3217 + $0xad0] sm:%s3207]
        %3916 = vst [vmem:[%s3218 + $0xae0] sm:%s3207] %v3915
        %v3917 = vld [vmem:[%s3217 + $0xad4] sm:%s3207]
        %3918 = vst [vmem:[%s3218 + $0xae8] sm:%s3207] %v3917
        %v3919 = vld [vmem:[%s3217 + $0xad8] sm:%s3207]
        %3920 = vst [vmem:[%s3218 + $0xaf0] sm:%s3207] %v3919
        %v3921 = vld [vmem:[%s3217 + $0xadc] sm:%s3207]
        %3922 = vst [vmem:[%s3218 + $0xaf8] sm:%s3207] %v3921
        %v3923 = vld [vmem:[%s3217 + $0xb00] sm:%s3207]
        %3924 = vst [vmem:[%s3218 + $0xb00] sm:%s3207] %v3923
        %v3925 = vld [vmem:[%s3217 + $0xb04] sm:%s3207]
        %3926 = vst [vmem:[%s3218 + $0xb08] sm:%s3207] %v3925
        %v3927 = vld [vmem:[%s3217 + $0xb08] sm:%s3207]
        %3928 = vst [vmem:[%s3218 + $0xb10] sm:%s3207] %v3927
        %v3929 = vld [vmem:[%s3217 + $0xb0c] sm:%s3207]
        %3930 = vst [vmem:[%s3218 + $0xb18] sm:%s3207] %v3929
        %v3931 = vld [vmem:[%s3217 + $0xb10] sm:%s3207]
        %3932 = vst [vmem:[%s3218 + $0xb20] sm:%s3207] %v3931
        %v3933 = vld [vmem:[%s3217 + $0xb14] sm:%s3207]
        %3934 = vst [vmem:[%s3218 + $0xb28] sm:%s3207] %v3933
        %v3935 = vld [vmem:[%s3217 + $0xb18] sm:%s3207]
        %3936 = vst [vmem:[%s3218 + $0xb30] sm:%s3207] %v3935
        %v3937 = vld [vmem:[%s3217 + $0xb1c] sm:%s3207]
        %3938 = vst [vmem:[%s3218 + $0xb38] sm:%s3207] %v3937
        %v3939 = vld [vmem:[%s3217 + $0xb40] sm:%s3207]
        %3940 = vst [vmem:[%s3218 + $0xb40] sm:%s3207] %v3939
        %v3941 = vld [vmem:[%s3217 + $0xb44] sm:%s3207]
        %3942 = vst [vmem:[%s3218 + $0xb48] sm:%s3207] %v3941
        %v3943 = vld [vmem:[%s3217 + $0xb48] sm:%s3207]
        %3944 = vst [vmem:[%s3218 + $0xb50] sm:%s3207] %v3943
        %v3945 = vld [vmem:[%s3217 + $0xb4c] sm:%s3207]
        %3946 = vst [vmem:[%s3218 + $0xb58] sm:%s3207] %v3945
        %v3947 = vld [vmem:[%s3217 + $0xb50] sm:%s3207]
        %3948 = vst [vmem:[%s3218 + $0xb60] sm:%s3207] %v3947
        %v3949 = vld [vmem:[%s3217 + $0xb54] sm:%s3207]
        %3950 = vst [vmem:[%s3218 + $0xb68] sm:%s3207] %v3949
        %v3951 = vld [vmem:[%s3217 + $0xb58] sm:%s3207]
        %3952 = vst [vmem:[%s3218 + $0xb70] sm:%s3207] %v3951
        %v3953 = vld [vmem:[%s3217 + $0xb5c] sm:%s3207]
        %3954 = vst [vmem:[%s3218 + $0xb78] sm:%s3207] %v3953
        %v3955 = vld [vmem:[%s3217 + $0xb80] sm:%s3207]
        %3956 = vst [vmem:[%s3218 + $0xb80] sm:%s3207] %v3955
        %v3957 = vld [vmem:[%s3217 + $0xb84] sm:%s3207]
        %3958 = vst [vmem:[%s3218 + $0xb88] sm:%s3207] %v3957
        %v3959 = vld [vmem:[%s3217 + $0xb88] sm:%s3207]
        %3960 = vst [vmem:[%s3218 + $0xb90] sm:%s3207] %v3959
        %v3961 = vld [vmem:[%s3217 + $0xb8c] sm:%s3207]
        %3962 = vst [vmem:[%s3218 + $0xb98] sm:%s3207] %v3961
        %v3963 = vld [vmem:[%s3217 + $0xb90] sm:%s3207]
        %3964 = vst [vmem:[%s3218 + $0xba0] sm:%s3207] %v3963
        %v3965 = vld [vmem:[%s3217 + $0xb94] sm:%s3207]
        %3966 = vst [vmem:[%s3218 + $0xba8] sm:%s3207] %v3965
        %v3967 = vld [vmem:[%s3217 + $0xb98] sm:%s3207]
        %3968 = vst [vmem:[%s3218 + $0xbb0] sm:%s3207] %v3967
        %v3969 = vld [vmem:[%s3217 + $0xb9c] sm:%s3207]
        %3970 = vst [vmem:[%s3218 + $0xbb8] sm:%s3207] %v3969
        %v3971 = vld [vmem:[%s3217 + $0xbc0] sm:%s3207]
        %3972 = vst [vmem:[%s3218 + $0xbc0] sm:%s3207] %v3971
        %v3973 = vld [vmem:[%s3217 + $0xbc4] sm:%s3207]
        %3974 = vst [vmem:[%s3218 + $0xbc8] sm:%s3207] %v3973
        %v3975 = vld [vmem:[%s3217 + $0xbc8] sm:%s3207]
        %3976 = vst [vmem:[%s3218 + $0xbd0] sm:%s3207] %v3975
        %v3977 = vld [vmem:[%s3217 + $0xbcc] sm:%s3207]
        %3978 = vst [vmem:[%s3218 + $0xbd8] sm:%s3207] %v3977
        %v3979 = vld [vmem:[%s3217 + $0xbd0] sm:%s3207]
        %3980 = vst [vmem:[%s3218 + $0xbe0] sm:%s3207] %v3979
        %v3981 = vld [vmem:[%s3217 + $0xbd4] sm:%s3207]
        %3982 = vst [vmem:[%s3218 + $0xbe8] sm:%s3207] %v3981
        %v3983 = vld [vmem:[%s3217 + $0xbd8] sm:%s3207]
        %3984 = vst [vmem:[%s3218 + $0xbf0] sm:%s3207] %v3983
        %v3985 = vld [vmem:[%s3217 + $0xbdc] sm:%s3207]
        %3986 = vst [vmem:[%s3218 + $0xbf8] sm:%s3207] %v3985
        %v3987 = vld [vmem:[%s3217 + $0xc00] sm:%s3207]
        %3988 = vst [vmem:[%s3218 + $0xc00] sm:%s3207] %v3987
        %v3989 = vld [vmem:[%s3217 + $0xc04] sm:%s3207]
        %3990 = vst [vmem:[%s3218 + $0xc08] sm:%s3207] %v3989
        %v3991 = vld [vmem:[%s3217 + $0xc08] sm:%s3207]
        %3992 = vst [vmem:[%s3218 + $0xc10] sm:%s3207] %v3991
        %v3993 = vld [vmem:[%s3217 + $0xc0c] sm:%s3207]
        %3994 = vst [vmem:[%s3218 + $0xc18] sm:%s3207] %v3993
        %v3995 = vld [vmem:[%s3217 + $0xc10] sm:%s3207]
        %3996 = vst [vmem:[%s3218 + $0xc20] sm:%s3207] %v3995
        %v3997 = vld [vmem:[%s3217 + $0xc14] sm:%s3207]
        %3998 = vst [vmem:[%s3218 + $0xc28] sm:%s3207] %v3997
        %v3999 = vld [vmem:[%s3217 + $0xc18] sm:%s3207]
        %4000 = vst [vmem:[%s3218 + $0xc30] sm:%s3207] %v3999
        %v4001 = vld [vmem:[%s3217 + $0xc1c] sm:%s3207]
        %4002 = vst [vmem:[%s3218 + $0xc38] sm:%s3207] %v4001
        %v4003 = vld [vmem:[%s3217 + $0xc40] sm:%s3207]
        %4004 = vst [vmem:[%s3218 + $0xc40] sm:%s3207] %v4003
        %v4005 = vld [vmem:[%s3217 + $0xc44] sm:%s3207]
        %4006 = vst [vmem:[%s3218 + $0xc48] sm:%s3207] %v4005
        %v4007 = vld [vmem:[%s3217 + $0xc48] sm:%s3207]
        %4008 = vst [vmem:[%s3218 + $0xc50] sm:%s3207] %v4007
        %v4009 = vld [vmem:[%s3217 + $0xc4c] sm:%s3207]
        %4010 = vst [vmem:[%s3218 + $0xc58] sm:%s3207] %v4009
        %v4011 = vld [vmem:[%s3217 + $0xc50] sm:%s3207]
        %4012 = vst [vmem:[%s3218 + $0xc60] sm:%s3207] %v4011
        %v4013 = vld [vmem:[%s3217 + $0xc54] sm:%s3207]
        %4014 = vst [vmem:[%s3218 + $0xc68] sm:%s3207] %v4013
        %v4015 = vld [vmem:[%s3217 + $0xc58] sm:%s3207]
        %4016 = vst [vmem:[%s3218 + $0xc70] sm:%s3207] %v4015
        %v4017 = vld [vmem:[%s3217 + $0xc5c] sm:%s3207]
        %4018 = vst [vmem:[%s3218 + $0xc78] sm:%s3207] %v4017
        %v4019 = vld [vmem:[%s3217 + $0xc80] sm:%s3207]
        %4020 = vst [vmem:[%s3218 + $0xc80] sm:%s3207] %v4019
        %v4021 = vld [vmem:[%s3217 + $0xc84] sm:%s3207]
        %4022 = vst [vmem:[%s3218 + $0xc88] sm:%s3207] %v4021
        %v4023 = vld [vmem:[%s3217 + $0xc88] sm:%s3207]
        %4024 = vst [vmem:[%s3218 + $0xc90] sm:%s3207] %v4023
        %v4025 = vld [vmem:[%s3217 + $0xc8c] sm:%s3207]
        %4026 = vst [vmem:[%s3218 + $0xc98] sm:%s3207] %v4025
        %v4027 = vld [vmem:[%s3217 + $0xc90] sm:%s3207]
        %4028 = vst [vmem:[%s3218 + $0xca0] sm:%s3207] %v4027
        %v4029 = vld [vmem:[%s3217 + $0xc94] sm:%s3207]
        %4030 = vst [vmem:[%s3218 + $0xca8] sm:%s3207] %v4029
        %v4031 = vld [vmem:[%s3217 + $0xc98] sm:%s3207]
        %4032 = vst [vmem:[%s3218 + $0xcb0] sm:%s3207] %v4031
        %v4033 = vld [vmem:[%s3217 + $0xc9c] sm:%s3207]
        %4034 = vst [vmem:[%s3218 + $0xcb8] sm:%s3207] %v4033
        %v4035 = vld [vmem:[%s3217 + $0xcc0] sm:%s3207]
        %4036 = vst [vmem:[%s3218 + $0xcc0] sm:%s3207] %v4035
        %v4037 = vld [vmem:[%s3217 + $0xcc4] sm:%s3207]
        %4038 = vst [vmem:[%s3218 + $0xcc8] sm:%s3207] %v4037
        %v4039 = vld [vmem:[%s3217 + $0xcc8] sm:%s3207]
        %4040 = vst [vmem:[%s3218 + $0xcd0] sm:%s3207] %v4039
        %v4041 = vld [vmem:[%s3217 + $0xccc] sm:%s3207]
        %4042 = vst [vmem:[%s3218 + $0xcd8] sm:%s3207] %v4041
        %v4043 = vld [vmem:[%s3217 + $0xcd0] sm:%s3207]
        %4044 = vst [vmem:[%s3218 + $0xce0] sm:%s3207] %v4043
        %v4045 = vld [vmem:[%s3217 + $0xcd4] sm:%s3207]
        %4046 = vst [vmem:[%s3218 + $0xce8] sm:%s3207] %v4045
        %v4047 = vld [vmem:[%s3217 + $0xcd8] sm:%s3207]
        %4048 = vst [vmem:[%s3218 + $0xcf0] sm:%s3207] %v4047
        %v4049 = vld [vmem:[%s3217 + $0xcdc] sm:%s3207]
        %4050 = vst [vmem:[%s3218 + $0xcf8] sm:%s3207] %v4049
        %v4051 = vld [vmem:[%s3217 + $0xd00] sm:%s3207]
        %4052 = vst [vmem:[%s3218 + $0xd00] sm:%s3207] %v4051
        %v4053 = vld [vmem:[%s3217 + $0xd04] sm:%s3207]
        %4054 = vst [vmem:[%s3218 + $0xd08] sm:%s3207] %v4053
        %v4055 = vld [vmem:[%s3217 + $0xd08] sm:%s3207]
        %4056 = vst [vmem:[%s3218 + $0xd10] sm:%s3207] %v4055
        %v4057 = vld [vmem:[%s3217 + $0xd0c] sm:%s3207]
        %4058 = vst [vmem:[%s3218 + $0xd18] sm:%s3207] %v4057
        %v4059 = vld [vmem:[%s3217 + $0xd10] sm:%s3207]
        %4060 = vst [vmem:[%s3218 + $0xd20] sm:%s3207] %v4059
        %v4061 = vld [vmem:[%s3217 + $0xd14] sm:%s3207]
        %4062 = vst [vmem:[%s3218 + $0xd28] sm:%s3207] %v4061
        %v4063 = vld [vmem:[%s3217 + $0xd18] sm:%s3207]
        %4064 = vst [vmem:[%s3218 + $0xd30] sm:%s3207] %v4063
        %v4065 = vld [vmem:[%s3217 + $0xd1c] sm:%s3207]
        %4066 = vst [vmem:[%s3218 + $0xd38] sm:%s3207] %v4065
        %v4067 = vld [vmem:[%s3217 + $0xd40] sm:%s3207]
        %4068 = vst [vmem:[%s3218 + $0xd40] sm:%s3207] %v4067
        %v4069 = vld [vmem:[%s3217 + $0xd44] sm:%s3207]
        %4070 = vst [vmem:[%s3218 + $0xd48] sm:%s3207] %v4069
        %v4071 = vld [vmem:[%s3217 + $0xd48] sm:%s3207]
        %4072 = vst [vmem:[%s3218 + $0xd50] sm:%s3207] %v4071
        %v4073 = vld [vmem:[%s3217 + $0xd4c] sm:%s3207]
        %4074 = vst [vmem:[%s3218 + $0xd58] sm:%s3207] %v4073
        %v4075 = vld [vmem:[%s3217 + $0xd50] sm:%s3207]
        %4076 = vst [vmem:[%s3218 + $0xd60] sm:%s3207] %v4075
        %v4077 = vld [vmem:[%s3217 + $0xd54] sm:%s3207]
        %4078 = vst [vmem:[%s3218 + $0xd68] sm:%s3207] %v4077
        %v4079 = vld [vmem:[%s3217 + $0xd58] sm:%s3207]
        %4080 = vst [vmem:[%s3218 + $0xd70] sm:%s3207] %v4079
        %v4081 = vld [vmem:[%s3217 + $0xd5c] sm:%s3207]
        %4082 = vst [vmem:[%s3218 + $0xd78] sm:%s3207] %v4081
        %v4083 = vld [vmem:[%s3217 + $0xd80] sm:%s3207]
        %4084 = vst [vmem:[%s3218 + $0xd80] sm:%s3207] %v4083
        %v4085 = vld [vmem:[%s3217 + $0xd84] sm:%s3207]
        %4086 = vst [vmem:[%s3218 + $0xd88] sm:%s3207] %v4085
        %v4087 = vld [vmem:[%s3217 + $0xd88] sm:%s3207]
        %4088 = vst [vmem:[%s3218 + $0xd90] sm:%s3207] %v4087
        %v4089 = vld [vmem:[%s3217 + $0xd8c] sm:%s3207]
        %4090 = vst [vmem:[%s3218 + $0xd98] sm:%s3207] %v4089
        %v4091 = vld [vmem:[%s3217 + $0xd90] sm:%s3207]
        %4092 = vst [vmem:[%s3218 + $0xda0] sm:%s3207] %v4091
        %v4093 = vld [vmem:[%s3217 + $0xd94] sm:%s3207]
        %4094 = vst [vmem:[%s3218 + $0xda8] sm:%s3207] %v4093
        %v4095 = vld [vmem:[%s3217 + $0xd98] sm:%s3207]
        %4096 = vst [vmem:[%s3218 + $0xdb0] sm:%s3207] %v4095
        %v4097 = vld [vmem:[%s3217 + $0xd9c] sm:%s3207]
        %4098 = vst [vmem:[%s3218 + $0xdb8] sm:%s3207] %v4097
        %v4099 = vld [vmem:[%s3217 + $0xdc0] sm:%s3207]
        %4100 = vst [vmem:[%s3218 + $0xdc0] sm:%s3207] %v4099
        %v4101 = vld [vmem:[%s3217 + $0xdc4] sm:%s3207]
        %4102 = vst [vmem:[%s3218 + $0xdc8] sm:%s3207] %v4101
        %v4103 = vld [vmem:[%s3217 + $0xdc8] sm:%s3207]
        %4104 = vst [vmem:[%s3218 + $0xdd0] sm:%s3207] %v4103
        %v4105 = vld [vmem:[%s3217 + $0xdcc] sm:%s3207]
        %4106 = vst [vmem:[%s3218 + $0xdd8] sm:%s3207] %v4105
        %v4107 = vld [vmem:[%s3217 + $0xdd0] sm:%s3207]
        %4108 = vst [vmem:[%s3218 + $0xde0] sm:%s3207] %v4107
        %v4109 = vld [vmem:[%s3217 + $0xdd4] sm:%s3207]
        %4110 = vst [vmem:[%s3218 + $0xde8] sm:%s3207] %v4109
        %v4111 = vld [vmem:[%s3217 + $0xdd8] sm:%s3207]
        %4112 = vst [vmem:[%s3218 + $0xdf0] sm:%s3207] %v4111
        %v4113 = vld [vmem:[%s3217 + $0xddc] sm:%s3207]
        %4114 = vst [vmem:[%s3218 + $0xdf8] sm:%s3207] %v4113
        %v4115 = vld [vmem:[%s3217 + $0xe00] sm:%s3207]
        %4116 = vst [vmem:[%s3218 + $0xe00] sm:%s3207] %v4115
        %v4117 = vld [vmem:[%s3217 + $0xe04] sm:%s3207]
        %4118 = vst [vmem:[%s3218 + $0xe08] sm:%s3207] %v4117
        %v4119 = vld [vmem:[%s3217 + $0xe08] sm:%s3207]
        %4120 = vst [vmem:[%s3218 + $0xe10] sm:%s3207] %v4119
        %v4121 = vld [vmem:[%s3217 + $0xe0c] sm:%s3207]
        %4122 = vst [vmem:[%s3218 + $0xe18] sm:%s3207] %v4121
        %v4123 = vld [vmem:[%s3217 + $0xe10] sm:%s3207]
        %4124 = vst [vmem:[%s3218 + $0xe20] sm:%s3207] %v4123
        %v4125 = vld [vmem:[%s3217 + $0xe14] sm:%s3207]
        %4126 = vst [vmem:[%s3218 + $0xe28] sm:%s3207] %v4125
        %v4127 = vld [vmem:[%s3217 + $0xe18] sm:%s3207]
        %4128 = vst [vmem:[%s3218 + $0xe30] sm:%s3207] %v4127
        %v4129 = vld [vmem:[%s3217 + $0xe1c] sm:%s3207]
        %4130 = vst [vmem:[%s3218 + $0xe38] sm:%s3207] %v4129
        %v4131 = vld [vmem:[%s3217 + $0xe40] sm:%s3207]
        %4132 = vst [vmem:[%s3218 + $0xe40] sm:%s3207] %v4131
        %v4133 = vld [vmem:[%s3217 + $0xe44] sm:%s3207]
        %4134 = vst [vmem:[%s3218 + $0xe48] sm:%s3207] %v4133
        %v4135 = vld [vmem:[%s3217 + $0xe48] sm:%s3207]
        %4136 = vst [vmem:[%s3218 + $0xe50] sm:%s3207] %v4135
        %v4137 = vld [vmem:[%s3217 + $0xe4c] sm:%s3207]
        %4138 = vst [vmem:[%s3218 + $0xe58] sm:%s3207] %v4137
        %v4139 = vld [vmem:[%s3217 + $0xe50] sm:%s3207]
        %4140 = vst [vmem:[%s3218 + $0xe60] sm:%s3207] %v4139
        %v4141 = vld [vmem:[%s3217 + $0xe54] sm:%s3207]
        %4142 = vst [vmem:[%s3218 + $0xe68] sm:%s3207] %v4141
        %v4143 = vld [vmem:[%s3217 + $0xe58] sm:%s3207]
        %4144 = vst [vmem:[%s3218 + $0xe70] sm:%s3207] %v4143
        %v4145 = vld [vmem:[%s3217 + $0xe5c] sm:%s3207]
        %4146 = vst [vmem:[%s3218 + $0xe78] sm:%s3207] %v4145
        %v4147 = vld [vmem:[%s3217 + $0xe80] sm:%s3207]
        %4148 = vst [vmem:[%s3218 + $0xe80] sm:%s3207] %v4147
        %v4149 = vld [vmem:[%s3217 + $0xe84] sm:%s3207]
        %4150 = vst [vmem:[%s3218 + $0xe88] sm:%s3207] %v4149
        %v4151 = vld [vmem:[%s3217 + $0xe88] sm:%s3207]
        %4152 = vst [vmem:[%s3218 + $0xe90] sm:%s3207] %v4151
        %v4153 = vld [vmem:[%s3217 + $0xe8c] sm:%s3207]
        %4154 = vst [vmem:[%s3218 + $0xe98] sm:%s3207] %v4153
        %v4155 = vld [vmem:[%s3217 + $0xe90] sm:%s3207]
        %4156 = vst [vmem:[%s3218 + $0xea0] sm:%s3207] %v4155
        %v4157 = vld [vmem:[%s3217 + $0xe94] sm:%s3207]
        %4158 = vst [vmem:[%s3218 + $0xea8] sm:%s3207] %v4157
        %v4159 = vld [vmem:[%s3217 + $0xe98] sm:%s3207]
        %4160 = vst [vmem:[%s3218 + $0xeb0] sm:%s3207] %v4159
        %v4161 = vld [vmem:[%s3217 + $0xe9c] sm:%s3207]
        %4162 = vst [vmem:[%s3218 + $0xeb8] sm:%s3207] %v4161
        %v4163 = vld [vmem:[%s3217 + $0xec0] sm:%s3207]
        %4164 = vst [vmem:[%s3218 + $0xec0] sm:%s3207] %v4163
        %v4165 = vld [vmem:[%s3217 + $0xec4] sm:%s3207]
        %4166 = vst [vmem:[%s3218 + $0xec8] sm:%s3207] %v4165
        %v4167 = vld [vmem:[%s3217 + $0xec8] sm:%s3207]
        %4168 = vst [vmem:[%s3218 + $0xed0] sm:%s3207] %v4167
        %v4169 = vld [vmem:[%s3217 + $0xecc] sm:%s3207]
        %4170 = vst [vmem:[%s3218 + $0xed8] sm:%s3207] %v4169
        %v4171 = vld [vmem:[%s3217 + $0xed0] sm:%s3207]
        %4172 = vst [vmem:[%s3218 + $0xee0] sm:%s3207] %v4171
        %v4173 = vld [vmem:[%s3217 + $0xed4] sm:%s3207]
        %4174 = vst [vmem:[%s3218 + $0xee8] sm:%s3207] %v4173
        %v4175 = vld [vmem:[%s3217 + $0xed8] sm:%s3207]
        %4176 = vst [vmem:[%s3218 + $0xef0] sm:%s3207] %v4175
        %v4177 = vld [vmem:[%s3217 + $0xedc] sm:%s3207]
        %4178 = vst [vmem:[%s3218 + $0xef8] sm:%s3207] %v4177
        %v4179 = vld [vmem:[%s3217 + $0xf00] sm:%s3207]
        %4180 = vst [vmem:[%s3218 + $0xf00] sm:%s3207] %v4179
        %v4181 = vld [vmem:[%s3217 + $0xf04] sm:%s3207]
        %4182 = vst [vmem:[%s3218 + $0xf08] sm:%s3207] %v4181
        %v4183 = vld [vmem:[%s3217 + $0xf08] sm:%s3207]
        %4184 = vst [vmem:[%s3218 + $0xf10] sm:%s3207] %v4183
        %v4185 = vld [vmem:[%s3217 + $0xf0c] sm:%s3207]
        %4186 = vst [vmem:[%s3218 + $0xf18] sm:%s3207] %v4185
        %v4187 = vld [vmem:[%s3217 + $0xf10] sm:%s3207]
        %4188 = vst [vmem:[%s3218 + $0xf20] sm:%s3207] %v4187
        %v4189 = vld [vmem:[%s3217 + $0xf14] sm:%s3207]
        %4190 = vst [vmem:[%s3218 + $0xf28] sm:%s3207] %v4189
        %v4191 = vld [vmem:[%s3217 + $0xf18] sm:%s3207]
        %4192 = vst [vmem:[%s3218 + $0xf30] sm:%s3207] %v4191
        %v4193 = vld [vmem:[%s3217 + $0xf1c] sm:%s3207]
        %4194 = vst [vmem:[%s3218 + $0xf38] sm:%s3207] %v4193
        %v4195 = vld [vmem:[%s3217 + $0xf40] sm:%s3207]
        %4196 = vst [vmem:[%s3218 + $0xf40] sm:%s3207] %v4195
        %v4197 = vld [vmem:[%s3217 + $0xf44] sm:%s3207]
        %4198 = vst [vmem:[%s3218 + $0xf48] sm:%s3207] %v4197
        %v4199 = vld [vmem:[%s3217 + $0xf48] sm:%s3207]
        %4200 = vst [vmem:[%s3218 + $0xf50] sm:%s3207] %v4199
        %v4201 = vld [vmem:[%s3217 + $0xf4c] sm:%s3207]
        %4202 = vst [vmem:[%s3218 + $0xf58] sm:%s3207] %v4201
        %v4203 = vld [vmem:[%s3217 + $0xf50] sm:%s3207]
        %4204 = vst [vmem:[%s3218 + $0xf60] sm:%s3207] %v4203
        %v4205 = vld [vmem:[%s3217 + $0xf54] sm:%s3207]
        %4206 = vst [vmem:[%s3218 + $0xf68] sm:%s3207] %v4205
        %v4207 = vld [vmem:[%s3217 + $0xf58] sm:%s3207]
        %4208 = vst [vmem:[%s3218 + $0xf70] sm:%s3207] %v4207
        %v4209 = vld [vmem:[%s3217 + $0xf5c] sm:%s3207]
        %4210 = vst [vmem:[%s3218 + $0xf78] sm:%s3207] %v4209
        %v4211 = vld [vmem:[%s3217 + $0xf80] sm:%s3207]
        %4212 = vst [vmem:[%s3218 + $0xf80] sm:%s3207] %v4211
        %v4213 = vld [vmem:[%s3217 + $0xf84] sm:%s3207]
        %4214 = vst [vmem:[%s3218 + $0xf88] sm:%s3207] %v4213
        %v4215 = vld [vmem:[%s3217 + $0xf88] sm:%s3207]
        %4216 = vst [vmem:[%s3218 + $0xf90] sm:%s3207] %v4215
        %v4217 = vld [vmem:[%s3217 + $0xf8c] sm:%s3207]
        %4218 = vst [vmem:[%s3218 + $0xf98] sm:%s3207] %v4217
        %v4219 = vld [vmem:[%s3217 + $0xf90] sm:%s3207]
        %4220 = vst [vmem:[%s3218 + $0xfa0] sm:%s3207] %v4219
        %v4221 = vld [vmem:[%s3217 + $0xf94] sm:%s3207]
        %4222 = vst [vmem:[%s3218 + $0xfa8] sm:%s3207] %v4221
        %v4223 = vld [vmem:[%s3217 + $0xf98] sm:%s3207]
        %4224 = vst [vmem:[%s3218 + $0xfb0] sm:%s3207] %v4223
        %v4225 = vld [vmem:[%s3217 + $0xf9c] sm:%s3207]
        %4226 = vst [vmem:[%s3218 + $0xfb8] sm:%s3207] %v4225
        %v4227 = vld [vmem:[%s3217 + $0xfc0] sm:%s3207]
        %4228 = vst [vmem:[%s3218 + $0xfc0] sm:%s3207] %v4227
        %v4229 = vld [vmem:[%s3217 + $0xfc4] sm:%s3207]
        %4230 = vst [vmem:[%s3218 + $0xfc8] sm:%s3207] %v4229
        %v4231 = vld [vmem:[%s3217 + $0xfc8] sm:%s3207]
        %4232 = vst [vmem:[%s3218 + $0xfd0] sm:%s3207] %v4231
        %v4233 = vld [vmem:[%s3217 + $0xfcc] sm:%s3207]
        %4234 = vst [vmem:[%s3218 + $0xfd8] sm:%s3207] %v4233
        %v4235 = vld [vmem:[%s3217 + $0xfd0] sm:%s3207]
        %4236 = vst [vmem:[%s3218 + $0xfe0] sm:%s3207] %v4235
        %v4237 = vld [vmem:[%s3217 + $0xfd4] sm:%s3207]
        %4238 = vst [vmem:[%s3218 + $0xfe8] sm:%s3207] %v4237
        %v4239 = vld [vmem:[%s3217 + $0xfd8] sm:%s3207]
        %4240 = vst [vmem:[%s3218 + $0xff0] sm:%s3207] %v4239
        %v4241 = vld [vmem:[%s3217 + $0xfdc] sm:%s3207]
        %4242 = vst [vmem:[%s3218 + $0xff8] sm:%s3207] %v4241
        %s4243 = sadd.s32 1, %s3216
        %p4244 = scmp.ge.s32.totalorder %s4243, 2
        %s4245 = scalar_select %p4244, 0, %s4243
        %s4246 = smul.u32 %s4245, 32
        %s4247 = smul.u32 %s4245, 4
        %s4248 = scalar_lea.vmem %s2149, %s4246
        %s4249 = scalar_lea.vmem %s2151, %s4247 [#allocation2]
      $region75: #{_lambda_.1} parent=62 // loop_footer
        %s3215 = sadd.s32 1, %s3211
      $region76: #{_lambda_.1} parent=62 // loop_footer_branch
        %3210 = sbr.rel target = $region72
      $region77: #{_lambda_.1} parent=62 // loop_exit
        _
    $region63: #{_lambda_.1} parent=36 // pred_fallthru
      _
  $region37: #{_lambda_.1} parent=0 // pred_fallthru
    _
  // Predicated region
  $region38: #{_lambda_.1} parent=0 // pred_check
    %p38 = pneg %p34
  $region39: #{_lambda_.1} parent=0 // pred_check_branch
    %40 = sbr.rel (%p38) target = $region41
  $region40: #{_lambda_.1} parent=0 // pred_region
    %s41 = sshllo.u32 0, 4
    loop: start=0, step=1, limit=2
    $region42: #{_lambda_.1} parent=40 // loop_pre_header
      _
    $region43: #{_lambda_.1} parent=40 // loop_header
      %s45 = sphi 0, %s49
      %p46 = scmp.ge.s32.totalorder %s45, 2
      %s50 = sphi 0, %s1079
      %s51 = sphi %s5, %s1082
      %s52 = sphi [#allocation2], %s1083
    $region44: #{_lambda_.1} parent=40 // loop_header_branch
      %48 = sbr.rel (%p46) target = $region48
    $region45: #{_lambda_.1} parent=40 // loop_body
      %v53 = vld [vmem:[%s51] sm:%s41]
      %54 = vst [vmem:[%s52] sm:%s41] %v53
      %v55 = vld [vmem:[%s51 + $0x4] sm:%s41]
      %56 = vst [vmem:[%s52 + $0x8] sm:%s41] %v55
      %v57 = vld [vmem:[%s51 + $0x8] sm:%s41]
      %58 = vst [vmem:[%s52 + $0x10] sm:%s41] %v57
      %v59 = vld [vmem:[%s51 + $0xc] sm:%s41]
      %60 = vst [vmem:[%s52 + $0x18] sm:%s41] %v59
      %v61 = vld [vmem:[%s51 + $0x10] sm:%s41]
      %62 = vst [vmem:[%s52 + $0x20] sm:%s41] %v61
      %v63 = vld [vmem:[%s51 + $0x14] sm:%s41]
      %64 = vst [vmem:[%s52 + $0x28] sm:%s41] %v63
      %v65 = vld [vmem:[%s51 + $0x18] sm:%s41]
      %66 = vst [vmem:[%s52 + $0x30] sm:%s41] %v65
      %v67 = vld [vmem:[%s51 + $0x1c] sm:%s41]
      %68 = vst [vmem:[%s52 + $0x38] sm:%s41] %v67
      %v69 = vld [vmem:[%s51 + $0x40] sm:%s41]
      %70 = vst [vmem:[%s52 + $0x40] sm:%s41] %v69
      %v71 = vld [vmem:[%s51 + $0x44] sm:%s41]
      %72 = vst [vmem:[%s52 + $0x48] sm:%s41] %v71
      %v73 = vld [vmem:[%s51 + $0x48] sm:%s41]
      %74 = vst [vmem:[%s52 + $0x50] sm:%s41] %v73
      %v75 = vld [vmem:[%s51 + $0x4c] sm:%s41]
      %76 = vst [vmem:[%s52 + $0x58] sm:%s41] %v75
      %v77 = vld [vmem:[%s51 + $0x50] sm:%s41]
      %78 = vst [vmem:[%s52 + $0x60] sm:%s41] %v77
      %v79 = vld [vmem:[%s51 + $0x54] sm:%s41]
      %80 = vst [vmem:[%s52 + $0x68] sm:%s41] %v79
      %v81 = vld [vmem:[%s51 + $0x58] sm:%s41]
      %82 = vst [vmem:[%s52 + $0x70] sm:%s41] %v81
      %v83 = vld [vmem:[%s51 + $0x5c] sm:%s41]
      %84 = vst [vmem:[%s52 + $0x78] sm:%s41] %v83
      %v85 = vld [vmem:[%s51 + $0x80] sm:%s41]
      %86 = vst [vmem:[%s52 + $0x80] sm:%s41] %v85
      %v87 = vld [vmem:[%s51 + $0x84] sm:%s41]
      %88 = vst [vmem:[%s52 + $0x88] sm:%s41] %v87
      %v89 = vld [vmem:[%s51 + $0x88] sm:%s41]
      %90 = vst [vmem:[%s52 + $0x90] sm:%s41] %v89
      %v91 = vld [vmem:[%s51 + $0x8c] sm:%s41]
      %92 = vst [vmem:[%s52 + $0x98] sm:%s41] %v91
      %v93 = vld [vmem:[%s51 + $0x90] sm:%s41]
      %94 = vst [vmem:[%s52 + $0xa0] sm:%s41] %v93
      %v95 = vld [vmem:[%s51 + $0x94] sm:%s41]
      %96 = vst [vmem:[%s52 + $0xa8] sm:%s41] %v95
      %v97 = vld [vmem:[%s51 + $0x98] sm:%s41]
      %98 = vst [vmem:[%s52 + $0xb0] sm:%s41] %v97
      %v99 = vld [vmem:[%s51 + $0x9c] sm:%s41]
      %100 = vst [vmem:[%s52 + $0xb8] sm:%s41] %v99
      %v101 = vld [vmem:[%s51 + $0xc0] sm:%s41]
      %102 = vst [vmem:[%s52 + $0xc0] sm:%s41] %v101
      %v103 = vld [vmem:[%s51 + $0xc4] sm:%s41]
      %104 = vst [vmem:[%s52 + $0xc8] sm:%s41] %v103
      %v105 = vld [vmem:[%s51 + $0xc8] sm:%s41]
      %106 = vst [vmem:[%s52 + $0xd0] sm:%s41] %v105
      %v107 = vld [vmem:[%s51 + $0xcc] sm:%s41]
      %108 = vst [vmem:[%s52 + $0xd8] sm:%s41] %v107
      %v109 = vld [vmem:[%s51 + $0xd0] sm:%s41]
      %110 = vst [vmem:[%s52 + $0xe0] sm:%s41] %v109
      %v111 = vld [vmem:[%s51 + $0xd4] sm:%s41]
      %112 = vst [vmem:[%s52 + $0xe8] sm:%s41] %v111
      %v113 = vld [vmem:[%s51 + $0xd8] sm:%s41]
      %114 = vst [vmem:[%s52 + $0xf0] sm:%s41] %v113
      %v115 = vld [vmem:[%s51 + $0xdc] sm:%s41]
      %116 = vst [vmem:[%s52 + $0xf8] sm:%s41] %v115
      %v117 = vld [vmem:[%s51 + $0x100] sm:%s41]
      %118 = vst [vmem:[%s52 + $0x100] sm:%s41] %v117
      %v119 = vld [vmem:[%s51 + $0x104] sm:%s41]
      %120 = vst [vmem:[%s52 + $0x108] sm:%s41] %v119
      %v121 = vld [vmem:[%s51 + $0x108] sm:%s41]
      %122 = vst [vmem:[%s52 + $0x110] sm:%s41] %v121
      %v123 = vld [vmem:[%s51 + $0x10c] sm:%s41]
      %124 = vst [vmem:[%s52 + $0x118] sm:%s41] %v123
      %v125 = vld [vmem:[%s51 + $0x110] sm:%s41]
      %126 = vst [vmem:[%s52 + $0x120] sm:%s41] %v125
      %v127 = vld [vmem:[%s51 + $0x114] sm:%s41]
      %128 = vst [vmem:[%s52 + $0x128] sm:%s41] %v127
      %v129 = vld [vmem:[%s51 + $0x118] sm:%s41]
      %130 = vst [vmem:[%s52 + $0x130] sm:%s41] %v129
      %v131 = vld [vmem:[%s51 + $0x11c] sm:%s41]
      %132 = vst [vmem:[%s52 + $0x138] sm:%s41] %v131
      %v133 = vld [vmem:[%s51 + $0x140] sm:%s41]
      %134 = vst [vmem:[%s52 + $0x140] sm:%s41] %v133
      %v135 = vld [vmem:[%s51 + $0x144] sm:%s41]
      %136 = vst [vmem:[%s52 + $0x148] sm:%s41] %v135
      %v137 = vld [vmem:[%s51 + $0x148] sm:%s41]
      %138 = vst [vmem:[%s52 + $0x150] sm:%s41] %v137
      %v139 = vld [vmem:[%s51 + $0x14c] sm:%s41]
      %140 = vst [vmem:[%s52 + $0x158] sm:%s41] %v139
      %v141 = vld [vmem:[%s51 + $0x150] sm:%s41]
      %142 = vst [vmem:[%s52 + $0x160] sm:%s41] %v141
      %v143 = vld [vmem:[%s51 + $0x154] sm:%s41]
      %144 = vst [vmem:[%s52 + $0x168] sm:%s41] %v143
      %v145 = vld [vmem:[%s51 + $0x158] sm:%s41]
      %146 = vst [vmem:[%s52 + $0x170] sm:%s41] %v145
      %v147 = vld [vmem:[%s51 + $0x15c] sm:%s41]
      %148 = vst [vmem:[%s52 + $0x178] sm:%s41] %v147
      %v149 = vld [vmem:[%s51 + $0x180] sm:%s41]
      %150 = vst [vmem:[%s52 + $0x180] sm:%s41] %v149
      %v151 = vld [vmem:[%s51 + $0x184] sm:%s41]
      %152 = vst [vmem:[%s52 + $0x188] sm:%s41] %v151
      %v153 = vld [vmem:[%s51 + $0x188] sm:%s41]
      %154 = vst [vmem:[%s52 + $0x190] sm:%s41] %v153
      %v155 = vld [vmem:[%s51 + $0x18c] sm:%s41]
      %156 = vst [vmem:[%s52 + $0x198] sm:%s41] %v155
      %v157 = vld [vmem:[%s51 + $0x190] sm:%s41]
      %158 = vst [vmem:[%s52 + $0x1a0] sm:%s41] %v157
      %v159 = vld [vmem:[%s51 + $0x194] sm:%s41]
      %160 = vst [vmem:[%s52 + $0x1a8] sm:%s41] %v159
      %v161 = vld [vmem:[%s51 + $0x198] sm:%s41]
      %162 = vst [vmem:[%s52 + $0x1b0] sm:%s41] %v161
      %v163 = vld [vmem:[%s51 + $0x19c] sm:%s41]
      %164 = vst [vmem:[%s52 + $0x1b8] sm:%s41] %v163
      %v165 = vld [vmem:[%s51 + $0x1c0] sm:%s41]
      %166 = vst [vmem:[%s52 + $0x1c0] sm:%s41] %v165
      %v167 = vld [vmem:[%s51 + $0x1c4] sm:%s41]
      %168 = vst [vmem:[%s52 + $0x1c8] sm:%s41] %v167
      %v169 = vld [vmem:[%s51 + $0x1c8] sm:%s41]
      %170 = vst [vmem:[%s52 + $0x1d0] sm:%s41] %v169
      %v171 = vld [vmem:[%s51 + $0x1cc] sm:%s41]
      %172 = vst [vmem:[%s52 + $0x1d8] sm:%s41] %v171
      %v173 = vld [vmem:[%s51 + $0x1d0] sm:%s41]
      %174 = vst [vmem:[%s52 + $0x1e0] sm:%s41] %v173
      %v175 = vld [vmem:[%s51 + $0x1d4] sm:%s41]
      %176 = vst [vmem:[%s52 + $0x1e8] sm:%s41] %v175
      %v177 = vld [vmem:[%s51 + $0x1d8] sm:%s41]
      %178 = vst [vmem:[%s52 + $0x1f0] sm:%s41] %v177
      %v179 = vld [vmem:[%s51 + $0x1dc] sm:%s41]
      %180 = vst [vmem:[%s52 + $0x1f8] sm:%s41] %v179
      %v181 = vld [vmem:[%s51 + $0x200] sm:%s41]
      %182 = vst [vmem:[%s52 + $0x200] sm:%s41] %v181
      %v183 = vld [vmem:[%s51 + $0x204] sm:%s41]
      %184 = vst [vmem:[%s52 + $0x208] sm:%s41] %v183
      %v185 = vld [vmem:[%s51 + $0x208] sm:%s41]
      %186 = vst [vmem:[%s52 + $0x210] sm:%s41] %v185
      %v187 = vld [vmem:[%s51 + $0x20c] sm:%s41]
      %188 = vst [vmem:[%s52 + $0x218] sm:%s41] %v187
      %v189 = vld [vmem:[%s51 + $0x210] sm:%s41]
      %190 = vst [vmem:[%s52 + $0x220] sm:%s41] %v189
      %v191 = vld [vmem:[%s51 + $0x214] sm:%s41]
      %192 = vst [vmem:[%s52 + $0x228] sm:%s41] %v191
      %v193 = vld [vmem:[%s51 + $0x218] sm:%s41]
      %194 = vst [vmem:[%s52 + $0x230] sm:%s41] %v193
      %v195 = vld [vmem:[%s51 + $0x21c] sm:%s41]
      %196 = vst [vmem:[%s52 + $0x238] sm:%s41] %v195
      %v197 = vld [vmem:[%s51 + $0x240] sm:%s41]
      %198 = vst [vmem:[%s52 + $0x240] sm:%s41] %v197
      %v199 = vld [vmem:[%s51 + $0x244] sm:%s41]
      %200 = vst [vmem:[%s52 + $0x248] sm:%s41] %v199
      %v201 = vld [vmem:[%s51 + $0x248] sm:%s41]
      %202 = vst [vmem:[%s52 + $0x250] sm:%s41] %v201
      %v203 = vld [vmem:[%s51 + $0x24c] sm:%s41]
      %204 = vst [vmem:[%s52 + $0x258] sm:%s41] %v203
      %v205 = vld [vmem:[%s51 + $0x250] sm:%s41]
      %206 = vst [vmem:[%s52 + $0x260] sm:%s41] %v205
      %v207 = vld [vmem:[%s51 + $0x254] sm:%s41]
      %208 = vst [vmem:[%s52 + $0x268] sm:%s41] %v207
      %v209 = vld [vmem:[%s51 + $0x258] sm:%s41]
      %210 = vst [vmem:[%s52 + $0x270] sm:%s41] %v209
      %v211 = vld [vmem:[%s51 + $0x25c] sm:%s41]
      %212 = vst [vmem:[%s52 + $0x278] sm:%s41] %v211
      %v213 = vld [vmem:[%s51 + $0x280] sm:%s41]
      %214 = vst [vmem:[%s52 + $0x280] sm:%s41] %v213
      %v215 = vld [vmem:[%s51 + $0x284] sm:%s41]
      %216 = vst [vmem:[%s52 + $0x288] sm:%s41] %v215
      %v217 = vld [vmem:[%s51 + $0x288] sm:%s41]
      %218 = vst [vmem:[%s52 + $0x290] sm:%s41] %v217
      %v219 = vld [vmem:[%s51 + $0x28c] sm:%s41]
      %220 = vst [vmem:[%s52 + $0x298] sm:%s41] %v219
      %v221 = vld [vmem:[%s51 + $0x290] sm:%s41]
      %222 = vst [vmem:[%s52 + $0x2a0] sm:%s41] %v221
      %v223 = vld [vmem:[%s51 + $0x294] sm:%s41]
      %224 = vst [vmem:[%s52 + $0x2a8] sm:%s41] %v223
      %v225 = vld [vmem:[%s51 + $0x298] sm:%s41]
      %226 = vst [vmem:[%s52 + $0x2b0] sm:%s41] %v225
      %v227 = vld [vmem:[%s51 + $0x29c] sm:%s41]
      %228 = vst [vmem:[%s52 + $0x2b8] sm:%s41] %v227
      %v229 = vld [vmem:[%s51 + $0x2c0] sm:%s41]
      %230 = vst [vmem:[%s52 + $0x2c0] sm:%s41] %v229
      %v231 = vld [vmem:[%s51 + $0x2c4] sm:%s41]
      %232 = vst [vmem:[%s52 + $0x2c8] sm:%s41] %v231
      %v233 = vld [vmem:[%s51 + $0x2c8] sm:%s41]
      %234 = vst [vmem:[%s52 + $0x2d0] sm:%s41] %v233
      %v235 = vld [vmem:[%s51 + $0x2cc] sm:%s41]
      %236 = vst [vmem:[%s52 + $0x2d8] sm:%s41] %v235
      %v237 = vld [vmem:[%s51 + $0x2d0] sm:%s41]
      %238 = vst [vmem:[%s52 + $0x2e0] sm:%s41] %v237
      %v239 = vld [vmem:[%s51 + $0x2d4] sm:%s41]
      %240 = vst [vmem:[%s52 + $0x2e8] sm:%s41] %v239
      %v241 = vld [vmem:[%s51 + $0x2d8] sm:%s41]
      %242 = vst [vmem:[%s52 + $0x2f0] sm:%s41] %v241
      %v243 = vld [vmem:[%s51 + $0x2dc] sm:%s41]
      %244 = vst [vmem:[%s52 + $0x2f8] sm:%s41] %v243
      %v245 = vld [vmem:[%s51 + $0x300] sm:%s41]
      %246 = vst [vmem:[%s52 + $0x300] sm:%s41] %v245
      %v247 = vld [vmem:[%s51 + $0x304] sm:%s41]
      %248 = vst [vmem:[%s52 + $0x308] sm:%s41] %v247
      %v249 = vld [vmem:[%s51 + $0x308] sm:%s41]
      %250 = vst [vmem:[%s52 + $0x310] sm:%s41] %v249
      %v251 = vld [vmem:[%s51 + $0x30c] sm:%s41]
      %252 = vst [vmem:[%s52 + $0x318] sm:%s41] %v251
      %v253 = vld [vmem:[%s51 + $0x310] sm:%s41]
      %254 = vst [vmem:[%s52 + $0x320] sm:%s41] %v253
      %v255 = vld [vmem:[%s51 + $0x314] sm:%s41]
      %256 = vst [vmem:[%s52 + $0x328] sm:%s41] %v255
      %v257 = vld [vmem:[%s51 + $0x318] sm:%s41]
      %258 = vst [vmem:[%s52 + $0x330] sm:%s41] %v257
      %v259 = vld [vmem:[%s51 + $0x31c] sm:%s41]
      %260 = vst [vmem:[%s52 + $0x338] sm:%s41] %v259
      %v261 = vld [vmem:[%s51 + $0x340] sm:%s41]
      %262 = vst [vmem:[%s52 + $0x340] sm:%s41] %v261
      %v263 = vld [vmem:[%s51 + $0x344] sm:%s41]
      %264 = vst [vmem:[%s52 + $0x348] sm:%s41] %v263
      %v265 = vld [vmem:[%s51 + $0x348] sm:%s41]
      %266 = vst [vmem:[%s52 + $0x350] sm:%s41] %v265
      %v267 = vld [vmem:[%s51 + $0x34c] sm:%s41]
      %268 = vst [vmem:[%s52 + $0x358] sm:%s41] %v267
      %v269 = vld [vmem:[%s51 + $0x350] sm:%s41]
      %270 = vst [vmem:[%s52 + $0x360] sm:%s41] %v269
      %v271 = vld [vmem:[%s51 + $0x354] sm:%s41]
      %272 = vst [vmem:[%s52 + $0x368] sm:%s41] %v271
      %v273 = vld [vmem:[%s51 + $0x358] sm:%s41]
      %274 = vst [vmem:[%s52 + $0x370] sm:%s41] %v273
      %v275 = vld [vmem:[%s51 + $0x35c] sm:%s41]
      %276 = vst [vmem:[%s52 + $0x378] sm:%s41] %v275
      %v277 = vld [vmem:[%s51 + $0x380] sm:%s41]
      %278 = vst [vmem:[%s52 + $0x380] sm:%s41] %v277
      %v279 = vld [vmem:[%s51 + $0x384] sm:%s41]
      %280 = vst [vmem:[%s52 + $0x388] sm:%s41] %v279
      %v281 = vld [vmem:[%s51 + $0x388] sm:%s41]
      %282 = vst [vmem:[%s52 + $0x390] sm:%s41] %v281
      %v283 = vld [vmem:[%s51 + $0x38c] sm:%s41]
      %284 = vst [vmem:[%s52 + $0x398] sm:%s41] %v283
      %v285 = vld [vmem:[%s51 + $0x390] sm:%s41]
      %286 = vst [vmem:[%s52 + $0x3a0] sm:%s41] %v285
      %v287 = vld [vmem:[%s51 + $0x394] sm:%s41]
      %288 = vst [vmem:[%s52 + $0x3a8] sm:%s41] %v287
      %v289 = vld [vmem:[%s51 + $0x398] sm:%s41]
      %290 = vst [vmem:[%s52 + $0x3b0] sm:%s41] %v289
      %v291 = vld [vmem:[%s51 + $0x39c] sm:%s41]
      %292 = vst [vmem:[%s52 + $0x3b8] sm:%s41] %v291
      %v293 = vld [vmem:[%s51 + $0x3c0] sm:%s41]
      %294 = vst [vmem:[%s52 + $0x3c0] sm:%s41] %v293
      %v295 = vld [vmem:[%s51 + $0x3c4] sm:%s41]
      %296 = vst [vmem:[%s52 + $0x3c8] sm:%s41] %v295
      %v297 = vld [vmem:[%s51 + $0x3c8] sm:%s41]
      %298 = vst [vmem:[%s52 + $0x3d0] sm:%s41] %v297
      %v299 = vld [vmem:[%s51 + $0x3cc] sm:%s41]
      %300 = vst [vmem:[%s52 + $0x3d8] sm:%s41] %v299
      %v301 = vld [vmem:[%s51 + $0x3d0] sm:%s41]
      %302 = vst [vmem:[%s52 + $0x3e0] sm:%s41] %v301
      %v303 = vld [vmem:[%s51 + $0x3d4] sm:%s41]
      %304 = vst [vmem:[%s52 + $0x3e8] sm:%s41] %v303
      %v305 = vld [vmem:[%s51 + $0x3d8] sm:%s41]
      %306 = vst [vmem:[%s52 + $0x3f0] sm:%s41] %v305
      %v307 = vld [vmem:[%s51 + $0x3dc] sm:%s41]
      %308 = vst [vmem:[%s52 + $0x3f8] sm:%s41] %v307
      %v309 = vld [vmem:[%s51 + $0x400] sm:%s41]
      %310 = vst [vmem:[%s52 + $0x400] sm:%s41] %v309
      %v311 = vld [vmem:[%s51 + $0x404] sm:%s41]
      %312 = vst [vmem:[%s52 + $0x408] sm:%s41] %v311
      %v313 = vld [vmem:[%s51 + $0x408] sm:%s41]
      %314 = vst [vmem:[%s52 + $0x410] sm:%s41] %v313
      %v315 = vld [vmem:[%s51 + $0x40c] sm:%s41]
      %316 = vst [vmem:[%s52 + $0x418] sm:%s41] %v315
      %v317 = vld [vmem:[%s51 + $0x410] sm:%s41]
      %318 = vst [vmem:[%s52 + $0x420] sm:%s41] %v317
      %v319 = vld [vmem:[%s51 + $0x414] sm:%s41]
      %320 = vst [vmem:[%s52 + $0x428] sm:%s41] %v319
      %v321 = vld [vmem:[%s51 + $0x418] sm:%s41]
      %322 = vst [vmem:[%s52 + $0x430] sm:%s41] %v321
      %v323 = vld [vmem:[%s51 + $0x41c] sm:%s41]
      %324 = vst [vmem:[%s52 + $0x438] sm:%s41] %v323
      %v325 = vld [vmem:[%s51 + $0x440] sm:%s41]
      %326 = vst [vmem:[%s52 + $0x440] sm:%s41] %v325
      %v327 = vld [vmem:[%s51 + $0x444] sm:%s41]
      %328 = vst [vmem:[%s52 + $0x448] sm:%s41] %v327
      %v329 = vld [vmem:[%s51 + $0x448] sm:%s41]
      %330 = vst [vmem:[%s52 + $0x450] sm:%s41] %v329
      %v331 = vld [vmem:[%s51 + $0x44c] sm:%s41]
      %332 = vst [vmem:[%s52 + $0x458] sm:%s41] %v331
      %v333 = vld [vmem:[%s51 + $0x450] sm:%s41]
      %334 = vst [vmem:[%s52 + $0x460] sm:%s41] %v333
      %v335 = vld [vmem:[%s51 + $0x454] sm:%s41]
      %336 = vst [vmem:[%s52 + $0x468] sm:%s41] %v335
      %v337 = vld [vmem:[%s51 + $0x458] sm:%s41]
      %338 = vst [vmem:[%s52 + $0x470] sm:%s41] %v337
      %v339 = vld [vmem:[%s51 + $0x45c] sm:%s41]
      %340 = vst [vmem:[%s52 + $0x478] sm:%s41] %v339
      %v341 = vld [vmem:[%s51 + $0x480] sm:%s41]
      %342 = vst [vmem:[%s52 + $0x480] sm:%s41] %v341
      %v343 = vld [vmem:[%s51 + $0x484] sm:%s41]
      %344 = vst [vmem:[%s52 + $0x488] sm:%s41] %v343
      %v345 = vld [vmem:[%s51 + $0x488] sm:%s41]
      %346 = vst [vmem:[%s52 + $0x490] sm:%s41] %v345
      %v347 = vld [vmem:[%s51 + $0x48c] sm:%s41]
      %348 = vst [vmem:[%s52 + $0x498] sm:%s41] %v347
      %v349 = vld [vmem:[%s51 + $0x490] sm:%s41]
      %350 = vst [vmem:[%s52 + $0x4a0] sm:%s41] %v349
      %v351 = vld [vmem:[%s51 + $0x494] sm:%s41]
      %352 = vst [vmem:[%s52 + $0x4a8] sm:%s41] %v351
      %v353 = vld [vmem:[%s51 + $0x498] sm:%s41]
      %354 = vst [vmem:[%s52 + $0x4b0] sm:%s41] %v353
      %v355 = vld [vmem:[%s51 + $0x49c] sm:%s41]
      %356 = vst [vmem:[%s52 + $0x4b8] sm:%s41] %v355
      %v357 = vld [vmem:[%s51 + $0x4c0] sm:%s41]
      %358 = vst [vmem:[%s52 + $0x4c0] sm:%s41] %v357
      %v359 = vld [vmem:[%s51 + $0x4c4] sm:%s41]
      %360 = vst [vmem:[%s52 + $0x4c8] sm:%s41] %v359
      %v361 = vld [vmem:[%s51 + $0x4c8] sm:%s41]
      %362 = vst [vmem:[%s52 + $0x4d0] sm:%s41] %v361
      %v363 = vld [vmem:[%s51 + $0x4cc] sm:%s41]
      %364 = vst [vmem:[%s52 + $0x4d8] sm:%s41] %v363
      %v365 = vld [vmem:[%s51 + $0x4d0] sm:%s41]
      %366 = vst [vmem:[%s52 + $0x4e0] sm:%s41] %v365
      %v367 = vld [vmem:[%s51 + $0x4d4] sm:%s41]
      %368 = vst [vmem:[%s52 + $0x4e8] sm:%s41] %v367
      %v369 = vld [vmem:[%s51 + $0x4d8] sm:%s41]
      %370 = vst [vmem:[%s52 + $0x4f0] sm:%s41] %v369
      %v371 = vld [vmem:[%s51 + $0x4dc] sm:%s41]
      %372 = vst [vmem:[%s52 + $0x4f8] sm:%s41] %v371
      %v373 = vld [vmem:[%s51 + $0x500] sm:%s41]
      %374 = vst [vmem:[%s52 + $0x500] sm:%s41] %v373
      %v375 = vld [vmem:[%s51 + $0x504] sm:%s41]
      %376 = vst [vmem:[%s52 + $0x508] sm:%s41] %v375
      %v377 = vld [vmem:[%s51 + $0x508] sm:%s41]
      %378 = vst [vmem:[%s52 + $0x510] sm:%s41] %v377
      %v379 = vld [vmem:[%s51 + $0x50c] sm:%s41]
      %380 = vst [vmem:[%s52 + $0x518] sm:%s41] %v379
      %v381 = vld [vmem:[%s51 + $0x510] sm:%s41]
      %382 = vst [vmem:[%s52 + $0x520] sm:%s41] %v381
      %v383 = vld [vmem:[%s51 + $0x514] sm:%s41]
      %384 = vst [vmem:[%s52 + $0x528] sm:%s41] %v383
      %v385 = vld [vmem:[%s51 + $0x518] sm:%s41]
      %386 = vst [vmem:[%s52 + $0x530] sm:%s41] %v385
      %v387 = vld [vmem:[%s51 + $0x51c] sm:%s41]
      %388 = vst [vmem:[%s52 + $0x538] sm:%s41] %v387
      %v389 = vld [vmem:[%s51 + $0x540] sm:%s41]
      %390 = vst [vmem:[%s52 + $0x540] sm:%s41] %v389
      %v391 = vld [vmem:[%s51 + $0x544] sm:%s41]
      %392 = vst [vmem:[%s52 + $0x548] sm:%s41] %v391
      %v393 = vld [vmem:[%s51 + $0x548] sm:%s41]
      %394 = vst [vmem:[%s52 + $0x550] sm:%s41] %v393
      %v395 = vld [vmem:[%s51 + $0x54c] sm:%s41]
      %396 = vst [vmem:[%s52 + $0x558] sm:%s41] %v395
      %v397 = vld [vmem:[%s51 + $0x550] sm:%s41]
      %398 = vst [vmem:[%s52 + $0x560] sm:%s41] %v397
      %v399 = vld [vmem:[%s51 + $0x554] sm:%s41]
      %400 = vst [vmem:[%s52 + $0x568] sm:%s41] %v399
      %v401 = vld [vmem:[%s51 + $0x558] sm:%s41]
      %402 = vst [vmem:[%s52 + $0x570] sm:%s41] %v401
      %v403 = vld [vmem:[%s51 + $0x55c] sm:%s41]
      %404 = vst [vmem:[%s52 + $0x578] sm:%s41] %v403
      %v405 = vld [vmem:[%s51 + $0x580] sm:%s41]
      %406 = vst [vmem:[%s52 + $0x580] sm:%s41] %v405
      %v407 = vld [vmem:[%s51 + $0x584] sm:%s41]
      %408 = vst [vmem:[%s52 + $0x588] sm:%s41] %v407
      %v409 = vld [vmem:[%s51 + $0x588] sm:%s41]
      %410 = vst [vmem:[%s52 + $0x590] sm:%s41] %v409
      %v411 = vld [vmem:[%s51 + $0x58c] sm:%s41]
      %412 = vst [vmem:[%s52 + $0x598] sm:%s41] %v411
      %v413 = vld [vmem:[%s51 + $0x590] sm:%s41]
      %414 = vst [vmem:[%s52 + $0x5a0] sm:%s41] %v413
      %v415 = vld [vmem:[%s51 + $0x594] sm:%s41]
      %416 = vst [vmem:[%s52 + $0x5a8] sm:%s41] %v415
      %v417 = vld [vmem:[%s51 + $0x598] sm:%s41]
      %418 = vst [vmem:[%s52 + $0x5b0] sm:%s41] %v417
      %v419 = vld [vmem:[%s51 + $0x59c] sm:%s41]
      %420 = vst [vmem:[%s52 + $0x5b8] sm:%s41] %v419
      %v421 = vld [vmem:[%s51 + $0x5c0] sm:%s41]
      %422 = vst [vmem:[%s52 + $0x5c0] sm:%s41] %v421
      %v423 = vld [vmem:[%s51 + $0x5c4] sm:%s41]
      %424 = vst [vmem:[%s52 + $0x5c8] sm:%s41] %v423
      %v425 = vld [vmem:[%s51 + $0x5c8] sm:%s41]
      %426 = vst [vmem:[%s52 + $0x5d0] sm:%s41] %v425
      %v427 = vld [vmem:[%s51 + $0x5cc] sm:%s41]
      %428 = vst [vmem:[%s52 + $0x5d8] sm:%s41] %v427
      %v429 = vld [vmem:[%s51 + $0x5d0] sm:%s41]
      %430 = vst [vmem:[%s52 + $0x5e0] sm:%s41] %v429
      %v431 = vld [vmem:[%s51 + $0x5d4] sm:%s41]
      %432 = vst [vmem:[%s52 + $0x5e8] sm:%s41] %v431
      %v433 = vld [vmem:[%s51 + $0x5d8] sm:%s41]
      %434 = vst [vmem:[%s52 + $0x5f0] sm:%s41] %v433
      %v435 = vld [vmem:[%s51 + $0x5dc] sm:%s41]
      %436 = vst [vmem:[%s52 + $0x5f8] sm:%s41] %v435
      %v437 = vld [vmem:[%s51 + $0x600] sm:%s41]
      %438 = vst [vmem:[%s52 + $0x600] sm:%s41] %v437
      %v439 = vld [vmem:[%s51 + $0x604] sm:%s41]
      %440 = vst [vmem:[%s52 + $0x608] sm:%s41] %v439
      %v441 = vld [vmem:[%s51 + $0x608] sm:%s41]
      %442 = vst [vmem:[%s52 + $0x610] sm:%s41] %v441
      %v443 = vld [vmem:[%s51 + $0x60c] sm:%s41]
      %444 = vst [vmem:[%s52 + $0x618] sm:%s41] %v443
      %v445 = vld [vmem:[%s51 + $0x610] sm:%s41]
      %446 = vst [vmem:[%s52 + $0x620] sm:%s41] %v445
      %v447 = vld [vmem:[%s51 + $0x614] sm:%s41]
      %448 = vst [vmem:[%s52 + $0x628] sm:%s41] %v447
      %v449 = vld [vmem:[%s51 + $0x618] sm:%s41]
      %450 = vst [vmem:[%s52 + $0x630] sm:%s41] %v449
      %v451 = vld [vmem:[%s51 + $0x61c] sm:%s41]
      %452 = vst [vmem:[%s52 + $0x638] sm:%s41] %v451
      %v453 = vld [vmem:[%s51 + $0x640] sm:%s41]
      %454 = vst [vmem:[%s52 + $0x640] sm:%s41] %v453
      %v455 = vld [vmem:[%s51 + $0x644] sm:%s41]
      %456 = vst [vmem:[%s52 + $0x648] sm:%s41] %v455
      %v457 = vld [vmem:[%s51 + $0x648] sm:%s41]
      %458 = vst [vmem:[%s52 + $0x650] sm:%s41] %v457
      %v459 = vld [vmem:[%s51 + $0x64c] sm:%s41]
      %460 = vst [vmem:[%s52 + $0x658] sm:%s41] %v459
      %v461 = vld [vmem:[%s51 + $0x650] sm:%s41]
      %462 = vst [vmem:[%s52 + $0x660] sm:%s41] %v461
      %v463 = vld [vmem:[%s51 + $0x654] sm:%s41]
      %464 = vst [vmem:[%s52 + $0x668] sm:%s41] %v463
      %v465 = vld [vmem:[%s51 + $0x658] sm:%s41]
      %466 = vst [vmem:[%s52 + $0x670] sm:%s41] %v465
      %v467 = vld [vmem:[%s51 + $0x65c] sm:%s41]
      %468 = vst [vmem:[%s52 + $0x678] sm:%s41] %v467
      %v469 = vld [vmem:[%s51 + $0x680] sm:%s41]
      %470 = vst [vmem:[%s52 + $0x680] sm:%s41] %v469
      %v471 = vld [vmem:[%s51 + $0x684] sm:%s41]
      %472 = vst [vmem:[%s52 + $0x688] sm:%s41] %v471
      %v473 = vld [vmem:[%s51 + $0x688] sm:%s41]
      %474 = vst [vmem:[%s52 + $0x690] sm:%s41] %v473
      %v475 = vld [vmem:[%s51 + $0x68c] sm:%s41]
      %476 = vst [vmem:[%s52 + $0x698] sm:%s41] %v475
      %v477 = vld [vmem:[%s51 + $0x690] sm:%s41]
      %478 = vst [vmem:[%s52 + $0x6a0] sm:%s41] %v477
      %v479 = vld [vmem:[%s51 + $0x694] sm:%s41]
      %480 = vst [vmem:[%s52 + $0x6a8] sm:%s41] %v479
      %v481 = vld [vmem:[%s51 + $0x698] sm:%s41]
      %482 = vst [vmem:[%s52 + $0x6b0] sm:%s41] %v481
      %v483 = vld [vmem:[%s51 + $0x69c] sm:%s41]
      %484 = vst [vmem:[%s52 + $0x6b8] sm:%s41] %v483
      %v485 = vld [vmem:[%s51 + $0x6c0] sm:%s41]
      %486 = vst [vmem:[%s52 + $0x6c0] sm:%s41] %v485
      %v487 = vld [vmem:[%s51 + $0x6c4] sm:%s41]
      %488 = vst [vmem:[%s52 + $0x6c8] sm:%s41] %v487
      %v489 = vld [vmem:[%s51 + $0x6c8] sm:%s41]
      %490 = vst [vmem:[%s52 + $0x6d0] sm:%s41] %v489
      %v491 = vld [vmem:[%s51 + $0x6cc] sm:%s41]
      %492 = vst [vmem:[%s52 + $0x6d8] sm:%s41] %v491
      %v493 = vld [vmem:[%s51 + $0x6d0] sm:%s41]
      %494 = vst [vmem:[%s52 + $0x6e0] sm:%s41] %v493
      %v495 = vld [vmem:[%s51 + $0x6d4] sm:%s41]
      %496 = vst [vmem:[%s52 + $0x6e8] sm:%s41] %v495
      %v497 = vld [vmem:[%s51 + $0x6d8] sm:%s41]
      %498 = vst [vmem:[%s52 + $0x6f0] sm:%s41] %v497
      %v499 = vld [vmem:[%s51 + $0x6dc] sm:%s41]
      %500 = vst [vmem:[%s52 + $0x6f8] sm:%s41] %v499
      %v501 = vld [vmem:[%s51 + $0x700] sm:%s41]
      %502 = vst [vmem:[%s52 + $0x700] sm:%s41] %v501
      %v503 = vld [vmem:[%s51 + $0x704] sm:%s41]
      %504 = vst [vmem:[%s52 + $0x708] sm:%s41] %v503
      %v505 = vld [vmem:[%s51 + $0x708] sm:%s41]
      %506 = vst [vmem:[%s52 + $0x710] sm:%s41] %v505
      %v507 = vld [vmem:[%s51 + $0x70c] sm:%s41]
      %508 = vst [vmem:[%s52 + $0x718] sm:%s41] %v507
      %v509 = vld [vmem:[%s51 + $0x710] sm:%s41]
      %510 = vst [vmem:[%s52 + $0x720] sm:%s41] %v509
      %v511 = vld [vmem:[%s51 + $0x714] sm:%s41]
      %512 = vst [vmem:[%s52 + $0x728] sm:%s41] %v511
      %v513 = vld [vmem:[%s51 + $0x718] sm:%s41]
      %514 = vst [vmem:[%s52 + $0x730] sm:%s41] %v513
      %v515 = vld [vmem:[%s51 + $0x71c] sm:%s41]
      %516 = vst [vmem:[%s52 + $0x738] sm:%s41] %v515
      %v517 = vld [vmem:[%s51 + $0x740] sm:%s41]
      %518 = vst [vmem:[%s52 + $0x740] sm:%s41] %v517
      %v519 = vld [vmem:[%s51 + $0x744] sm:%s41]
      %520 = vst [vmem:[%s52 + $0x748] sm:%s41] %v519
      %v521 = vld [vmem:[%s51 + $0x748] sm:%s41]
      %522 = vst [vmem:[%s52 + $0x750] sm:%s41] %v521
      %v523 = vld [vmem:[%s51 + $0x74c] sm:%s41]
      %524 = vst [vmem:[%s52 + $0x758] sm:%s41] %v523
      %v525 = vld [vmem:[%s51 + $0x750] sm:%s41]
      %526 = vst [vmem:[%s52 + $0x760] sm:%s41] %v525
      %v527 = vld [vmem:[%s51 + $0x754] sm:%s41]
      %528 = vst [vmem:[%s52 + $0x768] sm:%s41] %v527
      %v529 = vld [vmem:[%s51 + $0x758] sm:%s41]
      %530 = vst [vmem:[%s52 + $0x770] sm:%s41] %v529
      %v531 = vld [vmem:[%s51 + $0x75c] sm:%s41]
      %532 = vst [vmem:[%s52 + $0x778] sm:%s41] %v531
      %v533 = vld [vmem:[%s51 + $0x780] sm:%s41]
      %534 = vst [vmem:[%s52 + $0x780] sm:%s41] %v533
      %v535 = vld [vmem:[%s51 + $0x784] sm:%s41]
      %536 = vst [vmem:[%s52 + $0x788] sm:%s41] %v535
      %v537 = vld [vmem:[%s51 + $0x788] sm:%s41]
      %538 = vst [vmem:[%s52 + $0x790] sm:%s41] %v537
      %v539 = vld [vmem:[%s51 + $0x78c] sm:%s41]
      %540 = vst [vmem:[%s52 + $0x798] sm:%s41] %v539
      %v541 = vld [vmem:[%s51 + $0x790] sm:%s41]
      %542 = vst [vmem:[%s52 + $0x7a0] sm:%s41] %v541
      %v543 = vld [vmem:[%s51 + $0x794] sm:%s41]
      %544 = vst [vmem:[%s52 + $0x7a8] sm:%s41] %v543
      %v545 = vld [vmem:[%s51 + $0x798] sm:%s41]
      %546 = vst [vmem:[%s52 + $0x7b0] sm:%s41] %v545
      %v547 = vld [vmem:[%s51 + $0x79c] sm:%s41]
      %548 = vst [vmem:[%s52 + $0x7b8] sm:%s41] %v547
      %v549 = vld [vmem:[%s51 + $0x7c0] sm:%s41]
      %550 = vst [vmem:[%s52 + $0x7c0] sm:%s41] %v549
      %v551 = vld [vmem:[%s51 + $0x7c4] sm:%s41]
      %552 = vst [vmem:[%s52 + $0x7c8] sm:%s41] %v551
      %v553 = vld [vmem:[%s51 + $0x7c8] sm:%s41]
      %554 = vst [vmem:[%s52 + $0x7d0] sm:%s41] %v553
      %v555 = vld [vmem:[%s51 + $0x7cc] sm:%s41]
      %556 = vst [vmem:[%s52 + $0x7d8] sm:%s41] %v555
      %v557 = vld [vmem:[%s51 + $0x7d0] sm:%s41]
      %558 = vst [vmem:[%s52 + $0x7e0] sm:%s41] %v557
      %v559 = vld [vmem:[%s51 + $0x7d4] sm:%s41]
      %560 = vst [vmem:[%s52 + $0x7e8] sm:%s41] %v559
      %v561 = vld [vmem:[%s51 + $0x7d8] sm:%s41]
      %562 = vst [vmem:[%s52 + $0x7f0] sm:%s41] %v561
      %v563 = vld [vmem:[%s51 + $0x7dc] sm:%s41]
      %564 = vst [vmem:[%s52 + $0x7f8] sm:%s41] %v563
      %v565 = vld [vmem:[%s51 + $0x800] sm:%s41]
      %566 = vst [vmem:[%s52 + $0x800] sm:%s41] %v565
      %v567 = vld [vmem:[%s51 + $0x804] sm:%s41]
      %568 = vst [vmem:[%s52 + $0x808] sm:%s41] %v567
      %v569 = vld [vmem:[%s51 + $0x808] sm:%s41]
      %570 = vst [vmem:[%s52 + $0x810] sm:%s41] %v569
      %v571 = vld [vmem:[%s51 + $0x80c] sm:%s41]
      %572 = vst [vmem:[%s52 + $0x818] sm:%s41] %v571
      %v573 = vld [vmem:[%s51 + $0x810] sm:%s41]
      %574 = vst [vmem:[%s52 + $0x820] sm:%s41] %v573
      %v575 = vld [vmem:[%s51 + $0x814] sm:%s41]
      %576 = vst [vmem:[%s52 + $0x828] sm:%s41] %v575
      %v577 = vld [vmem:[%s51 + $0x818] sm:%s41]
      %578 = vst [vmem:[%s52 + $0x830] sm:%s41] %v577
      %v579 = vld [vmem:[%s51 + $0x81c] sm:%s41]
      %580 = vst [vmem:[%s52 + $0x838] sm:%s41] %v579
      %v581 = vld [vmem:[%s51 + $0x840] sm:%s41]
      %582 = vst [vmem:[%s52 + $0x840] sm:%s41] %v581
      %v583 = vld [vmem:[%s51 + $0x844] sm:%s41]
      %584 = vst [vmem:[%s52 + $0x848] sm:%s41] %v583
      %v585 = vld [vmem:[%s51 + $0x848] sm:%s41]
      %586 = vst [vmem:[%s52 + $0x850] sm:%s41] %v585
      %v587 = vld [vmem:[%s51 + $0x84c] sm:%s41]
      %588 = vst [vmem:[%s52 + $0x858] sm:%s41] %v587
      %v589 = vld [vmem:[%s51 + $0x850] sm:%s41]
      %590 = vst [vmem:[%s52 + $0x860] sm:%s41] %v589
      %v591 = vld [vmem:[%s51 + $0x854] sm:%s41]
      %592 = vst [vmem:[%s52 + $0x868] sm:%s41] %v591
      %v593 = vld [vmem:[%s51 + $0x858] sm:%s41]
      %594 = vst [vmem:[%s52 + $0x870] sm:%s41] %v593
      %v595 = vld [vmem:[%s51 + $0x85c] sm:%s41]
      %596 = vst [vmem:[%s52 + $0x878] sm:%s41] %v595
      %v597 = vld [vmem:[%s51 + $0x880] sm:%s41]
      %598 = vst [vmem:[%s52 + $0x880] sm:%s41] %v597
      %v599 = vld [vmem:[%s51 + $0x884] sm:%s41]
      %600 = vst [vmem:[%s52 + $0x888] sm:%s41] %v599
      %v601 = vld [vmem:[%s51 + $0x888] sm:%s41]
      %602 = vst [vmem:[%s52 + $0x890] sm:%s41] %v601
      %v603 = vld [vmem:[%s51 + $0x88c] sm:%s41]
      %604 = vst [vmem:[%s52 + $0x898] sm:%s41] %v603
      %v605 = vld [vmem:[%s51 + $0x890] sm:%s41]
      %606 = vst [vmem:[%s52 + $0x8a0] sm:%s41] %v605
      %v607 = vld [vmem:[%s51 + $0x894] sm:%s41]
      %608 = vst [vmem:[%s52 + $0x8a8] sm:%s41] %v607
      %v609 = vld [vmem:[%s51 + $0x898] sm:%s41]
      %610 = vst [vmem:[%s52 + $0x8b0] sm:%s41] %v609
      %v611 = vld [vmem:[%s51 + $0x89c] sm:%s41]
      %612 = vst [vmem:[%s52 + $0x8b8] sm:%s41] %v611
      %v613 = vld [vmem:[%s51 + $0x8c0] sm:%s41]
      %614 = vst [vmem:[%s52 + $0x8c0] sm:%s41] %v613
      %v615 = vld [vmem:[%s51 + $0x8c4] sm:%s41]
      %616 = vst [vmem:[%s52 + $0x8c8] sm:%s41] %v615
      %v617 = vld [vmem:[%s51 + $0x8c8] sm:%s41]
      %618 = vst [vmem:[%s52 + $0x8d0] sm:%s41] %v617
      %v619 = vld [vmem:[%s51 + $0x8cc] sm:%s41]
      %620 = vst [vmem:[%s52 + $0x8d8] sm:%s41] %v619
      %v621 = vld [vmem:[%s51 + $0x8d0] sm:%s41]
      %622 = vst [vmem:[%s52 + $0x8e0] sm:%s41] %v621
      %v623 = vld [vmem:[%s51 + $0x8d4] sm:%s41]
      %624 = vst [vmem:[%s52 + $0x8e8] sm:%s41] %v623
      %v625 = vld [vmem:[%s51 + $0x8d8] sm:%s41]
      %626 = vst [vmem:[%s52 + $0x8f0] sm:%s41] %v625
      %v627 = vld [vmem:[%s51 + $0x8dc] sm:%s41]
      %628 = vst [vmem:[%s52 + $0x8f8] sm:%s41] %v627
      %v629 = vld [vmem:[%s51 + $0x900] sm:%s41]
      %630 = vst [vmem:[%s52 + $0x900] sm:%s41] %v629
      %v631 = vld [vmem:[%s51 + $0x904] sm:%s41]
      %632 = vst [vmem:[%s52 + $0x908] sm:%s41] %v631
      %v633 = vld [vmem:[%s51 + $0x908] sm:%s41]
      %634 = vst [vmem:[%s52 + $0x910] sm:%s41] %v633
      %v635 = vld [vmem:[%s51 + $0x90c] sm:%s41]
      %636 = vst [vmem:[%s52 + $0x918] sm:%s41] %v635
      %v637 = vld [vmem:[%s51 + $0x910] sm:%s41]
      %638 = vst [vmem:[%s52 + $0x920] sm:%s41] %v637
      %v639 = vld [vmem:[%s51 + $0x914] sm:%s41]
      %640 = vst [vmem:[%s52 + $0x928] sm:%s41] %v639
      %v641 = vld [vmem:[%s51 + $0x918] sm:%s41]
      %642 = vst [vmem:[%s52 + $0x930] sm:%s41] %v641
      %v643 = vld [vmem:[%s51 + $0x91c] sm:%s41]
      %644 = vst [vmem:[%s52 + $0x938] sm:%s41] %v643
      %v645 = vld [vmem:[%s51 + $0x940] sm:%s41]
      %646 = vst [vmem:[%s52 + $0x940] sm:%s41] %v645
      %v647 = vld [vmem:[%s51 + $0x944] sm:%s41]
      %648 = vst [vmem:[%s52 + $0x948] sm:%s41] %v647
      %v649 = vld [vmem:[%s51 + $0x948] sm:%s41]
      %650 = vst [vmem:[%s52 + $0x950] sm:%s41] %v649
      %v651 = vld [vmem:[%s51 + $0x94c] sm:%s41]
      %652 = vst [vmem:[%s52 + $0x958] sm:%s41] %v651
      %v653 = vld [vmem:[%s51 + $0x950] sm:%s41]
      %654 = vst [vmem:[%s52 + $0x960] sm:%s41] %v653
      %v655 = vld [vmem:[%s51 + $0x954] sm:%s41]
      %656 = vst [vmem:[%s52 + $0x968] sm:%s41] %v655
      %v657 = vld [vmem:[%s51 + $0x958] sm:%s41]
      %658 = vst [vmem:[%s52 + $0x970] sm:%s41] %v657
      %v659 = vld [vmem:[%s51 + $0x95c] sm:%s41]
      %660 = vst [vmem:[%s52 + $0x978] sm:%s41] %v659
      %v661 = vld [vmem:[%s51 + $0x980] sm:%s41]
      %662 = vst [vmem:[%s52 + $0x980] sm:%s41] %v661
      %v663 = vld [vmem:[%s51 + $0x984] sm:%s41]
      %664 = vst [vmem:[%s52 + $0x988] sm:%s41] %v663
      %v665 = vld [vmem:[%s51 + $0x988] sm:%s41]
      %666 = vst [vmem:[%s52 + $0x990] sm:%s41] %v665
      %v667 = vld [vmem:[%s51 + $0x98c] sm:%s41]
      %668 = vst [vmem:[%s52 + $0x998] sm:%s41] %v667
      %v669 = vld [vmem:[%s51 + $0x990] sm:%s41]
      %670 = vst [vmem:[%s52 + $0x9a0] sm:%s41] %v669
      %v671 = vld [vmem:[%s51 + $0x994] sm:%s41]
      %672 = vst [vmem:[%s52 + $0x9a8] sm:%s41] %v671
      %v673 = vld [vmem:[%s51 + $0x998] sm:%s41]
      %674 = vst [vmem:[%s52 + $0x9b0] sm:%s41] %v673
      %v675 = vld [vmem:[%s51 + $0x99c] sm:%s41]
      %676 = vst [vmem:[%s52 + $0x9b8] sm:%s41] %v675
      %v677 = vld [vmem:[%s51 + $0x9c0] sm:%s41]
      %678 = vst [vmem:[%s52 + $0x9c0] sm:%s41] %v677
      %v679 = vld [vmem:[%s51 + $0x9c4] sm:%s41]
      %680 = vst [vmem:[%s52 + $0x9c8] sm:%s41] %v679
      %v681 = vld [vmem:[%s51 + $0x9c8] sm:%s41]
      %682 = vst [vmem:[%s52 + $0x9d0] sm:%s41] %v681
      %v683 = vld [vmem:[%s51 + $0x9cc] sm:%s41]
      %684 = vst [vmem:[%s52 + $0x9d8] sm:%s41] %v683
      %v685 = vld [vmem:[%s51 + $0x9d0] sm:%s41]
      %686 = vst [vmem:[%s52 + $0x9e0] sm:%s41] %v685
      %v687 = vld [vmem:[%s51 + $0x9d4] sm:%s41]
      %688 = vst [vmem:[%s52 + $0x9e8] sm:%s41] %v687
      %v689 = vld [vmem:[%s51 + $0x9d8] sm:%s41]
      %690 = vst [vmem:[%s52 + $0x9f0] sm:%s41] %v689
      %v691 = vld [vmem:[%s51 + $0x9dc] sm:%s41]
      %692 = vst [vmem:[%s52 + $0x9f8] sm:%s41] %v691
      %v693 = vld [vmem:[%s51 + $0xa00] sm:%s41]
      %694 = vst [vmem:[%s52 + $0xa00] sm:%s41] %v693
      %v695 = vld [vmem:[%s51 + $0xa04] sm:%s41]
      %696 = vst [vmem:[%s52 + $0xa08] sm:%s41] %v695
      %v697 = vld [vmem:[%s51 + $0xa08] sm:%s41]
      %698 = vst [vmem:[%s52 + $0xa10] sm:%s41] %v697
      %v699 = vld [vmem:[%s51 + $0xa0c] sm:%s41]
      %700 = vst [vmem:[%s52 + $0xa18] sm:%s41] %v699
      %v701 = vld [vmem:[%s51 + $0xa10] sm:%s41]
      %702 = vst [vmem:[%s52 + $0xa20] sm:%s41] %v701
      %v703 = vld [vmem:[%s51 + $0xa14] sm:%s41]
      %704 = vst [vmem:[%s52 + $0xa28] sm:%s41] %v703
      %v705 = vld [vmem:[%s51 + $0xa18] sm:%s41]
      %706 = vst [vmem:[%s52 + $0xa30] sm:%s41] %v705
      %v707 = vld [vmem:[%s51 + $0xa1c] sm:%s41]
      %708 = vst [vmem:[%s52 + $0xa38] sm:%s41] %v707
      %v709 = vld [vmem:[%s51 + $0xa40] sm:%s41]
      %710 = vst [vmem:[%s52 + $0xa40] sm:%s41] %v709
      %v711 = vld [vmem:[%s51 + $0xa44] sm:%s41]
      %712 = vst [vmem:[%s52 + $0xa48] sm:%s41] %v711
      %v713 = vld [vmem:[%s51 + $0xa48] sm:%s41]
      %714 = vst [vmem:[%s52 + $0xa50] sm:%s41] %v713
      %v715 = vld [vmem:[%s51 + $0xa4c] sm:%s41]
      %716 = vst [vmem:[%s52 + $0xa58] sm:%s41] %v715
      %v717 = vld [vmem:[%s51 + $0xa50] sm:%s41]
      %718 = vst [vmem:[%s52 + $0xa60] sm:%s41] %v717
      %v719 = vld [vmem:[%s51 + $0xa54] sm:%s41]
      %720 = vst [vmem:[%s52 + $0xa68] sm:%s41] %v719
      %v721 = vld [vmem:[%s51 + $0xa58] sm:%s41]
      %722 = vst [vmem:[%s52 + $0xa70] sm:%s41] %v721
      %v723 = vld [vmem:[%s51 + $0xa5c] sm:%s41]
      %724 = vst [vmem:[%s52 + $0xa78] sm:%s41] %v723
      %v725 = vld [vmem:[%s51 + $0xa80] sm:%s41]
      %726 = vst [vmem:[%s52 + $0xa80] sm:%s41] %v725
      %v727 = vld [vmem:[%s51 + $0xa84] sm:%s41]
      %728 = vst [vmem:[%s52 + $0xa88] sm:%s41] %v727
      %v729 = vld [vmem:[%s51 + $0xa88] sm:%s41]
      %730 = vst [vmem:[%s52 + $0xa90] sm:%s41] %v729
      %v731 = vld [vmem:[%s51 + $0xa8c] sm:%s41]
      %732 = vst [vmem:[%s52 + $0xa98] sm:%s41] %v731
      %v733 = vld [vmem:[%s51 + $0xa90] sm:%s41]
      %734 = vst [vmem:[%s52 + $0xaa0] sm:%s41] %v733
      %v735 = vld [vmem:[%s51 + $0xa94] sm:%s41]
      %736 = vst [vmem:[%s52 + $0xaa8] sm:%s41] %v735
      %v737 = vld [vmem:[%s51 + $0xa98] sm:%s41]
      %738 = vst [vmem:[%s52 + $0xab0] sm:%s41] %v737
      %v739 = vld [vmem:[%s51 + $0xa9c] sm:%s41]
      %740 = vst [vmem:[%s52 + $0xab8] sm:%s41] %v739
      %v741 = vld [vmem:[%s51 + $0xac0] sm:%s41]
      %742 = vst [vmem:[%s52 + $0xac0] sm:%s41] %v741
      %v743 = vld [vmem:[%s51 + $0xac4] sm:%s41]
      %744 = vst [vmem:[%s52 + $0xac8] sm:%s41] %v743
      %v745 = vld [vmem:[%s51 + $0xac8] sm:%s41]
      %746 = vst [vmem:[%s52 + $0xad0] sm:%s41] %v745
      %v747 = vld [vmem:[%s51 + $0xacc] sm:%s41]
      %748 = vst [vmem:[%s52 + $0xad8] sm:%s41] %v747
      %v749 = vld [vmem:[%s51 + $0xad0] sm:%s41]
      %750 = vst [vmem:[%s52 + $0xae0] sm:%s41] %v749
      %v751 = vld [vmem:[%s51 + $0xad4] sm:%s41]
      %752 = vst [vmem:[%s52 + $0xae8] sm:%s41] %v751
      %v753 = vld [vmem:[%s51 + $0xad8] sm:%s41]
      %754 = vst [vmem:[%s52 + $0xaf0] sm:%s41] %v753
      %v755 = vld [vmem:[%s51 + $0xadc] sm:%s41]
      %756 = vst [vmem:[%s52 + $0xaf8] sm:%s41] %v755
      %v757 = vld [vmem:[%s51 + $0xb00] sm:%s41]
      %758 = vst [vmem:[%s52 + $0xb00] sm:%s41] %v757
      %v759 = vld [vmem:[%s51 + $0xb04] sm:%s41]
      %760 = vst [vmem:[%s52 + $0xb08] sm:%s41] %v759
      %v761 = vld [vmem:[%s51 + $0xb08] sm:%s41]
      %762 = vst [vmem:[%s52 + $0xb10] sm:%s41] %v761
      %v763 = vld [vmem:[%s51 + $0xb0c] sm:%s41]
      %764 = vst [vmem:[%s52 + $0xb18] sm:%s41] %v763
      %v765 = vld [vmem:[%s51 + $0xb10] sm:%s41]
      %766 = vst [vmem:[%s52 + $0xb20] sm:%s41] %v765
      %v767 = vld [vmem:[%s51 + $0xb14] sm:%s41]
      %768 = vst [vmem:[%s52 + $0xb28] sm:%s41] %v767
      %v769 = vld [vmem:[%s51 + $0xb18] sm:%s41]
      %770 = vst [vmem:[%s52 + $0xb30] sm:%s41] %v769
      %v771 = vld [vmem:[%s51 + $0xb1c] sm:%s41]
      %772 = vst [vmem:[%s52 + $0xb38] sm:%s41] %v771
      %v773 = vld [vmem:[%s51 + $0xb40] sm:%s41]
      %774 = vst [vmem:[%s52 + $0xb40] sm:%s41] %v773
      %v775 = vld [vmem:[%s51 + $0xb44] sm:%s41]
      %776 = vst [vmem:[%s52 + $0xb48] sm:%s41] %v775
      %v777 = vld [vmem:[%s51 + $0xb48] sm:%s41]
      %778 = vst [vmem:[%s52 + $0xb50] sm:%s41] %v777
      %v779 = vld [vmem:[%s51 + $0xb4c] sm:%s41]
      %780 = vst [vmem:[%s52 + $0xb58] sm:%s41] %v779
      %v781 = vld [vmem:[%s51 + $0xb50] sm:%s41]
      %782 = vst [vmem:[%s52 + $0xb60] sm:%s41] %v781
      %v783 = vld [vmem:[%s51 + $0xb54] sm:%s41]
      %784 = vst [vmem:[%s52 + $0xb68] sm:%s41] %v783
      %v785 = vld [vmem:[%s51 + $0xb58] sm:%s41]
      %786 = vst [vmem:[%s52 + $0xb70] sm:%s41] %v785
      %v787 = vld [vmem:[%s51 + $0xb5c] sm:%s41]
      %788 = vst [vmem:[%s52 + $0xb78] sm:%s41] %v787
      %v789 = vld [vmem:[%s51 + $0xb80] sm:%s41]
      %790 = vst [vmem:[%s52 + $0xb80] sm:%s41] %v789
      %v791 = vld [vmem:[%s51 + $0xb84] sm:%s41]
      %792 = vst [vmem:[%s52 + $0xb88] sm:%s41] %v791
      %v793 = vld [vmem:[%s51 + $0xb88] sm:%s41]
      %794 = vst [vmem:[%s52 + $0xb90] sm:%s41] %v793
      %v795 = vld [vmem:[%s51 + $0xb8c] sm:%s41]
      %796 = vst [vmem:[%s52 + $0xb98] sm:%s41] %v795
      %v797 = vld [vmem:[%s51 + $0xb90] sm:%s41]
      %798 = vst [vmem:[%s52 + $0xba0] sm:%s41] %v797
      %v799 = vld [vmem:[%s51 + $0xb94] sm:%s41]
      %800 = vst [vmem:[%s52 + $0xba8] sm:%s41] %v799
      %v801 = vld [vmem:[%s51 + $0xb98] sm:%s41]
      %802 = vst [vmem:[%s52 + $0xbb0] sm:%s41] %v801
      %v803 = vld [vmem:[%s51 + $0xb9c] sm:%s41]
      %804 = vst [vmem:[%s52 + $0xbb8] sm:%s41] %v803
      %v805 = vld [vmem:[%s51 + $0xbc0] sm:%s41]
      %806 = vst [vmem:[%s52 + $0xbc0] sm:%s41] %v805
      %v807 = vld [vmem:[%s51 + $0xbc4] sm:%s41]
      %808 = vst [vmem:[%s52 + $0xbc8] sm:%s41] %v807
      %v809 = vld [vmem:[%s51 + $0xbc8] sm:%s41]
      %810 = vst [vmem:[%s52 + $0xbd0] sm:%s41] %v809
      %v811 = vld [vmem:[%s51 + $0xbcc] sm:%s41]
      %812 = vst [vmem:[%s52 + $0xbd8] sm:%s41] %v811
      %v813 = vld [vmem:[%s51 + $0xbd0] sm:%s41]
      %814 = vst [vmem:[%s52 + $0xbe0] sm:%s41] %v813
      %v815 = vld [vmem:[%s51 + $0xbd4] sm:%s41]
      %816 = vst [vmem:[%s52 + $0xbe8] sm:%s41] %v815
      %v817 = vld [vmem:[%s51 + $0xbd8] sm:%s41]
      %818 = vst [vmem:[%s52 + $0xbf0] sm:%s41] %v817
      %v819 = vld [vmem:[%s51 + $0xbdc] sm:%s41]
      %820 = vst [vmem:[%s52 + $0xbf8] sm:%s41] %v819
      %v821 = vld [vmem:[%s51 + $0xc00] sm:%s41]
      %822 = vst [vmem:[%s52 + $0xc00] sm:%s41] %v821
      %v823 = vld [vmem:[%s51 + $0xc04] sm:%s41]
      %824 = vst [vmem:[%s52 + $0xc08] sm:%s41] %v823
      %v825 = vld [vmem:[%s51 + $0xc08] sm:%s41]
      %826 = vst [vmem:[%s52 + $0xc10] sm:%s41] %v825
      %v827 = vld [vmem:[%s51 + $0xc0c] sm:%s41]
      %828 = vst [vmem:[%s52 + $0xc18] sm:%s41] %v827
      %v829 = vld [vmem:[%s51 + $0xc10] sm:%s41]
      %830 = vst [vmem:[%s52 + $0xc20] sm:%s41] %v829
      %v831 = vld [vmem:[%s51 + $0xc14] sm:%s41]
      %832 = vst [vmem:[%s52 + $0xc28] sm:%s41] %v831
      %v833 = vld [vmem:[%s51 + $0xc18] sm:%s41]
      %834 = vst [vmem:[%s52 + $0xc30] sm:%s41] %v833
      %v835 = vld [vmem:[%s51 + $0xc1c] sm:%s41]
      %836 = vst [vmem:[%s52 + $0xc38] sm:%s41] %v835
      %v837 = vld [vmem:[%s51 + $0xc40] sm:%s41]
      %838 = vst [vmem:[%s52 + $0xc40] sm:%s41] %v837
      %v839 = vld [vmem:[%s51 + $0xc44] sm:%s41]
      %840 = vst [vmem:[%s52 + $0xc48] sm:%s41] %v839
      %v841 = vld [vmem:[%s51 + $0xc48] sm:%s41]
      %842 = vst [vmem:[%s52 + $0xc50] sm:%s41] %v841
      %v843 = vld [vmem:[%s51 + $0xc4c] sm:%s41]
      %844 = vst [vmem:[%s52 + $0xc58] sm:%s41] %v843
      %v845 = vld [vmem:[%s51 + $0xc50] sm:%s41]
      %846 = vst [vmem:[%s52 + $0xc60] sm:%s41] %v845
      %v847 = vld [vmem:[%s51 + $0xc54] sm:%s41]
      %848 = vst [vmem:[%s52 + $0xc68] sm:%s41] %v847
      %v849 = vld [vmem:[%s51 + $0xc58] sm:%s41]
      %850 = vst [vmem:[%s52 + $0xc70] sm:%s41] %v849
      %v851 = vld [vmem:[%s51 + $0xc5c] sm:%s41]
      %852 = vst [vmem:[%s52 + $0xc78] sm:%s41] %v851
      %v853 = vld [vmem:[%s51 + $0xc80] sm:%s41]
      %854 = vst [vmem:[%s52 + $0xc80] sm:%s41] %v853
      %v855 = vld [vmem:[%s51 + $0xc84] sm:%s41]
      %856 = vst [vmem:[%s52 + $0xc88] sm:%s41] %v855
      %v857 = vld [vmem:[%s51 + $0xc88] sm:%s41]
      %858 = vst [vmem:[%s52 + $0xc90] sm:%s41] %v857
      %v859 = vld [vmem:[%s51 + $0xc8c] sm:%s41]
      %860 = vst [vmem:[%s52 + $0xc98] sm:%s41] %v859
      %v861 = vld [vmem:[%s51 + $0xc90] sm:%s41]
      %862 = vst [vmem:[%s52 + $0xca0] sm:%s41] %v861
      %v863 = vld [vmem:[%s51 + $0xc94] sm:%s41]
      %864 = vst [vmem:[%s52 + $0xca8] sm:%s41] %v863
      %v865 = vld [vmem:[%s51 + $0xc98] sm:%s41]
      %866 = vst [vmem:[%s52 + $0xcb0] sm:%s41] %v865
      %v867 = vld [vmem:[%s51 + $0xc9c] sm:%s41]
      %868 = vst [vmem:[%s52 + $0xcb8] sm:%s41] %v867
      %v869 = vld [vmem:[%s51 + $0xcc0] sm:%s41]
      %870 = vst [vmem:[%s52 + $0xcc0] sm:%s41] %v869
      %v871 = vld [vmem:[%s51 + $0xcc4] sm:%s41]
      %872 = vst [vmem:[%s52 + $0xcc8] sm:%s41] %v871
      %v873 = vld [vmem:[%s51 + $0xcc8] sm:%s41]
      %874 = vst [vmem:[%s52 + $0xcd0] sm:%s41] %v873
      %v875 = vld [vmem:[%s51 + $0xccc] sm:%s41]
      %876 = vst [vmem:[%s52 + $0xcd8] sm:%s41] %v875
      %v877 = vld [vmem:[%s51 + $0xcd0] sm:%s41]
      %878 = vst [vmem:[%s52 + $0xce0] sm:%s41] %v877
      %v879 = vld [vmem:[%s51 + $0xcd4] sm:%s41]
      %880 = vst [vmem:[%s52 + $0xce8] sm:%s41] %v879
      %v881 = vld [vmem:[%s51 + $0xcd8] sm:%s41]
      %882 = vst [vmem:[%s52 + $0xcf0] sm:%s41] %v881
      %v883 = vld [vmem:[%s51 + $0xcdc] sm:%s41]
      %884 = vst [vmem:[%s52 + $0xcf8] sm:%s41] %v883
      %v885 = vld [vmem:[%s51 + $0xd00] sm:%s41]
      %886 = vst [vmem:[%s52 + $0xd00] sm:%s41] %v885
      %v887 = vld [vmem:[%s51 + $0xd04] sm:%s41]
      %888 = vst [vmem:[%s52 + $0xd08] sm:%s41] %v887
      %v889 = vld [vmem:[%s51 + $0xd08] sm:%s41]
      %890 = vst [vmem:[%s52 + $0xd10] sm:%s41] %v889
      %v891 = vld [vmem:[%s51 + $0xd0c] sm:%s41]
      %892 = vst [vmem:[%s52 + $0xd18] sm:%s41] %v891
      %v893 = vld [vmem:[%s51 + $0xd10] sm:%s41]
      %894 = vst [vmem:[%s52 + $0xd20] sm:%s41] %v893
      %v895 = vld [vmem:[%s51 + $0xd14] sm:%s41]
      %896 = vst [vmem:[%s52 + $0xd28] sm:%s41] %v895
      %v897 = vld [vmem:[%s51 + $0xd18] sm:%s41]
      %898 = vst [vmem:[%s52 + $0xd30] sm:%s41] %v897
      %v899 = vld [vmem:[%s51 + $0xd1c] sm:%s41]
      %900 = vst [vmem:[%s52 + $0xd38] sm:%s41] %v899
      %v901 = vld [vmem:[%s51 + $0xd40] sm:%s41]
      %902 = vst [vmem:[%s52 + $0xd40] sm:%s41] %v901
      %v903 = vld [vmem:[%s51 + $0xd44] sm:%s41]
      %904 = vst [vmem:[%s52 + $0xd48] sm:%s41] %v903
      %v905 = vld [vmem:[%s51 + $0xd48] sm:%s41]
      %906 = vst [vmem:[%s52 + $0xd50] sm:%s41] %v905
      %v907 = vld [vmem:[%s51 + $0xd4c] sm:%s41]
      %908 = vst [vmem:[%s52 + $0xd58] sm:%s41] %v907
      %v909 = vld [vmem:[%s51 + $0xd50] sm:%s41]
      %910 = vst [vmem:[%s52 + $0xd60] sm:%s41] %v909
      %v911 = vld [vmem:[%s51 + $0xd54] sm:%s41]
      %912 = vst [vmem:[%s52 + $0xd68] sm:%s41] %v911
      %v913 = vld [vmem:[%s51 + $0xd58] sm:%s41]
      %914 = vst [vmem:[%s52 + $0xd70] sm:%s41] %v913
      %v915 = vld [vmem:[%s51 + $0xd5c] sm:%s41]
      %916 = vst [vmem:[%s52 + $0xd78] sm:%s41] %v915
      %v917 = vld [vmem:[%s51 + $0xd80] sm:%s41]
      %918 = vst [vmem:[%s52 + $0xd80] sm:%s41] %v917
      %v919 = vld [vmem:[%s51 + $0xd84] sm:%s41]
      %920 = vst [vmem:[%s52 + $0xd88] sm:%s41] %v919
      %v921 = vld [vmem:[%s51 + $0xd88] sm:%s41]
      %922 = vst [vmem:[%s52 + $0xd90] sm:%s41] %v921
      %v923 = vld [vmem:[%s51 + $0xd8c] sm:%s41]
      %924 = vst [vmem:[%s52 + $0xd98] sm:%s41] %v923
      %v925 = vld [vmem:[%s51 + $0xd90] sm:%s41]
      %926 = vst [vmem:[%s52 + $0xda0] sm:%s41] %v925
      %v927 = vld [vmem:[%s51 + $0xd94] sm:%s41]
      %928 = vst [vmem:[%s52 + $0xda8] sm:%s41] %v927
      %v929 = vld [vmem:[%s51 + $0xd98] sm:%s41]
      %930 = vst [vmem:[%s52 + $0xdb0] sm:%s41] %v929
      %v931 = vld [vmem:[%s51 + $0xd9c] sm:%s41]
      %932 = vst [vmem:[%s52 + $0xdb8] sm:%s41] %v931
      %v933 = vld [vmem:[%s51 + $0xdc0] sm:%s41]
      %934 = vst [vmem:[%s52 + $0xdc0] sm:%s41] %v933
      %v935 = vld [vmem:[%s51 + $0xdc4] sm:%s41]
      %936 = vst [vmem:[%s52 + $0xdc8] sm:%s41] %v935
      %v937 = vld [vmem:[%s51 + $0xdc8] sm:%s41]
      %938 = vst [vmem:[%s52 + $0xdd0] sm:%s41] %v937
      %v939 = vld [vmem:[%s51 + $0xdcc] sm:%s41]
      %940 = vst [vmem:[%s52 + $0xdd8] sm:%s41] %v939
      %v941 = vld [vmem:[%s51 + $0xdd0] sm:%s41]
      %942 = vst [vmem:[%s52 + $0xde0] sm:%s41] %v941
      %v943 = vld [vmem:[%s51 + $0xdd4] sm:%s41]
      %944 = vst [vmem:[%s52 + $0xde8] sm:%s41] %v943
      %v945 = vld [vmem:[%s51 + $0xdd8] sm:%s41]
      %946 = vst [vmem:[%s52 + $0xdf0] sm:%s41] %v945
      %v947 = vld [vmem:[%s51 + $0xddc] sm:%s41]
      %948 = vst [vmem:[%s52 + $0xdf8] sm:%s41] %v947
      %v949 = vld [vmem:[%s51 + $0xe00] sm:%s41]
      %950 = vst [vmem:[%s52 + $0xe00] sm:%s41] %v949
      %v951 = vld [vmem:[%s51 + $0xe04] sm:%s41]
      %952 = vst [vmem:[%s52 + $0xe08] sm:%s41] %v951
      %v953 = vld [vmem:[%s51 + $0xe08] sm:%s41]
      %954 = vst [vmem:[%s52 + $0xe10] sm:%s41] %v953
      %v955 = vld [vmem:[%s51 + $0xe0c] sm:%s41]
      %956 = vst [vmem:[%s52 + $0xe18] sm:%s41] %v955
      %v957 = vld [vmem:[%s51 + $0xe10] sm:%s41]
      %958 = vst [vmem:[%s52 + $0xe20] sm:%s41] %v957
      %v959 = vld [vmem:[%s51 + $0xe14] sm:%s41]
      %960 = vst [vmem:[%s52 + $0xe28] sm:%s41] %v959
      %v961 = vld [vmem:[%s51 + $0xe18] sm:%s41]
      %962 = vst [vmem:[%s52 + $0xe30] sm:%s41] %v961
      %v963 = vld [vmem:[%s51 + $0xe1c] sm:%s41]
      %964 = vst [vmem:[%s52 + $0xe38] sm:%s41] %v963
      %v965 = vld [vmem:[%s51 + $0xe40] sm:%s41]
      %966 = vst [vmem:[%s52 + $0xe40] sm:%s41] %v965
      %v967 = vld [vmem:[%s51 + $0xe44] sm:%s41]
      %968 = vst [vmem:[%s52 + $0xe48] sm:%s41] %v967
      %v969 = vld [vmem:[%s51 + $0xe48] sm:%s41]
      %970 = vst [vmem:[%s52 + $0xe50] sm:%s41] %v969
      %v971 = vld [vmem:[%s51 + $0xe4c] sm:%s41]
      %972 = vst [vmem:[%s52 + $0xe58] sm:%s41] %v971
      %v973 = vld [vmem:[%s51 + $0xe50] sm:%s41]
      %974 = vst [vmem:[%s52 + $0xe60] sm:%s41] %v973
      %v975 = vld [vmem:[%s51 + $0xe54] sm:%s41]
      %976 = vst [vmem:[%s52 + $0xe68] sm:%s41] %v975
      %v977 = vld [vmem:[%s51 + $0xe58] sm:%s41]
      %978 = vst [vmem:[%s52 + $0xe70] sm:%s41] %v977
      %v979 = vld [vmem:[%s51 + $0xe5c] sm:%s41]
      %980 = vst [vmem:[%s52 + $0xe78] sm:%s41] %v979
      %v981 = vld [vmem:[%s51 + $0xe80] sm:%s41]
      %982 = vst [vmem:[%s52 + $0xe80] sm:%s41] %v981
      %v983 = vld [vmem:[%s51 + $0xe84] sm:%s41]
      %984 = vst [vmem:[%s52 + $0xe88] sm:%s41] %v983
      %v985 = vld [vmem:[%s51 + $0xe88] sm:%s41]
      %986 = vst [vmem:[%s52 + $0xe90] sm:%s41] %v985
      %v987 = vld [vmem:[%s51 + $0xe8c] sm:%s41]
      %988 = vst [vmem:[%s52 + $0xe98] sm:%s41] %v987
      %v989 = vld [vmem:[%s51 + $0xe90] sm:%s41]
      %990 = vst [vmem:[%s52 + $0xea0] sm:%s41] %v989
      %v991 = vld [vmem:[%s51 + $0xe94] sm:%s41]
      %992 = vst [vmem:[%s52 + $0xea8] sm:%s41] %v991
      %v993 = vld [vmem:[%s51 + $0xe98] sm:%s41]
      %994 = vst [vmem:[%s52 + $0xeb0] sm:%s41] %v993
      %v995 = vld [vmem:[%s51 + $0xe9c] sm:%s41]
      %996 = vst [vmem:[%s52 + $0xeb8] sm:%s41] %v995
      %v997 = vld [vmem:[%s51 + $0xec0] sm:%s41]
      %998 = vst [vmem:[%s52 + $0xec0] sm:%s41] %v997
      %v999 = vld [vmem:[%s51 + $0xec4] sm:%s41]
      %1000 = vst [vmem:[%s52 + $0xec8] sm:%s41] %v999
      %v1001 = vld [vmem:[%s51 + $0xec8] sm:%s41]
      %1002 = vst [vmem:[%s52 + $0xed0] sm:%s41] %v1001
      %v1003 = vld [vmem:[%s51 + $0xecc] sm:%s41]
      %1004 = vst [vmem:[%s52 + $0xed8] sm:%s41] %v1003
      %v1005 = vld [vmem:[%s51 + $0xed0] sm:%s41]
      %1006 = vst [vmem:[%s52 + $0xee0] sm:%s41] %v1005
      %v1007 = vld [vmem:[%s51 + $0xed4] sm:%s41]
      %1008 = vst [vmem:[%s52 + $0xee8] sm:%s41] %v1007
      %v1009 = vld [vmem:[%s51 + $0xed8] sm:%s41]
      %1010 = vst [vmem:[%s52 + $0xef0] sm:%s41] %v1009
      %v1011 = vld [vmem:[%s51 + $0xedc] sm:%s41]
      %1012 = vst [vmem:[%s52 + $0xef8] sm:%s41] %v1011
      %v1013 = vld [vmem:[%s51 + $0xf00] sm:%s41]
      %1014 = vst [vmem:[%s52 + $0xf00] sm:%s41] %v1013
      %v1015 = vld [vmem:[%s51 + $0xf04] sm:%s41]
      %1016 = vst [vmem:[%s52 + $0xf08] sm:%s41] %v1015
      %v1017 = vld [vmem:[%s51 + $0xf08] sm:%s41]
      %1018 = vst [vmem:[%s52 + $0xf10] sm:%s41] %v1017
      %v1019 = vld [vmem:[%s51 + $0xf0c] sm:%s41]
      %1020 = vst [vmem:[%s52 + $0xf18] sm:%s41] %v1019
      %v1021 = vld [vmem:[%s51 + $0xf10] sm:%s41]
      %1022 = vst [vmem:[%s52 + $0xf20] sm:%s41] %v1021
      %v1023 = vld [vmem:[%s51 + $0xf14] sm:%s41]
      %1024 = vst [vmem:[%s52 + $0xf28] sm:%s41] %v1023
      %v1025 = vld [vmem:[%s51 + $0xf18] sm:%s41]
      %1026 = vst [vmem:[%s52 + $0xf30] sm:%s41] %v1025
      %v1027 = vld [vmem:[%s51 + $0xf1c] sm:%s41]
      %1028 = vst [vmem:[%s52 + $0xf38] sm:%s41] %v1027
      %v1029 = vld [vmem:[%s51 + $0xf40] sm:%s41]
      %1030 = vst [vmem:[%s52 + $0xf40] sm:%s41] %v1029
      %v1031 = vld [vmem:[%s51 + $0xf44] sm:%s41]
      %1032 = vst [vmem:[%s52 + $0xf48] sm:%s41] %v1031
      %v1033 = vld [vmem:[%s51 + $0xf48] sm:%s41]
      %1034 = vst [vmem:[%s52 + $0xf50] sm:%s41] %v1033
      %v1035 = vld [vmem:[%s51 + $0xf4c] sm:%s41]
      %1036 = vst [vmem:[%s52 + $0xf58] sm:%s41] %v1035
      %v1037 = vld [vmem:[%s51 + $0xf50] sm:%s41]
      %1038 = vst [vmem:[%s52 + $0xf60] sm:%s41] %v1037
      %v1039 = vld [vmem:[%s51 + $0xf54] sm:%s41]
      %1040 = vst [vmem:[%s52 + $0xf68] sm:%s41] %v1039
      %v1041 = vld [vmem:[%s51 + $0xf58] sm:%s41]
      %1042 = vst [vmem:[%s52 + $0xf70] sm:%s41] %v1041
      %v1043 = vld [vmem:[%s51 + $0xf5c] sm:%s41]
      %1044 = vst [vmem:[%s52 + $0xf78] sm:%s41] %v1043
      %v1045 = vld [vmem:[%s51 + $0xf80] sm:%s41]
      %1046 = vst [vmem:[%s52 + $0xf80] sm:%s41] %v1045
      %v1047 = vld [vmem:[%s51 + $0xf84] sm:%s41]
      %1048 = vst [vmem:[%s52 + $0xf88] sm:%s41] %v1047
      %v1049 = vld [vmem:[%s51 + $0xf88] sm:%s41]
      %1050 = vst [vmem:[%s52 + $0xf90] sm:%s41] %v1049
      %v1051 = vld [vmem:[%s51 + $0xf8c] sm:%s41]
      %1052 = vst [vmem:[%s52 + $0xf98] sm:%s41] %v1051
      %v1053 = vld [vmem:[%s51 + $0xf90] sm:%s41]
      %1054 = vst [vmem:[%s52 + $0xfa0] sm:%s41] %v1053
      %v1055 = vld [vmem:[%s51 + $0xf94] sm:%s41]
      %1056 = vst [vmem:[%s52 + $0xfa8] sm:%s41] %v1055
      %v1057 = vld [vmem:[%s51 + $0xf98] sm:%s41]
      %1058 = vst [vmem:[%s52 + $0xfb0] sm:%s41] %v1057
      %v1059 = vld [vmem:[%s51 + $0xf9c] sm:%s41]
      %1060 = vst [vmem:[%s52 + $0xfb8] sm:%s41] %v1059
      %v1061 = vld [vmem:[%s51 + $0xfc0] sm:%s41]
      %1062 = vst [vmem:[%s52 + $0xfc0] sm:%s41] %v1061
      %v1063 = vld [vmem:[%s51 + $0xfc4] sm:%s41]
      %1064 = vst [vmem:[%s52 + $0xfc8] sm:%s41] %v1063
      %v1065 = vld [vmem:[%s51 + $0xfc8] sm:%s41]
      %1066 = vst [vmem:[%s52 + $0xfd0] sm:%s41] %v1065
      %v1067 = vld [vmem:[%s51 + $0xfcc] sm:%s41]
      %1068 = vst [vmem:[%s52 + $0xfd8] sm:%s41] %v1067
      %v1069 = vld [vmem:[%s51 + $0xfd0] sm:%s41]
      %1070 = vst [vmem:[%s52 + $0xfe0] sm:%s41] %v1069
      %v1071 = vld [vmem:[%s51 + $0xfd4] sm:%s41]
      %1072 = vst [vmem:[%s52 + $0xfe8] sm:%s41] %v1071
      %v1073 = vld [vmem:[%s51 + $0xfd8] sm:%s41]
      %1074 = vst [vmem:[%s52 + $0xff0] sm:%s41] %v1073
      %v1075 = vld [vmem:[%s51 + $0xfdc] sm:%s41]
      %1076 = vst [vmem:[%s52 + $0xff8] sm:%s41] %v1075
      %s1077 = sadd.s32 1, %s50
      %p1078 = scmp.ge.s32.totalorder %s1077, 2
      %s1079 = scalar_select %p1078, 0, %s1077
      %s1080 = smul.u32 %s1079, 32
      %s1081 = smul.u32 %s1079, 4
      %s1082 = scalar_lea.vmem %s5, %s1080
      %s1083 = scalar_lea.vmem [#allocation2], %s1081
    $region46: #{_lambda_.1} parent=40 // loop_footer
      %s49 = sadd.s32 1, %s45
    $region47: #{_lambda_.1} parent=40 // loop_footer_branch
      %44 = sbr.rel target = $region43
    $region48: #{_lambda_.1} parent=40 // loop_exit
      _
  $region41: #{_lambda_.1} parent=0 // pred_fallthru
    _
  // Predicated region
  $region78: #{_lambda_.1} parent=0 // pred_check
    _
  $region79: #{_lambda_.1} parent=0 // pred_check_branch
    %4252 = sbr.rel (0) target = $region81
  $region80: #{_lambda_.1} parent=0 // pred_region
    %4253 = vsyncadd [#allocation3], 65536
  $region81: #{_lambda_.1} parent=0 // pred_fallthru
    _
  %v4254 = vld [vmem:[%s0] sm:$0xff]
  %v4255 = vpack.c.bf16 %v4254, %v4254
  %v4256 = vld [vmem:[%s1] sm:$0xff]
  %v4257 = vld [vmem:[%s1 + $0x8] sm:$0xff]
  %v4258 = vld [vmem:[%s1 + $0x10] sm:$0xff]
  %v4259 = vld [vmem:[%s1 + $0x18] sm:$0xff]
  %v4260 = vld [vmem:[%s1 + $0x20] sm:$0xff]
  %v4261 = vld [vmem:[%s1 + $0x28] sm:$0xff]
  %v4262 = vld [vmem:[%s1 + $0x30] sm:$0xff]
  %v4263 = vld [vmem:[%s1 + $0x38] sm:$0xff]
  %v4264 = vld [vmem:[%s2] sm:$0xff]
  %v4266 = vlaneseq
  %v4267 = vshrl.u32 %v4266, 7
  %v4268 = vsub.s32 0, %v4267
  %v4269 = vrot.slane %v4264, %v4268
  %v4270 = vlaneseq
  %v4271 = vshrl.u32 %v4270, 7
  %v4272 = vsub.s32 1, %v4271
  %v4273 = vrot.slane %v4264, %v4272
  %v4274 = vlaneseq
  %v4275 = vshrl.u32 %v4274, 7
  %v4276 = vsub.s32 2, %v4275
  %v4277 = vrot.slane %v4264, %v4276
  %v4278 = vlaneseq
  %v4279 = vshrl.u32 %v4278, 7
  %v4280 = vsub.s32 3, %v4279
  %v4281 = vrot.slane %v4264, %v4280
  %v4282 = vlaneseq
  %v4283 = vshrl.u32 %v4282, 7
  %v4284 = vsub.s32 4, %v4283
  %v4285 = vrot.slane %v4264, %v4284
  %v4286 = vlaneseq
  %v4287 = vshrl.u32 %v4286, 7
  %v4288 = vsub.s32 5, %v4287
  %v4289 = vrot.slane %v4264, %v4288
  %v4290 = vlaneseq
  %v4291 = vshrl.u32 %v4290, 7
  %v4292 = vsub.s32 6, %v4291
  %v4293 = vrot.slane %v4264, %v4292
  %v4294 = vlaneseq
  %v4295 = vshrl.u32 %v4294, 7
  %v4296 = vsub.s32 7, %v4295
  %v4297 = vrot.slane %v4264, %v4296
  %v4314 = vunpack.c.l.b16 %v4256
  %v4315 = vunpack.c.h.b16 %v4256
  %v4316 = vunpack.c.l.b16 %v4257
  %v4317 = vunpack.c.h.b16 %v4257
  %v4318 = vunpack.c.l.b16 %v4258
  %v4319 = vunpack.c.h.b16 %v4258
  %v4320 = vunpack.c.l.b16 %v4259
  %v4321 = vunpack.c.h.b16 %v4259
  %v4322 = vunpack.c.l.b16 %v4260
  %v4323 = vunpack.c.h.b16 %v4260
  %v4324 = vunpack.c.l.b16 %v4261
  %v4325 = vunpack.c.h.b16 %v4261
  %v4326 = vunpack.c.l.b16 %v4262
  %v4327 = vunpack.c.h.b16 %v4262
  %v4328 = vunpack.c.l.b16 %v4263
  %v4329 = vunpack.c.h.b16 %v4263
  %v4330 = vpack.c.b16 %v4322, %v4314
  %v4331 = vpack.c.b16 %v4323, %v4315
  %v4332 = vpack.c.b16 %v4324, %v4316
  %v4333 = vpack.c.b16 %v4325, %v4317
  %v4334 = vpack.c.b16 %v4326, %v4318
  %v4335 = vpack.c.b16 %v4327, %v4319
  %v4336 = vpack.c.b16 %v4328, %v4320
  %v4337 = vpack.c.b16 %v4329, %v4321
  %vm4346 = vcmask 130048
  %v4348 = vsel %vm4346, %v4255, 0
  %4350 = vmatprep.subr.bf16.mxu0 %v4331
  %4351 = vmatpush1.bf16.msra.mxu0 %v4330
  %4352 = vmatprep.subr.bf16.mxu0 0
  %4353 = vmatpush1.bf16.msra.mxu0 0
  %4354 = vmatprep.subr.bf16.mxu0 0
  %4355 = vmatpush1.bf16.msra.mxu0 0
  %4356 = vmatprep.subr.bf16.mxu0 0
  %4357 = vmatpush1.bf16.msra.mxu0 0
  %4358 = vmatprep.subr.bf16.mxu0 0
  %4359 = vmatpush1.bf16.msra.mxu0 0
  %4360 = vmatprep.subr.bf16.mxu0 0
  %4361 = vmatpush1.bf16.msra.mxu0 0
  %4362 = vmatprep.subr.bf16.mxu0 0
  %4363 = vmatpush1.bf16.msra.mxu0 0
  %4364 = vmatprep.subr.bf16.mxu0 0
  %4365 = vmatpush1.bf16.msra.mxu0 0
  %4366 = vmatprep.subr.bf16.mxu0 0
  %4367 = vmatpush1.bf16.msra.mxu0 0
  %4368 = vmatprep.subr.bf16.mxu0 0
  %4369 = vmatpush1.bf16.msra.mxu0 0
  %4370 = vmatprep.subr.bf16.mxu0 0
  %4371 = vmatpush1.bf16.msra.mxu0 0
  %4372 = vmatprep.subr.bf16.mxu0 0
  %4373 = vmatpush1.bf16.msra.mxu0 0
  %4374 = vmatprep.subr.bf16.mxu0 0
  %4375 = vmatpush1.bf16.msra.mxu0 0
  %4376 = vmatprep.subr.bf16.mxu0 0
  %4377 = vmatpush1.bf16.msra.mxu0 0
  %4378 = vmatprep.subr.bf16.mxu0 0
  %4379 = vmatpush1.bf16.msra.mxu0 0
  %4380 = vmatprep.subr.bf16.mxu0 0
  %4381 = vmatpush1.bf16.msra.mxu0 0
  %4382 = vmatprep.mubr.bf16.mxu0 0
  %4383 = vmatmul.mubr.bf16.gmra.mrb[0].mxu0 %v4348
  %v4384 = vpop.f32.mrb[0].mxu0
  %v4385 = vadd.f32 %v4269, %v4384
  %v4386 = vpop.f32.mrb[0].mxu0
  %v4387 = vadd.f32 %v4273, %v4386
  %v4388 = vpop.f32.mrb[0].mxu0
  %v4389 = vpop.f32.mrb[0].mxu0
  %4390 = vdwg.mxu0
  %4391 = vmatprep.subr.bf16.mxu0 %v4333
  %4392 = vmatpush1.bf16.msra.mxu0 %v4332
  %4393 = vmatprep.subr.bf16.mxu0 0
  %4394 = vmatpush1.bf16.msra.mxu0 0
  %4395 = vmatprep.subr.bf16.mxu0 0
  %4396 = vmatpush1.bf16.msra.mxu0 0
  %4397 = vmatprep.subr.bf16.mxu0 0
  %4398 = vmatpush1.bf16.msra.mxu0 0
  %4399 = vmatprep.subr.bf16.mxu0 0
  %4400 = vmatpush1.bf16.msra.mxu0 0
  %4401 = vmatprep.subr.bf16.mxu0 0
  %4402 = vmatpush1.bf16.msra.mxu0 0
  %4403 = vmatprep.subr.bf16.mxu0 0
  %4404 = vmatpush1.bf16.msra.mxu0 0
  %4405 = vmatprep.subr.bf16.mxu0 0
  %4406 = vmatpush1.bf16.msra.mxu0 0
  %4407 = vmatprep.subr.bf16.mxu0 0
  %4408 = vmatpush1.bf16.msra.mxu0 0
  %4409 = vmatprep.subr.bf16.mxu0 0
  %4410 = vmatpush1.bf16.msra.mxu0 0
  %4411 = vmatprep.subr.bf16.mxu0 0
  %4412 = vmatpush1.bf16.msra.mxu0 0
  %4413 = vmatprep.subr.bf16.mxu0 0
  %4414 = vmatpush1.bf16.msra.mxu0 0
  %4415 = vmatprep.subr.bf16.mxu0 0
  %4416 = vmatpush1.bf16.msra.mxu0 0
  %4417 = vmatprep.subr.bf16.mxu0 0
  %4418 = vmatpush1.bf16.msra.mxu0 0
  %4419 = vmatprep.subr.bf16.mxu0 0
  %4420 = vmatpush1.bf16.msra.mxu0 0
  %4421 = vmatprep.subr.bf16.mxu0 0
  %4422 = vmatpush1.bf16.msra.mxu0 0
  %4423 = vmatprep.mubr.bf16.mxu0 0
  %4424 = vmatmul.mubr.bf16.gmra.mrb[0].mxu0 %v4348
  %v4425 = vpop.f32.mrb[0].mxu0
  %v4426 = vadd.f32 %v4277, %v4425
  %v4427 = vpop.f32.mrb[0].mxu0
  %v4428 = vadd.f32 %v4281, %v4427
  %v4429 = vpop.f32.mrb[0].mxu0
  %v4430 = vpop.f32.mrb[0].mxu0
  %4431 = vdwg.mxu0
  %4432 = vmatprep.subr.bf16.mxu0 %v4335
  %4433 = vmatpush1.bf16.msra.mxu0 %v4334
  %4434 = vmatprep.subr.bf16.mxu0 0
  %4435 = vmatpush1.bf16.msra.mxu0 0
  %4436 = vmatprep.subr.bf16.mxu0 0
  %4437 = vmatpush1.bf16.msra.mxu0 0
  %4438 = vmatprep.subr.bf16.mxu0 0
  %4439 = vmatpush1.bf16.msra.mxu0 0
  %4440 = vmatprep.subr.bf16.mxu0 0
  %4441 = vmatpush1.bf16.msra.mxu0 0
  %4442 = vmatprep.subr.bf16.mxu0 0
  %4443 = vmatpush1.bf16.msra.mxu0 0
  %4444 = vmatprep.subr.bf16.mxu0 0
  %4445 = vmatpush1.bf16.msra.mxu0 0
  %4446 = vmatprep.subr.bf16.mxu0 0
  %4447 = vmatpush1.bf16.msra.mxu0 0
  %4448 = vmatprep.subr.bf16.mxu0 0
  %4449 = vmatpush1.bf16.msra.mxu0 0
  %4450 = vmatprep.subr.bf16.mxu0 0
  %4451 = vmatpush1.bf16.msra.mxu0 0
  %4452 = vmatprep.subr.bf16.mxu0 0
  %4453 = vmatpush1.bf16.msra.mxu0 0
  %4454 = vmatprep.subr.bf16.mxu0 0
  %4455 = vmatpush1.bf16.msra.mxu0 0
  %4456 = vmatprep.subr.bf16.mxu0 0
  %4457 = vmatpush1.bf16.msra.mxu0 0
  %4458 = vmatprep.subr.bf16.mxu0 0
  %4459 = vmatpush1.bf16.msra.mxu0 0
  %4460 = vmatprep.subr.bf16.mxu0 0
  %4461 = vmatpush1.bf16.msra.mxu0 0
  %4462 = vmatprep.subr.bf16.mxu0 0
  %4463 = vmatpush1.bf16.msra.mxu0 0
  %4464 = vmatprep.mubr.bf16.mxu0 0
  %4465 = vmatmul.mubr.bf16.gmra.mrb[0].mxu0 %v4348
  %v4466 = vpop.f32.mrb[0].mxu0
  %v4467 = vadd.f32 %v4285, %v4466
  %v4468 = vpop.f32.mrb[0].mxu0
  %v4469 = vadd.f32 %v4289, %v4468
  %v4470 = vpop.f32.mrb[0].mxu0
  %v4471 = vpop.f32.mrb[0].mxu0
  %4472 = vdwg.mxu0
  %4473 = vmatprep.subr.bf16.mxu0 %v4337
  %4474 = vmatpush1.bf16.msra.mxu0 %v4336
  %4475 = vmatprep.subr.bf16.mxu0 0
  %4476 = vmatpush1.bf16.msra.mxu0 0
  %4477 = vmatprep.subr.bf16.mxu0 0
  %4478 = vmatpush1.bf16.msra.mxu0 0
  %4479 = vmatprep.subr.bf16.mxu0 0
  %4480 = vmatpush1.bf16.msra.mxu0 0
  %4481 = vmatprep.subr.bf16.mxu0 0
  %4482 = vmatpush1.bf16.msra.mxu0 0
  %4483 = vmatprep.subr.bf16.mxu0 0
  %4484 = vmatpush1.bf16.msra.mxu0 0
  %4485 = vmatprep.subr.bf16.mxu0 0
  %4486 = vmatpush1.bf16.msra.mxu0 0
  %4487 = vmatprep.subr.bf16.mxu0 0
  %4488 = vmatpush1.bf16.msra.mxu0 0
  %4489 = vmatprep.subr.bf16.mxu0 0
  %4490 = vmatpush1.bf16.msra.mxu0 0
  %4491 = vmatprep.subr.bf16.mxu0 0
  %4492 = vmatpush1.bf16.msra.mxu0 0
  %4493 = vmatprep.subr.bf16.mxu0 0
  %4494 = vmatpush1.bf16.msra.mxu0 0
  %4495 = vmatprep.subr.bf16.mxu0 0
  %4496 = vmatpush1.bf16.msra.mxu0 0
  %4497 = vmatprep.subr.bf16.mxu0 0
  %4498 = vmatpush1.bf16.msra.mxu0 0
  %4499 = vmatprep.subr.bf16.mxu0 0
  %4500 = vmatpush1.bf16.msra.mxu0 0
  %4501 = vmatprep.subr.bf16.mxu0 0
  %4502 = vmatpush1.bf16.msra.mxu0 0
  %4503 = vmatprep.subr.bf16.mxu0 0
  %4504 = vmatpush1.bf16.msra.mxu0 0
  %4505 = vmatprep.mubr.bf16.mxu0 0
  %4506 = vmatmul.mubr.bf16.gmra.mrb[0].mxu0 %v4348
  %v4507 = vpop.f32.mrb[0].mxu0
  %v4508 = vadd.f32 %v4293, %v4507
  %v4509 = vpop.f32.mrb[0].mxu0
  %v4510 = vadd.f32 %v4297, %v4509
  %v4511 = vpop.f32.mrb[0].mxu0
  %v4512 = vpop.f32.mrb[0].mxu0
  %4513 = vdwg.mxu0
  %v4514 = vmax.f32 %v4385, 0.0
  %v4515 = vmax.f32 %v4387, 0.0
  %v4516 = vmax.f32 %v4426, 0.0
  %v4517 = vmax.f32 %v4428, 0.0
  %v4518 = vmax.f32 %v4467, 0.0
  %v4519 = vmax.f32 %v4469, 0.0
  %v4520 = vmax.f32 %v4508, 0.0
  %v4521 = vmax.f32 %v4510, 0.0
  %v4522 = vpack.c.bf16 %v4514, %v4514
  %v4523 = vpack.c.bf16 %v4515, %v4515
  %v4524 = vld [vmem:[%s3] sm:$0xff]
  %v4525 = vld [vmem:[%s3 + $0x8] sm:$0xff]
  %v4526 = vld [vmem:[%s3 + $0x10] sm:$0xff]
  %v4527 = vld [vmem:[%s3 + $0x18] sm:$0xff]
  %v4528 = vld [vmem:[%s3 + $0x20] sm:$0xff]
  %v4529 = vld [vmem:[%s3 + $0x28] sm:$0xff]
  %v4530 = vld [vmem:[%s3 + $0x30] sm:$0xff]
  %v4531 = vld [vmem:[%s3 + $0x38] sm:$0xff]
  %v4532 = vld [vmem:[%s3 + $0x40] sm:$0xff]
  %v4533 = vld [vmem:[%s3 + $0x48] sm:$0xff]
  %v4534 = vld [vmem:[%s3 + $0x50] sm:$0xff]
  %v4535 = vld [vmem:[%s3 + $0x58] sm:$0xff]
  %v4536 = vld [vmem:[%s3 + $0x60] sm:$0xff]
  %v4537 = vld [vmem:[%s3 + $0x68] sm:$0xff]
  %v4538 = vld [vmem:[%s3 + $0x70] sm:$0xff]
  %v4539 = vld [vmem:[%s3 + $0x78] sm:$0xff]
  %v4540 = vld [vmem:[%s3 + $0x80] sm:$0xff]
  %v4541 = vld [vmem:[%s3 + $0x88] sm:$0xff]
  %v4542 = vld [vmem:[%s3 + $0x90] sm:$0xff]
  %v4543 = vld [vmem:[%s3 + $0x98] sm:$0xff]
  %v4544 = vld [vmem:[%s3 + $0xa0] sm:$0xff]
  %v4545 = vld [vmem:[%s3 + $0xa8] sm:$0xff]
  %v4546 = vld [vmem:[%s3 + $0xb0] sm:$0xff]
  %v4547 = vld [vmem:[%s3 + $0xb8] sm:$0xff]
  %v4548 = vld [vmem:[%s3 + $0xc0] sm:$0xff]
  %v4549 = vld [vmem:[%s3 + $0xc8] sm:$0xff]
  %v4550 = vld [vmem:[%s3 + $0xd0] sm:$0xff]
  %v4551 = vld [vmem:[%s3 + $0xd8] sm:$0xff]
  %v4552 = vld [vmem:[%s3 + $0xe0] sm:$0xff]
  %v4553 = vld [vmem:[%s3 + $0xe8] sm:$0xff]
  %v4554 = vld [vmem:[%s3 + $0xf0] sm:$0xff]
  %v4555 = vld [vmem:[%s3 + $0xf8] sm:$0xff]
  %v4556 = vld [vmem:[%s4] sm:$0x3]
  %v4558 = vlaneseq
  %v4559 = vshrl.u32 %v4558, 7
  %v4560 = vsub.s32 0, %v4559
  %v4561 = vrot.slane %v4556, %v4560
  %v4562 = vlaneseq
  %v4563 = vshrl.u32 %v4562, 7
  %v4564 = vsub.s32 1, %v4563
  %v4565 = vrot.slane %v4556, %v4564
  %v4600 = vunpack.c.l.b16 %v4524
  %v4601 = vunpack.c.h.b16 %v4524
  %v4602 = vunpack.c.l.b16 %v4525
  %v4603 = vunpack.c.h.b16 %v4525
  %v4604 = vunpack.c.l.b16 %v4526
  %v4605 = vunpack.c.h.b16 %v4526
  %v4606 = vunpack.c.l.b16 %v4527
  %v4607 = vunpack.c.h.b16 %v4527
  %v4608 = vunpack.c.l.b16 %v4528
  %v4609 = vunpack.c.h.b16 %v4528
  %v4610 = vunpack.c.l.b16 %v4529
  %v4611 = vunpack.c.h.b16 %v4529
  %v4612 = vunpack.c.l.b16 %v4530
  %v4613 = vunpack.c.h.b16 %v4530
  %v4614 = vunpack.c.l.b16 %v4531
  %v4615 = vunpack.c.h.b16 %v4531
  %v4616 = vunpack.c.l.b16 %v4532
  %v4617 = vunpack.c.h.b16 %v4532
  %v4618 = vunpack.c.l.b16 %v4533
  %v4619 = vunpack.c.h.b16 %v4533
  %v4620 = vunpack.c.l.b16 %v4534
  %v4621 = vunpack.c.h.b16 %v4534
  %v4622 = vunpack.c.l.b16 %v4535
  %v4623 = vunpack.c.h.b16 %v4535
  %v4624 = vunpack.c.l.b16 %v4536
  %v4625 = vunpack.c.h.b16 %v4536
  %v4626 = vunpack.c.l.b16 %v4537
  %v4627 = vunpack.c.h.b16 %v4537
  %v4628 = vunpack.c.l.b16 %v4538
  %v4629 = vunpack.c.h.b16 %v4538
  %v4630 = vunpack.c.l.b16 %v4539
  %v4631 = vunpack.c.h.b16 %v4539
  %v4632 = vunpack.c.l.b16 %v4540
  %v4633 = vunpack.c.h.b16 %v4540
  %v4634 = vunpack.c.l.b16 %v4541
  %v4635 = vunpack.c.h.b16 %v4541
  %v4636 = vunpack.c.l.b16 %v4542
  %v4637 = vunpack.c.h.b16 %v4542
  %v4638 = vunpack.c.l.b16 %v4543
  %v4639 = vunpack.c.h.b16 %v4543
  %v4640 = vunpack.c.l.b16 %v4544
  %v4641 = vunpack.c.h.b16 %v4544
  %v4642 = vunpack.c.l.b16 %v4545
  %v4643 = vunpack.c.h.b16 %v4545
  %v4644 = vunpack.c.l.b16 %v4546
  %v4645 = vunpack.c.h.b16 %v4546
  %v4646 = vunpack.c.l.b16 %v4547
  %v4647 = vunpack.c.h.b16 %v4547
  %v4648 = vunpack.c.l.b16 %v4548
  %v4649 = vunpack.c.h.b16 %v4548
  %v4650 = vunpack.c.l.b16 %v4549
  %v4651 = vunpack.c.h.b16 %v4549
  %v4652 = vunpack.c.l.b16 %v4550
  %v4653 = vunpack.c.h.b16 %v4550
  %v4654 = vunpack.c.l.b16 %v4551
  %v4655 = vunpack.c.h.b16 %v4551
  %v4656 = vunpack.c.l.b16 %v4552
  %v4657 = vunpack.c.h.b16 %v4552
  %v4658 = vunpack.c.l.b16 %v4553
  %v4659 = vunpack.c.h.b16 %v4553
  %v4660 = vunpack.c.l.b16 %v4554
  %v4661 = vunpack.c.h.b16 %v4554
  %v4662 = vunpack.c.l.b16 %v4555
  %v4663 = vunpack.c.h.b16 %v4555
  %v4664 = vpack.c.b16 %v4602, %v4600
  %v4665 = vpack.c.b16 %v4603, %v4601
  %v4666 = vpack.c.b16 %v4606, %v4604
  %v4667 = vpack.c.b16 %v4607, %v4605
  %v4668 = vpack.c.b16 %v4610, %v4608
  %v4669 = vpack.c.b16 %v4611, %v4609
  %v4670 = vpack.c.b16 %v4614, %v4612
  %v4671 = vpack.c.b16 %v4615, %v4613
  %v4672 = vpack.c.b16 %v4618, %v4616
  %v4673 = vpack.c.b16 %v4619, %v4617
  %v4674 = vpack.c.b16 %v4622, %v4620
  %v4675 = vpack.c.b16 %v4623, %v4621
  %v4676 = vpack.c.b16 %v4626, %v4624
  %v4677 = vpack.c.b16 %v4627, %v4625
  %v4678 = vpack.c.b16 %v4630, %v4628
  %v4679 = vpack.c.b16 %v4631, %v4629
  %v4680 = vpack.c.b16 %v4634, %v4632
  %v4681 = vpack.c.b16 %v4635, %v4633
  %v4682 = vpack.c.b16 %v4638, %v4636
  %v4683 = vpack.c.b16 %v4639, %v4637
  %v4684 = vpack.c.b16 %v4642, %v4640
  %v4685 = vpack.c.b16 %v4643, %v4641
  %v4686 = vpack.c.b16 %v4646, %v4644
  %v4687 = vpack.c.b16 %v4647, %v4645
  %v4688 = vpack.c.b16 %v4650, %v4648
  %v4689 = vpack.c.b16 %v4651, %v4649
  %v4690 = vpack.c.b16 %v4654, %v4652
  %v4691 = vpack.c.b16 %v4655, %v4653
  %v4692 = vpack.c.b16 %v4658, %v4656
  %v4693 = vpack.c.b16 %v4659, %v4657
  %v4694 = vpack.c.b16 %v4662, %v4660
  %v4695 = vpack.c.b16 %v4663, %v4661
  %4728 = vmatprep.subr.bf16.mxu0 %v4665
  %4729 = vmatpush1.bf16.msra.mxu0 %v4664
  %4730 = vmatprep.subr.bf16.mxu0 %v4667
  %4731 = vmatpush1.bf16.msra.mxu0 %v4666
  %4732 = vmatprep.subr.bf16.mxu0 %v4669
  %4733 = vmatpush1.bf16.msra.mxu0 %v4668
  %4734 = vmatprep.subr.bf16.mxu0 %v4671
  %4735 = vmatpush1.bf16.msra.mxu0 %v4670
  %4736 = vmatprep.subr.bf16.mxu0 %v4673
  %4737 = vmatpush1.bf16.msra.mxu0 %v4672
  %4738 = vmatprep.subr.bf16.mxu0 %v4675
  %4739 = vmatpush1.bf16.msra.mxu0 %v4674
  %4740 = vmatprep.subr.bf16.mxu0 %v4677
  %4741 = vmatpush1.bf16.msra.mxu0 %v4676
  %4742 = vmatprep.subr.bf16.mxu0 %v4679
  %4743 = vmatpush1.bf16.msra.mxu0 %v4678
  %4744 = vmatprep.subr.bf16.mxu0 %v4681
  %4745 = vmatpush1.bf16.msra.mxu0 %v4680
  %4746 = vmatprep.subr.bf16.mxu0 %v4683
  %4747 = vmatpush1.bf16.msra.mxu0 %v4682
  %4748 = vmatprep.subr.bf16.mxu0 %v4685
  %4749 = vmatpush1.bf16.msra.mxu0 %v4684
  %4750 = vmatprep.subr.bf16.mxu0 %v4687
  %4751 = vmatpush1.bf16.msra.mxu0 %v4686
  %4752 = vmatprep.subr.bf16.mxu0 %v4689
  %4753 = vmatpush1.bf16.msra.mxu0 %v4688
  %4754 = vmatprep.subr.bf16.mxu0 %v4691
  %4755 = vmatpush1.bf16.msra.mxu0 %v4690
  %4756 = vmatprep.subr.bf16.mxu0 %v4693
  %4757 = vmatpush1.bf16.msra.mxu0 %v4692
  %4758 = vmatprep.subr.bf16.mxu0 %v4695
  %4759 = vmatpush1.bf16.msra.mxu0 %v4694
  %4760 = vmatprep.mubr.bf16.mxu0 %v4523
  %4761 = vmatmul.mubr.bf16.gmra.mrb[0].mxu0 %v4522
  %v4762 = vpop.f32.mrb[0].mxu0
  %v4763 = vadd.f32 %v4561, %v4762
  %v4764 = vpop.f32.mrb[0].mxu0
  %v4765 = vadd.f32 %v4565, %v4764
  %v4766 = vpop.f32.mrb[0].mxu0
  %v4767 = vpop.f32.mrb[0].mxu0
  %4768 = vdwg.mxu0
  %v4769 = vmax.f32 %v4763, 0.0
  %v4770 = vmax.f32 %v4765, 0.0
  %v4771 = vpack.c.bf16 %v4769, %v4769
  %v4772 = vpack.c.bf16 %v4770, %v4770
  %s4773 = scalar_lea.vmem %s3, 256
  %v4774 = vld [vmem:[%s4773] sm:$0xff]
  %v4775 = vld [vmem:[%s4773 + $0x8] sm:$0xff]
  %v4776 = vld [vmem:[%s4773 + $0x10] sm:$0xff]
  %v4777 = vld [vmem:[%s4773 + $0x18] sm:$0xff]
  %v4778 = vld [vmem:[%s4773 + $0x20] sm:$0xff]
  %v4779 = vld [vmem:[%s4773 + $0x28] sm:$0xff]
  %v4780 = vld [vmem:[%s4773 + $0x30] sm:$0xff]
  %v4781 = vld [vmem:[%s4773 + $0x38] sm:$0xff]
  %v4782 = vld [vmem:[%s4773 + $0x40] sm:$0xff]
  %v4783 = vld [vmem:[%s4773 + $0x48] sm:$0xff]
  %v4784 = vld [vmem:[%s4773 + $0x50] sm:$0xff]
  %v4785 = vld [vmem:[%s4773 + $0x58] sm:$0xff]
  %v4786 = vld [vmem:[%s4773 + $0x60] sm:$0xff]
  %v4787 = vld [vmem:[%s4773 + $0x68] sm:$0xff]
  %v4788 = vld [vmem:[%s4773 + $0x70] sm:$0xff]
  %v4789 = vld [vmem:[%s4773 + $0x78] sm:$0xff]
  %v4790 = vld [vmem:[%s4773 + $0x80] sm:$0xff]
  %v4791 = vld [vmem:[%s4773 + $0x88] sm:$0xff]
  %v4792 = vld [vmem:[%s4773 + $0x90] sm:$0xff]
  %v4793 = vld [vmem:[%s4773 + $0x98] sm:$0xff]
  %v4794 = vld [vmem:[%s4773 + $0xa0] sm:$0xff]
  %v4795 = vld [vmem:[%s4773 + $0xa8] sm:$0xff]
  %v4796 = vld [vmem:[%s4773 + $0xb0] sm:$0xff]
  %v4797 = vld [vmem:[%s4773 + $0xb8] sm:$0xff]
  %v4798 = vld [vmem:[%s4773 + $0xc0] sm:$0xff]
  %v4799 = vld [vmem:[%s4773 + $0xc8] sm:$0xff]
  %v4800 = vld [vmem:[%s4773 + $0xd0] sm:$0xff]
  %v4801 = vld [vmem:[%s4773 + $0xd8] sm:$0xff]
  %v4802 = vld [vmem:[%s4773 + $0xe0] sm:$0xff]
  %v4803 = vld [vmem:[%s4773 + $0xe8] sm:$0xff]
  %v4804 = vld [vmem:[%s4773 + $0xf0] sm:$0xff]
  %v4805 = vld [vmem:[%s4773 + $0xf8] sm:$0xff]
  %s4806 = scalar_lea.vmem %s4, 2
  %v4807 = vld [vmem:[%s4806] sm:$0x3]
  %v4809 = vlaneseq
  %v4810 = vshrl.u32 %v4809, 7
  %v4811 = vsub.s32 0, %v4810
  %v4812 = vrot.slane %v4807, %v4811
  %v4813 = vlaneseq
  %v4814 = vshrl.u32 %v4813, 7
  %v4815 = vsub.s32 1, %v4814
  %v4816 = vrot.slane %v4807, %v4815
  %v4851 = vunpack.c.l.b16 %v4774
  %v4852 = vunpack.c.h.b16 %v4774
  %v4853 = vunpack.c.l.b16 %v4775
  %v4854 = vunpack.c.h.b16 %v4775
  %v4855 = vunpack.c.l.b16 %v4776
  %v4856 = vunpack.c.h.b16 %v4776
  %v4857 = vunpack.c.l.b16 %v4777
  %v4858 = vunpack.c.h.b16 %v4777
  %v4859 = vunpack.c.l.b16 %v4778
  %v4860 = vunpack.c.h.b16 %v4778
  %v4861 = vunpack.c.l.b16 %v4779
  %v4862 = vunpack.c.h.b16 %v4779
  %v4863 = vunpack.c.l.b16 %v4780
  %v4864 = vunpack.c.h.b16 %v4780
  %v4865 = vunpack.c.l.b16 %v4781
  %v4866 = vunpack.c.h.b16 %v4781
  %v4867 = vunpack.c.l.b16 %v4782
  %v4868 = vunpack.c.h.b16 %v4782
  %v4869 = vunpack.c.l.b16 %v4783
  %v4870 = vunpack.c.h.b16 %v4783
  %v4871 = vunpack.c.l.b16 %v4784
  %v4872 = vunpack.c.h.b16 %v4784
  %v4873 = vunpack.c.l.b16 %v4785
  %v4874 = vunpack.c.h.b16 %v4785
  %v4875 = vunpack.c.l.b16 %v4786
  %v4876 = vunpack.c.h.b16 %v4786
  %v4877 = vunpack.c.l.b16 %v4787
  %v4878 = vunpack.c.h.b16 %v4787
  %v4879 = vunpack.c.l.b16 %v4788
  %v4880 = vunpack.c.h.b16 %v4788
  %v4881 = vunpack.c.l.b16 %v4789
  %v4882 = vunpack.c.h.b16 %v4789
  %v4883 = vunpack.c.l.b16 %v4790
  %v4884 = vunpack.c.h.b16 %v4790
  %v4885 = vunpack.c.l.b16 %v4791
  %v4886 = vunpack.c.h.b16 %v4791
  %v4887 = vunpack.c.l.b16 %v4792
  %v4888 = vunpack.c.h.b16 %v4792
  %v4889 = vunpack.c.l.b16 %v4793
  %v4890 = vunpack.c.h.b16 %v4793
  %v4891 = vunpack.c.l.b16 %v4794
  %v4892 = vunpack.c.h.b16 %v4794
  %v4893 = vunpack.c.l.b16 %v4795
  %v4894 = vunpack.c.h.b16 %v4795
  %v4895 = vunpack.c.l.b16 %v4796
  %v4896 = vunpack.c.h.b16 %v4796
  %v4897 = vunpack.c.l.b16 %v4797
  %v4898 = vunpack.c.h.b16 %v4797
  %v4899 = vunpack.c.l.b16 %v4798
  %v4900 = vunpack.c.h.b16 %v4798
  %v4901 = vunpack.c.l.b16 %v4799
  %v4902 = vunpack.c.h.b16 %v4799
  %v4903 = vunpack.c.l.b16 %v4800
  %v4904 = vunpack.c.h.b16 %v4800
  %v4905 = vunpack.c.l.b16 %v4801
  %v4906 = vunpack.c.h.b16 %v4801
  %v4907 = vunpack.c.l.b16 %v4802
  %v4908 = vunpack.c.h.b16 %v4802
  %v4909 = vunpack.c.l.b16 %v4803
  %v4910 = vunpack.c.h.b16 %v4803
  %v4911 = vunpack.c.l.b16 %v4804
  %v4912 = vunpack.c.h.b16 %v4804
  %v4913 = vunpack.c.l.b16 %v4805
  %v4914 = vunpack.c.h.b16 %v4805
  %v4915 = vpack.c.b16 %v4853, %v4851
  %v4916 = vpack.c.b16 %v4854, %v4852
  %v4917 = vpack.c.b16 %v4857, %v4855
  %v4918 = vpack.c.b16 %v4858, %v4856
  %v4919 = vpack.c.b16 %v4861, %v4859
  %v4920 = vpack.c.b16 %v4862, %v4860
  %v4921 = vpack.c.b16 %v4865, %v4863
  %v4922 = vpack.c.b16 %v4866, %v4864
  %v4923 = vpack.c.b16 %v4869, %v4867
  %v4924 = vpack.c.b16 %v4870, %v4868
  %v4925 = vpack.c.b16 %v4873, %v4871
  %v4926 = vpack.c.b16 %v4874, %v4872
  %v4927 = vpack.c.b16 %v4877, %v4875
  %v4928 = vpack.c.b16 %v4878, %v4876
  %v4929 = vpack.c.b16 %v4881, %v4879
  %v4930 = vpack.c.b16 %v4882, %v4880
  %v4931 = vpack.c.b16 %v4885, %v4883
  %v4932 = vpack.c.b16 %v4886, %v4884
  %v4933 = vpack.c.b16 %v4889, %v4887
  %v4934 = vpack.c.b16 %v4890, %v4888
  %v4935 = vpack.c.b16 %v4893, %v4891
  %v4936 = vpack.c.b16 %v4894, %v4892
  %v4937 = vpack.c.b16 %v4897, %v4895
  %v4938 = vpack.c.b16 %v4898, %v4896
  %v4939 = vpack.c.b16 %v4901, %v4899
  %v4940 = vpack.c.b16 %v4902, %v4900
  %v4941 = vpack.c.b16 %v4905, %v4903
  %v4942 = vpack.c.b16 %v4906, %v4904
  %v4943 = vpack.c.b16 %v4909, %v4907
  %v4944 = vpack.c.b16 %v4910, %v4908
  %v4945 = vpack.c.b16 %v4913, %v4911
  %v4946 = vpack.c.b16 %v4914, %v4912
  %4979 = vmatprep.subr.bf16.mxu0 %v4916
  %4980 = vmatpush1.bf16.msra.mxu0 %v4915
  %4981 = vmatprep.subr.bf16.mxu0 %v4918
  %4982 = vmatpush1.bf16.msra.mxu0 %v4917
  %4983 = vmatprep.subr.bf16.mxu0 %v4920
  %4984 = vmatpush1.bf16.msra.mxu0 %v4919
  %4985 = vmatprep.subr.bf16.mxu0 %v4922
  %4986 = vmatpush1.bf16.msra.mxu0 %v4921
  %4987 = vmatprep.subr.bf16.mxu0 %v4924
  %4988 = vmatpush1.bf16.msra.mxu0 %v4923
  %4989 = vmatprep.subr.bf16.mxu0 %v4926
  %4990 = vmatpush1.bf16.msra.mxu0 %v4925
  %4991 = vmatprep.subr.bf16.mxu0 %v4928
  %4992 = vmatpush1.bf16.msra.mxu0 %v4927
  %4993 = vmatprep.subr.bf16.mxu0 %v4930
  %4994 = vmatpush1.bf16.msra.mxu0 %v4929
  %4995 = vmatprep.subr.bf16.mxu0 %v4932
  %4996 = vmatpush1.bf16.msra.mxu0 %v4931
  %4997 = vmatprep.subr.bf16.mxu0 %v4934
  %4998 = vmatpush1.bf16.msra.mxu0 %v4933
  %4999 = vmatprep.subr.bf16.mxu0 %v4936
  %5000 = vmatpush1.bf16.msra.mxu0 %v4935
  %5001 = vmatprep.subr.bf16.mxu0 %v4938
  %5002 = vmatpush1.bf16.msra.mxu0 %v4937
  %5003 = vmatprep.subr.bf16.mxu0 %v4940
  %5004 = vmatpush1.bf16.msra.mxu0 %v4939
  %5005 = vmatprep.subr.bf16.mxu0 %v4942
  %5006 = vmatpush1.bf16.msra.mxu0 %v4941
  %5007 = vmatprep.subr.bf16.mxu0 %v4944
  %5008 = vmatpush1.bf16.msra.mxu0 %v4943
  %5009 = vmatprep.subr.bf16.mxu0 %v4946
  %5010 = vmatpush1.bf16.msra.mxu0 %v4945
  %5011 = vmatprep.mubr.bf16.mxu0 %v4772
  %5012 = vmatmul.mubr.bf16.gmra.mrb[0].mxu0 %v4771
  %v5013 = vpop.f32.mrb[0].mxu0
  %v5014 = vadd.f32 %v4812, %v5013
  %v5015 = vpop.f32.mrb[0].mxu0
  %v5016 = vadd.f32 %v4816, %v5015
  %v5017 = vpop.f32.mrb[0].mxu0
  %v5018 = vpop.f32.mrb[0].mxu0
  %5019 = vdwg.mxu0
  %v5020 = vmax.f32 %v5014, 0.0
  %v5021 = vmax.f32 %v5016, 0.0
  %v5022 = vpack.c.bf16 %v5020, %v5020
  %v5023 = vpack.c.bf16 %v5021, %v5021
  %v5024 = vpack.c.bf16 %v4516, %v4516
  %v5025 = vpack.c.bf16 %v4517, %v4517
  %5026 = vmatprep.subr.bf16.mxu0 %v4665
  %5027 = vmatpush1.bf16.msra.mxu0 %v4664
  %5028 = vmatprep.subr.bf16.mxu0 %v4667
  %5029 = vmatpush1.bf16.msra.mxu0 %v4666
  %5030 = vmatprep.subr.bf16.mxu0 %v4669
  %5031 = vmatpush1.bf16.msra.mxu0 %v4668
  %5032 = vmatprep.subr.bf16.mxu0 %v4671
  %5033 = vmatpush1.bf16.msra.mxu0 %v4670
  %5034 = vmatprep.subr.bf16.mxu0 %v4673
  %5035 = vmatpush1.bf16.msra.mxu0 %v4672
  %5036 = vmatprep.subr.bf16.mxu0 %v4675
  %5037 = vmatpush1.bf16.msra.mxu0 %v4674
  %5038 = vmatprep.subr.bf16.mxu0 %v4677
  %5039 = vmatpush1.bf16.msra.mxu0 %v4676
  %5040 = vmatprep.subr.bf16.mxu0 %v4679
  %5041 = vmatpush1.bf16.msra.mxu0 %v4678
  %5042 = vmatprep.subr.bf16.mxu0 %v4681
  %5043 = vmatpush1.bf16.msra.mxu0 %v4680
  %5044 = vmatprep.subr.bf16.mxu0 %v4683
  %5045 = vmatpush1.bf16.msra.mxu0 %v4682
  %5046 = vmatprep.subr.bf16.mxu0 %v4685
  %5047 = vmatpush1.bf16.msra.mxu0 %v4684
  %5048 = vmatprep.subr.bf16.mxu0 %v4687
  %5049 = vmatpush1.bf16.msra.mxu0 %v4686
  %5050 = vmatprep.subr.bf16.mxu0 %v4689
  %5051 = vmatpush1.bf16.msra.mxu0 %v4688
  %5052 = vmatprep.subr.bf16.mxu0 %v4691
  %5053 = vmatpush1.bf16.msra.mxu0 %v4690
  %5054 = vmatprep.subr.bf16.mxu0 %v4693
  %5055 = vmatpush1.bf16.msra.mxu0 %v4692
  %5056 = vmatprep.subr.bf16.mxu0 %v4695
  %5057 = vmatpush1.bf16.msra.mxu0 %v4694
  %5058 = vmatprep.mubr.bf16.mxu0 %v5025
  %5059 = vmatmul.mubr.bf16.gmra.mrb[0].mxu0 %v5024
  %v5060 = vpop.f32.mrb[0].mxu0
  %v5061 = vadd.f32 %v4561, %v5060
  %v5062 = vpop.f32.mrb[0].mxu0
  %v5063 = vadd.f32 %v4565, %v5062
  %v5064 = vpop.f32.mrb[0].mxu0
  %v5065 = vpop.f32.mrb[0].mxu0
  %5066 = vdwg.mxu0
  %v5067 = vmax.f32 %v5061, 0.0
  %v5068 = vmax.f32 %v5063, 0.0
  %v5069 = vpack.c.bf16 %v5067, %v5067
  %v5070 = vpack.c.bf16 %v5068, %v5068
  %5071 = vmatprep.subr.bf16.mxu0 %v4916
  %5072 = vmatpush1.bf16.msra.mxu0 %v4915
  %5073 = vmatprep.subr.bf16.mxu0 %v4918
  %5074 = vmatpush1.bf16.msra.mxu0 %v4917
  %5075 = vmatprep.subr.bf16.mxu0 %v4920
  %5076 = vmatpush1.bf16.msra.mxu0 %v4919
  %5077 = vmatprep.subr.bf16.mxu0 %v4922
  %5078 = vmatpush1.bf16.msra.mxu0 %v4921
  %5079 = vmatprep.subr.bf16.mxu0 %v4924
  %5080 = vmatpush1.bf16.msra.mxu0 %v4923
  %5081 = vmatprep.subr.bf16.mxu0 %v4926
  %5082 = vmatpush1.bf16.msra.mxu0 %v4925
  %5083 = vmatprep.subr.bf16.mxu0 %v4928
  %5084 = vmatpush1.bf16.msra.mxu0 %v4927
  %5085 = vmatprep.subr.bf16.mxu0 %v4930
  %5086 = vmatpush1.bf16.msra.mxu0 %v4929
  %5087 = vmatprep.subr.bf16.mxu0 %v4932
  %5088 = vmatpush1.bf16.msra.mxu0 %v4931
  %5089 = vmatprep.subr.bf16.mxu0 %v4934
  %5090 = vmatpush1.bf16.msra.mxu0 %v4933
  %5091 = vmatprep.subr.bf16.mxu0 %v4936
  %5092 = vmatpush1.bf16.msra.mxu0 %v4935
  %5093 = vmatprep.subr.bf16.mxu0 %v4938
  %5094 = vmatpush1.bf16.msra.mxu0 %v4937
  %5095 = vmatprep.subr.bf16.mxu0 %v4940
  %5096 = vmatpush1.bf16.msra.mxu0 %v4939
  %5097 = vmatprep.subr.bf16.mxu0 %v4942
  %5098 = vmatpush1.bf16.msra.mxu0 %v4941
  %5099 = vmatprep.subr.bf16.mxu0 %v4944
  %5100 = vmatpush1.bf16.msra.mxu0 %v4943
  %5101 = vmatprep.subr.bf16.mxu0 %v4946
  %5102 = vmatpush1.bf16.msra.mxu0 %v4945
  %5103 = vmatprep.mubr.bf16.mxu0 %v5070
  %5104 = vmatmul.mubr.bf16.gmra.mrb[0].mxu0 %v5069
  %v5105 = vpop.f32.mrb[0].mxu0
  %v5106 = vadd.f32 %v4812, %v5105
  %v5107 = vpop.f32.mrb[0].mxu0
  %v5108 = vadd.f32 %v4816, %v5107
  %v5109 = vpop.f32.mrb[0].mxu0
  %v5110 = vpop.f32.mrb[0].mxu0
  %5111 = vdwg.mxu0
  %v5112 = vmax.f32 %v5106, 0.0
  %v5113 = vmax.f32 %v5108, 0.0
  %v5114 = vpack.c.bf16 %v5112, %v5112
  %v5115 = vpack.c.bf16 %v5113, %v5113
  %v5116 = vpack.c.bf16 %v4518, %v4518
  %v5117 = vpack.c.bf16 %v4519, %v4519
  %5118 = vmatprep.subr.bf16.mxu0 %v4665
  %5119 = vmatpush1.bf16.msra.mxu0 %v4664
  %5120 = vmatprep.subr.bf16.mxu0 %v4667
  %5121 = vmatpush1.bf16.msra.mxu0 %v4666
  %5122 = vmatprep.subr.bf16.mxu0 %v4669
  %5123 = vmatpush1.bf16.msra.mxu0 %v4668
  %5124 = vmatprep.subr.bf16.mxu0 %v4671
  %5125 = vmatpush1.bf16.msra.mxu0 %v4670
  %5126 = vmatprep.subr.bf16.mxu0 %v4673
  %5127 = vmatpush1.bf16.msra.mxu0 %v4672
  %5128 = vmatprep.subr.bf16.mxu0 %v4675
  %5129 = vmatpush1.bf16.msra.mxu0 %v4674
  %5130 = vmatprep.subr.bf16.mxu0 %v4677
  %5131 = vmatpush1.bf16.msra.mxu0 %v4676
  %5132 = vmatprep.subr.bf16.mxu0 %v4679
  %5133 = vmatpush1.bf16.msra.mxu0 %v4678
  %5134 = vmatprep.subr.bf16.mxu0 %v4681
  %5135 = vmatpush1.bf16.msra.mxu0 %v4680
  %5136 = vmatprep.subr.bf16.mxu0 %v4683
  %5137 = vmatpush1.bf16.msra.mxu0 %v4682
  %5138 = vmatprep.subr.bf16.mxu0 %v4685
  %5139 = vmatpush1.bf16.msra.mxu0 %v4684
  %5140 = vmatprep.subr.bf16.mxu0 %v4687
  %5141 = vmatpush1.bf16.msra.mxu0 %v4686
  %5142 = vmatprep.subr.bf16.mxu0 %v4689
  %5143 = vmatpush1.bf16.msra.mxu0 %v4688
  %5144 = vmatprep.subr.bf16.mxu0 %v4691
  %5145 = vmatpush1.bf16.msra.mxu0 %v4690
  %5146 = vmatprep.subr.bf16.mxu0 %v4693
  %5147 = vmatpush1.bf16.msra.mxu0 %v4692
  %5148 = vmatprep.subr.bf16.mxu0 %v4695
  %5149 = vmatpush1.bf16.msra.mxu0 %v4694
  %5150 = vmatprep.mubr.bf16.mxu0 %v5117
  %5151 = vmatmul.mubr.bf16.gmra.mrb[0].mxu0 %v5116
  %v5152 = vpop.f32.mrb[0].mxu0
  %v5153 = vadd.f32 %v4561, %v5152
  %v5154 = vpop.f32.mrb[0].mxu0
  %v5155 = vadd.f32 %v4565, %v5154
  %v5156 = vpop.f32.mrb[0].mxu0
  %v5157 = vpop.f32.mrb[0].mxu0
  %5158 = vdwg.mxu0
  %v5159 = vmax.f32 %v5153, 0.0
  %v5160 = vmax.f32 %v5155, 0.0
  %v5161 = vpack.c.bf16 %v5159, %v5159
  %v5162 = vpack.c.bf16 %v5160, %v5160
  %5163 = vmatprep.subr.bf16.mxu0 %v4916
  %5164 = vmatpush1.bf16.msra.mxu0 %v4915
  %5165 = vmatprep.subr.bf16.mxu0 %v4918
  %5166 = vmatpush1.bf16.msra.mxu0 %v4917
  %5167 = vmatprep.subr.bf16.mxu0 %v4920
  %5168 = vmatpush1.bf16.msra.mxu0 %v4919
  %5169 = vmatprep.subr.bf16.mxu0 %v4922
  %5170 = vmatpush1.bf16.msra.mxu0 %v4921
  %5171 = vmatprep.subr.bf16.mxu0 %v4924
  %5172 = vmatpush1.bf16.msra.mxu0 %v4923
  %5173 = vmatprep.subr.bf16.mxu0 %v4926
  %5174 = vmatpush1.bf16.msra.mxu0 %v4925
  %5175 = vmatprep.subr.bf16.mxu0 %v4928
  %5176 = vmatpush1.bf16.msra.mxu0 %v4927
  %5177 = vmatprep.subr.bf16.mxu0 %v4930
  %5178 = vmatpush1.bf16.msra.mxu0 %v4929
  %5179 = vmatprep.subr.bf16.mxu0 %v4932
  %5180 = vmatpush1.bf16.msra.mxu0 %v4931
  %5181 = vmatprep.subr.bf16.mxu0 %v4934
  %5182 = vmatpush1.bf16.msra.mxu0 %v4933
  %5183 = vmatprep.subr.bf16.mxu0 %v4936
  %5184 = vmatpush1.bf16.msra.mxu0 %v4935
  %5185 = vmatprep.subr.bf16.mxu0 %v4938
  %5186 = vmatpush1.bf16.msra.mxu0 %v4937
  %5187 = vmatprep.subr.bf16.mxu0 %v4940
  %5188 = vmatpush1.bf16.msra.mxu0 %v4939
  %5189 = vmatprep.subr.bf16.mxu0 %v4942
  %5190 = vmatpush1.bf16.msra.mxu0 %v4941
  %5191 = vmatprep.subr.bf16.mxu0 %v4944
  %5192 = vmatpush1.bf16.msra.mxu0 %v4943
  %5193 = vmatprep.subr.bf16.mxu0 %v4946
  %5194 = vmatpush1.bf16.msra.mxu0 %v4945
  %5195 = vmatprep.mubr.bf16.mxu0 %v5162
  %5196 = vmatmul.mubr.bf16.gmra.mrb[0].mxu0 %v5161
  %v5197 = vpop.f32.mrb[0].mxu0
  %v5198 = vadd.f32 %v4812, %v5197
  %v5199 = vpop.f32.mrb[0].mxu0
  %v5200 = vadd.f32 %v4816, %v5199
  %v5201 = vpop.f32.mrb[0].mxu0
  %v5202 = vpop.f32.mrb[0].mxu0
  %5203 = vdwg.mxu0
  %v5204 = vmax.f32 %v5198, 0.0
  %v5205 = vmax.f32 %v5200, 0.0
  %v5206 = vpack.c.bf16 %v5204, %v5204
  %v5207 = vpack.c.bf16 %v5205, %v5205
  %v5208 = vpack.c.bf16 %v4520, %v4520
  %v5209 = vpack.c.bf16 %v4521, %v4521
  %5210 = vmatprep.subr.bf16.mxu0 %v4665
  %5211 = vmatpush1.bf16.msra.mxu0 %v4664
  %5212 = vmatprep.subr.bf16.mxu0 %v4667
  %5213 = vmatpush1.bf16.msra.mxu0 %v4666
  %5214 = vmatprep.subr.bf16.mxu0 %v4669
  %5215 = vmatpush1.bf16.msra.mxu0 %v4668
  %5216 = vmatprep.subr.bf16.mxu0 %v4671
  %5217 = vmatpush1.bf16.msra.mxu0 %v4670
  %5218 = vmatprep.subr.bf16.mxu0 %v4673
  %5219 = vmatpush1.bf16.msra.mxu0 %v4672
  %5220 = vmatprep.subr.bf16.mxu0 %v4675
  %5221 = vmatpush1.bf16.msra.mxu0 %v4674
  %5222 = vmatprep.subr.bf16.mxu0 %v4677
  %5223 = vmatpush1.bf16.msra.mxu0 %v4676
  %5224 = vmatprep.subr.bf16.mxu0 %v4679
  %5225 = vmatpush1.bf16.msra.mxu0 %v4678
  %5226 = vmatprep.subr.bf16.mxu0 %v4681
  %5227 = vmatpush1.bf16.msra.mxu0 %v4680
  %5228 = vmatprep.subr.bf16.mxu0 %v4683
  %5229 = vmatpush1.bf16.msra.mxu0 %v4682
  %5230 = vmatprep.subr.bf16.mxu0 %v4685
  %5231 = vmatpush1.bf16.msra.mxu0 %v4684
  %5232 = vmatprep.subr.bf16.mxu0 %v4687
  %5233 = vmatpush1.bf16.msra.mxu0 %v4686
  %5234 = vmatprep.subr.bf16.mxu0 %v4689
  %5235 = vmatpush1.bf16.msra.mxu0 %v4688
  %5236 = vmatprep.subr.bf16.mxu0 %v4691
  %5237 = vmatpush1.bf16.msra.mxu0 %v4690
  %5238 = vmatprep.subr.bf16.mxu0 %v4693
  %5239 = vmatpush1.bf16.msra.mxu0 %v4692
  %5240 = vmatprep.subr.bf16.mxu0 %v4695
  %5241 = vmatpush1.bf16.msra.mxu0 %v4694
  %5242 = vmatprep.mubr.bf16.mxu0 %v5209
  %5243 = vmatmul.mubr.bf16.gmra.mrb[0].mxu0 %v5208
  %v5244 = vpop.f32.mrb[0].mxu0
  %v5245 = vadd.f32 %v4561, %v5244
  %v5246 = vpop.f32.mrb[0].mxu0
  %v5247 = vadd.f32 %v4565, %v5246
  %v5248 = vpop.f32.mrb[0].mxu0
  %v5249 = vpop.f32.mrb[0].mxu0
  %5250 = vdwg.mxu0
  %v5251 = vmax.f32 %v5245, 0.0
  %v5252 = vmax.f32 %v5247, 0.0
  %v5253 = vpack.c.bf16 %v5251, %v5251
  %v5254 = vpack.c.bf16 %v5252, %v5252
  %5255 = vmatprep.subr.bf16.mxu0 %v4916
  %5256 = vmatpush1.bf16.msra.mxu0 %v4915
  %5257 = vmatprep.subr.bf16.mxu0 %v4918
  %5258 = vmatpush1.bf16.msra.mxu0 %v4917
  %5259 = vmatprep.subr.bf16.mxu0 %v4920
  %5260 = vmatpush1.bf16.msra.mxu0 %v4919
  %5261 = vmatprep.subr.bf16.mxu0 %v4922
  %5262 = vmatpush1.bf16.msra.mxu0 %v4921
  %5263 = vmatprep.subr.bf16.mxu0 %v4924
  %5264 = vmatpush1.bf16.msra.mxu0 %v4923
  %5265 = vmatprep.subr.bf16.mxu0 %v4926
  %5266 = vmatpush1.bf16.msra.mxu0 %v4925
  %5267 = vmatprep.subr.bf16.mxu0 %v4928
  %5268 = vmatpush1.bf16.msra.mxu0 %v4927
  %5269 = vmatprep.subr.bf16.mxu0 %v4930
  %5270 = vmatpush1.bf16.msra.mxu0 %v4929
  %5271 = vmatprep.subr.bf16.mxu0 %v4932
  %5272 = vmatpush1.bf16.msra.mxu0 %v4931
  %5273 = vmatprep.subr.bf16.mxu0 %v4934
  %5274 = vmatpush1.bf16.msra.mxu0 %v4933
  %5275 = vmatprep.subr.bf16.mxu0 %v4936
  %5276 = vmatpush1.bf16.msra.mxu0 %v4935
  %5277 = vmatprep.subr.bf16.mxu0 %v4938
  %5278 = vmatpush1.bf16.msra.mxu0 %v4937
  %5279 = vmatprep.subr.bf16.mxu0 %v4940
  %5280 = vmatpush1.bf16.msra.mxu0 %v4939
  %5281 = vmatprep.subr.bf16.mxu0 %v4942
  %5282 = vmatpush1.bf16.msra.mxu0 %v4941
  %5283 = vmatprep.subr.bf16.mxu0 %v4944
  %5284 = vmatpush1.bf16.msra.mxu0 %v4943
  %5285 = vmatprep.subr.bf16.mxu0 %v4946
  %5286 = vmatpush1.bf16.msra.mxu0 %v4945
  %5287 = vmatprep.mubr.bf16.mxu0 %v5254
  %5288 = vmatmul.mubr.bf16.gmra.mrb[0].mxu0 %v5253
  %v5289 = vpop.f32.mrb[0].mxu0
  %v5290 = vadd.f32 %v4812, %v5289
  %v5291 = vpop.f32.mrb[0].mxu0
  %v5292 = vadd.f32 %v4816, %v5291
  %v5293 = vpop.f32.mrb[0].mxu0
  %v5294 = vpop.f32.mrb[0].mxu0
  %5295 = vdwg.mxu0
  %v5296 = vmax.f32 %v5290, 0.0
  %v5297 = vmax.f32 %v5292, 0.0
  %v5298 = vpack.c.bf16 %v5296, %v5296
  %v5299 = vpack.c.bf16 %v5297, %v5297
  %s5300 = smul.u32 4, 4
  %s5301 = smul.u32 %s5300, 32
  %s5302 = smul.u32 %s5301, 8
  %s5303 = sshll.u32 %s5302, 4
  %5304 = dma.done [#allocation3], %s5303
  %v5305 = vld [vmem:[%s6] sm:$0xff]
  %v5306 = vld [vmem:[#allocation2] sm:$0xff]
  %v5307 = vld [vmem:[#allocation2 + $0x8] sm:$0xff]
  %v5308 = vld [vmem:[#allocation2 + $0x10] sm:$0xff]
  %v5309 = vld [vmem:[#allocation2 + $0x18] sm:$0xff]
  %v5310 = vld [vmem:[#allocation2 + $0x20] sm:$0xff]
  %v5311 = vld [vmem:[#allocation2 + $0x28] sm:$0xff]
  %v5312 = vld [vmem:[#allocation2 + $0x30] sm:$0xff]
  %v5313 = vld [vmem:[#allocation2 + $0x38] sm:$0xff]
  %v5314 = vld [vmem:[#allocation2 + $0x40] sm:$0xff]
  %v5315 = vld [vmem:[#allocation2 + $0x48] sm:$0xff]
  %v5316 = vld [vmem:[#allocation2 + $0x50] sm:$0xff]
  %v5317 = vld [vmem:[#allocation2 + $0x58] sm:$0xff]
  %v5318 = vld [vmem:[#allocation2 + $0x60] sm:$0xff]
  %v5319 = vld [vmem:[#allocation2 + $0x68] sm:$0xff]
  %v5320 = vld [vmem:[#allocation2 + $0x70] sm:$0xff]
  %v5321 = vld [vmem:[#allocation2 + $0x78] sm:$0xff]
  %v5322 = vld [vmem:[#allocation2 + $0x80] sm:$0xff]
  %v5323 = vld [vmem:[#allocation2 + $0x88] sm:$0xff]
  %v5324 = vld [vmem:[#allocation2 + $0x90] sm:$0xff]
  %v5325 = vld [vmem:[#allocation2 + $0x98] sm:$0xff]
  %v5326 = vld [vmem:[#allocation2 + $0xa0] sm:$0xff]
  %v5327 = vld [vmem:[#allocation2 + $0xa8] sm:$0xff]
  %v5328 = vld [vmem:[#allocation2 + $0xb0] sm:$0xff]
  %v5329 = vld [vmem:[#allocation2 + $0xb8] sm:$0xff]
  %v5330 = vld [vmem:[#allocation2 + $0xc0] sm:$0xff]
  %v5331 = vld [vmem:[#allocation2 + $0xc8] sm:$0xff]
  %v5332 = vld [vmem:[#allocation2 + $0xd0] sm:$0xff]
  %v5333 = vld [vmem:[#allocation2 + $0xd8] sm:$0xff]
  %v5334 = vld [vmem:[#allocation2 + $0xe0] sm:$0xff]
  %v5335 = vld [vmem:[#allocation2 + $0xe8] sm:$0xff]
  %v5336 = vld [vmem:[#allocation2 + $0xf0] sm:$0xff]
  %v5337 = vld [vmem:[#allocation2 + $0xf8] sm:$0xff]
  %v5338 = vld [vmem:[#allocation2 + $0x100] sm:$0xff]
  %v5339 = vld [vmem:[#allocation2 + $0x108] sm:$0xff]
  %v5340 = vld [vmem:[#allocation2 + $0x110] sm:$0xff]
  %v5341 = vld [vmem:[#allocation2 + $0x118] sm:$0xff]
  %v5342 = vld [vmem:[#allocation2 + $0x120] sm:$0xff]
  %v5343 = vld [vmem:[#allocation2 + $0x128] sm:$0xff]
  %v5344 = vld [vmem:[#allocation2 + $0x130] sm:$0xff]
  %v5345 = vld [vmem:[#allocation2 + $0x138] sm:$0xff]
  %v5346 = vld [vmem:[#allocation2 + $0x140] sm:$0xff]
  %v5347 = vld [vmem:[#allocation2 + $0x148] sm:$0xff]
  %v5348 = vld [vmem:[#allocation2 + $0x150] sm:$0xff]
  %v5349 = vld [vmem:[#allocation2 + $0x158] sm:$0xff]
  %v5350 = vld [vmem:[#allocation2 + $0x160] sm:$0xff]
  %v5351 = vld [vmem:[#allocation2 + $0x168] sm:$0xff]
  %v5352 = vld [vmem:[#allocation2 + $0x170] sm:$0xff]
  %v5353 = vld [vmem:[#allocation2 + $0x178] sm:$0xff]
  %v5354 = vld [vmem:[#allocation2 + $0x180] sm:$0xff]
  %v5355 = vld [vmem:[#allocation2 + $0x188] sm:$0xff]
  %v5356 = vld [vmem:[#allocation2 + $0x190] sm:$0xff]
  %v5357 = vld [vmem:[#allocation2 + $0x198] sm:$0xff]
  %v5358 = vld [vmem:[#allocation2 + $0x1a0] sm:$0xff]
  %v5359 = vld [vmem:[#allocation2 + $0x1a8] sm:$0xff]
  %v5360 = vld [vmem:[#allocation2 + $0x1b0] sm:$0xff]
  %v5361 = vld [vmem:[#allocation2 + $0x1b8] sm:$0xff]
  %v5362 = vld [vmem:[#allocation2 + $0x1c0] sm:$0xff]
  %v5363 = vld [vmem:[#allocation2 + $0x1c8] sm:$0xff]
  %v5364 = vld [vmem:[#allocation2 + $0x1d0] sm:$0xff]
  %v5365 = vld [vmem:[#allocation2 + $0x1d8] sm:$0xff]
  %v5366 = vld [vmem:[#allocation2 + $0x1e0] sm:$0xff]
  %v5367 = vld [vmem:[#allocation2 + $0x1e8] sm:$0xff]
  %v5368 = vld [vmem:[#allocation2 + $0x1f0] sm:$0xff]
  %v5369 = vld [vmem:[#allocation2 + $0x1f8] sm:$0xff]
  %v5370 = vld [vmem:[#allocation2 + $0x200] sm:$0xff]
  %v5371 = vld [vmem:[#allocation2 + $0x208] sm:$0xff]
  %v5372 = vld [vmem:[#allocation2 + $0x210] sm:$0xff]
  %v5373 = vld [vmem:[#allocation2 + $0x218] sm:$0xff]
  %v5374 = vld [vmem:[#allocation2 + $0x220] sm:$0xff]
  %v5375 = vld [vmem:[#allocation2 + $0x228] sm:$0xff]
  %v5376 = vld [vmem:[#allocation2 + $0x230] sm:$0xff]
  %v5377 = vld [vmem:[#allocation2 + $0x238] sm:$0xff]
  %v5378 = vld [vmem:[#allocation2 + $0x240] sm:$0xff]
  %v5379 = vld [vmem:[#allocation2 + $0x248] sm:$0xff]
  %v5380 = vld [vmem:[#allocation2 + $0x250] sm:$0xff]
  %v5381 = vld [vmem:[#allocation2 + $0x258] sm:$0xff]
  %v5382 = vld [vmem:[#allocation2 + $0x260] sm:$0xff]
  %v5383 = vld [vmem:[#allocation2 + $0x268] sm:$0xff]
  %v5384 = vld [vmem:[#allocation2 + $0x270] sm:$0xff]
  %v5385 = vld [vmem:[#allocation2 + $0x278] sm:$0xff]
  %v5386 = vld [vmem:[#allocation2 + $0x280] sm:$0xff]
  %v5387 = vld [vmem:[#allocation2 + $0x288] sm:$0xff]
  %v5388 = vld [vmem:[#allocation2 + $0x290] sm:$0xff]
  %v5389 = vld [vmem:[#allocation2 + $0x298] sm:$0xff]
  %v5390 = vld [vmem:[#allocation2 + $0x2a0] sm:$0xff]
  %v5391 = vld [vmem:[#allocation2 + $0x2a8] sm:$0xff]
  %v5392 = vld [vmem:[#allocation2 + $0x2b0] sm:$0xff]
  %v5393 = vld [vmem:[#allocation2 + $0x2b8] sm:$0xff]
  %v5394 = vld [vmem:[#allocation2 + $0x2c0] sm:$0xff]
  %v5395 = vld [vmem:[#allocation2 + $0x2c8] sm:$0xff]
  %v5396 = vld [vmem:[#allocation2 + $0x2d0] sm:$0xff]
  %v5397 = vld [vmem:[#allocation2 + $0x2d8] sm:$0xff]
  %v5398 = vld [vmem:[#allocation2 + $0x2e0] sm:$0xff]
  %v5399 = vld [vmem:[#allocation2 + $0x2e8] sm:$0xff]
  %v5400 = vld [vmem:[#allocation2 + $0x2f0] sm:$0xff]
  %v5401 = vld [vmem:[#allocation2 + $0x2f8] sm:$0xff]
  %v5402 = vld [vmem:[#allocation2 + $0x300] sm:$0xff]
  %v5403 = vld [vmem:[#allocation2 + $0x308] sm:$0xff]
  %v5404 = vld [vmem:[#allocation2 + $0x310] sm:$0xff]
  %v5405 = vld [vmem:[#allocation2 + $0x318] sm:$0xff]
  %v5406 = vld [vmem:[#allocation2 + $0x320] sm:$0xff]
  %v5407 = vld [vmem:[#allocation2 + $0x328] sm:$0xff]
  %v5408 = vld [vmem:[#allocation2 + $0x330] sm:$0xff]
  %v5409 = vld [vmem:[#allocation2 + $0x338] sm:$0xff]
  %v5410 = vld [vmem:[#allocation2 + $0x340] sm:$0xff]
  %v5411 = vld [vmem:[#allocation2 + $0x348] sm:$0xff]
  %v5412 = vld [vmem:[#allocation2 + $0x350] sm:$0xff]
  %v5413 = vld [vmem:[#allocation2 + $0x358] sm:$0xff]
  %v5414 = vld [vmem:[#allocation2 + $0x360] sm:$0xff]
  %v5415 = vld [vmem:[#allocation2 + $0x368] sm:$0xff]
  %v5416 = vld [vmem:[#allocation2 + $0x370] sm:$0xff]
  %v5417 = vld [vmem:[#allocation2 + $0x378] sm:$0xff]
  %v5418 = vld [vmem:[#allocation2 + $0x380] sm:$0xff]
  %v5419 = vld [vmem:[#allocation2 + $0x388] sm:$0xff]
  %v5420 = vld [vmem:[#allocation2 + $0x390] sm:$0xff]
  %v5421 = vld [vmem:[#allocation2 + $0x398] sm:$0xff]
  %v5422 = vld [vmem:[#allocation2 + $0x3a0] sm:$0xff]
  %v5423 = vld [vmem:[#allocation2 + $0x3a8] sm:$0xff]
  %v5424 = vld [vmem:[#allocation2 + $0x3b0] sm:$0xff]
  %v5425 = vld [vmem:[#allocation2 + $0x3b8] sm:$0xff]
  %v5426 = vld [vmem:[#allocation2 + $0x3c0] sm:$0xff]
  %v5427 = vld [vmem:[#allocation2 + $0x3c8] sm:$0xff]
  %v5428 = vld [vmem:[#allocation2 + $0x3d0] sm:$0xff]
  %v5429 = vld [vmem:[#allocation2 + $0x3d8] sm:$0xff]
  %v5430 = vld [vmem:[#allocation2 + $0x3e0] sm:$0xff]
  %v5431 = vld [vmem:[#allocation2 + $0x3e8] sm:$0xff]
  %v5432 = vld [vmem:[#allocation2 + $0x3f0] sm:$0xff]
  %v5433 = vld [vmem:[#allocation2 + $0x3f8] sm:$0xff]
  %5434 = vmatprep.subr.bf16.mxu0 %v5307
  %5435 = vmatpush1.bf16.msra.mxu0 %v5306
  %5436 = vmatprep.subr.bf16.mxu0 %v5315
  %5437 = vmatpush1.bf16.msra.mxu0 %v5314
  %5438 = vmatprep.subr.bf16.mxu0 %v5323
  %5439 = vmatpush1.bf16.msra.mxu0 %v5322
  %5440 = vmatprep.subr.bf16.mxu0 %v5331
  %5441 = vmatpush1.bf16.msra.mxu0 %v5330
  %5442 = vmatprep.subr.bf16.mxu0 %v5339
  %5443 = vmatpush1.bf16.msra.mxu0 %v5338
  %5444 = vmatprep.subr.bf16.mxu0 %v5347
  %5445 = vmatpush1.bf16.msra.mxu0 %v5346
  %5446 = vmatprep.subr.bf16.mxu0 %v5355
  %5447 = vmatpush1.bf16.msra.mxu0 %v5354
  %5448 = vmatprep.subr.bf16.mxu0 %v5363
  %5449 = vmatpush1.bf16.msra.mxu0 %v5362
  %5450 = vmatprep.subr.bf16.mxu0 %v5371
  %5451 = vmatpush1.bf16.msra.mxu0 %v5370
  %5452 = vmatprep.subr.bf16.mxu0 %v5379
  %5453 = vmatpush1.bf16.msra.mxu0 %v5378
  %5454 = vmatprep.subr.bf16.mxu0 %v5387
  %5455 = vmatpush1.bf16.msra.mxu0 %v5386
  %5456 = vmatprep.subr.bf16.mxu0 %v5395
  %5457 = vmatpush1.bf16.msra.mxu0 %v5394
  %5458 = vmatprep.subr.bf16.mxu0 %v5403
  %5459 = vmatpush1.bf16.msra.mxu0 %v5402
  %5460 = vmatprep.subr.bf16.mxu0 %v5411
  %5461 = vmatpush1.bf16.msra.mxu0 %v5410
  %5462 = vmatprep.subr.bf16.mxu0 %v5419
  %5463 = vmatpush1.bf16.msra.mxu0 %v5418
  %5464 = vmatprep.subr.bf16.mxu0 %v5427
  %5465 = vmatpush1.bf16.msra.mxu0 %v5426
  %5466 = vmatprep.mubr.bf16.mxu0 %v5023
  %5467 = vmatmul.mubr.bf16.gmra.mrb[0].mxu0 %v5022
  %v5468 = vpop.f32.mrb[0].mxu0
  %v5469 = vadd.f32 0.0, %v5468
  %v5470 = vpop.f32.mrb[0].mxu0
  %v5471 = vadd.f32 0.0, %v5470
  %v5472 = vpop.f32.mrb[0].mxu0
  %v5473 = vpop.f32.mrb[0].mxu0
  %5474 = vdwg.mxu0
  %5475 = vmatprep.subr.bf16.mxu0 %v5309
  %5476 = vmatpush1.bf16.msra.mxu0 %v5308
  %5477 = vmatprep.subr.bf16.mxu0 %v5317
  %5478 = vmatpush1.bf16.msra.mxu0 %v5316
  %5479 = vmatprep.subr.bf16.mxu0 %v5325
  %5480 = vmatpush1.bf16.msra.mxu0 %v5324
  %5481 = vmatprep.subr.bf16.mxu0 %v5333
  %5482 = vmatpush1.bf16.msra.mxu0 %v5332
  %5483 = vmatprep.subr.bf16.mxu0 %v5341
  %5484 = vmatpush1.bf16.msra.mxu0 %v5340
  %5485 = vmatprep.subr.bf16.mxu0 %v5349
  %5486 = vmatpush1.bf16.msra.mxu0 %v5348
  %5487 = vmatprep.subr.bf16.mxu0 %v5357
  %5488 = vmatpush1.bf16.msra.mxu0 %v5356
  %5489 = vmatprep.subr.bf16.mxu0 %v5365
  %5490 = vmatpush1.bf16.msra.mxu0 %v5364
  %5491 = vmatprep.subr.bf16.mxu0 %v5373
  %5492 = vmatpush1.bf16.msra.mxu0 %v5372
  %5493 = vmatprep.subr.bf16.mxu0 %v5381
  %5494 = vmatpush1.bf16.msra.mxu0 %v5380
  %5495 = vmatprep.subr.bf16.mxu0 %v5389
  %5496 = vmatpush1.bf16.msra.mxu0 %v5388
  %5497 = vmatprep.subr.bf16.mxu0 %v5397
  %5498 = vmatpush1.bf16.msra.mxu0 %v5396
  %5499 = vmatprep.subr.bf16.mxu0 %v5405
  %5500 = vmatpush1.bf16.msra.mxu0 %v5404
  %5501 = vmatprep.subr.bf16.mxu0 %v5413
  %5502 = vmatpush1.bf16.msra.mxu0 %v5412
  %5503 = vmatprep.subr.bf16.mxu0 %v5421
  %5504 = vmatpush1.bf16.msra.mxu0 %v5420
  %5505 = vmatprep.subr.bf16.mxu0 %v5429
  %5506 = vmatpush1.bf16.msra.mxu0 %v5428
  %5507 = vmatprep.mubr.bf16.mxu0 %v5023
  %5508 = vmatmul.mubr.bf16.gmra.mrb[0].mxu0 %v5022
  %v5509 = vpop.f32.mrb[0].mxu0
  %v5510 = vadd.f32 0.0, %v5509
  %v5511 = vpop.f32.mrb[0].mxu0
  %v5512 = vadd.f32 0.0, %v5511
  %v5513 = vpop.f32.mrb[0].mxu0
  %v5514 = vpop.f32.mrb[0].mxu0
  %5515 = vdwg.mxu0
  %5516 = vmatprep.subr.bf16.mxu0 %v5311
  %5517 = vmatpush1.bf16.msra.mxu0 %v5310
  %5518 = vmatprep.subr.bf16.mxu0 %v5319
  %5519 = vmatpush1.bf16.msra.mxu0 %v5318
  %5520 = vmatprep.subr.bf16.mxu0 %v5327
  %5521 = vmatpush1.bf16.msra.mxu0 %v5326
  %5522 = vmatprep.subr.bf16.mxu0 %v5335
  %5523 = vmatpush1.bf16.msra.mxu0 %v5334
  %5524 = vmatprep.subr.bf16.mxu0 %v5343
  %5525 = vmatpush1.bf16.msra.mxu0 %v5342
  %5526 = vmatprep.subr.bf16.mxu0 %v5351
  %5527 = vmatpush1.bf16.msra.mxu0 %v5350
  %5528 = vmatprep.subr.bf16.mxu0 %v5359
  %5529 = vmatpush1.bf16.msra.mxu0 %v5358
  %5530 = vmatprep.subr.bf16.mxu0 %v5367
  %5531 = vmatpush1.bf16.msra.mxu0 %v5366
  %5532 = vmatprep.subr.bf16.mxu0 %v5375
  %5533 = vmatpush1.bf16.msra.mxu0 %v5374
  %5534 = vmatprep.subr.bf16.mxu0 %v5383
  %5535 = vmatpush1.bf16.msra.mxu0 %v5382
  %5536 = vmatprep.subr.bf16.mxu0 %v5391
  %5537 = vmatpush1.bf16.msra.mxu0 %v5390
  %5538 = vmatprep.subr.bf16.mxu0 %v5399
  %5539 = vmatpush1.bf16.msra.mxu0 %v5398
  %5540 = vmatprep.subr.bf16.mxu0 %v5407
  %5541 = vmatpush1.bf16.msra.mxu0 %v5406
  %5542 = vmatprep.subr.bf16.mxu0 %v5415
  %5543 = vmatpush1.bf16.msra.mxu0 %v5414
  %5544 = vmatprep.subr.bf16.mxu0 %v5423
  %5545 = vmatpush1.bf16.msra.mxu0 %v5422
  %5546 = vmatprep.subr.bf16.mxu0 %v5431
  %5547 = vmatpush1.bf16.msra.mxu0 %v5430
  %5548 = vmatprep.mubr.bf16.mxu0 %v5023
  %5549 = vmatmul.mubr.bf16.gmra.mrb[0].mxu0 %v5022
  %v5550 = vpop.f32.mrb[0].mxu0
  %v5551 = vadd.f32 0.0, %v5550
  %v5552 = vpop.f32.mrb[0].mxu0
  %v5553 = vadd.f32 0.0, %v5552
  %v5554 = vpop.f32.mrb[0].mxu0
  %v5555 = vpop.f32.mrb[0].mxu0
  %5556 = vdwg.mxu0
  %5557 = vmatprep.subr.bf16.mxu0 %v5313
  %5558 = vmatpush1.bf16.msra.mxu0 %v5312
  %5559 = vmatprep.subr.bf16.mxu0 %v5321
  %5560 = vmatpush1.bf16.msra.mxu0 %v5320
  %5561 = vmatprep.subr.bf16.mxu0 %v5329
  %5562 = vmatpush1.bf16.msra.mxu0 %v5328
  %5563 = vmatprep.subr.bf16.mxu0 %v5337
  %5564 = vmatpush1.bf16.msra.mxu0 %v5336
  %5565 = vmatprep.subr.bf16.mxu0 %v5345
  %5566 = vmatpush1.bf16.msra.mxu0 %v5344
  %5567 = vmatprep.subr.bf16.mxu0 %v5353
  %5568 = vmatpush1.bf16.msra.mxu0 %v5352
  %5569 = vmatprep.subr.bf16.mxu0 %v5361
  %5570 = vmatpush1.bf16.msra.mxu0 %v5360
  %5571 = vmatprep.subr.bf16.mxu0 %v5369
  %5572 = vmatpush1.bf16.msra.mxu0 %v5368
  %5573 = vmatprep.subr.bf16.mxu0 %v5377
  %5574 = vmatpush1.bf16.msra.mxu0 %v5376
  %5575 = vmatprep.subr.bf16.mxu0 %v5385
  %5576 = vmatpush1.bf16.msra.mxu0 %v5384
  %5577 = vmatprep.subr.bf16.mxu0 %v5393
  %5578 = vmatpush1.bf16.msra.mxu0 %v5392
  %5579 = vmatprep.subr.bf16.mxu0 %v5401
  %5580 = vmatpush1.bf16.msra.mxu0 %v5400
  %5581 = vmatprep.subr.bf16.mxu0 %v5409
  %5582 = vmatpush1.bf16.msra.mxu0 %v5408
  %5583 = vmatprep.subr.bf16.mxu0 %v5417
  %5584 = vmatpush1.bf16.msra.mxu0 %v5416
  %5585 = vmatprep.subr.bf16.mxu0 %v5425
  %5586 = vmatpush1.bf16.msra.mxu0 %v5424
  %5587 = vmatprep.subr.bf16.mxu0 %v5433
  %5588 = vmatpush1.bf16.msra.mxu0 %v5432
  %5589 = vmatprep.mubr.bf16.mxu0 %v5023
  %5590 = vmatmul.mubr.bf16.gmra.mrb[0].mxu0 %v5022
  %v5591 = vpop.f32.mrb[0].mxu0
  %v5592 = vadd.f32 0.0, %v5591
  %v5593 = vpop.f32.mrb[0].mxu0
  %v5594 = vadd.f32 0.0, %v5593
  %v5595 = vpop.f32.mrb[0].mxu0
  %v5596 = vpop.f32.mrb[0].mxu0
  %5597 = vdwg.mxu0
  %v5599 = vlaneseq
  %v5600 = vshrl.u32 %v5599, 7
  %v5601 = vsub.s32 0, %v5600
  %v5602 = vrot.slane %v5305, %v5601
  %v5603 = vlaneseq
  %v5604 = vshrl.u32 %v5603, 7
  %v5605 = vsub.s32 1, %v5604
  %v5606 = vrot.slane %v5305, %v5605
  %v5607 = vlaneseq
  %v5608 = vshrl.u32 %v5607, 7
  %v5609 = vsub.s32 2, %v5608
  %v5610 = vrot.slane %v5305, %v5609
  %v5611 = vlaneseq
  %v5612 = vshrl.u32 %v5611, 7
  %v5613 = vsub.s32 3, %v5612
  %v5614 = vrot.slane %v5305, %v5613
  %v5615 = vlaneseq
  %v5616 = vshrl.u32 %v5615, 7
  %v5617 = vsub.s32 4, %v5616
  %v5618 = vrot.slane %v5305, %v5617
  %v5619 = vlaneseq
  %v5620 = vshrl.u32 %v5619, 7
  %v5621 = vsub.s32 5, %v5620
  %v5622 = vrot.slane %v5305, %v5621
  %v5623 = vlaneseq
  %v5624 = vshrl.u32 %v5623, 7
  %v5625 = vsub.s32 6, %v5624
  %v5626 = vrot.slane %v5305, %v5625
  %v5627 = vlaneseq
  %v5628 = vshrl.u32 %v5627, 7
  %v5629 = vsub.s32 7, %v5628
  %v5630 = vrot.slane %v5305, %v5629
  %v5639 = vadd.f32 %v5602, %v5469
  %v5640 = vadd.f32 %v5606, %v5471
  %v5641 = vadd.f32 %v5610, %v5510
  %v5642 = vadd.f32 %v5614, %v5512
  %v5643 = vadd.f32 %v5618, %v5551
  %v5644 = vadd.f32 %v5622, %v5553
  %v5645 = vadd.f32 %v5626, %v5592
  %v5646 = vadd.f32 %v5630, %v5594
  %s5647 = scalar_lea.vmem [#allocation2], 1024
  %v5648 = vld [vmem:[%s5647] sm:$0xff]
  %v5649 = vld [vmem:[%s5647 + $0x8] sm:$0xff]
  %v5650 = vld [vmem:[%s5647 + $0x10] sm:$0xff]
  %v5651 = vld [vmem:[%s5647 + $0x18] sm:$0xff]
  %v5652 = vld [vmem:[%s5647 + $0x20] sm:$0xff]
  %v5653 = vld [vmem:[%s5647 + $0x28] sm:$0xff]
  %v5654 = vld [vmem:[%s5647 + $0x30] sm:$0xff]
  %v5655 = vld [vmem:[%s5647 + $0x38] sm:$0xff]
  %v5656 = vld [vmem:[%s5647 + $0x40] sm:$0xff]
  %v5657 = vld [vmem:[%s5647 + $0x48] sm:$0xff]
  %v5658 = vld [vmem:[%s5647 + $0x50] sm:$0xff]
  %v5659 = vld [vmem:[%s5647 + $0x58] sm:$0xff]
  %v5660 = vld [vmem:[%s5647 + $0x60] sm:$0xff]
  %v5661 = vld [vmem:[%s5647 + $0x68] sm:$0xff]
  %v5662 = vld [vmem:[%s5647 + $0x70] sm:$0xff]
  %v5663 = vld [vmem:[%s5647 + $0x78] sm:$0xff]
  %v5664 = vld [vmem:[%s5647 + $0x80] sm:$0xff]
  %v5665 = vld [vmem:[%s5647 + $0x88] sm:$0xff]
  %v5666 = vld [vmem:[%s5647 + $0x90] sm:$0xff]
  %v5667 = vld [vmem:[%s5647 + $0x98] sm:$0xff]
  %v5668 = vld [vmem:[%s5647 + $0xa0] sm:$0xff]
  %v5669 = vld [vmem:[%s5647 + $0xa8] sm:$0xff]
  %v5670 = vld [vmem:[%s5647 + $0xb0] sm:$0xff]
  %v5671 = vld [vmem:[%s5647 + $0xb8] sm:$0xff]
  %v5672 = vld [vmem:[%s5647 + $0xc0] sm:$0xff]
  %v5673 = vld [vmem:[%s5647 + $0xc8] sm:$0xff]
  %v5674 = vld [vmem:[%s5647 + $0xd0] sm:$0xff]
  %v5675 = vld [vmem:[%s5647 + $0xd8] sm:$0xff]
  %v5676 = vld [vmem:[%s5647 + $0xe0] sm:$0xff]
  %v5677 = vld [vmem:[%s5647 + $0xe8] sm:$0xff]
  %v5678 = vld [vmem:[%s5647 + $0xf0] sm:$0xff]
  %v5679 = vld [vmem:[%s5647 + $0xf8] sm:$0xff]
  %v5680 = vld [vmem:[%s5647 + $0x100] sm:$0xff]
  %v5681 = vld [vmem:[%s5647 + $0x108] sm:$0xff]
  %v5682 = vld [vmem:[%s5647 + $0x110] sm:$0xff]
  %v5683 = vld [vmem:[%s5647 + $0x118] sm:$0xff]
  %v5684 = vld [vmem:[%s5647 + $0x120] sm:$0xff]
  %v5685 = vld [vmem:[%s5647 + $0x128] sm:$0xff]
  %v5686 = vld [vmem:[%s5647 + $0x130] sm:$0xff]
  %v5687 = vld [vmem:[%s5647 + $0x138] sm:$0xff]
  %v5688 = vld [vmem:[%s5647 + $0x140] sm:$0xff]
  %v5689 = vld [vmem:[%s5647 + $0x148] sm:$0xff]
  %v5690 = vld [vmem:[%s5647 + $0x150] sm:$0xff]
  %v5691 = vld [vmem:[%s5647 + $0x158] sm:$0xff]
  %v5692 = vld [vmem:[%s5647 + $0x160] sm:$0xff]
  %v5693 = vld [vmem:[%s5647 + $0x168] sm:$0xff]
  %v5694 = vld [vmem:[%s5647 + $0x170] sm:$0xff]
  %v5695 = vld [vmem:[%s5647 + $0x178] sm:$0xff]
  %v5696 = vld [vmem:[%s5647 + $0x180] sm:$0xff]
  %v5697 = vld [vmem:[%s5647 + $0x188] sm:$0xff]
  %v5698 = vld [vmem:[%s5647 + $0x190] sm:$0xff]
  %v5699 = vld [vmem:[%s5647 + $0x198] sm:$0xff]
  %v5700 = vld [vmem:[%s5647 + $0x1a0] sm:$0xff]
  %v5701 = vld [vmem:[%s5647 + $0x1a8] sm:$0xff]
  %v5702 = vld [vmem:[%s5647 + $0x1b0] sm:$0xff]
  %v5703 = vld [vmem:[%s5647 + $0x1b8] sm:$0xff]
  %v5704 = vld [vmem:[%s5647 + $0x1c0] sm:$0xff]
  %v5705 = vld [vmem:[%s5647 + $0x1c8] sm:$0xff]
  %v5706 = vld [vmem:[%s5647 + $0x1d0] sm:$0xff]
  %v5707 = vld [vmem:[%s5647 + $0x1d8] sm:$0xff]
  %v5708 = vld [vmem:[%s5647 + $0x1e0] sm:$0xff]
  %v5709 = vld [vmem:[%s5647 + $0x1e8] sm:$0xff]
  %v5710 = vld [vmem:[%s5647 + $0x1f0] sm:$0xff]
  %v5711 = vld [vmem:[%s5647 + $0x1f8] sm:$0xff]
  %v5712 = vld [vmem:[%s5647 + $0x200] sm:$0xff]
  %v5713 = vld [vmem:[%s5647 + $0x208] sm:$0xff]
  %v5714 = vld [vmem:[%s5647 + $0x210] sm:$0xff]
  %v5715 = vld [vmem:[%s5647 + $0x218] sm:$0xff]
  %v5716 = vld [vmem:[%s5647 + $0x220] sm:$0xff]
  %v5717 = vld [vmem:[%s5647 + $0x228] sm:$0xff]
  %v5718 = vld [vmem:[%s5647 + $0x230] sm:$0xff]
  %v5719 = vld [vmem:[%s5647 + $0x238] sm:$0xff]
  %v5720 = vld [vmem:[%s5647 + $0x240] sm:$0xff]
  %v5721 = vld [vmem:[%s5647 + $0x248] sm:$0xff]
  %v5722 = vld [vmem:[%s5647 + $0x250] sm:$0xff]
  %v5723 = vld [vmem:[%s5647 + $0x258] sm:$0xff]
  %v5724 = vld [vmem:[%s5647 + $0x260] sm:$0xff]
  %v5725 = vld [vmem:[%s5647 + $0x268] sm:$0xff]
  %v5726 = vld [vmem:[%s5647 + $0x270] sm:$0xff]
  %v5727 = vld [vmem:[%s5647 + $0x278] sm:$0xff]
  %v5728 = vld [vmem:[%s5647 + $0x280] sm:$0xff]
  %v5729 = vld [vmem:[%s5647 + $0x288] sm:$0xff]
  %v5730 = vld [vmem:[%s5647 + $0x290] sm:$0xff]
  %v5731 = vld [vmem:[%s5647 + $0x298] sm:$0xff]
  %v5732 = vld [vmem:[%s5647 + $0x2a0] sm:$0xff]
  %v5733 = vld [vmem:[%s5647 + $0x2a8] sm:$0xff]
  %v5734 = vld [vmem:[%s5647 + $0x2b0] sm:$0xff]
  %v5735 = vld [vmem:[%s5647 + $0x2b8] sm:$0xff]
  %v5736 = vld [vmem:[%s5647 + $0x2c0] sm:$0xff]
  %v5737 = vld [vmem:[%s5647 + $0x2c8] sm:$0xff]
  %v5738 = vld [vmem:[%s5647 + $0x2d0] sm:$0xff]
  %v5739 = vld [vmem:[%s5647 + $0x2d8] sm:$0xff]
  %v5740 = vld [vmem:[%s5647 + $0x2e0] sm:$0xff]
  %v5741 = vld [vmem:[%s5647 + $0x2e8] sm:$0xff]
  %v5742 = vld [vmem:[%s5647 + $0x2f0] sm:$0xff]
  %v5743 = vld [vmem:[%s5647 + $0x2f8] sm:$0xff]
  %v5744 = vld [vmem:[%s5647 + $0x300] sm:$0xff]
  %v5745 = vld [vmem:[%s5647 + $0x308] sm:$0xff]
  %v5746 = vld [vmem:[%s5647 + $0x310] sm:$0xff]
  %v5747 = vld [vmem:[%s5647 + $0x318] sm:$0xff]
  %v5748 = vld [vmem:[%s5647 + $0x320] sm:$0xff]
  %v5749 = vld [vmem:[%s5647 + $0x328] sm:$0xff]
  %v5750 = vld [vmem:[%s5647 + $0x330] sm:$0xff]
  %v5751 = vld [vmem:[%s5647 + $0x338] sm:$0xff]
  %v5752 = vld [vmem:[%s5647 + $0x340] sm:$0xff]
  %v5753 = vld [vmem:[%s5647 + $0x348] sm:$0xff]
  %v5754 = vld [vmem:[%s5647 + $0x350] sm:$0xff]
  %v5755 = vld [vmem:[%s5647 + $0x358] sm:$0xff]
  %v5756 = vld [vmem:[%s5647 + $0x360] sm:$0xff]
  %v5757 = vld [vmem:[%s5647 + $0x368] sm:$0xff]
  %v5758 = vld [vmem:[%s5647 + $0x370] sm:$0xff]
  %v5759 = vld [vmem:[%s5647 + $0x378] sm:$0xff]
  %v5760 = vld [vmem:[%s5647 + $0x380] sm:$0xff]
  %v5761 = vld [vmem:[%s5647 + $0x388] sm:$0xff]
  %v5762 = vld [vmem:[%s5647 + $0x390] sm:$0xff]
  %v5763 = vld [vmem:[%s5647 + $0x398] sm:$0xff]
  %v5764 = vld [vmem:[%s5647 + $0x3a0] sm:$0xff]
  %v5765 = vld [vmem:[%s5647 + $0x3a8] sm:$0xff]
  %v5766 = vld [vmem:[%s5647 + $0x3b0] sm:$0xff]
  %v5767 = vld [vmem:[%s5647 + $0x3b8] sm:$0xff]
  %v5768 = vld [vmem:[%s5647 + $0x3c0] sm:$0xff]
  %v5769 = vld [vmem:[%s5647 + $0x3c8] sm:$0xff]
  %v5770 = vld [vmem:[%s5647 + $0x3d0] sm:$0xff]
  %v5771 = vld [vmem:[%s5647 + $0x3d8] sm:$0xff]
  %v5772 = vld [vmem:[%s5647 + $0x3e0] sm:$0xff]
  %v5773 = vld [vmem:[%s5647 + $0x3e8] sm:$0xff]
  %v5774 = vld [vmem:[%s5647 + $0x3f0] sm:$0xff]
  %v5775 = vld [vmem:[%s5647 + $0x3f8] sm:$0xff]
  %5776 = vmatprep.subr.bf16.mxu0 %v5649
  %5777 = vmatpush1.bf16.msra.mxu0 %v5648
  %5778 = vmatprep.subr.bf16.mxu0 %v5657
  %5779 = vmatpush1.bf16.msra.mxu0 %v5656
  %5780 = vmatprep.subr.bf16.mxu0 %v5665
  %5781 = vmatpush1.bf16.msra.mxu0 %v5664
  %5782 = vmatprep.subr.bf16.mxu0 %v5673
  %5783 = vmatpush1.bf16.msra.mxu0 %v5672
  %5784 = vmatprep.subr.bf16.mxu0 %v5681
  %5785 = vmatpush1.bf16.msra.mxu0 %v5680
  %5786 = vmatprep.subr.bf16.mxu0 %v5689
  %5787 = vmatpush1.bf16.msra.mxu0 %v5688
  %5788 = vmatprep.subr.bf16.mxu0 %v5697
  %5789 = vmatpush1.bf16.msra.mxu0 %v5696
  %5790 = vmatprep.subr.bf16.mxu0 %v5705
  %5791 = vmatpush1.bf16.msra.mxu0 %v5704
  %5792 = vmatprep.subr.bf16.mxu0 %v5713
  %5793 = vmatpush1.bf16.msra.mxu0 %v5712
  %5794 = vmatprep.subr.bf16.mxu0 %v5721
  %5795 = vmatpush1.bf16.msra.mxu0 %v5720
  %5796 = vmatprep.subr.bf16.mxu0 %v5729
  %5797 = vmatpush1.bf16.msra.mxu0 %v5728
  %5798 = vmatprep.subr.bf16.mxu0 %v5737
  %5799 = vmatpush1.bf16.msra.mxu0 %v5736
  %5800 = vmatprep.subr.bf16.mxu0 %v5745
  %5801 = vmatpush1.bf16.msra.mxu0 %v5744
  %5802 = vmatprep.subr.bf16.mxu0 %v5753
  %5803 = vmatpush1.bf16.msra.mxu0 %v5752
  %5804 = vmatprep.subr.bf16.mxu0 %v5761
  %5805 = vmatpush1.bf16.msra.mxu0 %v5760
  %5806 = vmatprep.subr.bf16.mxu0 %v5769
  %5807 = vmatpush1.bf16.msra.mxu0 %v5768
  %5808 = vmatprep.mubr.bf16.mxu0 %v5115
  %5809 = vmatmul.mubr.bf16.gmra.mrb[0].mxu0 %v5114
  %v5810 = vpop.f32.mrb[0].mxu0
  %v5811 = vadd.f32 0.0, %v5810
  %v5812 = vpop.f32.mrb[0].mxu0
  %v5813 = vadd.f32 0.0, %v5812
  %v5814 = vpop.f32.mrb[0].mxu0
  %v5815 = vpop.f32.mrb[0].mxu0
  %5816 = vdwg.mxu0
  %5817 = vmatprep.subr.bf16.mxu0 %v5651
  %5818 = vmatpush1.bf16.msra.mxu0 %v5650
  %5819 = vmatprep.subr.bf16.mxu0 %v5659
  %5820 = vmatpush1.bf16.msra.mxu0 %v5658
  %5821 = vmatprep.subr.bf16.mxu0 %v5667
  %5822 = vmatpush1.bf16.msra.mxu0 %v5666
  %5823 = vmatprep.subr.bf16.mxu0 %v5675
  %5824 = vmatpush1.bf16.msra.mxu0 %v5674
  %5825 = vmatprep.subr.bf16.mxu0 %v5683
  %5826 = vmatpush1.bf16.msra.mxu0 %v5682
  %5827 = vmatprep.subr.bf16.mxu0 %v5691
  %5828 = vmatpush1.bf16.msra.mxu0 %v5690
  %5829 = vmatprep.subr.bf16.mxu0 %v5699
  %5830 = vmatpush1.bf16.msra.mxu0 %v5698
  %5831 = vmatprep.subr.bf16.mxu0 %v5707
  %5832 = vmatpush1.bf16.msra.mxu0 %v5706
  %5833 = vmatprep.subr.bf16.mxu0 %v5715
  %5834 = vmatpush1.bf16.msra.mxu0 %v5714
  %5835 = vmatprep.subr.bf16.mxu0 %v5723
  %5836 = vmatpush1.bf16.msra.mxu0 %v5722
  %5837 = vmatprep.subr.bf16.mxu0 %v5731
  %5838 = vmatpush1.bf16.msra.mxu0 %v5730
  %5839 = vmatprep.subr.bf16.mxu0 %v5739
  %5840 = vmatpush1.bf16.msra.mxu0 %v5738
  %5841 = vmatprep.subr.bf16.mxu0 %v5747
  %5842 = vmatpush1.bf16.msra.mxu0 %v5746
  %5843 = vmatprep.subr.bf16.mxu0 %v5755
  %5844 = vmatpush1.bf16.msra.mxu0 %v5754
  %5845 = vmatprep.subr.bf16.mxu0 %v5763
  %5846 = vmatpush1.bf16.msra.mxu0 %v5762
  %5847 = vmatprep.subr.bf16.mxu0 %v5771
  %5848 = vmatpush1.bf16.msra.mxu0 %v5770
  %5849 = vmatprep.mubr.bf16.mxu0 %v5115
  %5850 = vmatmul.mubr.bf16.gmra.mrb[0].mxu0 %v5114
  %v5851 = vpop.f32.mrb[0].mxu0
  %v5852 = vadd.f32 0.0, %v5851
  %v5853 = vpop.f32.mrb[0].mxu0
  %v5854 = vadd.f32 0.0, %v5853
  %v5855 = vpop.f32.mrb[0].mxu0
  %v5856 = vpop.f32.mrb[0].mxu0
  %5857 = vdwg.mxu0
  %5858 = vmatprep.subr.bf16.mxu0 %v5653
  %5859 = vmatpush1.bf16.msra.mxu0 %v5652
  %5860 = vmatprep.subr.bf16.mxu0 %v5661
  %5861 = vmatpush1.bf16.msra.mxu0 %v5660
  %5862 = vmatprep.subr.bf16.mxu0 %v5669
  %5863 = vmatpush1.bf16.msra.mxu0 %v5668
  %5864 = vmatprep.subr.bf16.mxu0 %v5677
  %5865 = vmatpush1.bf16.msra.mxu0 %v5676
  %5866 = vmatprep.subr.bf16.mxu0 %v5685
  %5867 = vmatpush1.bf16.msra.mxu0 %v5684
  %5868 = vmatprep.subr.bf16.mxu0 %v5693
  %5869 = vmatpush1.bf16.msra.mxu0 %v5692
  %5870 = vmatprep.subr.bf16.mxu0 %v5701
  %5871 = vmatpush1.bf16.msra.mxu0 %v5700
  %5872 = vmatprep.subr.bf16.mxu0 %v5709
  %5873 = vmatpush1.bf16.msra.mxu0 %v5708
  %5874 = vmatprep.subr.bf16.mxu0 %v5717
  %5875 = vmatpush1.bf16.msra.mxu0 %v5716
  %5876 = vmatprep.subr.bf16.mxu0 %v5725
  %5877 = vmatpush1.bf16.msra.mxu0 %v5724
  %5878 = vmatprep.subr.bf16.mxu0 %v5733
  %5879 = vmatpush1.bf16.msra.mxu0 %v5732
  %5880 = vmatprep.subr.bf16.mxu0 %v5741
  %5881 = vmatpush1.bf16.msra.mxu0 %v5740
  %5882 = vmatprep.subr.bf16.mxu0 %v5749
  %5883 = vmatpush1.bf16.msra.mxu0 %v5748
  %5884 = vmatprep.subr.bf16.mxu0 %v5757
  %5885 = vmatpush1.bf16.msra.mxu0 %v5756
  %5886 = vmatprep.subr.bf16.mxu0 %v5765
  %5887 = vmatpush1.bf16.msra.mxu0 %v5764
  %5888 = vmatprep.subr.bf16.mxu0 %v5773
  %5889 = vmatpush1.bf16.msra.mxu0 %v5772
  %5890 = vmatprep.mubr.bf16.mxu0 %v5115
  %5891 = vmatmul.mubr.bf16.gmra.mrb[0].mxu0 %v5114
  %v5892 = vpop.f32.mrb[0].mxu0
  %v5893 = vadd.f32 0.0, %v5892
  %v5894 = vpop.f32.mrb[0].mxu0
  %v5895 = vadd.f32 0.0, %v5894
  %v5896 = vpop.f32.mrb[0].mxu0
  %v5897 = vpop.f32.mrb[0].mxu0
  %5898 = vdwg.mxu0
  %5899 = vmatprep.subr.bf16.mxu0 %v5655
  %5900 = vmatpush1.bf16.msra.mxu0 %v5654
  %5901 = vmatprep.subr.bf16.mxu0 %v5663
  %5902 = vmatpush1.bf16.msra.mxu0 %v5662
  %5903 = vmatprep.subr.bf16.mxu0 %v5671
  %5904 = vmatpush1.bf16.msra.mxu0 %v5670
  %5905 = vmatprep.subr.bf16.mxu0 %v5679
  %5906 = vmatpush1.bf16.msra.mxu0 %v5678
  %5907 = vmatprep.subr.bf16.mxu0 %v5687
  %5908 = vmatpush1.bf16.msra.mxu0 %v5686
  %5909 = vmatprep.subr.bf16.mxu0 %v5695
  %5910 = vmatpush1.bf16.msra.mxu0 %v5694
  %5911 = vmatprep.subr.bf16.mxu0 %v5703
  %5912 = vmatpush1.bf16.msra.mxu0 %v5702
  %5913 = vmatprep.subr.bf16.mxu0 %v5711
  %5914 = vmatpush1.bf16.msra.mxu0 %v5710
  %5915 = vmatprep.subr.bf16.mxu0 %v5719
  %5916 = vmatpush1.bf16.msra.mxu0 %v5718
  %5917 = vmatprep.subr.bf16.mxu0 %v5727
  %5918 = vmatpush1.bf16.msra.mxu0 %v5726
  %5919 = vmatprep.subr.bf16.mxu0 %v5735
  %5920 = vmatpush1.bf16.msra.mxu0 %v5734
  %5921 = vmatprep.subr.bf16.mxu0 %v5743
  %5922 = vmatpush1.bf16.msra.mxu0 %v5742
  %5923 = vmatprep.subr.bf16.mxu0 %v5751
  %5924 = vmatpush1.bf16.msra.mxu0 %v5750
  %5925 = vmatprep.subr.bf16.mxu0 %v5759
  %5926 = vmatpush1.bf16.msra.mxu0 %v5758
  %5927 = vmatprep.subr.bf16.mxu0 %v5767
  %5928 = vmatpush1.bf16.msra.mxu0 %v5766
  %5929 = vmatprep.subr.bf16.mxu0 %v5775
  %5930 = vmatpush1.bf16.msra.mxu0 %v5774
  %5931 = vmatprep.mubr.bf16.mxu0 %v5115
  %5932 = vmatmul.mubr.bf16.gmra.mrb[0].mxu0 %v5114
  %v5933 = vpop.f32.mrb[0].mxu0
  %v5934 = vadd.f32 0.0, %v5933
  %v5935 = vpop.f32.mrb[0].mxu0
  %v5936 = vadd.f32 0.0, %v5935
  %v5937 = vpop.f32.mrb[0].mxu0
  %v5938 = vpop.f32.mrb[0].mxu0
  %5939 = vdwg.mxu0
  %v5940 = vadd.f32 %v5639, %v5811
  %v5941 = vadd.f32 %v5640, %v5813
  %v5942 = vadd.f32 %v5641, %v5852
  %v5943 = vadd.f32 %v5642, %v5854
  %v5944 = vadd.f32 %v5643, %v5893
  %v5945 = vadd.f32 %v5644, %v5895
  %v5946 = vadd.f32 %v5645, %v5934
  %v5947 = vadd.f32 %v5646, %v5936
  %s5948 = scalar_lea.vmem [#allocation2], 2048
  %v5949 = vld [vmem:[%s5948] sm:$0xff]
  %v5950 = vld [vmem:[%s5948 + $0x8] sm:$0xff]
  %v5951 = vld [vmem:[%s5948 + $0x10] sm:$0xff]
  %v5952 = vld [vmem:[%s5948 + $0x18] sm:$0xff]
  %v5953 = vld [vmem:[%s5948 + $0x20] sm:$0xff]
  %v5954 = vld [vmem:[%s5948 + $0x28] sm:$0xff]
  %v5955 = vld [vmem:[%s5948 + $0x30] sm:$0xff]
  %v5956 = vld [vmem:[%s5948 + $0x38] sm:$0xff]
  %v5957 = vld [vmem:[%s5948 + $0x40] sm:$0xff]
  %v5958 = vld [vmem:[%s5948 + $0x48] sm:$0xff]
  %v5959 = vld [vmem:[%s5948 + $0x50] sm:$0xff]
  %v5960 = vld [vmem:[%s5948 + $0x58] sm:$0xff]
  %v5961 = vld [vmem:[%s5948 + $0x60] sm:$0xff]
  %v5962 = vld [vmem:[%s5948 + $0x68] sm:$0xff]
  %v5963 = vld [vmem:[%s5948 + $0x70] sm:$0xff]
  %v5964 = vld [vmem:[%s5948 + $0x78] sm:$0xff]
  %v5965 = vld [vmem:[%s5948 + $0x80] sm:$0xff]
  %v5966 = vld [vmem:[%s5948 + $0x88] sm:$0xff]
  %v5967 = vld [vmem:[%s5948 + $0x90] sm:$0xff]
  %v5968 = vld [vmem:[%s5948 + $0x98] sm:$0xff]
  %v5969 = vld [vmem:[%s5948 + $0xa0] sm:$0xff]
  %v5970 = vld [vmem:[%s5948 + $0xa8] sm:$0xff]
  %v5971 = vld [vmem:[%s5948 + $0xb0] sm:$0xff]
  %v5972 = vld [vmem:[%s5948 + $0xb8] sm:$0xff]
  %v5973 = vld [vmem:[%s5948 + $0xc0] sm:$0xff]
  %v5974 = vld [vmem:[%s5948 + $0xc8] sm:$0xff]
  %v5975 = vld [vmem:[%s5948 + $0xd0] sm:$0xff]
  %v5976 = vld [vmem:[%s5948 + $0xd8] sm:$0xff]
  %v5977 = vld [vmem:[%s5948 + $0xe0] sm:$0xff]
  %v5978 = vld [vmem:[%s5948 + $0xe8] sm:$0xff]
  %v5979 = vld [vmem:[%s5948 + $0xf0] sm:$0xff]
  %v5980 = vld [vmem:[%s5948 + $0xf8] sm:$0xff]
  %v5981 = vld [vmem:[%s5948 + $0x100] sm:$0xff]
  %v5982 = vld [vmem:[%s5948 + $0x108] sm:$0xff]
  %v5983 = vld [vmem:[%s5948 + $0x110] sm:$0xff]
  %v5984 = vld [vmem:[%s5948 + $0x118] sm:$0xff]
  %v5985 = vld [vmem:[%s5948 + $0x120] sm:$0xff]
  %v5986 = vld [vmem:[%s5948 + $0x128] sm:$0xff]
  %v5987 = vld [vmem:[%s5948 + $0x130] sm:$0xff]
  %v5988 = vld [vmem:[%s5948 + $0x138] sm:$0xff]
  %v5989 = vld [vmem:[%s5948 + $0x140] sm:$0xff]
  %v5990 = vld [vmem:[%s5948 + $0x148] sm:$0xff]
  %v5991 = vld [vmem:[%s5948 + $0x150] sm:$0xff]
  %v5992 = vld [vmem:[%s5948 + $0x158] sm:$0xff]
  %v5993 = vld [vmem:[%s5948 + $0x160] sm:$0xff]
  %v5994 = vld [vmem:[%s5948 + $0x168] sm:$0xff]
  %v5995 = vld [vmem:[%s5948 + $0x170] sm:$0xff]
  %v5996 = vld [vmem:[%s5948 + $0x178] sm:$0xff]
  %v5997 = vld [vmem:[%s5948 + $0x180] sm:$0xff]
  %v5998 = vld [vmem:[%s5948 + $0x188] sm:$0xff]
  %v5999 = vld [vmem:[%s5948 + $0x190] sm:$0xff]
  %v6000 = vld [vmem:[%s5948 + $0x198] sm:$0xff]
  %v6001 = vld [vmem:[%s5948 + $0x1a0] sm:$0xff]
  %v6002 = vld [vmem:[%s5948 + $0x1a8] sm:$0xff]
  %v6003 = vld [vmem:[%s5948 + $0x1b0] sm:$0xff]
  %v6004 = vld [vmem:[%s5948 + $0x1b8] sm:$0xff]
  %v6005 = vld [vmem:[%s5948 + $0x1c0] sm:$0xff]
  %v6006 = vld [vmem:[%s5948 + $0x1c8] sm:$0xff]
  %v6007 = vld [vmem:[%s5948 + $0x1d0] sm:$0xff]
  %v6008 = vld [vmem:[%s5948 + $0x1d8] sm:$0xff]
  %v6009 = vld [vmem:[%s5948 + $0x1e0] sm:$0xff]
  %v6010 = vld [vmem:[%s5948 + $0x1e8] sm:$0xff]
  %v6011 = vld [vmem:[%s5948 + $0x1f0] sm:$0xff]
  %v6012 = vld [vmem:[%s5948 + $0x1f8] sm:$0xff]
  %v6013 = vld [vmem:[%s5948 + $0x200] sm:$0xff]
  %v6014 = vld [vmem:[%s5948 + $0x208] sm:$0xff]
  %v6015 = vld [vmem:[%s5948 + $0x210] sm:$0xff]
  %v6016 = vld [vmem:[%s5948 + $0x218] sm:$0xff]
  %v6017 = vld [vmem:[%s5948 + $0x220] sm:$0xff]
  %v6018 = vld [vmem:[%s5948 + $0x228] sm:$0xff]
  %v6019 = vld [vmem:[%s5948 + $0x230] sm:$0xff]
  %v6020 = vld [vmem:[%s5948 + $0x238] sm:$0xff]
  %v6021 = vld [vmem:[%s5948 + $0x240] sm:$0xff]
  %v6022 = vld [vmem:[%s5948 + $0x248] sm:$0xff]
  %v6023 = vld [vmem:[%s5948 + $0x250] sm:$0xff]
  %v6024 = vld [vmem:[%s5948 + $0x258] sm:$0xff]
  %v6025 = vld [vmem:[%s5948 + $0x260] sm:$0xff]
  %v6026 = vld [vmem:[%s5948 + $0x268] sm:$0xff]
  %v6027 = vld [vmem:[%s5948 + $0x270] sm:$0xff]
  %v6028 = vld [vmem:[%s5948 + $0x278] sm:$0xff]
  %v6029 = vld [vmem:[%s5948 + $0x280] sm:$0xff]
  %v6030 = vld [vmem:[%s5948 + $0x288] sm:$0xff]
  %v6031 = vld [vmem:[%s5948 + $0x290] sm:$0xff]
  %v6032 = vld [vmem:[%s5948 + $0x298] sm:$0xff]
  %v6033 = vld [vmem:[%s5948 + $0x2a0] sm:$0xff]
  %v6034 = vld [vmem:[%s5948 + $0x2a8] sm:$0xff]
  %v6035 = vld [vmem:[%s5948 + $0x2b0] sm:$0xff]
  %v6036 = vld [vmem:[%s5948 + $0x2b8] sm:$0xff]
  %v6037 = vld [vmem:[%s5948 + $0x2c0] sm:$0xff]
  %v6038 = vld [vmem:[%s5948 + $0x2c8] sm:$0xff]
  %v6039 = vld [vmem:[%s5948 + $0x2d0] sm:$0xff]
  %v6040 = vld [vmem:[%s5948 + $0x2d8] sm:$0xff]
  %v6041 = vld [vmem:[%s5948 + $0x2e0] sm:$0xff]
  %v6042 = vld [vmem:[%s5948 + $0x2e8] sm:$0xff]
  %v6043 = vld [vmem:[%s5948 + $0x2f0] sm:$0xff]
  %v6044 = vld [vmem:[%s5948 + $0x2f8] sm:$0xff]
  %v6045 = vld [vmem:[%s5948 + $0x300] sm:$0xff]
  %v6046 = vld [vmem:[%s5948 + $0x308] sm:$0xff]
  %v6047 = vld [vmem:[%s5948 + $0x310] sm:$0xff]
  %v6048 = vld [vmem:[%s5948 + $0x318] sm:$0xff]
  %v6049 = vld [vmem:[%s5948 + $0x320] sm:$0xff]
  %v6050 = vld [vmem:[%s5948 + $0x328] sm:$0xff]
  %v6051 = vld [vmem:[%s5948 + $0x330] sm:$0xff]
  %v6052 = vld [vmem:[%s5948 + $0x338] sm:$0xff]
  %v6053 = vld [vmem:[%s5948 + $0x340] sm:$0xff]
  %v6054 = vld [vmem:[%s5948 + $0x348] sm:$0xff]
  %v6055 = vld [vmem:[%s5948 + $0x350] sm:$0xff]
  %v6056 = vld [vmem:[%s5948 + $0x358] sm:$0xff]
  %v6057 = vld [vmem:[%s5948 + $0x360] sm:$0xff]
  %v6058 = vld [vmem:[%s5948 + $0x368] sm:$0xff]
  %v6059 = vld [vmem:[%s5948 + $0x370] sm:$0xff]
  %v6060 = vld [vmem:[%s5948 + $0x378] sm:$0xff]
  %v6061 = vld [vmem:[%s5948 + $0x380] sm:$0xff]
  %v6062 = vld [vmem:[%s5948 + $0x388] sm:$0xff]
  %v6063 = vld [vmem:[%s5948 + $0x390] sm:$0xff]
  %v6064 = vld [vmem:[%s5948 + $0x398] sm:$0xff]
  %v6065 = vld [vmem:[%s5948 + $0x3a0] sm:$0xff]
  %v6066 = vld [vmem:[%s5948 + $0x3a8] sm:$0xff]
  %v6067 = vld [vmem:[%s5948 + $0x3b0] sm:$0xff]
  %v6068 = vld [vmem:[%s5948 + $0x3b8] sm:$0xff]
  %v6069 = vld [vmem:[%s5948 + $0x3c0] sm:$0xff]
  %v6070 = vld [vmem:[%s5948 + $0x3c8] sm:$0xff]
  %v6071 = vld [vmem:[%s5948 + $0x3d0] sm:$0xff]
  %v6072 = vld [vmem:[%s5948 + $0x3d8] sm:$0xff]
  %v6073 = vld [vmem:[%s5948 + $0x3e0] sm:$0xff]
  %v6074 = vld [vmem:[%s5948 + $0x3e8] sm:$0xff]
  %v6075 = vld [vmem:[%s5948 + $0x3f0] sm:$0xff]
  %v6076 = vld [vmem:[%s5948 + $0x3f8] sm:$0xff]
  %6077 = vmatprep.subr.bf16.mxu0 %v5950
  %6078 = vmatpush1.bf16.msra.mxu0 %v5949
  %6079 = vmatprep.subr.bf16.mxu0 %v5958
  %6080 = vmatpush1.bf16.msra.mxu0 %v5957
  %6081 = vmatprep.subr.bf16.mxu0 %v5966
  %6082 = vmatpush1.bf16.msra.mxu0 %v5965
  %6083 = vmatprep.subr.bf16.mxu0 %v5974
  %6084 = vmatpush1.bf16.msra.mxu0 %v5973
  %6085 = vmatprep.subr.bf16.mxu0 %v5982
  %6086 = vmatpush1.bf16.msra.mxu0 %v5981
  %6087 = vmatprep.subr.bf16.mxu0 %v5990
  %6088 = vmatpush1.bf16.msra.mxu0 %v5989
  %6089 = vmatprep.subr.bf16.mxu0 %v5998
  %6090 = vmatpush1.bf16.msra.mxu0 %v5997
  %6091 = vmatprep.subr.bf16.mxu0 %v6006
  %6092 = vmatpush1.bf16.msra.mxu0 %v6005
  %6093 = vmatprep.subr.bf16.mxu0 %v6014
  %6094 = vmatpush1.bf16.msra.mxu0 %v6013
  %6095 = vmatprep.subr.bf16.mxu0 %v6022
  %6096 = vmatpush1.bf16.msra.mxu0 %v6021
  %6097 = vmatprep.subr.bf16.mxu0 %v6030
  %6098 = vmatpush1.bf16.msra.mxu0 %v6029
  %6099 = vmatprep.subr.bf16.mxu0 %v6038
  %6100 = vmatpush1.bf16.msra.mxu0 %v6037
  %6101 = vmatprep.subr.bf16.mxu0 %v6046
  %6102 = vmatpush1.bf16.msra.mxu0 %v6045
  %6103 = vmatprep.subr.bf16.mxu0 %v6054
  %6104 = vmatpush1.bf16.msra.mxu0 %v6053
  %6105 = vmatprep.subr.bf16.mxu0 %v6062
  %6106 = vmatpush1.bf16.msra.mxu0 %v6061
  %6107 = vmatprep.subr.bf16.mxu0 %v6070
  %6108 = vmatpush1.bf16.msra.mxu0 %v6069
  %6109 = vmatprep.mubr.bf16.mxu0 %v5207
  %6110 = vmatmul.mubr.bf16.gmra.mrb[0].mxu0 %v5206
  %v6111 = vpop.f32.mrb[0].mxu0
  %v6112 = vadd.f32 0.0, %v6111
  %v6113 = vpop.f32.mrb[0].mxu0
  %v6114 = vadd.f32 0.0, %v6113
  %v6115 = vpop.f32.mrb[0].mxu0
  %v6116 = vpop.f32.mrb[0].mxu0
  %6117 = vdwg.mxu0
  %6118 = vmatprep.subr.bf16.mxu0 %v5952
  %6119 = vmatpush1.bf16.msra.mxu0 %v5951
  %6120 = vmatprep.subr.bf16.mxu0 %v5960
  %6121 = vmatpush1.bf16.msra.mxu0 %v5959
  %6122 = vmatprep.subr.bf16.mxu0 %v5968
  %6123 = vmatpush1.bf16.msra.mxu0 %v5967
  %6124 = vmatprep.subr.bf16.mxu0 %v5976
  %6125 = vmatpush1.bf16.msra.mxu0 %v5975
  %6126 = vmatprep.subr.bf16.mxu0 %v5984
  %6127 = vmatpush1.bf16.msra.mxu0 %v5983
  %6128 = vmatprep.subr.bf16.mxu0 %v5992
  %6129 = vmatpush1.bf16.msra.mxu0 %v5991
  %6130 = vmatprep.subr.bf16.mxu0 %v6000
  %6131 = vmatpush1.bf16.msra.mxu0 %v5999
  %6132 = vmatprep.subr.bf16.mxu0 %v6008
  %6133 = vmatpush1.bf16.msra.mxu0 %v6007
  %6134 = vmatprep.subr.bf16.mxu0 %v6016
  %6135 = vmatpush1.bf16.msra.mxu0 %v6015
  %6136 = vmatprep.subr.bf16.mxu0 %v6024
  %6137 = vmatpush1.bf16.msra.mxu0 %v6023
  %6138 = vmatprep.subr.bf16.mxu0 %v6032
  %6139 = vmatpush1.bf16.msra.mxu0 %v6031
  %6140 = vmatprep.subr.bf16.mxu0 %v6040
  %6141 = vmatpush1.bf16.msra.mxu0 %v6039
  %6142 = vmatprep.subr.bf16.mxu0 %v6048
  %6143 = vmatpush1.bf16.msra.mxu0 %v6047
  %6144 = vmatprep.subr.bf16.mxu0 %v6056
  %6145 = vmatpush1.bf16.msra.mxu0 %v6055
  %6146 = vmatprep.subr.bf16.mxu0 %v6064
  %6147 = vmatpush1.bf16.msra.mxu0 %v6063
  %6148 = vmatprep.subr.bf16.mxu0 %v6072
  %6149 = vmatpush1.bf16.msra.mxu0 %v6071
  %6150 = vmatprep.mubr.bf16.mxu0 %v5207
  %6151 = vmatmul.mubr.bf16.gmra.mrb[0].mxu0 %v5206
  %v6152 = vpop.f32.mrb[0].mxu0
  %v6153 = vadd.f32 0.0, %v6152
  %v6154 = vpop.f32.mrb[0].mxu0
  %v6155 = vadd.f32 0.0, %v6154
  %v6156 = vpop.f32.mrb[0].mxu0
  %v6157 = vpop.f32.mrb[0].mxu0
  %6158 = vdwg.mxu0
  %6159 = vmatprep.subr.bf16.mxu0 %v5954
  %6160 = vmatpush1.bf16.msra.mxu0 %v5953
  %6161 = vmatprep.subr.bf16.mxu0 %v5962
  %6162 = vmatpush1.bf16.msra.mxu0 %v5961
  %6163 = vmatprep.subr.bf16.mxu0 %v5970
  %6164 = vmatpush1.bf16.msra.mxu0 %v5969
  %6165 = vmatprep.subr.bf16.mxu0 %v5978
  %6166 = vmatpush1.bf16.msra.mxu0 %v5977
  %6167 = vmatprep.subr.bf16.mxu0 %v5986
  %6168 = vmatpush1.bf16.msra.mxu0 %v5985
  %6169 = vmatprep.subr.bf16.mxu0 %v5994
  %6170 = vmatpush1.bf16.msra.mxu0 %v5993
  %6171 = vmatprep.subr.bf16.mxu0 %v6002
  %6172 = vmatpush1.bf16.msra.mxu0 %v6001
  %6173 = vmatprep.subr.bf16.mxu0 %v6010
  %6174 = vmatpush1.bf16.msra.mxu0 %v6009
  %6175 = vmatprep.subr.bf16.mxu0 %v6018
  %6176 = vmatpush1.bf16.msra.mxu0 %v6017
  %6177 = vmatprep.subr.bf16.mxu0 %v6026
  %6178 = vmatpush1.bf16.msra.mxu0 %v6025
  %6179 = vmatprep.subr.bf16.mxu0 %v6034
  %6180 = vmatpush1.bf16.msra.mxu0 %v6033
  %6181 = vmatprep.subr.bf16.mxu0 %v6042
  %6182 = vmatpush1.bf16.msra.mxu0 %v6041
  %6183 = vmatprep.subr.bf16.mxu0 %v6050
  %6184 = vmatpush1.bf16.msra.mxu0 %v6049
  %6185 = vmatprep.subr.bf16.mxu0 %v6058
  %6186 = vmatpush1.bf16.msra.mxu0 %v6057
  %6187 = vmatprep.subr.bf16.mxu0 %v6066
  %6188 = vmatpush1.bf16.msra.mxu0 %v6065
  %6189 = vmatprep.subr.bf16.mxu0 %v6074
  %6190 = vmatpush1.bf16.msra.mxu0 %v6073
  %6191 = vmatprep.mubr.bf16.mxu0 %v5207
  %6192 = vmatmul.mubr.bf16.gmra.mrb[0].mxu0 %v5206
  %v6193 = vpop.f32.mrb[0].mxu0
  %v6194 = vadd.f32 0.0, %v6193
  %v6195 = vpop.f32.mrb[0].mxu0
  %v6196 = vadd.f32 0.0, %v6195
  %v6197 = vpop.f32.mrb[0].mxu0
  %v6198 = vpop.f32.mrb[0].mxu0
  %6199 = vdwg.mxu0
  %6200 = vmatprep.subr.bf16.mxu0 %v5956
  %6201 = vmatpush1.bf16.msra.mxu0 %v5955
  %6202 = vmatprep.subr.bf16.mxu0 %v5964
  %6203 = vmatpush1.bf16.msra.mxu0 %v5963
  %6204 = vmatprep.subr.bf16.mxu0 %v5972
  %6205 = vmatpush1.bf16.msra.mxu0 %v5971
  %6206 = vmatprep.subr.bf16.mxu0 %v5980
  %6207 = vmatpush1.bf16.msra.mxu0 %v5979
  %6208 = vmatprep.subr.bf16.mxu0 %v5988
  %6209 = vmatpush1.bf16.msra.mxu0 %v5987
  %6210 = vmatprep.subr.bf16.mxu0 %v5996
  %6211 = vmatpush1.bf16.msra.mxu0 %v5995
  %6212 = vmatprep.subr.bf16.mxu0 %v6004
  %6213 = vmatpush1.bf16.msra.mxu0 %v6003
  %6214 = vmatprep.subr.bf16.mxu0 %v6012
  %6215 = vmatpush1.bf16.msra.mxu0 %v6011
  %6216 = vmatprep.subr.bf16.mxu0 %v6020
  %6217 = vmatpush1.bf16.msra.mxu0 %v6019
  %6218 = vmatprep.subr.bf16.mxu0 %v6028
  %6219 = vmatpush1.bf16.msra.mxu0 %v6027
  %6220 = vmatprep.subr.bf16.mxu0 %v6036
  %6221 = vmatpush1.bf16.msra.mxu0 %v6035
  %6222 = vmatprep.subr.bf16.mxu0 %v6044
  %6223 = vmatpush1.bf16.msra.mxu0 %v6043
  %6224 = vmatprep.subr.bf16.mxu0 %v6052
  %6225 = vmatpush1.bf16.msra.mxu0 %v6051
  %6226 = vmatprep.subr.bf16.mxu0 %v6060
  %6227 = vmatpush1.bf16.msra.mxu0 %v6059
  %6228 = vmatprep.subr.bf16.mxu0 %v6068
  %6229 = vmatpush1.bf16.msra.mxu0 %v6067
  %6230 = vmatprep.subr.bf16.mxu0 %v6076
  %6231 = vmatpush1.bf16.msra.mxu0 %v6075
  %6232 = vmatprep.mubr.bf16.mxu0 %v5207
  %6233 = vmatmul.mubr.bf16.gmra.mrb[0].mxu0 %v5206
  %v6234 = vpop.f32.mrb[0].mxu0
  %v6235 = vadd.f32 0.0, %v6234
  %v6236 = vpop.f32.mrb[0].mxu0
  %v6237 = vadd.f32 0.0, %v6236
  %v6238 = vpop.f32.mrb[0].mxu0
  %v6239 = vpop.f32.mrb[0].mxu0
  %6240 = vdwg.mxu0
  %v6241 = vadd.f32 %v5940, %v6112
  %v6242 = vadd.f32 %v5941, %v6114
  %v6243 = vadd.f32 %v5942, %v6153
  %v6244 = vadd.f32 %v5943, %v6155
  %v6245 = vadd.f32 %v5944, %v6194
  %v6246 = vadd.f32 %v5945, %v6196
  %v6247 = vadd.f32 %v5946, %v6235
  %v6248 = vadd.f32 %v5947, %v6237
  %s6249 = scalar_lea.vmem [#allocation2], 3072
  %v6250 = vld [vmem:[%s6249] sm:$0xff]
  %v6251 = vld [vmem:[%s6249 + $0x8] sm:$0xff]
  %v6252 = vld [vmem:[%s6249 + $0x10] sm:$0xff]
  %v6253 = vld [vmem:[%s6249 + $0x18] sm:$0xff]
  %v6254 = vld [vmem:[%s6249 + $0x20] sm:$0xff]
  %v6255 = vld [vmem:[%s6249 + $0x28] sm:$0xff]
  %v6256 = vld [vmem:[%s6249 + $0x30] sm:$0xff]
  %v6257 = vld [vmem:[%s6249 + $0x38] sm:$0xff]
  %v6258 = vld [vmem:[%s6249 + $0x40] sm:$0xff]
  %v6259 = vld [vmem:[%s6249 + $0x48] sm:$0xff]
  %v6260 = vld [vmem:[%s6249 + $0x50] sm:$0xff]
  %v6261 = vld [vmem:[%s6249 + $0x58] sm:$0xff]
  %v6262 = vld [vmem:[%s6249 + $0x60] sm:$0xff]
  %v6263 = vld [vmem:[%s6249 + $0x68] sm:$0xff]
  %v6264 = vld [vmem:[%s6249 + $0x70] sm:$0xff]
  %v6265 = vld [vmem:[%s6249 + $0x78] sm:$0xff]
  %v6266 = vld [vmem:[%s6249 + $0x80] sm:$0xff]
  %v6267 = vld [vmem:[%s6249 + $0x88] sm:$0xff]
  %v6268 = vld [vmem:[%s6249 + $0x90] sm:$0xff]
  %v6269 = vld [vmem:[%s6249 + $0x98] sm:$0xff]
  %v6270 = vld [vmem:[%s6249 + $0xa0] sm:$0xff]
  %v6271 = vld [vmem:[%s6249 + $0xa8] sm:$0xff]
  %v6272 = vld [vmem:[%s6249 + $0xb0] sm:$0xff]
  %v6273 = vld [vmem:[%s6249 + $0xb8] sm:$0xff]
  %v6274 = vld [vmem:[%s6249 + $0xc0] sm:$0xff]
  %v6275 = vld [vmem:[%s6249 + $0xc8] sm:$0xff]
  %v6276 = vld [vmem:[%s6249 + $0xd0] sm:$0xff]
  %v6277 = vld [vmem:[%s6249 + $0xd8] sm:$0xff]
  %v6278 = vld [vmem:[%s6249 + $0xe0] sm:$0xff]
  %v6279 = vld [vmem:[%s6249 + $0xe8] sm:$0xff]
  %v6280 = vld [vmem:[%s6249 + $0xf0] sm:$0xff]
  %v6281 = vld [vmem:[%s6249 + $0xf8] sm:$0xff]
  %v6282 = vld [vmem:[%s6249 + $0x100] sm:$0xff]
  %v6283 = vld [vmem:[%s6249 + $0x108] sm:$0xff]
  %v6284 = vld [vmem:[%s6249 + $0x110] sm:$0xff]
  %v6285 = vld [vmem:[%s6249 + $0x118] sm:$0xff]
  %v6286 = vld [vmem:[%s6249 + $0x120] sm:$0xff]
  %v6287 = vld [vmem:[%s6249 + $0x128] sm:$0xff]
  %v6288 = vld [vmem:[%s6249 + $0x130] sm:$0xff]
  %v6289 = vld [vmem:[%s6249 + $0x138] sm:$0xff]
  %v6290 = vld [vmem:[%s6249 + $0x140] sm:$0xff]
  %v6291 = vld [vmem:[%s6249 + $0x148] sm:$0xff]
  %v6292 = vld [vmem:[%s6249 + $0x150] sm:$0xff]
  %v6293 = vld [vmem:[%s6249 + $0x158] sm:$0xff]
  %v6294 = vld [vmem:[%s6249 + $0x160] sm:$0xff]
  %v6295 = vld [vmem:[%s6249 + $0x168] sm:$0xff]
  %v6296 = vld [vmem:[%s6249 + $0x170] sm:$0xff]
  %v6297 = vld [vmem:[%s6249 + $0x178] sm:$0xff]
  %v6298 = vld [vmem:[%s6249 + $0x180] sm:$0xff]
  %v6299 = vld [vmem:[%s6249 + $0x188] sm:$0xff]
  %v6300 = vld [vmem:[%s6249 + $0x190] sm:$0xff]
  %v6301 = vld [vmem:[%s6249 + $0x198] sm:$0xff]
  %v6302 = vld [vmem:[%s6249 + $0x1a0] sm:$0xff]
  %v6303 = vld [vmem:[%s6249 + $0x1a8] sm:$0xff]
  %v6304 = vld [vmem:[%s6249 + $0x1b0] sm:$0xff]
  %v6305 = vld [vmem:[%s6249 + $0x1b8] sm:$0xff]
  %v6306 = vld [vmem:[%s6249 + $0x1c0] sm:$0xff]
  %v6307 = vld [vmem:[%s6249 + $0x1c8] sm:$0xff]
  %v6308 = vld [vmem:[%s6249 + $0x1d0] sm:$0xff]
  %v6309 = vld [vmem:[%s6249 + $0x1d8] sm:$0xff]
  %v6310 = vld [vmem:[%s6249 + $0x1e0] sm:$0xff]
  %v6311 = vld [vmem:[%s6249 + $0x1e8] sm:$0xff]
  %v6312 = vld [vmem:[%s6249 + $0x1f0] sm:$0xff]
  %v6313 = vld [vmem:[%s6249 + $0x1f8] sm:$0xff]
  %v6314 = vld [vmem:[%s6249 + $0x200] sm:$0xff]
  %v6315 = vld [vmem:[%s6249 + $0x208] sm:$0xff]
  %v6316 = vld [vmem:[%s6249 + $0x210] sm:$0xff]
  %v6317 = vld [vmem:[%s6249 + $0x218] sm:$0xff]
  %v6318 = vld [vmem:[%s6249 + $0x220] sm:$0xff]
  %v6319 = vld [vmem:[%s6249 + $0x228] sm:$0xff]
  %v6320 = vld [vmem:[%s6249 + $0x230] sm:$0xff]
  %v6321 = vld [vmem:[%s6249 + $0x238] sm:$0xff]
  %v6322 = vld [vmem:[%s6249 + $0x240] sm:$0xff]
  %v6323 = vld [vmem:[%s6249 + $0x248] sm:$0xff]
  %v6324 = vld [vmem:[%s6249 + $0x250] sm:$0xff]
  %v6325 = vld [vmem:[%s6249 + $0x258] sm:$0xff]
  %v6326 = vld [vmem:[%s6249 + $0x260] sm:$0xff]
  %v6327 = vld [vmem:[%s6249 + $0x268] sm:$0xff]
  %v6328 = vld [vmem:[%s6249 + $0x270] sm:$0xff]
  %v6329 = vld [vmem:[%s6249 + $0x278] sm:$0xff]
  %v6330 = vld [vmem:[%s6249 + $0x280] sm:$0xff]
  %v6331 = vld [vmem:[%s6249 + $0x288] sm:$0xff]
  %v6332 = vld [vmem:[%s6249 + $0x290] sm:$0xff]
  %v6333 = vld [vmem:[%s6249 + $0x298] sm:$0xff]
  %v6334 = vld [vmem:[%s6249 + $0x2a0] sm:$0xff]
  %v6335 = vld [vmem:[%s6249 + $0x2a8] sm:$0xff]
  %v6336 = vld [vmem:[%s6249 + $0x2b0] sm:$0xff]
  %v6337 = vld [vmem:[%s6249 + $0x2b8] sm:$0xff]
  %v6338 = vld [vmem:[%s6249 + $0x2c0] sm:$0xff]
  %v6339 = vld [vmem:[%s6249 + $0x2c8] sm:$0xff]
  %v6340 = vld [vmem:[%s6249 + $0x2d0] sm:$0xff]
  %v6341 = vld [vmem:[%s6249 + $0x2d8] sm:$0xff]
  %v6342 = vld [vmem:[%s6249 + $0x2e0] sm:$0xff]
  %v6343 = vld [vmem:[%s6249 + $0x2e8] sm:$0xff]
  %v6344 = vld [vmem:[%s6249 + $0x2f0] sm:$0xff]
  %v6345 = vld [vmem:[%s6249 + $0x2f8] sm:$0xff]
  %v6346 = vld [vmem:[%s6249 + $0x300] sm:$0xff]
  %v6347 = vld [vmem:[%s6249 + $0x308] sm:$0xff]
  %v6348 = vld [vmem:[%s6249 + $0x310] sm:$0xff]
  %v6349 = vld [vmem:[%s6249 + $0x318] sm:$0xff]
  %v6350 = vld [vmem:[%s6249 + $0x320] sm:$0xff]
  %v6351 = vld [vmem:[%s6249 + $0x328] sm:$0xff]
  %v6352 = vld [vmem:[%s6249 + $0x330] sm:$0xff]
  %v6353 = vld [vmem:[%s6249 + $0x338] sm:$0xff]
  %v6354 = vld [vmem:[%s6249 + $0x340] sm:$0xff]
  %v6355 = vld [vmem:[%s6249 + $0x348] sm:$0xff]
  %v6356 = vld [vmem:[%s6249 + $0x350] sm:$0xff]
  %v6357 = vld [vmem:[%s6249 + $0x358] sm:$0xff]
  %v6358 = vld [vmem:[%s6249 + $0x360] sm:$0xff]
  %v6359 = vld [vmem:[%s6249 + $0x368] sm:$0xff]
  %v6360 = vld [vmem:[%s6249 + $0x370] sm:$0xff]
  %v6361 = vld [vmem:[%s6249 + $0x378] sm:$0xff]
  %v6362 = vld [vmem:[%s6249 + $0x380] sm:$0xff]
  %v6363 = vld [vmem:[%s6249 + $0x388] sm:$0xff]
  %v6364 = vld [vmem:[%s6249 + $0x390] sm:$0xff]
  %v6365 = vld [vmem:[%s6249 + $0x398] sm:$0xff]
  %v6366 = vld [vmem:[%s6249 + $0x3a0] sm:$0xff]
  %v6367 = vld [vmem:[%s6249 + $0x3a8] sm:$0xff]
  %v6368 = vld [vmem:[%s6249 + $0x3b0] sm:$0xff]
  %v6369 = vld [vmem:[%s6249 + $0x3b8] sm:$0xff]
  %v6370 = vld [vmem:[%s6249 + $0x3c0] sm:$0xff]
  %v6371 = vld [vmem:[%s6249 + $0x3c8] sm:$0xff]
  %v6372 = vld [vmem:[%s6249 + $0x3d0] sm:$0xff]
  %v6373 = vld [vmem:[%s6249 + $0x3d8] sm:$0xff]
  %v6374 = vld [vmem:[%s6249 + $0x3e0] sm:$0xff]
  %v6375 = vld [vmem:[%s6249 + $0x3e8] sm:$0xff]
  %v6376 = vld [vmem:[%s6249 + $0x3f0] sm:$0xff]
  %v6377 = vld [vmem:[%s6249 + $0x3f8] sm:$0xff]
  %6378 = vmatprep.subr.bf16.mxu0 %v6251
  %6379 = vmatpush1.bf16.msra.mxu0 %v6250
  %6380 = vmatprep.subr.bf16.mxu0 %v6259
  %6381 = vmatpush1.bf16.msra.mxu0 %v6258
  %6382 = vmatprep.subr.bf16.mxu0 %v6267
  %6383 = vmatpush1.bf16.msra.mxu0 %v6266
  %6384 = vmatprep.subr.bf16.mxu0 %v6275
  %6385 = vmatpush1.bf16.msra.mxu0 %v6274
  %6386 = vmatprep.subr.bf16.mxu0 %v6283
  %6387 = vmatpush1.bf16.msra.mxu0 %v6282
  %6388 = vmatprep.subr.bf16.mxu0 %v6291
  %6389 = vmatpush1.bf16.msra.mxu0 %v6290
  %6390 = vmatprep.subr.bf16.mxu0 %v6299
  %6391 = vmatpush1.bf16.msra.mxu0 %v6298
  %6392 = vmatprep.subr.bf16.mxu0 %v6307
  %6393 = vmatpush1.bf16.msra.mxu0 %v6306
  %6394 = vmatprep.subr.bf16.mxu0 %v6315
  %6395 = vmatpush1.bf16.msra.mxu0 %v6314
  %6396 = vmatprep.subr.bf16.mxu0 %v6323
  %6397 = vmatpush1.bf16.msra.mxu0 %v6322
  %6398 = vmatprep.subr.bf16.mxu0 %v6331
  %6399 = vmatpush1.bf16.msra.mxu0 %v6330
  %6400 = vmatprep.subr.bf16.mxu0 %v6339
  %6401 = vmatpush1.bf16.msra.mxu0 %v6338
  %6402 = vmatprep.subr.bf16.mxu0 %v6347
  %6403 = vmatpush1.bf16.msra.mxu0 %v6346
  %6404 = vmatprep.subr.bf16.mxu0 %v6355
  %6405 = vmatpush1.bf16.msra.mxu0 %v6354
  %6406 = vmatprep.subr.bf16.mxu0 %v6363
  %6407 = vmatpush1.bf16.msra.mxu0 %v6362
  %6408 = vmatprep.subr.bf16.mxu0 %v6371
  %6409 = vmatpush1.bf16.msra.mxu0 %v6370
  %6410 = vmatprep.mubr.bf16.mxu0 %v5299
  %6411 = vmatmul.mubr.bf16.gmra.mrb[0].mxu0 %v5298
  %v6412 = vpop.f32.mrb[0].mxu0
  %v6413 = vadd.f32 0.0, %v6412
  %v6414 = vpop.f32.mrb[0].mxu0
  %v6415 = vadd.f32 0.0, %v6414
  %v6416 = vpop.f32.mrb[0].mxu0
  %v6417 = vpop.f32.mrb[0].mxu0
  %6418 = vdwg.mxu0
  %6419 = vmatprep.subr.bf16.mxu0 %v6253
  %6420 = vmatpush1.bf16.msra.mxu0 %v6252
  %6421 = vmatprep.subr.bf16.mxu0 %v6261
  %6422 = vmatpush1.bf16.msra.mxu0 %v6260
  %6423 = vmatprep.subr.bf16.mxu0 %v6269
  %6424 = vmatpush1.bf16.msra.mxu0 %v6268
  %6425 = vmatprep.subr.bf16.mxu0 %v6277
  %6426 = vmatpush1.bf16.msra.mxu0 %v6276
  %6427 = vmatprep.subr.bf16.mxu0 %v6285
  %6428 = vmatpush1.bf16.msra.mxu0 %v6284
  %6429 = vmatprep.subr.bf16.mxu0 %v6293
  %6430 = vmatpush1.bf16.msra.mxu0 %v6292
  %6431 = vmatprep.subr.bf16.mxu0 %v6301
  %6432 = vmatpush1.bf16.msra.mxu0 %v6300
  %6433 = vmatprep.subr.bf16.mxu0 %v6309
  %6434 = vmatpush1.bf16.msra.mxu0 %v6308
  %6435 = vmatprep.subr.bf16.mxu0 %v6317
  %6436 = vmatpush1.bf16.msra.mxu0 %v6316
  %6437 = vmatprep.subr.bf16.mxu0 %v6325
  %6438 = vmatpush1.bf16.msra.mxu0 %v6324
  %6439 = vmatprep.subr.bf16.mxu0 %v6333
  %6440 = vmatpush1.bf16.msra.mxu0 %v6332
  %6441 = vmatprep.subr.bf16.mxu0 %v6341
  %6442 = vmatpush1.bf16.msra.mxu0 %v6340
  %6443 = vmatprep.subr.bf16.mxu0 %v6349
  %6444 = vmatpush1.bf16.msra.mxu0 %v6348
  %6445 = vmatprep.subr.bf16.mxu0 %v6357
  %6446 = vmatpush1.bf16.msra.mxu0 %v6356
  %6447 = vmatprep.subr.bf16.mxu0 %v6365
  %6448 = vmatpush1.bf16.msra.mxu0 %v6364
  %6449 = vmatprep.subr.bf16.mxu0 %v6373
  %6450 = vmatpush1.bf16.msra.mxu0 %v6372
  %6451 = vmatprep.mubr.bf16.mxu0 %v5299
  %6452 = vmatmul.mubr.bf16.gmra.mrb[0].mxu0 %v5298
  %v6453 = vpop.f32.mrb[0].mxu0
  %v6454 = vadd.f32 0.0, %v6453
  %v6455 = vpop.f32.mrb[0].mxu0
  %v6456 = vadd.f32 0.0, %v6455
  %v6457 = vpop.f32.mrb[0].mxu0
  %v6458 = vpop.f32.mrb[0].mxu0
  %6459 = vdwg.mxu0
  %6460 = vmatprep.subr.bf16.mxu0 %v6255
  %6461 = vmatpush1.bf16.msra.mxu0 %v6254
  %6462 = vmatprep.subr.bf16.mxu0 %v6263
  %6463 = vmatpush1.bf16.msra.mxu0 %v6262
  %6464 = vmatprep.subr.bf16.mxu0 %v6271
  %6465 = vmatpush1.bf16.msra.mxu0 %v6270
  %6466 = vmatprep.subr.bf16.mxu0 %v6279
  %6467 = vmatpush1.bf16.msra.mxu0 %v6278
  %6468 = vmatprep.subr.bf16.mxu0 %v6287
  %6469 = vmatpush1.bf16.msra.mxu0 %v6286
  %6470 = vmatprep.subr.bf16.mxu0 %v6295
  %6471 = vmatpush1.bf16.msra.mxu0 %v6294
  %6472 = vmatprep.subr.bf16.mxu0 %v6303
  %6473 = vmatpush1.bf16.msra.mxu0 %v6302
  %6474 = vmatprep.subr.bf16.mxu0 %v6311
  %6475 = vmatpush1.bf16.msra.mxu0 %v6310
  %6476 = vmatprep.subr.bf16.mxu0 %v6319
  %6477 = vmatpush1.bf16.msra.mxu0 %v6318
  %6478 = vmatprep.subr.bf16.mxu0 %v6327
  %6479 = vmatpush1.bf16.msra.mxu0 %v6326
  %6480 = vmatprep.subr.bf16.mxu0 %v6335
  %6481 = vmatpush1.bf16.msra.mxu0 %v6334
  %6482 = vmatprep.subr.bf16.mxu0 %v6343
  %6483 = vmatpush1.bf16.msra.mxu0 %v6342
  %6484 = vmatprep.subr.bf16.mxu0 %v6351
  %6485 = vmatpush1.bf16.msra.mxu0 %v6350
  %6486 = vmatprep.subr.bf16.mxu0 %v6359
  %6487 = vmatpush1.bf16.msra.mxu0 %v6358
  %6488 = vmatprep.subr.bf16.mxu0 %v6367
  %6489 = vmatpush1.bf16.msra.mxu0 %v6366
  %6490 = vmatprep.subr.bf16.mxu0 %v6375
  %6491 = vmatpush1.bf16.msra.mxu0 %v6374
  %6492 = vmatprep.mubr.bf16.mxu0 %v5299
  %6493 = vmatmul.mubr.bf16.gmra.mrb[0].mxu0 %v5298
  %v6494 = vpop.f32.mrb[0].mxu0
  %v6495 = vadd.f32 0.0, %v6494
  %v6496 = vpop.f32.mrb[0].mxu0
  %v6497 = vadd.f32 0.0, %v6496
  %v6498 = vpop.f32.mrb[0].mxu0
  %v6499 = vpop.f32.mrb[0].mxu0
  %6500 = vdwg.mxu0
  %6501 = vmatprep.subr.bf16.mxu0 %v6257
  %6502 = vmatpush1.bf16.msra.mxu0 %v6256
  %6503 = vmatprep.subr.bf16.mxu0 %v6265
  %6504 = vmatpush1.bf16.msra.mxu0 %v6264
  %6505 = vmatprep.subr.bf16.mxu0 %v6273
  %6506 = vmatpush1.bf16.msra.mxu0 %v6272
  %6507 = vmatprep.subr.bf16.mxu0 %v6281
  %6508 = vmatpush1.bf16.msra.mxu0 %v6280
  %6509 = vmatprep.subr.bf16.mxu0 %v6289
  %6510 = vmatpush1.bf16.msra.mxu0 %v6288
  %6511 = vmatprep.subr.bf16.mxu0 %v6297
  %6512 = vmatpush1.bf16.msra.mxu0 %v6296
  %6513 = vmatprep.subr.bf16.mxu0 %v6305
  %6514 = vmatpush1.bf16.msra.mxu0 %v6304
  %6515 = vmatprep.subr.bf16.mxu0 %v6313
  %6516 = vmatpush1.bf16.msra.mxu0 %v6312
  %6517 = vmatprep.subr.bf16.mxu0 %v6321
  %6518 = vmatpush1.bf16.msra.mxu0 %v6320
  %6519 = vmatprep.subr.bf16.mxu0 %v6329
  %6520 = vmatpush1.bf16.msra.mxu0 %v6328
  %6521 = vmatprep.subr.bf16.mxu0 %v6337
  %6522 = vmatpush1.bf16.msra.mxu0 %v6336
  %6523 = vmatprep.subr.bf16.mxu0 %v6345
  %6524 = vmatpush1.bf16.msra.mxu0 %v6344
  %6525 = vmatprep.subr.bf16.mxu0 %v6353
  %6526 = vmatpush1.bf16.msra.mxu0 %v6352
  %6527 = vmatprep.subr.bf16.mxu0 %v6361
  %6528 = vmatpush1.bf16.msra.mxu0 %v6360
  %6529 = vmatprep.subr.bf16.mxu0 %v6369
  %6530 = vmatpush1.bf16.msra.mxu0 %v6368
  %6531 = vmatprep.subr.bf16.mxu0 %v6377
  %6532 = vmatpush1.bf16.msra.mxu0 %v6376
  %6533 = vmatprep.mubr.bf16.mxu0 %v5299
  %6534 = vmatmul.mubr.bf16.gmra.mrb[0].mxu0 %v5298
  %v6535 = vpop.f32.mrb[0].mxu0
  %v6536 = vadd.f32 0.0, %v6535
  %v6537 = vpop.f32.mrb[0].mxu0
  %v6538 = vadd.f32 0.0, %v6537
  %v6539 = vpop.f32.mrb[0].mxu0
  %v6540 = vpop.f32.mrb[0].mxu0
  %6541 = vdwg.mxu0
  %v6542 = vadd.f32 %v6241, %v6413
  %v6543 = vadd.f32 %v6242, %v6415
  %v6544 = vadd.f32 %v6243, %v6454
  %v6545 = vadd.f32 %v6244, %v6456
  %v6546 = vadd.f32 %v6245, %v6495
  %v6547 = vadd.f32 %v6246, %v6497
  %v6548 = vadd.f32 %v6247, %v6536
  %v6549 = vadd.f32 %v6248, %v6538
  %v6550 = vld [vmem:[%s7] sm:$0xff]
  %v6551 = vld [vmem:[%s7 + $0x8] sm:$0xff]
  %v6552 = vld [vmem:[%s7 + $0x10] sm:$0xff]
  %v6553 = vld [vmem:[%s7 + $0x18] sm:$0xff]
  %v6554 = vld [vmem:[%s7 + $0x20] sm:$0xff]
  %v6555 = vld [vmem:[%s7 + $0x28] sm:$0xff]
  %v6556 = vld [vmem:[%s7 + $0x30] sm:$0xff]
  %v6557 = vld [vmem:[%s7 + $0x38] sm:$0xff]
  %v6558 = vld [vmem:[%s7 + $0x40] sm:$0xff]
  %v6559 = vld [vmem:[%s7 + $0x48] sm:$0xff]
  %v6560 = vld [vmem:[%s7 + $0x50] sm:$0xff]
  %v6561 = vld [vmem:[%s7 + $0x58] sm:$0xff]
  %v6562 = vld [vmem:[%s7 + $0x60] sm:$0xff]
  %v6563 = vld [vmem:[%s7 + $0x68] sm:$0xff]
  %v6564 = vld [vmem:[%s7 + $0x70] sm:$0xff]
  %v6565 = vld [vmem:[%s7 + $0x78] sm:$0xff]
  %v6566 = vld [vmem:[%s7 + $0x80] sm:$0xff]
  %v6567 = vld [vmem:[%s7 + $0x88] sm:$0xff]
  %v6568 = vld [vmem:[%s7 + $0x90] sm:$0xff]
  %v6569 = vld [vmem:[%s7 + $0x98] sm:$0xff]
  %v6570 = vld [vmem:[%s7 + $0xa0] sm:$0xff]
  %v6571 = vld [vmem:[%s7 + $0xa8] sm:$0xff]
  %v6572 = vld [vmem:[%s7 + $0xb0] sm:$0xff]
  %v6573 = vld [vmem:[%s7 + $0xb8] sm:$0xff]
  %v6574 = vld [vmem:[%s7 + $0xc0] sm:$0xff]
  %v6575 = vld [vmem:[%s7 + $0xc8] sm:$0xff]
  %v6576 = vld [vmem:[%s7 + $0xd0] sm:$0xff]
  %v6577 = vld [vmem:[%s7 + $0xd8] sm:$0xff]
  %v6578 = vld [vmem:[%s7 + $0xe0] sm:$0xff]
  %v6579 = vld [vmem:[%s7 + $0xe8] sm:$0xff]
  %v6580 = vld [vmem:[%s7 + $0xf0] sm:$0xff]
  %v6581 = vld [vmem:[%s7 + $0xf8] sm:$0xff]
  %v6582 = vld [vmem:[%s7 + $0x100] sm:$0xff]
  %v6583 = vld [vmem:[%s7 + $0x108] sm:$0xff]
  %v6584 = vld [vmem:[%s7 + $0x110] sm:$0xff]
  %v6585 = vld [vmem:[%s7 + $0x118] sm:$0xff]
  %v6586 = vld [vmem:[%s7 + $0x120] sm:$0xff]
  %v6587 = vld [vmem:[%s7 + $0x128] sm:$0xff]
  %v6588 = vld [vmem:[%s7 + $0x130] sm:$0xff]
  %v6589 = vld [vmem:[%s7 + $0x138] sm:$0xff]
  %v6590 = vld [vmem:[%s7 + $0x140] sm:$0xff]
  %v6591 = vld [vmem:[%s7 + $0x148] sm:$0xff]
  %v6592 = vld [vmem:[%s7 + $0x150] sm:$0xff]
  %v6593 = vld [vmem:[%s7 + $0x158] sm:$0xff]
  %v6594 = vld [vmem:[%s7 + $0x160] sm:$0xff]
  %v6595 = vld [vmem:[%s7 + $0x168] sm:$0xff]
  %v6596 = vld [vmem:[%s7 + $0x170] sm:$0xff]
  %v6597 = vld [vmem:[%s7 + $0x178] sm:$0xff]
  %v6598 = vld [vmem:[%s7 + $0x180] sm:$0xff]
  %v6599 = vld [vmem:[%s7 + $0x188] sm:$0xff]
  %v6600 = vld [vmem:[%s7 + $0x190] sm:$0xff]
  %v6601 = vld [vmem:[%s7 + $0x198] sm:$0xff]
  %v6602 = vld [vmem:[%s7 + $0x1a0] sm:$0xff]
  %v6603 = vld [vmem:[%s7 + $0x1a8] sm:$0xff]
  %v6604 = vld [vmem:[%s7 + $0x1b0] sm:$0xff]
  %v6605 = vld [vmem:[%s7 + $0x1b8] sm:$0xff]
  %v6606 = vld [vmem:[%s7 + $0x1c0] sm:$0xff]
  %v6607 = vld [vmem:[%s7 + $0x1c8] sm:$0xff]
  %v6608 = vld [vmem:[%s7 + $0x1d0] sm:$0xff]
  %v6609 = vld [vmem:[%s7 + $0x1d8] sm:$0xff]
  %v6610 = vld [vmem:[%s7 + $0x1e0] sm:$0xff]
  %v6611 = vld [vmem:[%s7 + $0x1e8] sm:$0xff]
  %v6612 = vld [vmem:[%s7 + $0x1f0] sm:$0xff]
  %v6613 = vld [vmem:[%s7 + $0x1f8] sm:$0xff]
  %v6614 = vld [vmem:[%s7 + $0x200] sm:$0xff]
  %v6615 = vld [vmem:[%s7 + $0x208] sm:$0xff]
  %v6616 = vld [vmem:[%s7 + $0x210] sm:$0xff]
  %v6617 = vld [vmem:[%s7 + $0x218] sm:$0xff]
  %v6618 = vld [vmem:[%s7 + $0x220] sm:$0xff]
  %v6619 = vld [vmem:[%s7 + $0x228] sm:$0xff]
  %v6620 = vld [vmem:[%s7 + $0x230] sm:$0xff]
  %v6621 = vld [vmem:[%s7 + $0x238] sm:$0xff]
  %v6622 = vld [vmem:[%s7 + $0x240] sm:$0xff]
  %v6623 = vld [vmem:[%s7 + $0x248] sm:$0xff]
  %v6624 = vld [vmem:[%s7 + $0x250] sm:$0xff]
  %v6625 = vld [vmem:[%s7 + $0x258] sm:$0xff]
  %v6626 = vld [vmem:[%s7 + $0x260] sm:$0xff]
  %v6627 = vld [vmem:[%s7 + $0x268] sm:$0xff]
  %v6628 = vld [vmem:[%s7 + $0x270] sm:$0xff]
  %v6629 = vld [vmem:[%s7 + $0x278] sm:$0xff]
  %v6630 = vld [vmem:[%s7 + $0x280] sm:$0xff]
  %v6631 = vld [vmem:[%s7 + $0x288] sm:$0xff]
  %v6632 = vld [vmem:[%s7 + $0x290] sm:$0xff]
  %v6633 = vld [vmem:[%s7 + $0x298] sm:$0xff]
  %v6634 = vld [vmem:[%s7 + $0x2a0] sm:$0xff]
  %v6635 = vld [vmem:[%s7 + $0x2a8] sm:$0xff]
  %v6636 = vld [vmem:[%s7 + $0x2b0] sm:$0xff]
  %v6637 = vld [vmem:[%s7 + $0x2b8] sm:$0xff]
  %v6638 = vld [vmem:[%s7 + $0x2c0] sm:$0xff]
  %v6639 = vld [vmem:[%s7 + $0x2c8] sm:$0xff]
  %v6640 = vld [vmem:[%s7 + $0x2d0] sm:$0xff]
  %v6641 = vld [vmem:[%s7 + $0x2d8] sm:$0xff]
  %v6642 = vld [vmem:[%s7 + $0x2e0] sm:$0xff]
  %v6643 = vld [vmem:[%s7 + $0x2e8] sm:$0xff]
  %v6644 = vld [vmem:[%s7 + $0x2f0] sm:$0xff]
  %v6645 = vld [vmem:[%s7 + $0x2f8] sm:$0xff]
  %v6646 = vld [vmem:[%s7 + $0x300] sm:$0xff]
  %v6647 = vld [vmem:[%s7 + $0x308] sm:$0xff]
  %v6648 = vld [vmem:[%s7 + $0x310] sm:$0xff]
  %v6649 = vld [vmem:[%s7 + $0x318] sm:$0xff]
  %v6650 = vld [vmem:[%s7 + $0x320] sm:$0xff]
  %v6651 = vld [vmem:[%s7 + $0x328] sm:$0xff]
  %v6652 = vld [vmem:[%s7 + $0x330] sm:$0xff]
  %v6653 = vld [vmem:[%s7 + $0x338] sm:$0xff]
  %v6654 = vld [vmem:[%s7 + $0x340] sm:$0xff]
  %v6655 = vld [vmem:[%s7 + $0x348] sm:$0xff]
  %v6656 = vld [vmem:[%s7 + $0x350] sm:$0xff]
  %v6657 = vld [vmem:[%s7 + $0x358] sm:$0xff]
  %v6658 = vld [vmem:[%s7 + $0x360] sm:$0xff]
  %v6659 = vld [vmem:[%s7 + $0x368] sm:$0xff]
  %v6660 = vld [vmem:[%s7 + $0x370] sm:$0xff]
  %v6661 = vld [vmem:[%s7 + $0x378] sm:$0xff]
  %v6662 = vld [vmem:[%s7 + $0x380] sm:$0xff]
  %v6663 = vld [vmem:[%s7 + $0x388] sm:$0xff]
  %v6664 = vld [vmem:[%s7 + $0x390] sm:$0xff]
  %v6665 = vld [vmem:[%s7 + $0x398] sm:$0xff]
  %v6666 = vld [vmem:[%s7 + $0x3a0] sm:$0xff]
  %v6667 = vld [vmem:[%s7 + $0x3a8] sm:$0xff]
  %v6668 = vld [vmem:[%s7 + $0x3b0] sm:$0xff]
  %v6669 = vld [vmem:[%s7 + $0x3b8] sm:$0xff]
  %v6670 = vld [vmem:[%s7 + $0x3c0] sm:$0xff]
  %v6671 = vld [vmem:[%s7 + $0x3c8] sm:$0xff]
  %v6672 = vld [vmem:[%s7 + $0x3d0] sm:$0xff]
  %v6673 = vld [vmem:[%s7 + $0x3d8] sm:$0xff]
  %v6674 = vld [vmem:[%s7 + $0x3e0] sm:$0xff]
  %v6675 = vld [vmem:[%s7 + $0x3e8] sm:$0xff]
  %v6676 = vld [vmem:[%s7 + $0x3f0] sm:$0xff]
  %v6677 = vld [vmem:[%s7 + $0x3f8] sm:$0xff]
  %v6678 = vld [vmem:[%s8] sm:$0x1]
  %v6680 = vlaneseq
  %v6681 = vshrl.u32 %v6680, 7
  %v6682 = vsub.s32 0, %v6681
  %v6683 = vrot.slane %v6678, %v6682
  %6685 = vmatprep.subr.mxu0 0.0
  %6686 = vmatpush1.msra.mxu0 %v6550
  %6687 = vmatprep.subr.mxu0 0.0
  %6688 = vmatpush1.msra.mxu0 %v6551
  %6689 = vmatprep.subr.mxu0 0.0
  %6690 = vmatpush1.msra.mxu0 %v6552
  %6691 = vmatprep.subr.mxu0 0.0
  %6692 = vmatpush1.msra.mxu0 %v6553
  %6693 = vmatprep.subr.mxu0 0.0
  %6694 = vmatpush1.msra.mxu0 %v6554
  %6695 = vmatprep.subr.mxu0 0.0
  %6696 = vmatpush1.msra.mxu0 %v6555
  %6697 = vmatprep.subr.mxu0 0.0
  %6698 = vmatpush1.msra.mxu0 %v6556
  %6699 = vmatprep.subr.mxu0 0.0
  %6700 = vmatpush1.msra.mxu0 %v6557
  %6701 = vmatprep.subr.mxu0 0.0
  %6702 = vmatpush1.msra.mxu0 %v6558
  %6703 = vmatprep.subr.mxu0 0.0
  %6704 = vmatpush1.msra.mxu0 %v6559
  %6705 = vmatprep.subr.mxu0 0.0
  %6706 = vmatpush1.msra.mxu0 %v6560
  %6707 = vmatprep.subr.mxu0 0.0
  %6708 = vmatpush1.msra.mxu0 %v6561
  %6709 = vmatprep.subr.mxu0 0.0
  %6710 = vmatpush1.msra.mxu0 %v6562
  %6711 = vmatprep.subr.mxu0 0.0
  %6712 = vmatpush1.msra.mxu0 %v6563
  %6713 = vmatprep.subr.mxu0 0.0
  %6714 = vmatpush1.msra.mxu0 %v6564
  %6715 = vmatprep.subr.mxu0 0.0
  %6716 = vmatpush1.msra.mxu0 %v6565
  %6717 = vmatprep.subr.mxu0 0.0
  %6718 = vmatpush1.msra.mxu0 %v6566
  %6719 = vmatprep.subr.mxu0 0.0
  %6720 = vmatpush1.msra.mxu0 %v6567
  %6721 = vmatprep.subr.mxu0 0.0
  %6722 = vmatpush1.msra.mxu0 %v6568
  %6723 = vmatprep.subr.mxu0 0.0
  %6724 = vmatpush1.msra.mxu0 %v6569
  %6725 = vmatprep.subr.mxu0 0.0
  %6726 = vmatpush1.msra.mxu0 %v6570
  %6727 = vmatprep.subr.mxu0 0.0
  %6728 = vmatpush1.msra.mxu0 %v6571
  %6729 = vmatprep.subr.mxu0 0.0
  %6730 = vmatpush1.msra.mxu0 %v6572
  %6731 = vmatprep.subr.mxu0 0.0
  %6732 = vmatpush1.msra.mxu0 %v6573
  %6733 = vmatprep.subr.mxu0 0.0
  %6734 = vmatpush1.msra.mxu0 %v6574
  %6735 = vmatprep.subr.mxu0 0.0
  %6736 = vmatpush1.msra.mxu0 %v6575
  %6737 = vmatprep.subr.mxu0 0.0
  %6738 = vmatpush1.msra.mxu0 %v6576
  %6739 = vmatprep.subr.mxu0 0.0
  %6740 = vmatpush1.msra.mxu0 %v6577
  %6741 = vmatprep.subr.mxu0 0.0
  %6742 = vmatpush1.msra.mxu0 %v6578
  %6743 = vmatprep.subr.mxu0 0.0
  %6744 = vmatpush1.msra.mxu0 %v6579
  %6745 = vmatprep.subr.mxu0 0.0
  %6746 = vmatpush1.msra.mxu0 %v6580
  %6747 = vmatprep.subr.mxu0 0.0
  %6748 = vmatpush1.msra.mxu0 %v6581
  %6749 = vmatprep.mubr.f32.mxu0 %v6543
  %6750 = vmatmul.mubr.f32.gmra.mrb[0].mxu0 %v6542
  %v6751 = vpop.f32.mrb[0].mxu0
  %v6752 = vadd.f32 %v6683, %v6751
  %v6753 = vpop.f32.mrb[0].mxu0
  %6754 = vdwg.mxu0
  %6755 = vmatprep.subr.mxu0 0.0
  %6756 = vmatpush1.msra.mxu0 %v6582
  %6757 = vmatprep.subr.mxu0 0.0
  %6758 = vmatpush1.msra.mxu0 %v6583
  %6759 = vmatprep.subr.mxu0 0.0
  %6760 = vmatpush1.msra.mxu0 %v6584
  %6761 = vmatprep.subr.mxu0 0.0
  %6762 = vmatpush1.msra.mxu0 %v6585
  %6763 = vmatprep.subr.mxu0 0.0
  %6764 = vmatpush1.msra.mxu0 %v6586
  %6765 = vmatprep.subr.mxu0 0.0
  %6766 = vmatpush1.msra.mxu0 %v6587
  %6767 = vmatprep.subr.mxu0 0.0
  %6768 = vmatpush1.msra.mxu0 %v6588
  %6769 = vmatprep.subr.mxu0 0.0
  %6770 = vmatpush1.msra.mxu0 %v6589
  %6771 = vmatprep.subr.mxu0 0.0
  %6772 = vmatpush1.msra.mxu0 %v6590
  %6773 = vmatprep.subr.mxu0 0.0
  %6774 = vmatpush1.msra.mxu0 %v6591
  %6775 = vmatprep.subr.mxu0 0.0
  %6776 = vmatpush1.msra.mxu0 %v6592
  %6777 = vmatprep.subr.mxu0 0.0
  %6778 = vmatpush1.msra.mxu0 %v6593
  %6779 = vmatprep.subr.mxu0 0.0
  %6780 = vmatpush1.msra.mxu0 %v6594
  %6781 = vmatprep.subr.mxu0 0.0
  %6782 = vmatpush1.msra.mxu0 %v6595
  %6783 = vmatprep.subr.mxu0 0.0
  %6784 = vmatpush1.msra.mxu0 %v6596
  %6785 = vmatprep.subr.mxu0 0.0
  %6786 = vmatpush1.msra.mxu0 %v6597
  %6787 = vmatprep.subr.mxu0 0.0
  %6788 = vmatpush1.msra.mxu0 %v6598
  %6789 = vmatprep.subr.mxu0 0.0
  %6790 = vmatpush1.msra.mxu0 %v6599
  %6791 = vmatprep.subr.mxu0 0.0
  %6792 = vmatpush1.msra.mxu0 %v6600
  %6793 = vmatprep.subr.mxu0 0.0
  %6794 = vmatpush1.msra.mxu0 %v6601
  %6795 = vmatprep.subr.mxu0 0.0
  %6796 = vmatpush1.msra.mxu0 %v6602
  %6797 = vmatprep.subr.mxu0 0.0
  %6798 = vmatpush1.msra.mxu0 %v6603
  %6799 = vmatprep.subr.mxu0 0.0
  %6800 = vmatpush1.msra.mxu0 %v6604
  %6801 = vmatprep.subr.mxu0 0.0
  %6802 = vmatpush1.msra.mxu0 %v6605
  %6803 = vmatprep.subr.mxu0 0.0
  %6804 = vmatpush1.msra.mxu0 %v6606
  %6805 = vmatprep.subr.mxu0 0.0
  %6806 = vmatpush1.msra.mxu0 %v6607
  %6807 = vmatprep.subr.mxu0 0.0
  %6808 = vmatpush1.msra.mxu0 %v6608
  %6809 = vmatprep.subr.mxu0 0.0
  %6810 = vmatpush1.msra.mxu0 %v6609
  %6811 = vmatprep.subr.mxu0 0.0
  %6812 = vmatpush1.msra.mxu0 %v6610
  %6813 = vmatprep.subr.mxu0 0.0
  %6814 = vmatpush1.msra.mxu0 %v6611
  %6815 = vmatprep.subr.mxu0 0.0
  %6816 = vmatpush1.msra.mxu0 %v6612
  %6817 = vmatprep.subr.mxu0 0.0
  %6818 = vmatpush1.msra.mxu0 %v6613
  %6819 = vmatprep.mubr.f32.mxu0 %v6545
  %6820 = vmatmul.mubr.f32.gmra.mrb[0].mxu0 %v6544
  %v6821 = vpop.f32.mrb[0].mxu0
  %v6822 = vadd.f32 %v6752, %v6821
  %v6823 = vpop.f32.mrb[0].mxu0
  %6824 = vdwg.mxu0
  %6825 = vmatprep.subr.mxu0 0.0
  %6826 = vmatpush1.msra.mxu0 %v6614
  %6827 = vmatprep.subr.mxu0 0.0
  %6828 = vmatpush1.msra.mxu0 %v6615
  %6829 = vmatprep.subr.mxu0 0.0
  %6830 = vmatpush1.msra.mxu0 %v6616
  %6831 = vmatprep.subr.mxu0 0.0
  %6832 = vmatpush1.msra.mxu0 %v6617
  %6833 = vmatprep.subr.mxu0 0.0
  %6834 = vmatpush1.msra.mxu0 %v6618
  %6835 = vmatprep.subr.mxu0 0.0
  %6836 = vmatpush1.msra.mxu0 %v6619
  %6837 = vmatprep.subr.mxu0 0.0
  %6838 = vmatpush1.msra.mxu0 %v6620
  %6839 = vmatprep.subr.mxu0 0.0
  %6840 = vmatpush1.msra.mxu0 %v6621
  %6841 = vmatprep.subr.mxu0 0.0
  %6842 = vmatpush1.msra.mxu0 %v6622
  %6843 = vmatprep.subr.mxu0 0.0
  %6844 = vmatpush1.msra.mxu0 %v6623
  %6845 = vmatprep.subr.mxu0 0.0
  %6846 = vmatpush1.msra.mxu0 %v6624
  %6847 = vmatprep.subr.mxu0 0.0
  %6848 = vmatpush1.msra.mxu0 %v6625
  %6849 = vmatprep.subr.mxu0 0.0
  %6850 = vmatpush1.msra.mxu0 %v6626
  %6851 = vmatprep.subr.mxu0 0.0
  %6852 = vmatpush1.msra.mxu0 %v6627
  %6853 = vmatprep.subr.mxu0 0.0
  %6854 = vmatpush1.msra.mxu0 %v6628
  %6855 = vmatprep.subr.mxu0 0.0
  %6856 = vmatpush1.msra.mxu0 %v6629
  %6857 = vmatprep.subr.mxu0 0.0
  %6858 = vmatpush1.msra.mxu0 %v6630
  %6859 = vmatprep.subr.mxu0 0.0
  %6860 = vmatpush1.msra.mxu0 %v6631
  %6861 = vmatprep.subr.mxu0 0.0
  %6862 = vmatpush1.msra.mxu0 %v6632
  %6863 = vmatprep.subr.mxu0 0.0
  %6864 = vmatpush1.msra.mxu0 %v6633
  %6865 = vmatprep.subr.mxu0 0.0
  %6866 = vmatpush1.msra.mxu0 %v6634
  %6867 = vmatprep.subr.mxu0 0.0
  %6868 = vmatpush1.msra.mxu0 %v6635
  %6869 = vmatprep.subr.mxu0 0.0
  %6870 = vmatpush1.msra.mxu0 %v6636
  %6871 = vmatprep.subr.mxu0 0.0
  %6872 = vmatpush1.msra.mxu0 %v6637
  %6873 = vmatprep.subr.mxu0 0.0
  %6874 = vmatpush1.msra.mxu0 %v6638
  %6875 = vmatprep.subr.mxu0 0.0
  %6876 = vmatpush1.msra.mxu0 %v6639
  %6877 = vmatprep.subr.mxu0 0.0
  %6878 = vmatpush1.msra.mxu0 %v6640
  %6879 = vmatprep.subr.mxu0 0.0
  %6880 = vmatpush1.msra.mxu0 %v6641
  %6881 = vmatprep.subr.mxu0 0.0
  %6882 = vmatpush1.msra.mxu0 %v6642
  %6883 = vmatprep.subr.mxu0 0.0
  %6884 = vmatpush1.msra.mxu0 %v6643
  %6885 = vmatprep.subr.mxu0 0.0
  %6886 = vmatpush1.msra.mxu0 %v6644
  %6887 = vmatprep.subr.mxu0 0.0
  %6888 = vmatpush1.msra.mxu0 %v6645
  %6889 = vmatprep.mubr.f32.mxu0 %v6547
  %6890 = vmatmul.mubr.f32.gmra.mrb[0].mxu0 %v6546
  %v6891 = vpop.f32.mrb[0].mxu0
  %v6892 = vadd.f32 %v6822, %v6891
  %v6893 = vpop.f32.mrb[0].mxu0
  %6894 = vdwg.mxu0
  %6895 = vmatprep.subr.mxu0 0.0
  %6896 = vmatpush1.msra.mxu0 %v6646
  %6897 = vmatprep.subr.mxu0 0.0
  %6898 = vmatpush1.msra.mxu0 %v6647
  %6899 = vmatprep.subr.mxu0 0.0
  %6900 = vmatpush1.msra.mxu0 %v6648
  %6901 = vmatprep.subr.mxu0 0.0
  %6902 = vmatpush1.msra.mxu0 %v6649
  %6903 = vmatprep.subr.mxu0 0.0
  %6904 = vmatpush1.msra.mxu0 %v6650
  %6905 = vmatprep.subr.mxu0 0.0
  %6906 = vmatpush1.msra.mxu0 %v6651
  %6907 = vmatprep.subr.mxu0 0.0
  %6908 = vmatpush1.msra.mxu0 %v6652
  %6909 = vmatprep.subr.mxu0 0.0
  %6910 = vmatpush1.msra.mxu0 %v6653
  %6911 = vmatprep.subr.mxu0 0.0
  %6912 = vmatpush1.msra.mxu0 %v6654
  %6913 = vmatprep.subr.mxu0 0.0
  %6914 = vmatpush1.msra.mxu0 %v6655
  %6915 = vmatprep.subr.mxu0 0.0
  %6916 = vmatpush1.msra.mxu0 %v6656
  %6917 = vmatprep.subr.mxu0 0.0
  %6918 = vmatpush1.msra.mxu0 %v6657
  %6919 = vmatprep.subr.mxu0 0.0
  %6920 = vmatpush1.msra.mxu0 %v6658
  %6921 = vmatprep.subr.mxu0 0.0
  %6922 = vmatpush1.msra.mxu0 %v6659
  %6923 = vmatprep.subr.mxu0 0.0
  %6924 = vmatpush1.msra.mxu0 %v6660
  %6925 = vmatprep.subr.mxu0 0.0
  %6926 = vmatpush1.msra.mxu0 %v6661
  %6927 = vmatprep.subr.mxu0 0.0
  %6928 = vmatpush1.msra.mxu0 %v6662
  %6929 = vmatprep.subr.mxu0 0.0
  %6930 = vmatpush1.msra.mxu0 %v6663
  %6931 = vmatprep.subr.mxu0 0.0
  %6932 = vmatpush1.msra.mxu0 %v6664
  %6933 = vmatprep.subr.mxu0 0.0
  %6934 = vmatpush1.msra.mxu0 %v6665
  %6935 = vmatprep.subr.mxu0 0.0
  %6936 = vmatpush1.msra.mxu0 %v6666
  %6937 = vmatprep.subr.mxu0 0.0
  %6938 = vmatpush1.msra.mxu0 %v6667
  %6939 = vmatprep.subr.mxu0 0.0
  %6940 = vmatpush1.msra.mxu0 %v6668
  %6941 = vmatprep.subr.mxu0 0.0
  %6942 = vmatpush1.msra.mxu0 %v6669
  %6943 = vmatprep.subr.mxu0 0.0
  %6944 = vmatpush1.msra.mxu0 %v6670
  %6945 = vmatprep.subr.mxu0 0.0
  %6946 = vmatpush1.msra.mxu0 %v6671
  %6947 = vmatprep.subr.mxu0 0.0
  %6948 = vmatpush1.msra.mxu0 %v6672
  %6949 = vmatprep.subr.mxu0 0.0
  %6950 = vmatpush1.msra.mxu0 %v6673
  %6951 = vmatprep.subr.mxu0 0.0
  %6952 = vmatpush1.msra.mxu0 %v6674
  %6953 = vmatprep.subr.mxu0 0.0
  %6954 = vmatpush1.msra.mxu0 %v6675
  %6955 = vmatprep.subr.mxu0 0.0
  %6956 = vmatpush1.msra.mxu0 %v6676
  %6957 = vmatprep.subr.mxu0 0.0
  %6958 = vmatpush1.msra.mxu0 %v6677
  %6959 = vmatprep.mubr.f32.mxu0 %v6549
  %6960 = vmatmul.mubr.f32.gmra.mrb[0].mxu0 %v6548
  %v6961 = vpop.f32.mrb[0].mxu0
  %v6962 = vadd.f32 %v6892, %v6961
  %v6963 = vpop.f32.mrb[0].mxu0
  %6964 = vdwg.mxu0
  %vm6965 = vcmask 15360
  %6966 = vst.msk [vmem:[%s9] sm:$0xff] %vm6965, %v6962
  %v6967 = vxor.u32 %v6962, 2147483648
  %v6968 = vmul.f32 %v6967, 1.442695
  %v6969 = vpow.pop %v6968
  %v6970 = vadd.f32 %v6969, 1.0
  %v6971 = vrcp.pop %v6970
  %v6972 = vmul.f32 1.0, %v6971
  %6973 = vst.msk [vmem:[%s10] sm:$0xff] %vm6965, %v6972
  // Predicated region
  $region82: #{_lambda_.1} parent=0 // pred_check
    _
  $region83: #{_lambda_.1} parent=0 // pred_check_branch
    %6975 = sbr.rel (0) target = $region85
  $region84: #{_lambda_.1} parent=0 // pred_region
    _
  $region85: #{_lambda_.1} parent=0 // pred_fallthru
    _
  // Predicated region
  $region86: #{_lambda_.1} parent=0 // pred_check
    _
  $region87: #{_lambda_.1} parent=0 // pred_check_branch
    %6977 = sbr.rel (0) target = $region89
  $region88: #{_lambda_.1} parent=0 // pred_region
    _
  $region89: #{_lambda_.1} parent=0 // pred_fallthru
    _
  // Predicated region
  $region90: #{_lambda_.1} parent=0 // pred_check
    _
  $region91: #{_lambda_.1} parent=0 // pred_check_branch
    %6979 = sbr.rel (0) target = $region93
  $region92: #{_lambda_.1} parent=0 // pred_region
    _
  $region93: #{_lambda_.1} parent=0 // pred_fallthru
    _
  // Predicated region
  $region94: #{_lambda_.1} parent=0 // pred_check
    _
  $region95: #{_lambda_.1} parent=0 // pred_check_branch
    %6981 = sbr.rel (0) target = $region97
  $region96: #{_lambda_.1} parent=0 // pred_region
    _
  $region97: #{_lambda_.1} parent=0 // pred_fallthru
    _
  %6982 = vsyncmov [#allocation3]
  %s6983 = vpop.sfrf %6982
  %p6984 = scmp.eq.s32.totalorder %s6983, 0
  %p6985 = pneg %p6984
  %6987 = shalt.err (%p6985)

</llo_original>
